<compile_context>
chip_gen: v7x
topology: tpu7x:2x2x1
jax: 0.10.0
libtpu: 0.0.40
codegen_flags: <defaults>
</compile_context>

<pallas_src>
import functools

import jax
import jax.numpy as jnp
from jax.experimental import pallas as pl
from jax.experimental.pallas import tpu as pltpu


_VMEM_LIMIT = 32 * 1024 * 1024   # explicit scoped-VMEM budget (raises v5e's 16 MiB default)
_TILE_TARGET = 512               # N-tile rows; ~4 MiB live working set per kernel at 512


# ---------------------------------------------------------------------------
# Small helpers
# ---------------------------------------------------------------------------
def _round_up(x, m):
    return ((x + m - 1) // m) * m


def _tile_plan(n, target=_TILE_TARGET):
    """Balanced tiles: nt tiles of tn rows (tn multiple of 8, <= target), n padded to tn*nt."""
    nt = -(-n // target)
    tn = _round_up(-(-n // nt), 8)
    return tn, tn * nt, nt


def _pad_rows(x, n_pad):
    n = x.shape[1]
    if n_pad == n:
        return x
    return jnp.pad(x, ((0, 0), (0, n_pad - n), (0, 0)))


def _dot(h, w_ref, b_ref, relu=False):
    """Pointwise-conv layer: bf16 MXU matmul with f32 accumulation, bias + ReLU in f32."""
    out = jnp.dot(h.astype(w_ref.dtype), w_ref[...],
                  preferred_element_type=jnp.float32)
    out = out + b_ref[...]
    if relu:
        out = jnp.maximum(out, 0.0)
    return out


def _interleave(wb):
    ws, bs = wb
    flat = []
    for w, b in zip(ws, bs):
        flat.extend([w, b])
    return flat


def _blockdiag(a, b):
    r1, c1 = a.shape
    r2, c2 = b.shape
    top = jnp.concatenate([a, jnp.zeros((r1, c2), a.dtype)], axis=1)
    bot = jnp.concatenate([jnp.zeros((r2, c1), b.dtype), b], axis=1)
    return jnp.concatenate([top, bot], axis=0)


def _tail_mask(vals, tn, n_total):
    """Zero out padded rows (row index >= n_total) of a (tn, C) tile before pooling."""
    rows = jax.lax.broadcasted_iota(jnp.int32, (tn, 1), 0) + pl.program_id(1) * tn
    return jnp.where(rows < n_total, vals, 0.0)


# ---------------------------------------------------------------------------
# Kernel 1: fused instance branch
#   [points | pixels] --(4 block-diagonal 128-wide layers)--> inst_local (128)
#   inst_local --(instance_global)--> 1024, per-tile partial sums for the avg pool.
# ---------------------------------------------------------------------------
def _instance_branch_kernel(mask_tail, n_total, tn,
                            x_ref,
                            fw1, fb1, fw2, fb2, fw3, fb3, fw4, fb4,   # fused pts|pix chain
                            iw1, ib1, iw2, ib2,                        # instance_global
                            local_ref, gpart_ref):
    h = _dot(x_ref[...], fw1, fb1, relu=True)              # (tn, 128)
    h = _dot(h, fw2, fb2, relu=True)
    h = _dot(h, fw3, fb3, relu=True)
    inst_local = _dot(h, fw4, fb4, relu=True)               # (tn, 128) = [pts_feat | emb]
    local_ref[...] = inst_local.astype(local_ref.dtype)

    g = _dot(inst_local, iw1, ib1, relu=True)                # (tn, 128)
    g = _dot(g, iw2, ib2, relu=True)                         # (tn, 1024)
    if mask_tail:
        g = _tail_mask(g, tn, n_total)
    gpart_ref[...] = jnp.sum(g, axis=0, keepdims=True)       # per-tile partial sum


def instance_branch(points, pix, params, tile_target=_TILE_TARGET):
    B, N, _ = points.shape
    tn, n_pad, nt = _tile_plan(N, tile_target)

    x = jnp.concatenate([points, pix], axis=-1)              # (B, N, 6)
    x = _pad_rows(x, n_pad)

    weights = (_interleave(params["instance_fused"])
               + _interleave(params["instance_global"]))

    def const_spec(a):
        return pl.BlockSpec(a.shape, lambda b, t: (0, 0))

    in_specs = [pl.BlockSpec((None, tn, 6), lambda b, t: (b, t, 0))]
    in_specs += [const_spec(a) for a in weights]

    grid_spec = pltpu.PrefetchScalarGridSpec(
        num_scalar_prefetch=0,
        grid=(B, nt),
        in_specs=in_specs,
        out_specs=(pl.BlockSpec((None, tn, 128), lambda b, t: (b, t, 0)),
                   pl.BlockSpec((None, 1, 1024), lambda b, t: (b, t, 0))),
    )
    local, partial = pl.pallas_call(
        functools.partial(_instance_branch_kernel, n_pad != N, N, tn),
        grid_spec=grid_spec,
        out_shape=(jax.ShapeDtypeStruct((B, n_pad, 128), jnp.bfloat16),
                   jax.ShapeDtypeStruct((B, nt, 1024), jnp.float32)),
        compiler_params=pltpu.CompilerParams(
            dimension_semantics=("parallel", "parallel"),
            vmem_limit_bytes=_VMEM_LIMIT),
    )(x, *weights)
    inst_global = jnp.sum(partial, axis=1, keepdims=True) * (1.0 / N)   # AdaptiveAvgPool1d(1)
    return local, inst_global


# ---------------------------------------------------------------------------
# Kernel 2: fused category branch (category_local + category_global + pool)
# cat_local is lane-padded 64 -> 128 (zero weight cols), downstream weights pad rows.
# ---------------------------------------------------------------------------
def _category_branch_kernel(mask_tail, n_total, tn,
                            prior_ref,
                            lw1, lb1, lw2, lb2, lw3, lb3,   # category_local (last padded to 128)
                            gw1, gb1, gw2, gb2,             # category_global (rows padded to 128)
                            local_ref, gpart_ref):
    c = _dot(prior_ref[...], lw1, lb1, relu=True)
    c = _dot(c, lw2, lb2, relu=True)
    c = _dot(c, lw3, lb3, relu=True)                        # (tv, 128), cols 64.. are zero
    local_ref[...] = c.astype(local_ref.dtype)

    g = _dot(c, gw1, gb1, relu=True)                        # (tv, 128)
    g = _dot(g, gw2, gb2, relu=True)                        # (tv, 1024)
    if mask_tail:
        g = _tail_mask(g, tn, n_total)
    gpart_ref[...] = jnp.sum(g, axis=0, keepdims=True)


def category_branch(prior, params, tile_target=_TILE_TARGET):
    B, NV, _ = prior.shape
    tv, n_pad, nt = _tile_plan(NV, tile_target)
    prior_p = _pad_rows(prior, n_pad)

    weights = (_interleave(params["category_local"])
               + _interleave(params["category_global"]))

    def const_spec(a):
        return pl.BlockSpec(a.shape, lambda b, t: (0, 0))

    in_specs = [pl.BlockSpec((None, tv, 3), lambda b, t: (b, t, 0))]
    in_specs += [const_spec(a) for a in weights]

    grid_spec = pltpu.PrefetchScalarGridSpec(
        num_scalar_prefetch=0,
        grid=(B, nt),
        in_specs=in_specs,
        out_specs=(pl.BlockSpec((None, tv, 128), lambda b, t: (b, t, 0)),
                   pl.BlockSpec((None, 1, 1024), lambda b, t: (b, t, 0))),
    )
    local, partial = pl.pallas_call(
        functools.partial(_category_branch_kernel, n_pad != NV, NV, tv),
        grid_spec=grid_spec,
        out_shape=(jax.ShapeDtypeStruct((B, n_pad, 128), jnp.bfloat16),
                   jax.ShapeDtypeStruct((B, nt, 1024), jnp.float32)),
        compiler_params=pltpu.CompilerParams(
            dimension_semantics=("parallel", "parallel"),
            vmem_limit_bytes=_VMEM_LIMIT),
    )(prior_p, *weights)
    cat_global = jnp.sum(partial, axis=1, keepdims=True) * (1.0 / NV)
    return local, cat_global


# ---------------------------------------------------------------------------
# Kernels 3/4: assignment / deformation heads.
#   h = relu(local @ W_local + g_bias)   (g_bias hoisted per batch in the wrapper)
#   followed by 512->256->out with the per-category (scalar-prefetched cat_id) weight
#   block for the last layer, out padded to a multiple of 128 lanes.
# ---------------------------------------------------------------------------
def _split_head_kernel(cid_ref, local_ref, gbias_ref, w1l, w2, b2, w3, b3, o_ref):
    del cid_ref  # only consumed by the index_maps (per-category weight block selection)
    h = jnp.dot(local_ref[...], w1l[...], preferred_element_type=jnp.float32)
    h = jnp.maximum(h + gbias_ref[...], 0.0)                 # (tn, 512)
    h = _dot(h, w2, b2, relu=True)                           # (tn, 256)
    o_ref[...] = _dot(h, w3, b3, relu=False).astype(o_ref.dtype)


def _head_gbias(global_a, global_b, head):
    """Per-batch first-layer bias: global_a @ W_ga + global_b @ W_gb + b1, shape (B,1,512)."""
    ga = jnp.squeeze(global_a, axis=1)
    gb = jnp.squeeze(global_b, axis=1)
    h = (jnp.dot(ga.astype(head["w1ga"].dtype), head["w1ga"],
                 preferred_element_type=jnp.float32)
         + jnp.dot(gb.astype(head["w1gb"].dtype), head["w1gb"],
                   preferred_element_type=jnp.float32)
         + head["b1"])
    return h[:, None, :]


def _split_head(local, g_bias, cat_id, head, tile_target=_TILE_TARGET):
    B, Np, Cl = local.shape
    tn, n_pad, nt = _tile_plan(Np, tile_target)
    local = _pad_rows(local, n_pad)   # no-op when Np came from a branch (same tile plan)

    w1l, w2, b2, w3, b3 = head["w1l"], head["w2"], head["b2"], head["w3"], head["b3"]
    out_c = w3.shape[-1]
    gb_c = g_bias.shape[-1]

    def wspec2(a):   # dense 2-D weight / bias, resident across the whole grid
        return pl.BlockSpec(a.shape, lambda b, t, cid: (0, 0))

    def wspec3(a):   # (n_cat, R, C): pick this batch's category block via cat_id
        return pl.BlockSpec((None,) + a.shape[1:], lambda b, t, cid: (cid[b], 0, 0))

    grid_spec = pltpu.PrefetchScalarGridSpec(
        num_scalar_prefetch=1,
        grid=(B, nt),
        in_specs=[
            pl.BlockSpec((None, tn, Cl), lambda b, t, cid: (b, t, 0)),
            pl.BlockSpec((None, 1, gb_c), lambda b, t, cid: (b, 0, 0)),
            wspec2(w1l), wspec2(w2), wspec2(b2), wspec3(w3), wspec3(b3),
        ],
        out_specs=pl.BlockSpec((None, tn, out_c), lambda b, t, cid: (b, t, 0)),
    )
    return pl.pallas_call(
        _split_head_kernel,
        grid_spec=grid_spec,
        out_shape=jax.ShapeDtypeStruct((B, n_pad, out_c), jnp.float32),
        compiler_params=pltpu.CompilerParams(
            dimension_semantics=("parallel", "parallel"),
            vmem_limit_bytes=_VMEM_LIMIT),
    )(cat_id, local, g_bias, w1l, w2, b2, w3, b3)


# ---------------------------------------------------------------------------
# Deterministic parameter construction (mirrors the nn.Conv1d shapes in __init__).
# Weights stored (Cin, Cout) = conv_weight.T, all matmul weights bf16, biases f32.
# ---------------------------------------------------------------------------
def init_deformnet_params(key, n_cat=6, nv_prior=64):
    keys = iter(jax.random.split(key, 64))
    bf16 = jnp.bfloat16

    def conv(cin, cout, std=None):
        kw, kb = jax.random.split(next(keys))
        s = (float(cin) ** -0.5) if std is None else std
        w = jax.random.normal(kw, (cin, cout), jnp.float32) * s
        b = jax.random.normal(kb, (1, cout), jnp.float32) * 0.01
        return w, b

    p = {}

    # ---- instance branch: individual layers, then block-diagonal fusion -----------
    gw1, gb1 = conv(3, 64)
    gw2, gb2 = conv(64, 64)                      # instance_geometry
    # TODO(synk): RGBformer / PCformer (SegFormer-style backbones) are not defined in the
    # provided module source; approximated as pointwise conv blocks with matching channel
    # counts (pcformer: 64->64->64, rgbformer: 3->64->32 so that di == 32).
    pw1, pb1 = conv(64, 64)
    pw2, pb2 = conv(64, 64)                      # pcformer (placeholder)
    rw1, rb1 = conv(3, 64)
    rw2, rb2 = conv(64, 32)                      # rgbformer (placeholder)
    cw1, cb1 = conv(32, 64)                      # instance_color

    rw2p = jnp.pad(rw2, ((0, 0), (0, 32)))       # pix layer-2 cols padded 32 -> 64
    rb2p = jnp.pad(rb2, ((0, 0), (0, 32)))
    cw1p = jnp.pad(cw1, ((0, 32), (0, 0)))       # rows for the padded (zero) inputs
    eye64 = jnp.eye(64, dtype=jnp.float32)

    f_ws = [_blockdiag(gw1, rw1),                # (6, 128)
            _blockdiag(gw2, rw2p),               # (128, 128)
            _blockdiag(pw1, cw1p),               # (128, 128)
            _blockdiag(pw2, eye64)]              # (128, 128); identity carries emb through
    f_bs = [jnp.concatenate([gb1, rb1], axis=1),
            jnp.concatenate([gb2, rb2p], axis=1),
            jnp.concatenate([pb1, cb1], axis=1),
            jnp.concatenate([pb2, jnp.zeros((1, 64), jnp.float32)], axis=1)]
    p["instance_fused"] = ([w.astype(bf16) for w in f_ws], f_bs)

    iw1, ib1 = conv(128, 128)
    iw2, ib2 = conv(128, 1024)                   # instance_global
    p["instance_global"] = ([iw1.astype(bf16), iw2.astype(bf16)], [ib1, ib2])

    # ---- category branch: last local layer lane-padded 64 -> 128 -------------------
    lw1, lb1 = conv(3, 64)
    lw2, lb2 = conv(64, 64)
    lw3, lb3 = conv(64, 64)
    lw3 = jnp.pad(lw3, ((0, 0), (0, 64)))
    lb3 = jnp.pad(lb3, ((0, 0), (0, 64)))
    p["category_local"] = ([lw1.astype(bf16), lw2.astype(bf16), lw3.astype(bf16)],
                           [lb1, lb2, lb3])

    cgw1, cgb1 = conv(64, 128)
    cgw2, cgb2 = conv(128, 1024)
    cgw1 = jnp.pad(cgw1, ((0, 64), (0, 0)))      # rows for the padded (zero) cat_local lanes
    p["category_global"] = ([cgw1.astype(bf16), cgw2.astype(bf16)], [cgb1, cgb2])

    # ---- assignment head: Conv1d(2176,512)/(512,256)/(256, n_cat*nv_prior) ---------
    # First-layer rows split by source: [0:128)=inst_local, [128:1152)=inst_global,
    # [1152:2176)=cat_global.  Global rows are only used for the hoisted per-batch bias.
    # Last layer reshaped to (n_cat, 256, nv) and lane-padded to a multiple of 128.
    w1, b1 = conv(2176, 512)
    w2, b2 = conv(512, 256)
    w3, b3 = conv(256, n_cat * nv_prior)
    nv_pad = _round_up(nv_prior, 128)
    w3 = jnp.transpose(w3.reshape(256, n_cat, nv_prior), (1, 0, 2))
    w3 = jnp.pad(w3, ((0, 0), (0, 0), (0, nv_pad - nv_prior)))
    b3 = jnp.pad(b3.reshape(n_cat, 1, nv_prior), ((0, 0), (0, 0), (0, nv_pad - nv_prior)))
    p["assignment"] = dict(
        w1l=w1[:128].astype(bf16),
        w1ga=w1[128:1152].astype(bf16),          # multiplies inst_global (hoisted)
        w1gb=w1[1152:].astype(bf16),             # multiplies cat_global  (hoisted)
        b1=b1,
        w2=w2.astype(bf16), b2=b2,
        w3=w3.astype(bf16), b3=b3)

    # ---- deformation head: Conv1d(2112,512)/(512,256)/(256, n_cat*3), last ~N(0,1e-4)
    # Rows: [0:64)=cat_local (padded to 128 to match the padded cat_local), [64:1088)=
    # cat_global, [1088:2112)=inst_global.  Last layer lane-padded 3 -> 128.
    w1, b1 = conv(2112, 512)
    w2, b2 = conv(512, 256)
    w3, b3 = conv(256, n_cat * 3, std=1e-4)
    w1l = jnp.pad(w1[:64], ((0, 64), (0, 0)))
    w3 = jnp.transpose(w3.reshape(256, n_cat, 3), (1, 0, 2))
    w3 = jnp.pad(w3, ((0, 0), (0, 0), (0, 125)))
    b3 = jnp.pad(b3.reshape(n_cat, 1, 3), ((0, 0), (0, 0), (0, 125)))
    p["deformation"] = dict(
        w1l=w1l.astype(bf16),
        w1ga=w1[64:1088].astype(bf16),           # multiplies cat_global  (hoisted)
        w1gb=w1[1088:].astype(bf16),             # multiplies inst_global (hoisted)
        b1=b1,
        w2=w2.astype(bf16), b2=b2,
        w3=w3.astype(bf16), b3=b3)
    return p


# ---------------------------------------------------------------------------
# Forward pass.
# ---------------------------------------------------------------------------
def deformnet_forward(params, points, img, choose, cat_id, prior):
    B, C, H, W = img.shape
    n_pts = points.shape[1]
    nv = prior.shape[1]

    # Gather the chosen pixels BEFORE the (pointwise-placeholder) rgbformer so the
    # per-pixel convs run on n_pts points instead of H*W pixels.  (Only valid while
    # rgbformer is pointwise, see TODO in init.)
    img_flat = jnp.transpose(img.reshape(B, C, H * W), (0, 2, 1))       # (bs, H*W, 3)
    pix = jnp.take_along_axis(img_flat, choose[:, :, None].astype(jnp.int32), axis=1)
    cat_id = cat_id.astype(jnp.int32)

    inst_local, inst_global = instance_branch(points, pix, params)      # (B,Np,128) bf16, (B,1,1024)
    cat_local, cat_global = category_branch(prior, params)              # (B,NVp,128) bf16, (B,1,1024)

    # assign_feat = cat(inst_local, inst_global, cat_global)
    # deform_feat = cat(cat_local,  cat_global,  inst_global)
    # -- global parts hoisted into tiny per-batch biases; local parts matmul'd in-kernel.
    assign_bias = _head_gbias(inst_global, cat_global, params["assignment"])
    deform_bias = _head_gbias(cat_global, inst_global, params["deformation"])

    assign = _split_head(inst_local, assign_bias, cat_id, params["assignment"])
    deform = _split_head(cat_local, deform_bias, cat_id, params["deformation"])

    assign_mat = assign[:, :n_pts, :nv]                                  # (bs, n_pts, nv)
    deltas = deform[:, :nv, :3]                                          # (bs, nv, 3)
    return assign_mat, deltas


# ---------------------------------------------------------------------------
if __name__ == "__main__":
    key = jax.random.PRNGKey(0)
    n_cat, nv_prior = 6, 64
    bs, n_pts, H, W = 2, 64, 16, 16

    k1, k2, k3, k4, k5, kp = jax.random.split(key, 6)
    points = jax.random.normal(k1, (bs, n_pts, 3), jnp.float32)
    img = jax.random.normal(k2, (bs, 3, H, W), jnp.float32)
    choose = jax.random.randint(k3, (bs, n_pts), 0, H * W)
    cat_id = jax.random.randint(k4, (bs,), 0, n_cat)
    prior = jax.random.normal(k5, (bs, nv_prior, 3), jnp.float32)

    params = init_deformnet_params(kp, n_cat=n_cat, nv_prior=nv_prior)

    fwd = jax.jit(deformnet_forward)
    assign_mat, deltas = fwd(params, points, img, choose, cat_id, prior)
    jax.block_until_ready((assign_mat, deltas))

    assert assign_mat.shape == (bs, n_pts, nv_prior)
    assert deltas.shape == (bs, nv_prior, 3)
    assert bool(jnp.all(jnp.isfinite(assign_mat))) and bool(jnp.all(jnp.isfinite(deltas)))
    print("KERNEL_OK")
</pallas_src>

<mosaic_0001>
module attributes {stable_mosaic.version = 11 : i64} {
  func.func @_instance_branch_kernel(%arg0: i32, %arg1: i32, %arg2: memref<1x64x6xf32, #tpu.memory_space<vmem>>, %arg3: memref<6x128xbf16, #tpu.memory_space<vmem>>, %arg4: memref<1x128xf32, #tpu.memory_space<vmem>>, %arg5: memref<128x128xbf16, #tpu.memory_space<vmem>>, %arg6: memref<1x128xf32, #tpu.memory_space<vmem>>, %arg7: memref<128x128xbf16, #tpu.memory_space<vmem>>, %arg8: memref<1x128xf32, #tpu.memory_space<vmem>>, %arg9: memref<128x128xbf16, #tpu.memory_space<vmem>>, %arg10: memref<1x128xf32, #tpu.memory_space<vmem>>, %arg11: memref<128x128xbf16, #tpu.memory_space<vmem>>, %arg12: memref<1x128xf32, #tpu.memory_space<vmem>>, %arg13: memref<128x1024xbf16, #tpu.memory_space<vmem>>, %arg14: memref<1x1024xf32, #tpu.memory_space<vmem>>, %arg15: memref<1x64x128xbf16, #tpu.memory_space<vmem>>, %arg16: memref<1x1x1024xf32, #tpu.memory_space<vmem>>) attributes {dimension_semantics = [#tpu.dimension_semantics<parallel>, #tpu.dimension_semantics<parallel>], iteration_bounds = array<i64: 2, 1>, scalar_prefetch = 0 : i64, scratch_operands = 0 : i64, tpu.core_type = #tpu.core_type<tc>, window_params = [{transform_indices = @transform_0, window_bounds = array<i64: 1, 64, 6>}, {pipeline_mode = #tpu.pipeline_mode<synchronous>, transform_indices = @transform_1, window_bounds = array<i64: 6, 128>}, {pipeline_mode = #tpu.pipeline_mode<synchronous>, transform_indices = @transform_2, window_bounds = array<i64: 1, 128>}, {pipeline_mode = #tpu.pipeline_mode<synchronous>, transform_indices = @transform_3, window_bounds = array<i64: 128, 128>}, {pipeline_mode = #tpu.pipeline_mode<synchronous>, transform_indices = @transform_4, window_bounds = array<i64: 1, 128>}, {pipeline_mode = #tpu.pipeline_mode<synchronous>, transform_indices = @transform_5, window_bounds = array<i64: 128, 128>}, {pipeline_mode = #tpu.pipeline_mode<synchronous>, transform_indices = @transform_6, window_bounds = array<i64: 1, 128>}, {pipeline_mode = #tpu.pipeline_mode<synchronous>, transform_indices = @transform_7, window_bounds = array<i64: 128, 128>}, {pipeline_mode = #tpu.pipeline_mode<synchronous>, transform_indices = @transform_8, window_bounds = array<i64: 1, 128>}, {pipeline_mode = #tpu.pipeline_mode<synchronous>, transform_indices = @transform_9, window_bounds = array<i64: 128, 128>}, {pipeline_mode = #tpu.pipeline_mode<synchronous>, transform_indices = @transform_10, window_bounds = array<i64: 1, 128>}, {pipeline_mode = #tpu.pipeline_mode<synchronous>, transform_indices = @transform_11, window_bounds = array<i64: 128, 1024>}, {pipeline_mode = #tpu.pipeline_mode<synchronous>, transform_indices = @transform_12, window_bounds = array<i64: 1, 1024>}, {transform_indices = @transform_13, window_bounds = array<i64: 1, 64, 128>}, {transform_indices = @transform_14, window_bounds = array<i64: 1, 1, 1024>}]} {
    %c0 = arith.constant 0 : index
    %c0_0 = arith.constant 0 : index
    %c0_1 = arith.constant 0 : index
    %0 = vector.load %arg2[%c0, %c0_0, %c0_1] : memref<1x64x6xf32, #tpu.memory_space<vmem>>, vector<1x64x6xf32>
    %1 = vector.shape_cast %0 : vector<1x64x6xf32> to vector<64x6xf32>
    %2 = arith.truncf %1 : vector<64x6xf32> to vector<64x6xbf16>
    %c0_2 = arith.constant 0 : index
    %c0_3 = arith.constant 0 : index
    %3 = vector.load %arg3[%c0_2, %c0_3] : memref<6x128xbf16, #tpu.memory_space<vmem>>, vector<6x128xbf16>
    %cst = arith.constant dense<0.000000e+00> : vector<64x128xf32>
    %4 = tpu.matmul %2, %3, %cst {dimension_numbers = #tpu.dot_dimension_numbers<[1], [0], [0], [1], [0, 0, 1, 1], [], []>} : vector<64x6xbf16>, vector<6x128xbf16>, vector<64x128xf32> -> vector<64x128xf32>
    %c0_4 = arith.constant 0 : index
    %c0_5 = arith.constant 0 : index
    %5 = vector.load %arg4[%c0_4, %c0_5] : memref<1x128xf32, #tpu.memory_space<vmem>>, vector<1x128xf32>
    %6 = vector.broadcast %5 : vector<1x128xf32> to vector<64x128xf32>
    %7 = arith.addf %4, %6 : vector<64x128xf32>
    %cst_6 = arith.constant 0.000000e+00 : f32
    %8 = vector.broadcast %cst_6 : f32 to vector<64x128xf32>
    %9 = arith.maximumf %7, %8 : vector<64x128xf32>
    %10 = arith.truncf %9 : vector<64x128xf32> to vector<64x128xbf16>
    %c0_7 = arith.constant 0 : index
    %c0_8 = arith.constant 0 : index
    %11 = vector.load %arg5[%c0_7, %c0_8] : memref<128x128xbf16, #tpu.memory_space<vmem>>, vector<128x128xbf16>
    %cst_9 = arith.constant dense<0.000000e+00> : vector<64x128xf32>
    %12 = tpu.matmul %10, %11, %cst_9 {dimension_numbers = #tpu.dot_dimension_numbers<[1], [0], [0], [1], [0, 0, 1, 1], [], []>} : vector<64x128xbf16>, vector<128x128xbf16>, vector<64x128xf32> -> vector<64x128xf32>
    %c0_10 = arith.constant 0 : index
    %c0_11 = arith.constant 0 : index
    %13 = vector.load %arg6[%c0_10, %c0_11] : memref<1x128xf32, #tpu.memory_space<vmem>>, vector<1x128xf32>
    %14 = vector.broadcast %13 : vector<1x128xf32> to vector<64x128xf32>
    %15 = arith.addf %12, %14 : vector<64x128xf32>
    %cst_12 = arith.constant 0.000000e+00 : f32
    %16 = vector.broadcast %cst_12 : f32 to vector<64x128xf32>
    %17 = arith.maximumf %15, %16 : vector<64x128xf32>
    %18 = arith.truncf %17 : vector<64x128xf32> to vector<64x128xbf16>
    %c0_13 = arith.constant 0 : index
    %c0_14 = arith.constant 0 : index
    %19 = vector.load %arg7[%c0_13, %c0_14] : memref<128x128xbf16, #tpu.memory_space<vmem>>, vector<128x128xbf16>
    %cst_15 = arith.constant dense<0.000000e+00> : vector<64x128xf32>
    %20 = tpu.matmul %18, %19, %cst_15 {dimension_numbers = #tpu.dot_dimension_numbers<[1], [0], [0], [1], [0, 0, 1, 1], [], []>} : vector<64x128xbf16>, vector<128x128xbf16>, vector<64x128xf32> -> vector<64x128xf32>
    %c0_16 = arith.constant 0 : index
    %c0_17 = arith.constant 0 : index
    %21 = vector.load %arg8[%c0_16, %c0_17] : memref<1x128xf32, #tpu.memory_space<vmem>>, vector<1x128xf32>
    %22 = vector.broadcast %21 : vector<1x128xf32> to vector<64x128xf32>
    %23 = arith.addf %20, %22 : vector<64x128xf32>
    %cst_18 = arith.constant 0.000000e+00 : f32
    %24 = vector.broadcast %cst_18 : f32 to vector<64x128xf32>
    %25 = arith.maximumf %23, %24 : vector<64x128xf32>
    %26 = arith.truncf %25 : vector<64x128xf32> to vector<64x128xbf16>
    %c0_19 = arith.constant 0 : index
    %c0_20 = arith.constant 0 : index
    %27 = vector.load %arg9[%c0_19, %c0_20] : memref<128x128xbf16, #tpu.memory_space<vmem>>, vector<128x128xbf16>
    %cst_21 = arith.constant dense<0.000000e+00> : vector<64x128xf32>
    %28 = tpu.matmul %26, %27, %cst_21 {dimension_numbers = #tpu.dot_dimension_numbers<[1], [0], [0], [1], [0, 0, 1, 1], [], []>} : vector<64x128xbf16>, vector<128x128xbf16>, vector<64x128xf32> -> vector<64x128xf32>
    %c0_22 = arith.constant 0 : index
    %c0_23 = arith.constant 0 : index
    %29 = vector.load %arg10[%c0_22, %c0_23] : memref<1x128xf32, #tpu.memory_space<vmem>>, vector<1x128xf32>
    %30 = vector.broadcast %29 : vector<1x128xf32> to vector<64x128xf32>
    %31 = arith.addf %28, %30 : vector<64x128xf32>
    %cst_24 = arith.constant 0.000000e+00 : f32
    %32 = vector.broadcast %cst_24 : f32 to vector<64x128xf32>
    %33 = arith.maximumf %31, %32 : vector<64x128xf32>
    %34 = arith.truncf %33 : vector<64x128xf32> to vector<64x128xbf16>
    %c0_25 = arith.constant 0 : index
    %c0_26 = arith.constant 0 : index
    %c0_27 = arith.constant 0 : index
    %35 = vector.load %arg15[%c0_25, %c0_26, %c0_27] : memref<1x64x128xbf16, #tpu.memory_space<vmem>>, vector<1x64x128xbf16>
    %36 = vector.shape_cast %35 : vector<1x64x128xbf16> to vector<64x128xbf16>
    %37 = vector.shape_cast %34 : vector<64x128xbf16> to vector<1x64x128xbf16>
    tpu.vector_store %arg15[%c0_25, %c0_26, %c0_27], %37 {strides = array<i32>} : memref<1x64x128xbf16, #tpu.memory_space<vmem>>, vector<1x64x128xbf16>,
    %38 = arith.truncf %33 : vector<64x128xf32> to vector<64x128xbf16>
    %c0_28 = arith.constant 0 : index
    %c0_29 = arith.constant 0 : index
    %39 = vector.load %arg11[%c0_28, %c0_29] : memref<128x128xbf16, #tpu.memory_space<vmem>>, vector<128x128xbf16>
    %cst_30 = arith.constant dense<0.000000e+00> : vector<64x128xf32>
    %40 = tpu.matmul %38, %39, %cst_30 {dimension_numbers = #tpu.dot_dimension_numbers<[1], [0], [0], [1], [0, 0, 1, 1], [], []>} : vector<64x128xbf16>, vector<128x128xbf16>, vector<64x128xf32> -> vector<64x128xf32>
    %c0_31 = arith.constant 0 : index
    %c0_32 = arith.constant 0 : index
    %41 = vector.load %arg12[%c0_31, %c0_32] : memref<1x128xf32, #tpu.memory_space<vmem>>, vector<1x128xf32>
    %42 = vector.broadcast %41 : vector<1x128xf32> to vector<64x128xf32>
    %43 = arith.addf %40, %42 : vector<64x128xf32>
    %cst_33 = arith.constant 0.000000e+00 : f32
    %44 = vector.broadcast %cst_33 : f32 to vector<64x128xf32>
    %45 = arith.maximumf %43, %44 : vector<64x128xf32>
    %46 = arith.truncf %45 : vector<64x128xf32> to vector<64x128xbf16>
    %c0_34 = arith.constant 0 : index
    %c0_35 = arith.constant 0 : index
    %47 = vector.load %arg13[%c0_34, %c0_35] : memref<128x1024xbf16, #tpu.memory_space<vmem>>, vector<128x1024xbf16>
    %cst_36 = arith.constant dense<0.000000e+00> : vector<64x1024xf32>
    %48 = tpu.matmul %46, %47, %cst_36 {dimension_numbers = #tpu.dot_dimension_numbers<[1], [0], [0], [1], [0, 0, 1, 1], [], []>} : vector<64x128xbf16>, vector<128x1024xbf16>, vector<64x1024xf32> -> vector<64x1024xf32>
    %c0_37 = arith.constant 0 : index
    %c0_38 = arith.constant 0 : index
    %49 = vector.load %arg14[%c0_37, %c0_38] : memref<1x1024xf32, #tpu.memory_space<vmem>>, vector<1x1024xf32>
    %50 = vector.broadcast %49 : vector<1x1024xf32> to vector<64x1024xf32>
    %51 = arith.addf %48, %50 : vector<64x1024xf32>
    %cst_39 = arith.constant 0.000000e+00 : f32
    %52 = vector.broadcast %cst_39 : f32 to vector<64x1024xf32>
    %53 = arith.maximumf %51, %52 : vector<64x1024xf32>
    %cst_40 = arith.constant dense<0.000000e+00> : vector<1024xf32>
    %54 = vector.multi_reduction <add>, %53, %cst_40 [0] : vector<64x1024xf32> to vector<1024xf32>
    %55 = vector.shape_cast %54 : vector<1024xf32> to vector<1x1024xf32>
    %c0_41 = arith.constant 0 : index
    %c0_42 = arith.constant 0 : index
    %c0_43 = arith.constant 0 : index
    %56 = vector.load %arg16[%c0_41, %c0_42, %c0_43] : memref<1x1x1024xf32, #tpu.memory_space<vmem>>, vector<1x1x1024xf32>
    %57 = vector.shape_cast %56 : vector<1x1x1024xf32> to vector<1x1024xf32>
    %58 = vector.shape_cast %55 : vector<1x1024xf32> to vector<1x1x1024xf32>
    tpu.vector_store %arg16[%c0_41, %c0_42, %c0_43], %58 {strides = array<i32>} : memref<1x1x1024xf32, #tpu.memory_space<vmem>>, vector<1x1x1024xf32>,
    return
  }
  func.func @transform_0(%arg0: i32, %arg1: i32) -> (i32, i32, i32) {
    %c0_i32 = arith.constant 0 : i32
    %c0_i32_0 = arith.constant 0 : i32
    return %arg0, %arg1, %c0_i32 : i32, i32, i32
  }
  func.func @transform_1(%arg0: i32, %arg1: i32) -> (i32, i32) {
    %c0_i32 = arith.constant 0 : i32
    %c0_i32_0 = arith.constant 0 : i32
    %c0_i32_1 = arith.constant 0 : i32
    return %c0_i32, %c0_i32_0 : i32, i32
  }
  func.func @transform_2(%arg0: i32, %arg1: i32) -> (i32, i32) {
    %c0_i32 = arith.constant 0 : i32
    %c0_i32_0 = arith.constant 0 : i32
    %c0_i32_1 = arith.constant 0 : i32
    return %c0_i32, %c0_i32_0 : i32, i32
  }
  func.func @transform_3(%arg0: i32, %arg1: i32) -> (i32, i32) {
    %c0_i32 = arith.constant 0 : i32
    %c0_i32_0 = arith.constant 0 : i32
    %c0_i32_1 = arith.constant 0 : i32
    return %c0_i32, %c0_i32_0 : i32, i32
  }
  func.func @transform_4(%arg0: i32, %arg1: i32) -> (i32, i32) {
    %c0_i32 = arith.constant 0 : i32
    %c0_i32_0 = arith.constant 0 : i32
    %c0_i32_1 = arith.constant 0 : i32
    return %c0_i32, %c0_i32_0 : i32, i32
  }
  func.func @transform_5(%arg0: i32, %arg1: i32) -> (i32, i32) {
    %c0_i32 = arith.constant 0 : i32
    %c0_i32_0 = arith.constant 0 : i32
    %c0_i32_1 = arith.constant 0 : i32
    return %c0_i32, %c0_i32_0 : i32, i32
  }
  func.func @transform_6(%arg0: i32, %arg1: i32) -> (i32, i32) {
    %c0_i32 = arith.constant 0 : i32
    %c0_i32_0 = arith.constant 0 : i32
    %c0_i32_1 = arith.constant 0 : i32
    return %c0_i32, %c0_i32_0 : i32, i32
  }
  func.func @transform_7(%arg0: i32, %arg1: i32) -> (i32, i32) {
    %c0_i32 = arith.constant 0 : i32
    %c0_i32_0 = arith.constant 0 : i32
    %c0_i32_1 = arith.constant 0 : i32
    return %c0_i32, %c0_i32_0 : i32, i32
  }
  func.func @transform_8(%arg0: i32, %arg1: i32) -> (i32, i32) {
    %c0_i32 = arith.constant 0 : i32
    %c0_i32_0 = arith.constant 0 : i32
    %c0_i32_1 = arith.constant 0 : i32
    return %c0_i32, %c0_i32_0 : i32, i32
  }
  func.func @transform_9(%arg0: i32, %arg1: i32) -> (i32, i32) {
    %c0_i32 = arith.constant 0 : i32
    %c0_i32_0 = arith.constant 0 : i32
    %c0_i32_1 = arith.constant 0 : i32
    return %c0_i32, %c0_i32_0 : i32, i32
  }
  func.func @transform_10(%arg0: i32, %arg1: i32) -> (i32, i32) {
    %c0_i32 = arith.constant 0 : i32
    %c0_i32_0 = arith.constant 0 : i32
    %c0_i32_1 = arith.constant 0 : i32
    return %c0_i32, %c0_i32_0 : i32, i32
  }
  func.func @transform_11(%arg0: i32, %arg1: i32) -> (i32, i32) {
    %c0_i32 = arith.constant 0 : i32
    %c0_i32_0 = arith.constant 0 : i32
    %c0_i32_1 = arith.constant 0 : i32
    return %c0_i32, %c0_i32_0 : i32, i32
  }
  func.func @transform_12(%arg0: i32, %arg1: i32) -> (i32, i32) {
    %c0_i32 = arith.constant 0 : i32
    %c0_i32_0 = arith.constant 0 : i32
    %c0_i32_1 = arith.constant 0 : i32
    return %c0_i32, %c0_i32_0 : i32, i32
  }
  func.func @transform_13(%arg0: i32, %arg1: i32) -> (i32, i32, i32) {
    %c0_i32 = arith.constant 0 : i32
    %c0_i32_0 = arith.constant 0 : i32
    return %arg0, %arg1, %c0_i32 : i32, i32, i32
  }
  func.func @transform_14(%arg0: i32, %arg1: i32) -> (i32, i32, i32) {
    %c0_i32 = arith.constant 0 : i32
    %c0_i32_0 = arith.constant 0 : i32
    return %arg0, %arg1, %c0_i32 : i32, i32, i32
  }
}

module attributes {stable_mosaic.version = 11 : i64} {
  func.func @_category_branch_kernel(%arg0: i32, %arg1: i32, %arg2: memref<1x64x3xf32, #tpu.memory_space<vmem>>, %arg3: memref<3x64xbf16, #tpu.memory_space<vmem>>, %arg4: memref<1x64xf32, #tpu.memory_space<vmem>>, %arg5: memref<64x64xbf16, #tpu.memory_space<vmem>>, %arg6: memref<1x64xf32, #tpu.memory_space<vmem>>, %arg7: memref<64x128xbf16, #tpu.memory_space<vmem>>, %arg8: memref<1x128xf32, #tpu.memory_space<vmem>>, %arg9: memref<128x128xbf16, #tpu.memory_space<vmem>>, %arg10: memref<1x128xf32, #tpu.memory_space<vmem>>, %arg11: memref<128x1024xbf16, #tpu.memory_space<vmem>>, %arg12: memref<1x1024xf32, #tpu.memory_space<vmem>>, %arg13: memref<1x64x128xbf16, #tpu.memory_space<vmem>>, %arg14: memref<1x1x1024xf32, #tpu.memory_space<vmem>>) attributes {dimension_semantics = [#tpu.dimension_semantics<parallel>, #tpu.dimension_semantics<parallel>], iteration_bounds = array<i64: 2, 1>, scalar_prefetch = 0 : i64, scratch_operands = 0 : i64, tpu.core_type = #tpu.core_type<tc>, window_params = [{transform_indices = @transform_0, window_bounds = array<i64: 1, 64, 3>}, {pipeline_mode = #tpu.pipeline_mode<synchronous>, transform_indices = @transform_1, window_bounds = array<i64: 3, 64>}, {pipeline_mode = #tpu.pipeline_mode<synchronous>, transform_indices = @transform_2, window_bounds = array<i64: 1, 64>}, {pipeline_mode = #tpu.pipeline_mode<synchronous>, transform_indices = @transform_3, window_bounds = array<i64: 64, 64>}, {pipeline_mode = #tpu.pipeline_mode<synchronous>, transform_indices = @transform_4, window_bounds = array<i64: 1, 64>}, {pipeline_mode = #tpu.pipeline_mode<synchronous>, transform_indices = @transform_5, window_bounds = array<i64: 64, 128>}, {pipeline_mode = #tpu.pipeline_mode<synchronous>, transform_indices = @transform_6, window_bounds = array<i64: 1, 128>}, {pipeline_mode = #tpu.pipeline_mode<synchronous>, transform_indices = @transform_7, window_bounds = array<i64: 128, 128>}, {pipeline_mode = #tpu.pipeline_mode<synchronous>, transform_indices = @transform_8, window_bounds = array<i64: 1, 128>}, {pipeline_mode = #tpu.pipeline_mode<synchronous>, transform_indices = @transform_9, window_bounds = array<i64: 128, 1024>}, {pipeline_mode = #tpu.pipeline_mode<synchronous>, transform_indices = @transform_10, window_bounds = array<i64: 1, 1024>}, {transform_indices = @transform_11, window_bounds = array<i64: 1, 64, 128>}, {transform_indices = @transform_12, window_bounds = array<i64: 1, 1, 1024>}]} {
    %c0 = arith.constant 0 : index
    %c0_0 = arith.constant 0 : index
    %c0_1 = arith.constant 0 : index
    %0 = vector.load %arg2[%c0, %c0_0, %c0_1] : memref<1x64x3xf32, #tpu.memory_space<vmem>>, vector<1x64x3xf32>
    %1 = vector.shape_cast %0 : vector<1x64x3xf32> to vector<64x3xf32>
    %2 = arith.truncf %1 : vector<64x3xf32> to vector<64x3xbf16>
    %c0_2 = arith.constant 0 : index
    %c0_3 = arith.constant 0 : index
    %3 = vector.load %arg3[%c0_2, %c0_3] : memref<3x64xbf16, #tpu.memory_space<vmem>>, vector<3x64xbf16>
    %cst = arith.constant dense<0.000000e+00> : vector<64x64xf32>
    %4 = tpu.matmul %2, %3, %cst {dimension_numbers = #tpu.dot_dimension_numbers<[1], [0], [0], [1], [0, 0, 1, 1], [], []>} : vector<64x3xbf16>, vector<3x64xbf16>, vector<64x64xf32> -> vector<64x64xf32>
    %c0_4 = arith.constant 0 : index
    %c0_5 = arith.constant 0 : index
    %5 = vector.load %arg4[%c0_4, %c0_5] : memref<1x64xf32, #tpu.memory_space<vmem>>, vector<1x64xf32>
    %6 = vector.broadcast %5 : vector<1x64xf32> to vector<64x64xf32>
    %7 = arith.addf %4, %6 : vector<64x64xf32>
    %cst_6 = arith.constant 0.000000e+00 : f32
    %8 = vector.broadcast %cst_6 : f32 to vector<64x64xf32>
    %9 = arith.maximumf %7, %8 : vector<64x64xf32>
    %10 = arith.truncf %9 : vector<64x64xf32> to vector<64x64xbf16>
    %c0_7 = arith.constant 0 : index
    %c0_8 = arith.constant 0 : index
    %11 = vector.load %arg5[%c0_7, %c0_8] : memref<64x64xbf16, #tpu.memory_space<vmem>>, vector<64x64xbf16>
    %cst_9 = arith.constant dense<0.000000e+00> : vector<64x64xf32>
    %12 = tpu.matmul %10, %11, %cst_9 {dimension_numbers = #tpu.dot_dimension_numbers<[1], [0], [0], [1], [0, 0, 1, 1], [], []>} : vector<64x64xbf16>, vector<64x64xbf16>, vector<64x64xf32> -> vector<64x64xf32>
    %c0_10 = arith.constant 0 : index
    %c0_11 = arith.constant 0 : index
    %13 = vector.load %arg6[%c0_10, %c0_11] : memref<1x64xf32, #tpu.memory_space<vmem>>, vector<1x64xf32>
    %14 = vector.broadcast %13 : vector<1x64xf32> to vector<64x64xf32>
    %15 = arith.addf %12, %14 : vector<64x64xf32>
    %cst_12 = arith.constant 0.000000e+00 : f32
    %16 = vector.broadcast %cst_12 : f32 to vector<64x64xf32>
    %17 = arith.maximumf %15, %16 : vector<64x64xf32>
    %18 = arith.truncf %17 : vector<64x64xf32> to vector<64x64xbf16>
    %c0_13 = arith.constant 0 : index
    %c0_14 = arith.constant 0 : index
    %19 = vector.load %arg7[%c0_13, %c0_14] : memref<64x128xbf16, #tpu.memory_space<vmem>>, vector<64x128xbf16>
    %cst_15 = arith.constant dense<0.000000e+00> : vector<64x128xf32>
    %20 = tpu.matmul %18, %19, %cst_15 {dimension_numbers = #tpu.dot_dimension_numbers<[1], [0], [0], [1], [0, 0, 1, 1], [], []>} : vector<64x64xbf16>, vector<64x128xbf16>, vector<64x128xf32> -> vector<64x128xf32>
    %c0_16 = arith.constant 0 : index
    %c0_17 = arith.constant 0 : index
    %21 = vector.load %arg8[%c0_16, %c0_17] : memref<1x128xf32, #tpu.memory_space<vmem>>, vector<1x128xf32>
    %22 = vector.broadcast %21 : vector<1x128xf32> to vector<64x128xf32>
    %23 = arith.addf %20, %22 : vector<64x128xf32>
    %cst_18 = arith.constant 0.000000e+00 : f32
    %24 = vector.broadcast %cst_18 : f32 to vector<64x128xf32>
    %25 = arith.maximumf %23, %24 : vector<64x128xf32>
    %26 = arith.truncf %25 : vector<64x128xf32> to vector<64x128xbf16>
    %c0_19 = arith.constant 0 : index
    %c0_20 = arith.constant 0 : index
    %c0_21 = arith.constant 0 : index
    %27 = vector.load %arg13[%c0_19, %c0_20, %c0_21] : memref<1x64x128xbf16, #tpu.memory_space<vmem>>, vector<1x64x128xbf16>
    %28 = vector.shape_cast %27 : vector<1x64x128xbf16> to vector<64x128xbf16>
    %29 = vector.shape_cast %26 : vector<64x128xbf16> to vector<1x64x128xbf16>
    tpu.vector_store %arg13[%c0_19, %c0_20, %c0_21], %29 {strides = array<i32>} : memref<1x64x128xbf16, #tpu.memory_space<vmem>>, vector<1x64x128xbf16>,
    %30 = arith.truncf %25 : vector<64x128xf32> to vector<64x128xbf16>
    %c0_22 = arith.constant 0 : index
    %c0_23 = arith.constant 0 : index
    %31 = vector.load %arg9[%c0_22, %c0_23] : memref<128x128xbf16, #tpu.memory_space<vmem>>, vector<128x128xbf16>
    %cst_24 = arith.constant dense<0.000000e+00> : vector<64x128xf32>
    %32 = tpu.matmul %30, %31, %cst_24 {dimension_numbers = #tpu.dot_dimension_numbers<[1], [0], [0], [1], [0, 0, 1, 1], [], []>} : vector<64x128xbf16>, vector<128x128xbf16>, vector<64x128xf32> -> vector<64x128xf32>
    %c0_25 = arith.constant 0 : index
    %c0_26 = arith.constant 0 : index
    %33 = vector.load %arg10[%c0_25, %c0_26] : memref<1x128xf32, #tpu.memory_space<vmem>>, vector<1x128xf32>
    %34 = vector.broadcast %33 : vector<1x128xf32> to vector<64x128xf32>
    %35 = arith.addf %32, %34 : vector<64x128xf32>
    %cst_27 = arith.constant 0.000000e+00 : f32
    %36 = vector.broadcast %cst_27 : f32 to vector<64x128xf32>
    %37 = arith.maximumf %35, %36 : vector<64x128xf32>
    %38 = arith.truncf %37 : vector<64x128xf32> to vector<64x128xbf16>
    %c0_28 = arith.constant 0 : index
    %c0_29 = arith.constant 0 : index
    %39 = vector.load %arg11[%c0_28, %c0_29] : memref<128x1024xbf16, #tpu.memory_space<vmem>>, vector<128x1024xbf16>
    %cst_30 = arith.constant dense<0.000000e+00> : vector<64x1024xf32>
    %40 = tpu.matmul %38, %39, %cst_30 {dimension_numbers = #tpu.dot_dimension_numbers<[1], [0], [0], [1], [0, 0, 1, 1], [], []>} : vector<64x128xbf16>, vector<128x1024xbf16>, vector<64x1024xf32> -> vector<64x1024xf32>
    %c0_31 = arith.constant 0 : index
    %c0_32 = arith.constant 0 : index
    %41 = vector.load %arg12[%c0_31, %c0_32] : memref<1x1024xf32, #tpu.memory_space<vmem>>, vector<1x1024xf32>
    %42 = vector.broadcast %41 : vector<1x1024xf32> to vector<64x1024xf32>
    %43 = arith.addf %40, %42 : vector<64x1024xf32>
    %cst_33 = arith.constant 0.000000e+00 : f32
    %44 = vector.broadcast %cst_33 : f32 to vector<64x1024xf32>
    %45 = arith.maximumf %43, %44 : vector<64x1024xf32>
    %cst_34 = arith.constant dense<0.000000e+00> : vector<1024xf32>
    %46 = vector.multi_reduction <add>, %45, %cst_34 [0] : vector<64x1024xf32> to vector<1024xf32>
    %47 = vector.shape_cast %46 : vector<1024xf32> to vector<1x1024xf32>
    %c0_35 = arith.constant 0 : index
    %c0_36 = arith.constant 0 : index
    %c0_37 = arith.constant 0 : index
    %48 = vector.load %arg14[%c0_35, %c0_36, %c0_37] : memref<1x1x1024xf32, #tpu.memory_space<vmem>>, vector<1x1x1024xf32>
    %49 = vector.shape_cast %48 : vector<1x1x1024xf32> to vector<1x1024xf32>
    %50 = vector.shape_cast %47 : vector<1x1024xf32> to vector<1x1x1024xf32>
    tpu.vector_store %arg14[%c0_35, %c0_36, %c0_37], %50 {strides = array<i32>} : memref<1x1x1024xf32, #tpu.memory_space<vmem>>, vector<1x1x1024xf32>,
    return
  }
  func.func @transform_0(%arg0: i32, %arg1: i32) -> (i32, i32, i32) {
    %c0_i32 = arith.constant 0 : i32
    %c0_i32_0 = arith.constant 0 : i32
    return %arg0, %arg1, %c0_i32 : i32, i32, i32
  }
  func.func @transform_1(%arg0: i32, %arg1: i32) -> (i32, i32) {
    %c0_i32 = arith.constant 0 : i32
    %c0_i32_0 = arith.constant 0 : i32
    %c0_i32_1 = arith.constant 0 : i32
    return %c0_i32, %c0_i32_0 : i32, i32
  }
  func.func @transform_2(%arg0: i32, %arg1: i32) -> (i32, i32) {
    %c0_i32 = arith.constant 0 : i32
    %c0_i32_0 = arith.constant 0 : i32
    %c0_i32_1 = arith.constant 0 : i32
    return %c0_i32, %c0_i32_0 : i32, i32
  }
  func.func @transform_3(%arg0: i32, %arg1: i32) -> (i32, i32) {
    %c0_i32 = arith.constant 0 : i32
    %c0_i32_0 = arith.constant 0 : i32
    %c0_i32_1 = arith.constant 0 : i32
    return %c0_i32, %c0_i32_0 : i32, i32
  }
  func.func @transform_4(%arg0: i32, %arg1: i32) -> (i32, i32) {
    %c0_i32 = arith.constant 0 : i32
    %c0_i32_0 = arith.constant 0 : i32
    %c0_i32_1 = arith.constant 0 : i32
    return %c0_i32, %c0_i32_0 : i32, i32
  }
  func.func @transform_5(%arg0: i32, %arg1: i32) -> (i32, i32) {
    %c0_i32 = arith.constant 0 : i32
    %c0_i32_0 = arith.constant 0 : i32
    %c0_i32_1 = arith.constant 0 : i32
    return %c0_i32, %c0_i32_0 : i32, i32
  }
  func.func @transform_6(%arg0: i32, %arg1: i32) -> (i32, i32) {
    %c0_i32 = arith.constant 0 : i32
    %c0_i32_0 = arith.constant 0 : i32
    %c0_i32_1 = arith.constant 0 : i32
    return %c0_i32, %c0_i32_0 : i32, i32
  }
  func.func @transform_7(%arg0: i32, %arg1: i32) -> (i32, i32) {
    %c0_i32 = arith.constant 0 : i32
    %c0_i32_0 = arith.constant 0 : i32
    %c0_i32_1 = arith.constant 0 : i32
    return %c0_i32, %c0_i32_0 : i32, i32
  }
  func.func @transform_8(%arg0: i32, %arg1: i32) -> (i32, i32) {
    %c0_i32 = arith.constant 0 : i32
    %c0_i32_0 = arith.constant 0 : i32
    %c0_i32_1 = arith.constant 0 : i32
    return %c0_i32, %c0_i32_0 : i32, i32
  }
  func.func @transform_9(%arg0: i32, %arg1: i32) -> (i32, i32) {
    %c0_i32 = arith.constant 0 : i32
    %c0_i32_0 = arith.constant 0 : i32
    %c0_i32_1 = arith.constant 0 : i32
    return %c0_i32, %c0_i32_0 : i32, i32
  }
  func.func @transform_10(%arg0: i32, %arg1: i32) -> (i32, i32) {
    %c0_i32 = arith.constant 0 : i32
    %c0_i32_0 = arith.constant 0 : i32
    %c0_i32_1 = arith.constant 0 : i32
    return %c0_i32, %c0_i32_0 : i32, i32
  }
  func.func @transform_11(%arg0: i32, %arg1: i32) -> (i32, i32, i32) {
    %c0_i32 = arith.constant 0 : i32
    %c0_i32_0 = arith.constant 0 : i32
    return %arg0, %arg1, %c0_i32 : i32, i32, i32
  }
  func.func @transform_12(%arg0: i32, %arg1: i32) -> (i32, i32, i32) {
    %c0_i32 = arith.constant 0 : i32
    %c0_i32_0 = arith.constant 0 : i32
    return %arg0, %arg1, %c0_i32 : i32, i32, i32
  }
}

module attributes {stable_mosaic.version = 11 : i64} {
  func.func @_split_head_kernel(%arg0: i32, %arg1: i32, %arg2: memref<2xi32, #tpu.memory_space<smem>>, %arg3: memref<1x64x128xbf16, #tpu.memory_space<vmem>>, %arg4: memref<1x1x512xf32, #tpu.memory_space<vmem>>, %arg5: memref<128x512xbf16, #tpu.memory_space<vmem>>, %arg6: memref<512x256xbf16, #tpu.memory_space<vmem>>, %arg7: memref<1x256xf32, #tpu.memory_space<vmem>>, %arg8: memref<1x256x128xbf16, #tpu.memory_space<vmem>>, %arg9: memref<1x1x128xf32, #tpu.memory_space<vmem>>, %arg10: memref<1x64x128xf32, #tpu.memory_space<vmem>>) attributes {dimension_semantics = [#tpu.dimension_semantics<parallel>, #tpu.dimension_semantics<parallel>], iteration_bounds = array<i64: 2, 1>, scalar_prefetch = 1 : i64, scratch_operands = 0 : i64, tpu.core_type = #tpu.core_type<tc>, window_params = [{transform_indices = @transform_0, window_bounds = array<i64: 1, 64, 128>}, {transform_indices = @transform_1, window_bounds = array<i64: 1, 1, 512>}, {pipeline_mode = #tpu.pipeline_mode<synchronous>, transform_indices = @transform_2, window_bounds = array<i64: 128, 512>}, {pipeline_mode = #tpu.pipeline_mode<synchronous>, transform_indices = @transform_3, window_bounds = array<i64: 512, 256>}, {pipeline_mode = #tpu.pipeline_mode<synchronous>, transform_indices = @transform_4, window_bounds = array<i64: 1, 256>}, {transform_indices = @transform_5, window_bounds = array<i64: 1, 256, 128>}, {transform_indices = @transform_6, window_bounds = array<i64: 1, 1, 128>}, {transform_indices = @transform_7, window_bounds = array<i64: 1, 64, 128>}]} {
    %c0 = arith.constant 0 : index
    %c0_0 = arith.constant 0 : index
    %c0_1 = arith.constant 0 : index
    %0 = vector.load %arg3[%c0, %c0_0, %c0_1] : memref<1x64x128xbf16, #tpu.memory_space<vmem>>, vector<1x64x128xbf16>
    %1 = vector.shape_cast %0 : vector<1x64x128xbf16> to vector<64x128xbf16>
    %c0_2 = arith.constant 0 : index
    %c0_3 = arith.constant 0 : index
    %2 = vector.load %arg5[%c0_2, %c0_3] : memref<128x512xbf16, #tpu.memory_space<vmem>>, vector<128x512xbf16>
    %cst = arith.constant dense<0.000000e+00> : vector<64x512xf32>
    %3 = tpu.matmul %1, %2, %cst {dimension_numbers = #tpu.dot_dimension_numbers<[1], [0], [0], [1], [0, 0, 1, 1], [], []>} : vector<64x128xbf16>, vector<128x512xbf16>, vector<64x512xf32> -> vector<64x512xf32>
    %c0_4 = arith.constant 0 : index
    %c0_5 = arith.constant 0 : index
    %c0_6 = arith.constant 0 : index
    %4 = vector.load %arg4[%c0_4, %c0_5, %c0_6] : memref<1x1x512xf32, #tpu.memory_space<vmem>>, vector<1x1x512xf32>
    %5 = vector.shape_cast %4 : vector<1x1x512xf32> to vector<1x512xf32>
    %6 = vector.broadcast %5 : vector<1x512xf32> to vector<64x512xf32>
    %7 = arith.addf %3, %6 : vector<64x512xf32>
    %cst_7 = arith.constant 0.000000e+00 : f32
    %8 = vector.broadcast %cst_7 : f32 to vector<64x512xf32>
    %9 = arith.maximumf %7, %8 : vector<64x512xf32>
    %10 = arith.truncf %9 : vector<64x512xf32> to vector<64x512xbf16>
    %c0_8 = arith.constant 0 : index
    %c0_9 = arith.constant 0 : index
    %11 = vector.load %arg6[%c0_8, %c0_9] : memref<512x256xbf16, #tpu.memory_space<vmem>>, vector<512x256xbf16>
    %cst_10 = arith.constant dense<0.000000e+00> : vector<64x256xf32>
    %12 = tpu.matmul %10, %11, %cst_10 {dimension_numbers = #tpu.dot_dimension_numbers<[1], [0], [0], [1], [0, 0, 1, 1], [], []>} : vector<64x512xbf16>, vector<512x256xbf16>, vector<64x256xf32> -> vector<64x256xf32>
    %c0_11 = arith.constant 0 : index
    %c0_12 = arith.constant 0 : index
    %13 = vector.load %arg7[%c0_11, %c0_12] : memref<1x256xf32, #tpu.memory_space<vmem>>, vector<1x256xf32>
    %14 = vector.broadcast %13 : vector<1x256xf32> to vector<64x256xf32>
    %15 = arith.addf %12, %14 : vector<64x256xf32>
    %cst_13 = arith.constant 0.000000e+00 : f32
    %16 = vector.broadcast %cst_13 : f32 to vector<64x256xf32>
    %17 = arith.maximumf %15, %16 : vector<64x256xf32>
    %18 = arith.truncf %17 : vector<64x256xf32> to vector<64x256xbf16>
    %c0_14 = arith.constant 0 : index
    %c0_15 = arith.constant 0 : index
    %c0_16 = arith.constant 0 : index
    %19 = vector.load %arg8[%c0_14, %c0_15, %c0_16] : memref<1x256x128xbf16, #tpu.memory_space<vmem>>, vector<1x256x128xbf16>
    %20 = vector.shape_cast %19 : vector<1x256x128xbf16> to vector<256x128xbf16>
    %cst_17 = arith.constant dense<0.000000e+00> : vector<64x128xf32>
    %21 = tpu.matmul %18, %20, %cst_17 {dimension_numbers = #tpu.dot_dimension_numbers<[1], [0], [0], [1], [0, 0, 1, 1], [], []>} : vector<64x256xbf16>, vector<256x128xbf16>, vector<64x128xf32> -> vector<64x128xf32>
    %c0_18 = arith.constant 0 : index
    %c0_19 = arith.constant 0 : index
    %c0_20 = arith.constant 0 : index
    %22 = vector.load %arg9[%c0_18, %c0_19, %c0_20] : memref<1x1x128xf32, #tpu.memory_space<vmem>>, vector<1x1x128xf32>
    %23 = vector.shape_cast %22 : vector<1x1x128xf32> to vector<1x128xf32>
    %24 = vector.broadcast %23 : vector<1x128xf32> to vector<64x128xf32>
    %25 = arith.addf %21, %24 : vector<64x128xf32>
    %c0_21 = arith.constant 0 : index
    %c0_22 = arith.constant 0 : index
    %c0_23 = arith.constant 0 : index
    %26 = vector.load %arg10[%c0_21, %c0_22, %c0_23] : memref<1x64x128xf32, #tpu.memory_space<vmem>>, vector<1x64x128xf32>
    %27 = vector.shape_cast %26 : vector<1x64x128xf32> to vector<64x128xf32>
    %28 = vector.shape_cast %25 : vector<64x128xf32> to vector<1x64x128xf32>
    tpu.vector_store %arg10[%c0_21, %c0_22, %c0_23], %28 {strides = array<i32>} : memref<1x64x128xf32, #tpu.memory_space<vmem>>, vector<1x64x128xf32>,
    return
  }
  func.func @transform_0(%arg0: i32, %arg1: i32, %arg2: memref<2xi32, #tpu.memory_space<smem>>) -> (i32, i32, i32) {
    %c0_i32 = arith.constant 0 : i32
    %c0_i32_0 = arith.constant 0 : i32
    return %arg0, %arg1, %c0_i32 : i32, i32, i32
  }
  func.func @transform_1(%arg0: i32, %arg1: i32, %arg2: memref<2xi32, #tpu.memory_space<smem>>) -> (i32, i32, i32) {
    %c0_i32 = arith.constant 0 : i32
    %c0_i32_0 = arith.constant 0 : i32
    %c0_i32_1 = arith.constant 0 : i32
    return %arg0, %c0_i32, %c0_i32_0 : i32, i32, i32
  }
  func.func @transform_2(%arg0: i32, %arg1: i32, %arg2: memref<2xi32, #tpu.memory_space<smem>>) -> (i32, i32) {
    %c0_i32 = arith.constant 0 : i32
    %c0_i32_0 = arith.constant 0 : i32
    %c0_i32_1 = arith.constant 0 : i32
    return %c0_i32, %c0_i32_0 : i32, i32
  }
  func.func @transform_3(%arg0: i32, %arg1: i32, %arg2: memref<2xi32, #tpu.memory_space<smem>>) -> (i32, i32) {
    %c0_i32 = arith.constant 0 : i32
    %c0_i32_0 = arith.constant 0 : i32
    %c0_i32_1 = arith.constant 0 : i32
    return %c0_i32, %c0_i32_0 : i32, i32
  }
  func.func @transform_4(%arg0: i32, %arg1: i32, %arg2: memref<2xi32, #tpu.memory_space<smem>>) -> (i32, i32) {
    %c0_i32 = arith.constant 0 : i32
    %c0_i32_0 = arith.constant 0 : i32
    %c0_i32_1 = arith.constant 0 : i32
    return %c0_i32, %c0_i32_0 : i32, i32
  }
  func.func @transform_5(%arg0: i32, %arg1: i32, %arg2: memref<2xi32, #tpu.memory_space<smem>>) -> (i32, i32, i32) {
    %0 = arith.index_cast %arg0 : i32 to index
    %1 = memref.load %arg2[%0] : memref<2xi32, #tpu.memory_space<smem>>
    %c0_i32 = arith.constant 0 : i32
    %c0_i32_0 = arith.constant 0 : i32
    %c0_i32_1 = arith.constant 0 : i32
    return %1, %c0_i32, %c0_i32_0 : i32, i32, i32
  }
  func.func @transform_6(%arg0: i32, %arg1: i32, %arg2: memref<2xi32, #tpu.memory_space<smem>>) -> (i32, i32, i32) {
    %0 = arith.index_cast %arg0 : i32 to index
    %1 = memref.load %arg2[%0] : memref<2xi32, #tpu.memory_space<smem>>
    %c0_i32 = arith.constant 0 : i32
    %c0_i32_0 = arith.constant 0 : i32
    %c0_i32_1 = arith.constant 0 : i32
    return %1, %c0_i32, %c0_i32_0 : i32, i32, i32
  }
  func.func @transform_7(%arg0: i32, %arg1: i32, %arg2: memref<2xi32, #tpu.memory_space<smem>>) -> (i32, i32, i32) {
    %c0_i32 = arith.constant 0 : i32
    %c0_i32_0 = arith.constant 0 : i32
    return %arg0, %arg1, %c0_i32 : i32, i32, i32
  }
}

module attributes {stable_mosaic.version = 11 : i64} {
  func.func @_split_head_kernel(%arg0: i32, %arg1: i32, %arg2: memref<2xi32, #tpu.memory_space<smem>>, %arg3: memref<1x64x128xbf16, #tpu.memory_space<vmem>>, %arg4: memref<1x1x512xf32, #tpu.memory_space<vmem>>, %arg5: memref<128x512xbf16, #tpu.memory_space<vmem>>, %arg6: memref<512x256xbf16, #tpu.memory_space<vmem>>, %arg7: memref<1x256xf32, #tpu.memory_space<vmem>>, %arg8: memref<1x256x128xbf16, #tpu.memory_space<vmem>>, %arg9: memref<1x1x128xf32, #tpu.memory_space<vmem>>, %arg10: memref<1x64x128xf32, #tpu.memory_space<vmem>>) attributes {dimension_semantics = [#tpu.dimension_semantics<parallel>, #tpu.dimension_semantics<parallel>], iteration_bounds = array<i64: 2, 1>, scalar_prefetch = 1 : i64, scratch_operands = 0 : i64, tpu.core_type = #tpu.core_type<tc>, window_params = [{transform_indices = @transform_0, window_bounds = array<i64: 1, 64, 128>}, {transform_indices = @transform_1, window_bounds = array<i64: 1, 1, 512>}, {pipeline_mode = #tpu.pipeline_mode<synchronous>, transform_indices = @transform_2, window_bounds = array<i64: 128, 512>}, {pipeline_mode = #tpu.pipeline_mode<synchronous>, transform_indices = @transform_3, window_bounds = array<i64: 512, 256>}, {pipeline_mode = #tpu.pipeline_mode<synchronous>, transform_indices = @transform_4, window_bounds = array<i64: 1, 256>}, {transform_indices = @transform_5, window_bounds = array<i64: 1, 256, 128>}, {transform_indices = @transform_6, window_bounds = array<i64: 1, 1, 128>}, {transform_indices = @transform_7, window_bounds = array<i64: 1, 64, 128>}]} {
    %c0 = arith.constant 0 : index
    %c0_0 = arith.constant 0 : index
    %c0_1 = arith.constant 0 : index
    %0 = vector.load %arg3[%c0, %c0_0, %c0_1] : memref<1x64x128xbf16, #tpu.memory_space<vmem>>, vector<1x64x128xbf16>
    %1 = vector.shape_cast %0 : vector<1x64x128xbf16> to vector<64x128xbf16>
    %c0_2 = arith.constant 0 : index
    %c0_3 = arith.constant 0 : index
    %2 = vector.load %arg5[%c0_2, %c0_3] : memref<128x512xbf16, #tpu.memory_space<vmem>>, vector<128x512xbf16>
    %cst = arith.constant dense<0.000000e+00> : vector<64x512xf32>
    %3 = tpu.matmul %1, %2, %cst {dimension_numbers = #tpu.dot_dimension_numbers<[1], [0], [0], [1], [0, 0, 1, 1], [], []>} : vector<64x128xbf16>, vector<128x512xbf16>, vector<64x512xf32> -> vector<64x512xf32>
    %c0_4 = arith.constant 0 : index
    %c0_5 = arith.constant 0 : index
    %c0_6 = arith.constant 0 : index
    %4 = vector.load %arg4[%c0_4, %c0_5, %c0_6] : memref<1x1x512xf32, #tpu.memory_space<vmem>>, vector<1x1x512xf32>
    %5 = vector.shape_cast %4 : vector<1x1x512xf32> to vector<1x512xf32>
    %6 = vector.broadcast %5 : vector<1x512xf32> to vector<64x512xf32>
    %7 = arith.addf %3, %6 : vector<64x512xf32>
    %cst_7 = arith.constant 0.000000e+00 : f32
    %8 = vector.broadcast %cst_7 : f32 to vector<64x512xf32>
    %9 = arith.maximumf %7, %8 : vector<64x512xf32>
    %10 = arith.truncf %9 : vector<64x512xf32> to vector<64x512xbf16>
    %c0_8 = arith.constant 0 : index
    %c0_9 = arith.constant 0 : index
    %11 = vector.load %arg6[%c0_8, %c0_9] : memref<512x256xbf16, #tpu.memory_space<vmem>>, vector<512x256xbf16>
    %cst_10 = arith.constant dense<0.000000e+00> : vector<64x256xf32>
    %12 = tpu.matmul %10, %11, %cst_10 {dimension_numbers = #tpu.dot_dimension_numbers<[1], [0], [0], [1], [0, 0, 1, 1], [], []>} : vector<64x512xbf16>, vector<512x256xbf16>, vector<64x256xf32> -> vector<64x256xf32>
    %c0_11 = arith.constant 0 : index
    %c0_12 = arith.constant 0 : index
    %13 = vector.load %arg7[%c0_11, %c0_12] : memref<1x256xf32, #tpu.memory_space<vmem>>, vector<1x256xf32>
    %14 = vector.broadcast %13 : vector<1x256xf32> to vector<64x256xf32>
    %15 = arith.addf %12, %14 : vector<64x256xf32>
    %cst_13 = arith.constant 0.000000e+00 : f32
    %16 = vector.broadcast %cst_13 : f32 to vector<64x256xf32>
    %17 = arith.maximumf %15, %16 : vector<64x256xf32>
    %18 = arith.truncf %17 : vector<64x256xf32> to vector<64x256xbf16>
    %c0_14 = arith.constant 0 : index
    %c0_15 = arith.constant 0 : index
    %c0_16 = arith.constant 0 : index
    %19 = vector.load %arg8[%c0_14, %c0_15, %c0_16] : memref<1x256x128xbf16, #tpu.memory_space<vmem>>, vector<1x256x128xbf16>
    %20 = vector.shape_cast %19 : vector<1x256x128xbf16> to vector<256x128xbf16>
    %cst_17 = arith.constant dense<0.000000e+00> : vector<64x128xf32>
    %21 = tpu.matmul %18, %20, %cst_17 {dimension_numbers = #tpu.dot_dimension_numbers<[1], [0], [0], [1], [0, 0, 1, 1], [], []>} : vector<64x256xbf16>, vector<256x128xbf16>, vector<64x128xf32> -> vector<64x128xf32>
    %c0_18 = arith.constant 0 : index
    %c0_19 = arith.constant 0 : index
    %c0_20 = arith.constant 0 : index
    %22 = vector.load %arg9[%c0_18, %c0_19, %c0_20] : memref<1x1x128xf32, #tpu.memory_space<vmem>>, vector<1x1x128xf32>
    %23 = vector.shape_cast %22 : vector<1x1x128xf32> to vector<1x128xf32>
    %24 = vector.broadcast %23 : vector<1x128xf32> to vector<64x128xf32>
    %25 = arith.addf %21, %24 : vector<64x128xf32>
    %c0_21 = arith.constant 0 : index
    %c0_22 = arith.constant 0 : index
    %c0_23 = arith.constant 0 : index
    %26 = vector.load %arg10[%c0_21, %c0_22, %c0_23] : memref<1x64x128xf32, #tpu.memory_space<vmem>>, vector<1x64x128xf32>
    %27 = vector.shape_cast %26 : vector<1x64x128xf32> to vector<64x128xf32>
    %28 = vector.shape_cast %25 : vector<64x128xf32> to vector<1x64x128xf32>
    tpu.vector_store %arg10[%c0_21, %c0_22, %c0_23], %28 {strides = array<i32>} : memref<1x64x128xf32, #tpu.memory_space<vmem>>, vector<1x64x128xf32>,
    return
  }
  func.func @transform_0(%arg0: i32, %arg1: i32, %arg2: memref<2xi32, #tpu.memory_space<smem>>) -> (i32, i32, i32) {
    %c0_i32 = arith.constant 0 : i32
    %c0_i32_0 = arith.constant 0 : i32
    return %arg0, %arg1, %c0_i32 : i32, i32, i32
  }
  func.func @transform_1(%arg0: i32, %arg1: i32, %arg2: memref<2xi32, #tpu.memory_space<smem>>) -> (i32, i32, i32) {
    %c0_i32 = arith.constant 0 : i32
    %c0_i32_0 = arith.constant 0 : i32
    %c0_i32_1 = arith.constant 0 : i32
    return %arg0, %c0_i32, %c0_i32_0 : i32, i32, i32
  }
  func.func @transform_2(%arg0: i32, %arg1: i32, %arg2: memref<2xi32, #tpu.memory_space<smem>>) -> (i32, i32) {
    %c0_i32 = arith.constant 0 : i32
    %c0_i32_0 = arith.constant 0 : i32
    %c0_i32_1 = arith.constant 0 : i32
    return %c0_i32, %c0_i32_0 : i32, i32
  }
  func.func @transform_3(%arg0: i32, %arg1: i32, %arg2: memref<2xi32, #tpu.memory_space<smem>>) -> (i32, i32) {
    %c0_i32 = arith.constant 0 : i32
    %c0_i32_0 = arith.constant 0 : i32
    %c0_i32_1 = arith.constant 0 : i32
    return %c0_i32, %c0_i32_0 : i32, i32
  }
  func.func @transform_4(%arg0: i32, %arg1: i32, %arg2: memref<2xi32, #tpu.memory_space<smem>>) -> (i32, i32) {
    %c0_i32 = arith.constant 0 : i32
    %c0_i32_0 = arith.constant 0 : i32
    %c0_i32_1 = arith.constant 0 : i32
    return %c0_i32, %c0_i32_0 : i32, i32
  }
  func.func @transform_5(%arg0: i32, %arg1: i32, %arg2: memref<2xi32, #tpu.memory_space<smem>>) -> (i32, i32, i32) {
    %0 = arith.index_cast %arg0 : i32 to index
    %1 = memref.load %arg2[%0] : memref<2xi32, #tpu.memory_space<smem>>
    %c0_i32 = arith.constant 0 : i32
    %c0_i32_0 = arith.constant 0 : i32
    %c0_i32_1 = arith.constant 0 : i32
    return %1, %c0_i32, %c0_i32_0 : i32, i32, i32
  }
  func.func @transform_6(%arg0: i32, %arg1: i32, %arg2: memref<2xi32, #tpu.memory_space<smem>>) -> (i32, i32, i32) {
    %0 = arith.index_cast %arg0 : i32 to index
    %1 = memref.load %arg2[%0] : memref<2xi32, #tpu.memory_space<smem>>
    %c0_i32 = arith.constant 0 : i32
    %c0_i32_0 = arith.constant 0 : i32
    %c0_i32_1 = arith.constant 0 : i32
    return %1, %c0_i32, %c0_i32_0 : i32, i32, i32
  }
  func.func @transform_7(%arg0: i32, %arg1: i32, %arg2: memref<2xi32, #tpu.memory_space<smem>>) -> (i32, i32, i32) {
    %c0_i32 = arith.constant 0 : i32
    %c0_i32_0 = arith.constant 0 : i32
    return %arg0, %arg1, %c0_i32 : i32, i32, i32
  }
}

</mosaic_0001>

<llo_original>
// kernel: deformnet_forward.4
$region0: #{deformnet_forward.4}
  #allocation0 [shape = 'u32[]', space=smem, size = 0x4, offset = 0x4, fixed_abs, tag = 'smem constant byte address 0x4 - core index']
  #allocation1 [shape = 'u32[144,128]{1,0:T(1,128)}', space=vmem, size = 0x12000, scoped, tag = 'internal scratch']
  %s0 = inlined_call_operand.vmem [shape: f32[2,64,6], index: 0, kind: input, shape index: {}]
  %s1 = inlined_call_operand.vmem [shape: bf16[6,128], index: 1, kind: input, shape index: {}]
  %s2 = inlined_call_operand.vmem [shape: f32[1,128], index: 2, kind: input, shape index: {}]
  %s3 = inlined_call_operand.vmem [shape: bf16[128,128], index: 3, kind: input, shape index: {}]
  %s4 = inlined_call_operand.vmem [shape: f32[1,128], index: 4, kind: input, shape index: {}]
  %s5 = inlined_call_operand.vmem [shape: bf16[128,128], index: 5, kind: input, shape index: {}]
  %s6 = inlined_call_operand.vmem [shape: f32[1,128], index: 6, kind: input, shape index: {}]
  %s7 = inlined_call_operand.vmem [shape: bf16[128,128], index: 7, kind: input, shape index: {}]
  %s8 = inlined_call_operand.vmem [shape: f32[1,128], index: 8, kind: input, shape index: {}]
  %s9 = inlined_call_operand.vmem [shape: bf16[128,128], index: 9, kind: input, shape index: {}]
  %s10 = inlined_call_operand.vmem [shape: f32[1,128], index: 10, kind: input, shape index: {}]
  %s11 = inlined_call_operand.vmem [shape: bf16[128,1024], index: 11, kind: input, shape index: {}]
  %s12 = inlined_call_operand.vmem [shape: f32[1,1024], index: 12, kind: input, shape index: {}]
  %s13 = inlined_call_operand.vmem [shape: bf16[2,64,128], index: 13, kind: output, shape index: {0}]
  %s14 = inlined_call_operand.vmem [shape: f32[2,1,1024], index: 14, kind: output, shape index: {1}]
  %15 = xla_tuple %s13, %s14
  %s16 = sld [smem:[#allocation0]]
  $region93: #{deformnet_forward.4} parent=0
    _
  %s18 = ssub.s32 1, %s16
  %s19 = scalar_select 0, %s18, %s16
  loop: start=0, step=1, limit=4
  $region2: #{deformnet_forward.4} parent=0 // loop_pre_header
    _
  $region3: #{deformnet_forward.4} parent=0 // loop_header
    %s21 = sphi 0, %s25
    %p22 = scmp.ge.s32.totalorder %s21, 4
    %s28 = sphi 0, %s40
    %s29 = sphi 0, %s36
    %s30 = sphi 0, %s28
    %s31 = sphi 0, %s29
    %s32 = sphi 0, %s30
    %s33 = sphi 0, %s31
    %s45 = sphi 0, %s47
    %s48 = sphi 0, %s45
    %s49 = sphi 0, %s48
    %s65 = sphi 0, %s49
    %s69 = sphi 0, %s69
    %s71 = sphi 0, %s69
    %s72 = sphi 0, %s71
    %s86 = sphi 0, %s72
    %s90 = sphi 0, %s90
    %s92 = sphi 0, %s90
    %s93 = sphi 0, %s92
    %s107 = sphi 0, %s93
    %s111 = sphi 0, %s111
    %s113 = sphi 0, %s111
    %s114 = sphi 0, %s113
    %s128 = sphi 0, %s114
    %s132 = sphi 0, %s132
    %s134 = sphi 0, %s132
    %s135 = sphi 0, %s134
    %s149 = sphi 0, %s135
    %s153 = sphi 0, %s153
    %s155 = sphi 0, %s153
    %s156 = sphi 0, %s155
    %s170 = sphi 0, %s156
    %s174 = sphi 0, %s174
    %s176 = sphi 0, %s174
    %s177 = sphi 0, %s176
    %s191 = sphi 0, %s177
    %s195 = sphi 0, %s195
    %s197 = sphi 0, %s195
    %s198 = sphi 0, %s197
    %s212 = sphi 0, %s198
    %s216 = sphi 0, %s216
    %s218 = sphi 0, %s216
    %s219 = sphi 0, %s218
    %s233 = sphi 0, %s219
    %s237 = sphi 0, %s237
    %s239 = sphi 0, %s237
    %s240 = sphi 0, %s239
    %s254 = sphi 0, %s240
    %s258 = sphi 0, %s258
    %s260 = sphi 0, %s258
    %s261 = sphi 0, %s260
    %s275 = sphi 0, %s261
    %s279 = sphi 0, %s279
    %s281 = sphi 0, %s279
    %s282 = sphi 0, %s281
    %s296 = sphi 0, %s282
    %s300 = sphi 0, %s300
    %s302 = sphi 0, %s300
    %s303 = sphi 0, %s302
    %s317 = sphi 0, %s303
    %s325 = sphi 0, %s327
    %s328 = sphi 0, %s325
    %s329 = sphi 0, %s328
    %s345 = sphi 0, %s329
    %s353 = sphi 0, %s355
    %s356 = sphi 0, %s353
    %s357 = sphi 0, %s356
    %s373 = sphi 0, %s357
  $region4: #{deformnet_forward.4} parent=0 // loop_header_branch
    %24 = sbr.rel (%p22) target = $region8
  $region5: #{deformnet_forward.4} parent=0 // loop_body
    %s26 = ssub.s32 %s21, 1
    %s27 = ssub.s32 %s21, 2
    %s34 = sadd.s32 1, %s29
    %p35 = scmp.ge.s32.totalorder %s34, 1
    %s36 = scalar_select %p35, 0, %s34
    %s37 = sadd.s32 1, %s28
    %s38 = scalar_select %p35, %s37, %s28
    %p39 = scmp.ge.s32.totalorder %s38, 2
    %s40 = scalar_select %p39, 0, %s38
    %s41 = ssub.s32 %s28, %s40
    %s42 = ssub.s32 %s29, %s36
    %s43 = sor.u32 %s41, %s42
    %p44 = scmp.eq.s32.totalorder %s43, 0
    %s46 = sadd.s32 %s45, 1
    %s47 = scalar_select %p44, %s45, %s46
    %p50 = pneg %p44
    %p51 = scmp.eq.s32.totalorder %s21, 1
    %p52 = por %p50, %p51
    %p53 = scmp.ne.s32.totalorder %s45, %s48
    %p54 = scmp.eq.s32.totalorder %s21, 0
    %p55 = por %p53, %p54
    %p56 = scmp.ne.s32.totalorder %s45, %s48
    %p57 = scmp.eq.s32.totalorder %s26, 1
    %p58 = por %p56, %p57
    %p59 = scmp.ne.s32.totalorder %s48, %s49
    %p60 = scmp.eq.s32.totalorder %s26, 0
    %p61 = por %p59, %p60
    %p62 = scmp.ne.s32.totalorder %s48, %s49
    %p63 = scmp.eq.s32.totalorder %s27, 1
    %p64 = por %p62, %p63
    %p66 = scmp.ne.s32.totalorder %s49, %s65
    %p67 = scmp.eq.s32.totalorder %s27, 0
    %p68 = por %p66, %p67
    %s70 = sadd.s32 %s69, 1
    %p73 = scmp.eq.s32.totalorder %s21, 1
    %p74 = scmp.ne.s32.totalorder %s69, %s71
    %p75 = scmp.eq.s32.totalorder %s21, 0
    %p76 = por %p74, %p75
    %p77 = scmp.ne.s32.totalorder %s69, %s71
    %p78 = scmp.eq.s32.totalorder %s26, 1
    %p79 = por %p77, %p78
    %p80 = scmp.ne.s32.totalorder %s71, %s72
    %p81 = scmp.eq.s32.totalorder %s26, 0
    %p82 = por %p80, %p81
    %p83 = scmp.ne.s32.totalorder %s71, %s72
    %p84 = scmp.eq.s32.totalorder %s27, 1
    %p85 = por %p83, %p84
    %p87 = scmp.ne.s32.totalorder %s72, %s86
    %p88 = scmp.eq.s32.totalorder %s27, 0
    %p89 = por %p87, %p88
    %s91 = sadd.s32 %s90, 1
    %p94 = scmp.eq.s32.totalorder %s21, 1
    %p95 = scmp.ne.s32.totalorder %s90, %s92
    %p96 = scmp.eq.s32.totalorder %s21, 0
    %p97 = por %p95, %p96
    %p98 = scmp.ne.s32.totalorder %s90, %s92
    %p99 = scmp.eq.s32.totalorder %s26, 1
    %p100 = por %p98, %p99
    %p101 = scmp.ne.s32.totalorder %s92, %s93
    %p102 = scmp.eq.s32.totalorder %s26, 0
    %p103 = por %p101, %p102
    %p104 = scmp.ne.s32.totalorder %s92, %s93
    %p105 = scmp.eq.s32.totalorder %s27, 1
    %p106 = por %p104, %p105
    %p108 = scmp.ne.s32.totalorder %s93, %s107
    %p109 = scmp.eq.s32.totalorder %s27, 0
    %p110 = por %p108, %p109
    %s112 = sadd.s32 %s111, 1
    %p115 = scmp.eq.s32.totalorder %s21, 1
    %p116 = scmp.ne.s32.totalorder %s111, %s113
    %p117 = scmp.eq.s32.totalorder %s21, 0
    %p118 = por %p116, %p117
    %p119 = scmp.ne.s32.totalorder %s111, %s113
    %p120 = scmp.eq.s32.totalorder %s26, 1
    %p121 = por %p119, %p120
    %p122 = scmp.ne.s32.totalorder %s113, %s114
    %p123 = scmp.eq.s32.totalorder %s26, 0
    %p124 = por %p122, %p123
    %p125 = scmp.ne.s32.totalorder %s113, %s114
    %p126 = scmp.eq.s32.totalorder %s27, 1
    %p127 = por %p125, %p126
    %p129 = scmp.ne.s32.totalorder %s114, %s128
    %p130 = scmp.eq.s32.totalorder %s27, 0
    %p131 = por %p129, %p130
    %s133 = sadd.s32 %s132, 1
    %p136 = scmp.eq.s32.totalorder %s21, 1
    %p137 = scmp.ne.s32.totalorder %s132, %s134
    %p138 = scmp.eq.s32.totalorder %s21, 0
    %p139 = por %p137, %p138
    %p140 = scmp.ne.s32.totalorder %s132, %s134
    %p141 = scmp.eq.s32.totalorder %s26, 1
    %p142 = por %p140, %p141
    %p143 = scmp.ne.s32.totalorder %s134, %s135
    %p144 = scmp.eq.s32.totalorder %s26, 0
    %p145 = por %p143, %p144
    %p146 = scmp.ne.s32.totalorder %s134, %s135
    %p147 = scmp.eq.s32.totalorder %s27, 1
    %p148 = por %p146, %p147
    %p150 = scmp.ne.s32.totalorder %s135, %s149
    %p151 = scmp.eq.s32.totalorder %s27, 0
    %p152 = por %p150, %p151
    %s154 = sadd.s32 %s153, 1
    %p157 = scmp.eq.s32.totalorder %s21, 1
    %p158 = scmp.ne.s32.totalorder %s153, %s155
    %p159 = scmp.eq.s32.totalorder %s21, 0
    %p160 = por %p158, %p159
    %p161 = scmp.ne.s32.totalorder %s153, %s155
    %p162 = scmp.eq.s32.totalorder %s26, 1
    %p163 = por %p161, %p162
    %p164 = scmp.ne.s32.totalorder %s155, %s156
    %p165 = scmp.eq.s32.totalorder %s26, 0
    %p166 = por %p164, %p165
    %p167 = scmp.ne.s32.totalorder %s155, %s156
    %p168 = scmp.eq.s32.totalorder %s27, 1
    %p169 = por %p167, %p168
    %p171 = scmp.ne.s32.totalorder %s156, %s170
    %p172 = scmp.eq.s32.totalorder %s27, 0
    %p173 = por %p171, %p172
    %s175 = sadd.s32 %s174, 1
    %p178 = scmp.eq.s32.totalorder %s21, 1
    %p179 = scmp.ne.s32.totalorder %s174, %s176
    %p180 = scmp.eq.s32.totalorder %s21, 0
    %p181 = por %p179, %p180
    %p182 = scmp.ne.s32.totalorder %s174, %s176
    %p183 = scmp.eq.s32.totalorder %s26, 1
    %p184 = por %p182, %p183
    %p185 = scmp.ne.s32.totalorder %s176, %s177
    %p186 = scmp.eq.s32.totalorder %s26, 0
    %p187 = por %p185, %p186
    %p188 = scmp.ne.s32.totalorder %s176, %s177
    %p189 = scmp.eq.s32.totalorder %s27, 1
    %p190 = por %p188, %p189
    %p192 = scmp.ne.s32.totalorder %s177, %s191
    %p193 = scmp.eq.s32.totalorder %s27, 0
    %p194 = por %p192, %p193
    %s196 = sadd.s32 %s195, 1
    %p199 = scmp.eq.s32.totalorder %s21, 1
    %p200 = scmp.ne.s32.totalorder %s195, %s197
    %p201 = scmp.eq.s32.totalorder %s21, 0
    %p202 = por %p200, %p201
    %p203 = scmp.ne.s32.totalorder %s195, %s197
    %p204 = scmp.eq.s32.totalorder %s26, 1
    %p205 = por %p203, %p204
    %p206 = scmp.ne.s32.totalorder %s197, %s198
    %p207 = scmp.eq.s32.totalorder %s26, 0
    %p208 = por %p206, %p207
    %p209 = scmp.ne.s32.totalorder %s197, %s198
    %p210 = scmp.eq.s32.totalorder %s27, 1
    %p211 = por %p209, %p210
    %p213 = scmp.ne.s32.totalorder %s198, %s212
    %p214 = scmp.eq.s32.totalorder %s27, 0
    %p215 = por %p213, %p214
    %s217 = sadd.s32 %s216, 1
    %p220 = scmp.eq.s32.totalorder %s21, 1
    %p221 = scmp.ne.s32.totalorder %s216, %s218
    %p222 = scmp.eq.s32.totalorder %s21, 0
    %p223 = por %p221, %p222
    %p224 = scmp.ne.s32.totalorder %s216, %s218
    %p225 = scmp.eq.s32.totalorder %s26, 1
    %p226 = por %p224, %p225
    %p227 = scmp.ne.s32.totalorder %s218, %s219
    %p228 = scmp.eq.s32.totalorder %s26, 0
    %p229 = por %p227, %p228
    %p230 = scmp.ne.s32.totalorder %s218, %s219
    %p231 = scmp.eq.s32.totalorder %s27, 1
    %p232 = por %p230, %p231
    %p234 = scmp.ne.s32.totalorder %s219, %s233
    %p235 = scmp.eq.s32.totalorder %s27, 0
    %p236 = por %p234, %p235
    %s238 = sadd.s32 %s237, 1
    %p241 = scmp.eq.s32.totalorder %s21, 1
    %p242 = scmp.ne.s32.totalorder %s237, %s239
    %p243 = scmp.eq.s32.totalorder %s21, 0
    %p244 = por %p242, %p243
    %p245 = scmp.ne.s32.totalorder %s237, %s239
    %p246 = scmp.eq.s32.totalorder %s26, 1
    %p247 = por %p245, %p246
    %p248 = scmp.ne.s32.totalorder %s239, %s240
    %p249 = scmp.eq.s32.totalorder %s26, 0
    %p250 = por %p248, %p249
    %p251 = scmp.ne.s32.totalorder %s239, %s240
    %p252 = scmp.eq.s32.totalorder %s27, 1
    %p253 = por %p251, %p252
    %p255 = scmp.ne.s32.totalorder %s240, %s254
    %p256 = scmp.eq.s32.totalorder %s27, 0
    %p257 = por %p255, %p256
    %s259 = sadd.s32 %s258, 1
    %p262 = scmp.eq.s32.totalorder %s21, 1
    %p263 = scmp.ne.s32.totalorder %s258, %s260
    %p264 = scmp.eq.s32.totalorder %s21, 0
    %p265 = por %p263, %p264
    %p266 = scmp.ne.s32.totalorder %s258, %s260
    %p267 = scmp.eq.s32.totalorder %s26, 1
    %p268 = por %p266, %p267
    %p269 = scmp.ne.s32.totalorder %s260, %s261
    %p270 = scmp.eq.s32.totalorder %s26, 0
    %p271 = por %p269, %p270
    %p272 = scmp.ne.s32.totalorder %s260, %s261
    %p273 = scmp.eq.s32.totalorder %s27, 1
    %p274 = por %p272, %p273
    %p276 = scmp.ne.s32.totalorder %s261, %s275
    %p277 = scmp.eq.s32.totalorder %s27, 0
    %p278 = por %p276, %p277
    %s280 = sadd.s32 %s279, 1
    %p283 = scmp.eq.s32.totalorder %s21, 1
    %p284 = scmp.ne.s32.totalorder %s279, %s281
    %p285 = scmp.eq.s32.totalorder %s21, 0
    %p286 = por %p284, %p285
    %p287 = scmp.ne.s32.totalorder %s279, %s281
    %p288 = scmp.eq.s32.totalorder %s26, 1
    %p289 = por %p287, %p288
    %p290 = scmp.ne.s32.totalorder %s281, %s282
    %p291 = scmp.eq.s32.totalorder %s26, 0
    %p292 = por %p290, %p291
    %p293 = scmp.ne.s32.totalorder %s281, %s282
    %p294 = scmp.eq.s32.totalorder %s27, 1
    %p295 = por %p293, %p294
    %p297 = scmp.ne.s32.totalorder %s282, %s296
    %p298 = scmp.eq.s32.totalorder %s27, 0
    %p299 = por %p297, %p298
    %s301 = sadd.s32 %s300, 1
    %p304 = scmp.eq.s32.totalorder %s21, 1
    %p305 = scmp.ne.s32.totalorder %s300, %s302
    %p306 = scmp.eq.s32.totalorder %s21, 0
    %p307 = por %p305, %p306
    %p308 = scmp.ne.s32.totalorder %s300, %s302
    %p309 = scmp.eq.s32.totalorder %s26, 1
    %p310 = por %p308, %p309
    %p311 = scmp.ne.s32.totalorder %s302, %s303
    %p312 = scmp.eq.s32.totalorder %s26, 0
    %p313 = por %p311, %p312
    %p314 = scmp.ne.s32.totalorder %s302, %s303
    %p315 = scmp.eq.s32.totalorder %s27, 1
    %p316 = por %p314, %p315
    %p318 = scmp.ne.s32.totalorder %s303, %s317
    %p319 = scmp.eq.s32.totalorder %s27, 0
    %p320 = por %p318, %p319
    %s321 = ssub.s32 %s28, %s40
    %s322 = ssub.s32 %s29, %s36
    %s323 = sor.u32 %s321, %s322
    %p324 = scmp.eq.s32.totalorder %s323, 0
    %s326 = sadd.s32 %s325, 1
    %s327 = scalar_select %p324, %s325, %s326
    %p330 = pneg %p324
    %p331 = scmp.eq.s32.totalorder %s21, 1
    %p332 = por %p330, %p331
    %p333 = scmp.ne.s32.totalorder %s325, %s328
    %p334 = scmp.eq.s32.totalorder %s21, 0
    %p335 = por %p333, %p334
    %p336 = scmp.ne.s32.totalorder %s325, %s328
    %p337 = scmp.eq.s32.totalorder %s26, 1
    %p338 = por %p336, %p337
    %p339 = scmp.ne.s32.totalorder %s328, %s329
    %p340 = scmp.eq.s32.totalorder %s26, 0
    %p341 = por %p339, %p340
    %p342 = scmp.ne.s32.totalorder %s328, %s329
    %p343 = scmp.eq.s32.totalorder %s27, 1
    %p344 = por %p342, %p343
    %p346 = scmp.ne.s32.totalorder %s329, %s345
    %p347 = scmp.eq.s32.totalorder %s27, 0
    %p348 = por %p346, %p347
    %s349 = ssub.s32 %s28, %s40
    %s350 = ssub.s32 %s29, %s36
    %s351 = sor.u32 %s349, %s350
    %p352 = scmp.eq.s32.totalorder %s351, 0
    %s354 = sadd.s32 %s353, 1
    %s355 = scalar_select %p352, %s353, %s354
    %p358 = pneg %p352
    %p359 = scmp.eq.s32.totalorder %s21, 1
    %p360 = por %p358, %p359
    %p361 = scmp.ne.s32.totalorder %s353, %s356
    %p362 = scmp.eq.s32.totalorder %s21, 0
    %p363 = por %p361, %p362
    %p364 = scmp.ne.s32.totalorder %s353, %s356
    %p365 = scmp.eq.s32.totalorder %s26, 1
    %p366 = por %p364, %p365
    %p367 = scmp.ne.s32.totalorder %s356, %s357
    %p368 = scmp.eq.s32.totalorder %s26, 0
    %p369 = por %p367, %p368
    %p370 = scmp.ne.s32.totalorder %s356, %s357
    %p371 = scmp.eq.s32.totalorder %s27, 1
    %p372 = por %p370, %p371
    %p374 = scmp.ne.s32.totalorder %s357, %s373
    %p375 = scmp.eq.s32.totalorder %s27, 0
    %p376 = por %p374, %p375
    %p377 = scmp.le.s32.totalorder 1, %s21
    %p378 = scmp.lt.s32.totalorder %s21, 3
    %p379 = pnand %p377, %p378
    %p380 = pneg %p379
    // Predicated region
    $region9: #{deformnet_forward.4} parent=5 // pred_check
      _
    $region10: #{deformnet_forward.4} parent=5 // pred_check_branch
      %382 = sbr.rel (%p379) target = $region12
    $region11: #{deformnet_forward.4} parent=5 // pred_region
      %s383 = ssub.s32 %s21, 1
      // Predicated region
      $region13: #{deformnet_forward.4} parent=11 // pred_check
        %p384 = pneg %p82
      $region14: #{deformnet_forward.4} parent=11 // pred_check_branch
        %386 = sbr.rel (%p384) target = $region16
      $region15: #{deformnet_forward.4} parent=11 // pred_region
        _
      $region16: #{deformnet_forward.4} parent=11 // pred_fallthru
        _
      // Predicated region
      $region17: #{deformnet_forward.4} parent=11 // pred_check
        %p387 = pneg %p103
      $region18: #{deformnet_forward.4} parent=11 // pred_check_branch
        %389 = sbr.rel (%p387) target = $region20
      $region19: #{deformnet_forward.4} parent=11 // pred_region
        _
      $region20: #{deformnet_forward.4} parent=11 // pred_fallthru
        _
      // Predicated region
      $region21: #{deformnet_forward.4} parent=11 // pred_check
        %p390 = pneg %p124
      $region22: #{deformnet_forward.4} parent=11 // pred_check_branch
        %392 = sbr.rel (%p390) target = $region24
      $region23: #{deformnet_forward.4} parent=11 // pred_region
        _
      $region24: #{deformnet_forward.4} parent=11 // pred_fallthru
        _
      // Predicated region
      $region25: #{deformnet_forward.4} parent=11 // pred_check
        %p393 = pneg %p145
      $region26: #{deformnet_forward.4} parent=11 // pred_check_branch
        %395 = sbr.rel (%p393) target = $region28
      $region27: #{deformnet_forward.4} parent=11 // pred_region
        _
      $region28: #{deformnet_forward.4} parent=11 // pred_fallthru
        _
      // Predicated region
      $region29: #{deformnet_forward.4} parent=11 // pred_check
        %p396 = pneg %p166
      $region30: #{deformnet_forward.4} parent=11 // pred_check_branch
        %398 = sbr.rel (%p396) target = $region32
      $region31: #{deformnet_forward.4} parent=11 // pred_region
        _
      $region32: #{deformnet_forward.4} parent=11 // pred_fallthru
        _
      // Predicated region
      $region33: #{deformnet_forward.4} parent=11 // pred_check
        %p399 = pneg %p187
      $region34: #{deformnet_forward.4} parent=11 // pred_check_branch
        %401 = sbr.rel (%p399) target = $region36
      $region35: #{deformnet_forward.4} parent=11 // pred_region
        _
      $region36: #{deformnet_forward.4} parent=11 // pred_fallthru
        _
      // Predicated region
      $region37: #{deformnet_forward.4} parent=11 // pred_check
        %p402 = pneg %p208
      $region38: #{deformnet_forward.4} parent=11 // pred_check_branch
        %404 = sbr.rel (%p402) target = $region40
      $region39: #{deformnet_forward.4} parent=11 // pred_region
        _
      $region40: #{deformnet_forward.4} parent=11 // pred_fallthru
        _
      // Predicated region
      $region41: #{deformnet_forward.4} parent=11 // pred_check
        %p405 = pneg %p229
      $region42: #{deformnet_forward.4} parent=11 // pred_check_branch
        %407 = sbr.rel (%p405) target = $region44
      $region43: #{deformnet_forward.4} parent=11 // pred_region
        _
      $region44: #{deformnet_forward.4} parent=11 // pred_fallthru
        _
      // Predicated region
      $region45: #{deformnet_forward.4} parent=11 // pred_check
        %p408 = pneg %p250
      $region46: #{deformnet_forward.4} parent=11 // pred_check_branch
        %410 = sbr.rel (%p408) target = $region48
      $region47: #{deformnet_forward.4} parent=11 // pred_region
        _
      $region48: #{deformnet_forward.4} parent=11 // pred_fallthru
        _
      // Predicated region
      $region49: #{deformnet_forward.4} parent=11 // pred_check
        %p411 = pneg %p271
      $region50: #{deformnet_forward.4} parent=11 // pred_check_branch
        %413 = sbr.rel (%p411) target = $region52
      $region51: #{deformnet_forward.4} parent=11 // pred_region
        _
      $region52: #{deformnet_forward.4} parent=11 // pred_fallthru
        _
      // Predicated region
      $region53: #{deformnet_forward.4} parent=11 // pred_check
        %p414 = pneg %p292
      $region54: #{deformnet_forward.4} parent=11 // pred_check_branch
        %416 = sbr.rel (%p414) target = $region56
      $region55: #{deformnet_forward.4} parent=11 // pred_region
        _
      $region56: #{deformnet_forward.4} parent=11 // pred_fallthru
        _
      // Predicated region
      $region57: #{deformnet_forward.4} parent=11 // pred_check
        %p417 = pneg %p313
      $region58: #{deformnet_forward.4} parent=11 // pred_check_branch
        %419 = sbr.rel (%p417) target = $region60
      $region59: #{deformnet_forward.4} parent=11 // pred_region
        _
      $region60: #{deformnet_forward.4} parent=11 // pred_fallthru
        _
    $region12: #{deformnet_forward.4} parent=5 // pred_fallthru
      _
    %p420 = scmp.lt.s32.totalorder %s21, 2
    // Predicated region
    $region61: #{deformnet_forward.4} parent=5 // pred_check
      %p421 = pneg %p420
    $region62: #{deformnet_forward.4} parent=5 // pred_check_branch
      %423 = sbr.rel (%p421) target = $region64
    $region63: #{deformnet_forward.4} parent=5 // pred_region
      // Predicated region
      $region65: #{deformnet_forward.4} parent=63 // pred_check
        %p424 = pneg %p55
      $region66: #{deformnet_forward.4} parent=63 // pred_check_branch
        %426 = sbr.rel (%p424) target = $region68
      $region67: #{deformnet_forward.4} parent=63 // pred_region
        %s427 = smul.u32 8, %s29
        %p428 = scmp.lt.s32.totalorder %s28, 1
        %s429 = scalar_select %p428, %s28, 1
        %p430 = scmp.lt.s32.totalorder %s427, 7
        %s431 = scalar_select %p430, %s427, 7
        %s432 = smul.addr %s429, 8
        %s433 = sadd.s32 %s431, %s432
        %s434 = smul.addr %s433, 8
        %s435 = scalar_lea.vmem %s0, %s434
        %s436 = smul.u32 8, %s29
      $region68: #{deformnet_forward.4} parent=63 // pred_fallthru
        _
    $region64: #{deformnet_forward.4} parent=5 // pred_fallthru
      _
    %p437 = scmp.le.s32.totalorder 1, %s21
    %p438 = scmp.lt.s32.totalorder %s21, 3
    %p439 = pnand %p437, %p438
    %p440 = pneg %p439
    // Predicated region
    $region69: #{deformnet_forward.4} parent=5 // pred_check
      _
    $region70: #{deformnet_forward.4} parent=5 // pred_check_branch
      %442 = sbr.rel (%p439) target = $region72
    $region71: #{deformnet_forward.4} parent=5 // pred_region
      %s443 = ssub.s32 %s21, 1
      %s444 = smul.u32 8, %s31
      %p445 = scmp.lt.s32.totalorder %s30, 1
      %s446 = scalar_select %p445, %s30, 1
      %p447 = scmp.lt.s32.totalorder %s444, 7
      %s448 = scalar_select %p447, %s444, 7
      %s449 = smul.addr %s446, 8
      %s450 = sadd.s32 %s448, %s449
      %s451 = smul.addr %s450, 8
      %s452 = scalar_lea.vmem %s0, %s451
      %p453 = pneg %p61
      %p454 = pneg %p58
      %p455 = pneg %p82
      %p456 = pneg %p79
      %p457 = pneg %p103
      %p458 = pneg %p100
      %p459 = pneg %p124
      %p460 = pneg %p121
      %p461 = pneg %p145
      %p462 = pneg %p142
      %p463 = pneg %p166
      %p464 = pneg %p163
      %p465 = pneg %p187
      %p466 = pneg %p184
      %p467 = pneg %p208
      %p468 = pneg %p205
      %p469 = pneg %p229
      %p470 = pneg %p226
      %p471 = pneg %p250
      %p472 = pneg %p247
      %p473 = pneg %p271
      %p474 = pneg %p268
      %p475 = pneg %p292
      %p476 = pneg %p289
      %p477 = pneg %p313
      %p478 = pneg %p310
      %p479 = pneg %p341
      %p480 = pneg %p338
      %s481 = smul.u32 8, %s31
      %p482 = scmp.lt.s32.totalorder %s30, 1
      %s483 = scalar_select %p482, %s30, 1
      %p484 = scmp.lt.s32.totalorder %s481, 7
      %s485 = scalar_select %p484, %s481, 7
      %s486 = smul.addr %s483, 8
      %s487 = sadd.s32 %s485, %s486
      %s488 = smul.addr %s487, 4
      %s489 = scalar_lea.vmem %s13, %s488
      %p490 = pneg %p369
      %p491 = pneg %p366
      %p492 = scmp.lt.s32.totalorder %s30, 1
      %s493 = scalar_select %p492, %s30, 1
      %p494 = scmp.lt.s32.totalorder %s31, 0
      %s495 = scalar_select %p494, %s31, 0
      %s496 = smul.addr %s495, 8
      %s497 = smul.addr %s493, 8
      %s498 = sadd.s32 %s496, %s497
      %s499 = scalar_lea.vmem %s14, %s498
      %s500 = smul.u32 8, %s31
      %p501 = scmp.lt.s32.totalorder %s30, 1
      %s502 = scalar_select %p501, %s30, 1
      %p503 = scmp.lt.s32.totalorder %s500, 7
      %s504 = scalar_select %p503, %s500, 7
      %s505 = smul.addr %s502, 8
      %s506 = sadd.s32 %s504, %s505
      %s507 = smul.addr %s506, 8
      %s508 = scalar_lea.vmem %s0, %s507
      %s509 = smul.u32 8, %s31
      %s510 = smul.u32 8, %s31
      %p511 = scmp.lt.s32.totalorder %s30, 1
      %s512 = scalar_select %p511, %s30, 1
      %p513 = scmp.lt.s32.totalorder %s510, 7
      %s514 = scalar_select %p513, %s510, 7
      %s515 = smul.addr %s512, 8
      %s516 = sadd.s32 %s514, %s515
      %s517 = smul.addr %s516, 4
      %s518 = scalar_lea.vmem %s13, %s517
      %s519 = smul.u32 8, %s31
      %p520 = scmp.lt.s32.totalorder %s30, 1
      %s521 = scalar_select %p520, %s30, 1
      %p522 = scmp.lt.s32.totalorder %s31, 0
      %s523 = scalar_select %p522, %s31, 0
      %s524 = smul.addr %s523, 8
      %s525 = smul.addr %s521, 8
      %s526 = sadd.s32 %s524, %s525
      %s527 = scalar_lea.vmem %s14, %s526
      %v529 = vld [vmem:[%s508] sm:$0xff]
      %v530 = vld [vmem:[%s508 + $0x8] sm:$0xff]
      %v531 = vld [vmem:[%s508 + $0x10] sm:$0xff]
      %v532 = vld [vmem:[%s508 + $0x18] sm:$0xff]
      %v533 = vld [vmem:[%s508 + $0x20] sm:$0xff]
      %v534 = vld [vmem:[%s508 + $0x28] sm:$0xff]
      %v535 = vld [vmem:[%s508 + $0x30] sm:$0xff]
      %v536 = vld [vmem:[%s508 + $0x38] sm:$0xff]
      %v537 = vpack.c.bf16 %v530, %v529
      %v538 = vpack.c.bf16 %v532, %v531
      %v539 = vpack.c.bf16 %v534, %v533
      %v540 = vpack.c.bf16 %v536, %v535
      %v541 = vld [vmem:[%s1] sm:$0x7]
      %v542 = vld [vmem:[%s2] sm:$0x1]
      %v544 = vlaneseq
      %v545 = vshrl.u32 %v544, 7
      %v546 = vsub.s32 0, %v545
      %v547 = vrot.slane %v542, %v546
      %vm549 = vcmask 48128
      %v551 = vsel %vm549, %v537, 0
      %v554 = vsel %vm549, %v538, 0
      %v557 = vsel %vm549, %v539, 0
      %v560 = vsel %vm549, %v540, 0
      %vm562 = vcmask 1042432
      %v564 = vsel %vm562, %v541, 0
      %566 = vmatprep.subr.bf16.mxu0 0
      %567 = vmatpush1.bf16.msra.mxu0 %v564
      %568 = vmatprep.subr.bf16.mxu0 0
      %569 = vmatpush1.bf16.msra.mxu0 0
      %570 = vmatprep.subr.bf16.mxu0 0
      %571 = vmatpush1.bf16.msra.mxu0 0
      %572 = vmatprep.subr.bf16.mxu0 0
      %573 = vmatpush1.bf16.msra.mxu0 0
      %574 = vmatprep.subr.bf16.mxu0 0
      %575 = vmatpush1.bf16.msra.mxu0 0
      %576 = vmatprep.subr.bf16.mxu0 0
      %577 = vmatpush1.bf16.msra.mxu0 0
      %578 = vmatprep.subr.bf16.mxu0 0
      %579 = vmatpush1.bf16.msra.mxu0 0
      %580 = vmatprep.subr.bf16.mxu0 0
      %581 = vmatpush1.bf16.msra.mxu0 0
      %582 = vmatprep.subr.bf16.mxu0 0
      %583 = vmatpush1.bf16.msra.mxu0 0
      %584 = vmatprep.subr.bf16.mxu0 0
      %585 = vmatpush1.bf16.msra.mxu0 0
      %586 = vmatprep.subr.bf16.mxu0 0
      %587 = vmatpush1.bf16.msra.mxu0 0
      %588 = vmatprep.subr.bf16.mxu0 0
      %589 = vmatpush1.bf16.msra.mxu0 0
      %590 = vmatprep.subr.bf16.mxu0 0
      %591 = vmatpush1.bf16.msra.mxu0 0
      %592 = vmatprep.subr.bf16.mxu0 0
      %593 = vmatpush1.bf16.msra.mxu0 0
      %594 = vmatprep.subr.bf16.mxu0 0
      %595 = vmatpush1.bf16.msra.mxu0 0
      %596 = vmatprep.subr.bf16.mxu0 0
      %597 = vmatpush1.bf16.msra.mxu0 0
      %598 = vmatprep.mubr.bf16.mxu0 0
      %599 = vmatmul.mubr.bf16.gmra.mrb[0].mxu0 %v551
      %v600 = vpop.f32.mrb[0].mxu0
      %v601 = vadd.f32 %v547, %v600
      %v602 = vpop.f32.mrb[0].mxu0
      %v603 = vpop.f32.mrb[0].mxu0
      %v604 = vadd.f32 %v547, %v603
      %v605 = vpop.f32.mrb[0].mxu0
      %606 = vmatprep.mubr.bf16.mxu0 0
      %607 = vmatmul.mubr.bf16.gmra.mrb[0].mxu0 %v554
      %v608 = vpop.f32.mrb[0].mxu0
      %v609 = vadd.f32 %v547, %v608
      %v610 = vpop.f32.mrb[0].mxu0
      %v611 = vpop.f32.mrb[0].mxu0
      %v612 = vadd.f32 %v547, %v611
      %v613 = vpop.f32.mrb[0].mxu0
      %614 = vmatprep.mubr.bf16.mxu0 0
      %615 = vmatmul.mubr.bf16.gmra.mrb[0].mxu0 %v557
      %v616 = vpop.f32.mrb[0].mxu0
      %v617 = vadd.f32 %v547, %v616
      %v618 = vpop.f32.mrb[0].mxu0
      %v619 = vpop.f32.mrb[0].mxu0
      %v620 = vadd.f32 %v547, %v619
      %v621 = vpop.f32.mrb[0].mxu0
      %622 = vmatprep.mubr.bf16.mxu0 0
      %623 = vmatmul.mubr.bf16.gmra.mrb[0].mxu0 %v560
      %v624 = vpop.f32.mrb[0].mxu0
      %v625 = vadd.f32 %v547, %v624
      %v626 = vpop.f32.mrb[0].mxu0
      %v627 = vpop.f32.mrb[0].mxu0
      %v628 = vadd.f32 %v547, %v627
      %v629 = vpop.f32.mrb[0].mxu0
      %630 = vdwg.mxu0
      %v631 = vmax.f32 %v601, 0.0
      %v632 = vmax.f32 %v604, 0.0
      %v633 = vmax.f32 %v609, 0.0
      %v634 = vmax.f32 %v612, 0.0
      %v635 = vmax.f32 %v617, 0.0
      %v636 = vmax.f32 %v620, 0.0
      %v637 = vmax.f32 %v625, 0.0
      %v638 = vmax.f32 %v628, 0.0
      %v639 = vpack.c.bf16 %v632, %v631
      %v640 = vpack.c.bf16 %v634, %v633
      %v641 = vpack.c.bf16 %v636, %v635
      %v642 = vpack.c.bf16 %v638, %v637
      %v643 = vld [vmem:[%s3] sm:$0xf]
      %v644 = vld [vmem:[%s3 + $0x4] sm:$0xf]
      %v645 = vld [vmem:[%s3 + $0x8] sm:$0xf]
      %v646 = vld [vmem:[%s3 + $0xc] sm:$0xf]
      %v647 = vld [vmem:[%s3 + $0x10] sm:$0xf]
      %v648 = vld [vmem:[%s3 + $0x14] sm:$0xf]
      %v649 = vld [vmem:[%s3 + $0x18] sm:$0xf]
      %v650 = vld [vmem:[%s3 + $0x1c] sm:$0xf]
      %v651 = vld [vmem:[%s3 + $0x20] sm:$0xf]
      %v652 = vld [vmem:[%s3 + $0x24] sm:$0xf]
      %v653 = vld [vmem:[%s3 + $0x28] sm:$0xf]
      %v654 = vld [vmem:[%s3 + $0x2c] sm:$0xf]
      %v655 = vld [vmem:[%s3 + $0x30] sm:$0xf]
      %v656 = vld [vmem:[%s3 + $0x34] sm:$0xf]
      %v657 = vld [vmem:[%s3 + $0x38] sm:$0xf]
      %v658 = vld [vmem:[%s3 + $0x3c] sm:$0xf]
      %v659 = vld [vmem:[%s4] sm:$0x1]
      %v661 = vlaneseq
      %v662 = vshrl.u32 %v661, 7
      %v663 = vsub.s32 0, %v662
      %v664 = vrot.slane %v659, %v663
      %v682 = vunpack.c.l.b16 %v643
      %v683 = vunpack.c.l.b16 %v644
      %v684 = vunpack.c.l.b16 %v645
      %v685 = vunpack.c.l.b16 %v646
      %v686 = vunpack.c.l.b16 %v647
      %v687 = vunpack.c.l.b16 %v648
      %v688 = vunpack.c.l.b16 %v649
      %v689 = vunpack.c.l.b16 %v650
      %v690 = vunpack.c.l.b16 %v651
      %v691 = vunpack.c.l.b16 %v652
      %v692 = vunpack.c.l.b16 %v653
      %v693 = vunpack.c.l.b16 %v654
      %v694 = vunpack.c.l.b16 %v655
      %v695 = vunpack.c.l.b16 %v656
      %v696 = vunpack.c.l.b16 %v657
      %v697 = vunpack.c.l.b16 %v658
      %v698 = vpack.c.b16 %v683, %v682
      %v699 = vpack.c.b16 %v685, %v684
      %v700 = vpack.c.b16 %v687, %v686
      %v701 = vpack.c.b16 %v689, %v688
      %v702 = vpack.c.b16 %v691, %v690
      %v703 = vpack.c.b16 %v693, %v692
      %v704 = vpack.c.b16 %v695, %v694
      %v705 = vpack.c.b16 %v697, %v696
      %714 = vmatprep.subr.bf16.mxu0 0
      %715 = vmatpush1.bf16.msra.mxu0 %v698
      %716 = vmatprep.subr.bf16.mxu0 0
      %717 = vmatpush1.bf16.msra.mxu0 %v699
      %718 = vmatprep.subr.bf16.mxu0 0
      %719 = vmatpush1.bf16.msra.mxu0 %v700
      %720 = vmatprep.subr.bf16.mxu0 0
      %721 = vmatpush1.bf16.msra.mxu0 %v701
      %722 = vmatprep.subr.bf16.mxu0 0
      %723 = vmatpush1.bf16.msra.mxu0 %v702
      %724 = vmatprep.subr.bf16.mxu0 0
      %725 = vmatpush1.bf16.msra.mxu0 %v703
      %726 = vmatprep.subr.bf16.mxu0 0
      %727 = vmatpush1.bf16.msra.mxu0 %v704
      %728 = vmatprep.subr.bf16.mxu0 0
      %729 = vmatpush1.bf16.msra.mxu0 %v705
      %730 = vmatprep.subr.bf16.mxu0 0
      %731 = vmatpush1.bf16.msra.mxu0 0
      %732 = vmatprep.subr.bf16.mxu0 0
      %733 = vmatpush1.bf16.msra.mxu0 0
      %734 = vmatprep.subr.bf16.mxu0 0
      %735 = vmatpush1.bf16.msra.mxu0 0
      %736 = vmatprep.subr.bf16.mxu0 0
      %737 = vmatpush1.bf16.msra.mxu0 0
      %738 = vmatprep.subr.bf16.mxu0 0
      %739 = vmatpush1.bf16.msra.mxu0 0
      %740 = vmatprep.subr.bf16.mxu0 0
      %741 = vmatpush1.bf16.msra.mxu0 0
      %742 = vmatprep.subr.bf16.mxu0 0
      %743 = vmatpush1.bf16.msra.mxu0 0
      %744 = vmatprep.subr.bf16.mxu0 0
      %745 = vmatpush1.bf16.msra.mxu0 0
      %746 = vmatprep.mubr.bf16.mxu0 0
      %747 = vmatmul.mubr.bf16.gmra.mrb[0].mxu0 %v639
      %v748 = vpop.f32.mrb[0].mxu0
      %v749 = vadd.f32 %v664, %v748
      %v750 = vpop.f32.mrb[0].mxu0
      %v751 = vpop.f32.mrb[0].mxu0
      %v752 = vadd.f32 %v664, %v751
      %v753 = vpop.f32.mrb[0].mxu0
      %754 = vmatprep.mubr.bf16.mxu0 0
      %755 = vmatmul.mubr.bf16.gmra.mrb[0].mxu0 %v640
      %v756 = vpop.f32.mrb[0].mxu0
      %v757 = vadd.f32 %v664, %v756
      %v758 = vpop.f32.mrb[0].mxu0
      %v759 = vpop.f32.mrb[0].mxu0
      %v760 = vadd.f32 %v664, %v759
      %v761 = vpop.f32.mrb[0].mxu0
      %762 = vmatprep.mubr.bf16.mxu0 0
      %763 = vmatmul.mubr.bf16.gmra.mrb[0].mxu0 %v641
      %v764 = vpop.f32.mrb[0].mxu0
      %v765 = vadd.f32 %v664, %v764
      %v766 = vpop.f32.mrb[0].mxu0
      %v767 = vpop.f32.mrb[0].mxu0
      %v768 = vadd.f32 %v664, %v767
      %v769 = vpop.f32.mrb[0].mxu0
      %770 = vmatprep.mubr.bf16.mxu0 0
      %771 = vmatmul.mubr.bf16.gmra.mrb[0].mxu0 %v642
      %v772 = vpop.f32.mrb[0].mxu0
      %v773 = vadd.f32 %v664, %v772
      %v774 = vpop.f32.mrb[0].mxu0
      %v775 = vpop.f32.mrb[0].mxu0
      %v776 = vadd.f32 %v664, %v775
      %v777 = vpop.f32.mrb[0].mxu0
      %778 = vdwg.mxu0
      %v779 = vmax.f32 %v749, 0.0
      %v780 = vmax.f32 %v752, 0.0
      %v781 = vmax.f32 %v757, 0.0
      %v782 = vmax.f32 %v760, 0.0
      %v783 = vmax.f32 %v765, 0.0
      %v784 = vmax.f32 %v768, 0.0
      %v785 = vmax.f32 %v773, 0.0
      %v786 = vmax.f32 %v776, 0.0
      %v787 = vpack.c.bf16 %v780, %v779
      %v788 = vpack.c.bf16 %v782, %v781
      %v789 = vpack.c.bf16 %v784, %v783
      %v790 = vpack.c.bf16 %v786, %v785
      %v791 = vld [vmem:[%s5] sm:$0xf]
      %v792 = vld [vmem:[%s5 + $0x4] sm:$0xf]
      %v793 = vld [vmem:[%s5 + $0x8] sm:$0xf]
      %v794 = vld [vmem:[%s5 + $0xc] sm:$0xf]
      %v795 = vld [vmem:[%s5 + $0x10] sm:$0xf]
      %v796 = vld [vmem:[%s5 + $0x14] sm:$0xf]
      %v797 = vld [vmem:[%s5 + $0x18] sm:$0xf]
      %v798 = vld [vmem:[%s5 + $0x1c] sm:$0xf]
      %v799 = vld [vmem:[%s5 + $0x20] sm:$0xf]
      %v800 = vld [vmem:[%s5 + $0x24] sm:$0xf]
      %v801 = vld [vmem:[%s5 + $0x28] sm:$0xf]
      %v802 = vld [vmem:[%s5 + $0x2c] sm:$0xf]
      %v803 = vld [vmem:[%s5 + $0x30] sm:$0xf]
      %v804 = vld [vmem:[%s5 + $0x34] sm:$0xf]
      %v805 = vld [vmem:[%s5 + $0x38] sm:$0xf]
      %v806 = vld [vmem:[%s5 + $0x3c] sm:$0xf]
      %v807 = vld [vmem:[%s6] sm:$0x1]
      %v809 = vlaneseq
      %v810 = vshrl.u32 %v809, 7
      %v811 = vsub.s32 0, %v810
      %v812 = vrot.slane %v807, %v811
      %v830 = vunpack.c.l.b16 %v791
      %v831 = vunpack.c.l.b16 %v792
      %v832 = vunpack.c.l.b16 %v793
      %v833 = vunpack.c.l.b16 %v794
      %v834 = vunpack.c.l.b16 %v795
      %v835 = vunpack.c.l.b16 %v796
      %v836 = vunpack.c.l.b16 %v797
      %v837 = vunpack.c.l.b16 %v798
      %v838 = vunpack.c.l.b16 %v799
      %v839 = vunpack.c.l.b16 %v800
      %v840 = vunpack.c.l.b16 %v801
      %v841 = vunpack.c.l.b16 %v802
      %v842 = vunpack.c.l.b16 %v803
      %v843 = vunpack.c.l.b16 %v804
      %v844 = vunpack.c.l.b16 %v805
      %v845 = vunpack.c.l.b16 %v806
      %v846 = vpack.c.b16 %v831, %v830
      %v847 = vpack.c.b16 %v833, %v832
      %v848 = vpack.c.b16 %v835, %v834
      %v849 = vpack.c.b16 %v837, %v836
      %v850 = vpack.c.b16 %v839, %v838
      %v851 = vpack.c.b16 %v841, %v840
      %v852 = vpack.c.b16 %v843, %v842
      %v853 = vpack.c.b16 %v845, %v844
      %862 = vmatprep.subr.bf16.mxu0 0
      %863 = vmatpush1.bf16.msra.mxu0 %v846
      %864 = vmatprep.subr.bf16.mxu0 0
      %865 = vmatpush1.bf16.msra.mxu0 %v847
      %866 = vmatprep.subr.bf16.mxu0 0
      %867 = vmatpush1.bf16.msra.mxu0 %v848
      %868 = vmatprep.subr.bf16.mxu0 0
      %869 = vmatpush1.bf16.msra.mxu0 %v849
      %870 = vmatprep.subr.bf16.mxu0 0
      %871 = vmatpush1.bf16.msra.mxu0 %v850
      %872 = vmatprep.subr.bf16.mxu0 0
      %873 = vmatpush1.bf16.msra.mxu0 %v851
      %874 = vmatprep.subr.bf16.mxu0 0
      %875 = vmatpush1.bf16.msra.mxu0 %v852
      %876 = vmatprep.subr.bf16.mxu0 0
      %877 = vmatpush1.bf16.msra.mxu0 %v853
      %878 = vmatprep.subr.bf16.mxu0 0
      %879 = vmatpush1.bf16.msra.mxu0 0
      %880 = vmatprep.subr.bf16.mxu0 0
      %881 = vmatpush1.bf16.msra.mxu0 0
      %882 = vmatprep.subr.bf16.mxu0 0
      %883 = vmatpush1.bf16.msra.mxu0 0
      %884 = vmatprep.subr.bf16.mxu0 0
      %885 = vmatpush1.bf16.msra.mxu0 0
      %886 = vmatprep.subr.bf16.mxu0 0
      %887 = vmatpush1.bf16.msra.mxu0 0
      %888 = vmatprep.subr.bf16.mxu0 0
      %889 = vmatpush1.bf16.msra.mxu0 0
      %890 = vmatprep.subr.bf16.mxu0 0
      %891 = vmatpush1.bf16.msra.mxu0 0
      %892 = vmatprep.subr.bf16.mxu0 0
      %893 = vmatpush1.bf16.msra.mxu0 0
      %894 = vmatprep.mubr.bf16.mxu0 0
      %895 = vmatmul.mubr.bf16.gmra.mrb[0].mxu0 %v787
      %v896 = vpop.f32.mrb[0].mxu0
      %v897 = vadd.f32 %v812, %v896
      %v898 = vpop.f32.mrb[0].mxu0
      %v899 = vpop.f32.mrb[0].mxu0
      %v900 = vadd.f32 %v812, %v899
      %v901 = vpop.f32.mrb[0].mxu0
      %902 = vmatprep.mubr.bf16.mxu0 0
      %903 = vmatmul.mubr.bf16.gmra.mrb[0].mxu0 %v788
      %v904 = vpop.f32.mrb[0].mxu0
      %v905 = vadd.f32 %v812, %v904
      %v906 = vpop.f32.mrb[0].mxu0
      %v907 = vpop.f32.mrb[0].mxu0
      %v908 = vadd.f32 %v812, %v907
      %v909 = vpop.f32.mrb[0].mxu0
      %910 = vmatprep.mubr.bf16.mxu0 0
      %911 = vmatmul.mubr.bf16.gmra.mrb[0].mxu0 %v789
      %v912 = vpop.f32.mrb[0].mxu0
      %v913 = vadd.f32 %v812, %v912
      %v914 = vpop.f32.mrb[0].mxu0
      %v915 = vpop.f32.mrb[0].mxu0
      %v916 = vadd.f32 %v812, %v915
      %v917 = vpop.f32.mrb[0].mxu0
      %918 = vmatprep.mubr.bf16.mxu0 0
      %919 = vmatmul.mubr.bf16.gmra.mrb[0].mxu0 %v790
      %v920 = vpop.f32.mrb[0].mxu0
      %v921 = vadd.f32 %v812, %v920
      %v922 = vpop.f32.mrb[0].mxu0
      %v923 = vpop.f32.mrb[0].mxu0
      %v924 = vadd.f32 %v812, %v923
      %v925 = vpop.f32.mrb[0].mxu0
      %926 = vdwg.mxu0
      %v927 = vmax.f32 %v897, 0.0
      %v928 = vmax.f32 %v900, 0.0
      %v929 = vmax.f32 %v905, 0.0
      %v930 = vmax.f32 %v908, 0.0
      %v931 = vmax.f32 %v913, 0.0
      %v932 = vmax.f32 %v916, 0.0
      %v933 = vmax.f32 %v921, 0.0
      %v934 = vmax.f32 %v924, 0.0
      %v935 = vpack.c.bf16 %v928, %v927
      %v936 = vpack.c.bf16 %v930, %v929
      %v937 = vpack.c.bf16 %v932, %v931
      %v938 = vpack.c.bf16 %v934, %v933
      %v939 = vld [vmem:[%s7] sm:$0xf]
      %v940 = vld [vmem:[%s7 + $0x4] sm:$0xf]
      %v941 = vld [vmem:[%s7 + $0x8] sm:$0xf]
      %v942 = vld [vmem:[%s7 + $0xc] sm:$0xf]
      %v943 = vld [vmem:[%s7 + $0x10] sm:$0xf]
      %v944 = vld [vmem:[%s7 + $0x14] sm:$0xf]
      %v945 = vld [vmem:[%s7 + $0x18] sm:$0xf]
      %v946 = vld [vmem:[%s7 + $0x1c] sm:$0xf]
      %v947 = vld [vmem:[%s7 + $0x20] sm:$0xf]
      %v948 = vld [vmem:[%s7 + $0x24] sm:$0xf]
      %v949 = vld [vmem:[%s7 + $0x28] sm:$0xf]
      %v950 = vld [vmem:[%s7 + $0x2c] sm:$0xf]
      %v951 = vld [vmem:[%s7 + $0x30] sm:$0xf]
      %v952 = vld [vmem:[%s7 + $0x34] sm:$0xf]
      %v953 = vld [vmem:[%s7 + $0x38] sm:$0xf]
      %v954 = vld [vmem:[%s7 + $0x3c] sm:$0xf]
      %v955 = vld [vmem:[%s8] sm:$0x1]
      %v957 = vlaneseq
      %v958 = vshrl.u32 %v957, 7
      %v959 = vsub.s32 0, %v958
      %v960 = vrot.slane %v955, %v959
      %v978 = vunpack.c.l.b16 %v939
      %v979 = vunpack.c.l.b16 %v940
      %v980 = vunpack.c.l.b16 %v941
      %v981 = vunpack.c.l.b16 %v942
      %v982 = vunpack.c.l.b16 %v943
      %v983 = vunpack.c.l.b16 %v944
      %v984 = vunpack.c.l.b16 %v945
      %v985 = vunpack.c.l.b16 %v946
      %v986 = vunpack.c.l.b16 %v947
      %v987 = vunpack.c.l.b16 %v948
      %v988 = vunpack.c.l.b16 %v949
      %v989 = vunpack.c.l.b16 %v950
      %v990 = vunpack.c.l.b16 %v951
      %v991 = vunpack.c.l.b16 %v952
      %v992 = vunpack.c.l.b16 %v953
      %v993 = vunpack.c.l.b16 %v954
      %v994 = vpack.c.b16 %v979, %v978
      %v995 = vpack.c.b16 %v981, %v980
      %v996 = vpack.c.b16 %v983, %v982
      %v997 = vpack.c.b16 %v985, %v984
      %v998 = vpack.c.b16 %v987, %v986
      %v999 = vpack.c.b16 %v989, %v988
      %v1000 = vpack.c.b16 %v991, %v990
      %v1001 = vpack.c.b16 %v993, %v992
      %1010 = vmatprep.subr.bf16.mxu0 0
      %1011 = vmatpush1.bf16.msra.mxu0 %v994
      %1012 = vmatprep.subr.bf16.mxu0 0
      %1013 = vmatpush1.bf16.msra.mxu0 %v995
      %1014 = vmatprep.subr.bf16.mxu0 0
      %1015 = vmatpush1.bf16.msra.mxu0 %v996
      %1016 = vmatprep.subr.bf16.mxu0 0
      %1017 = vmatpush1.bf16.msra.mxu0 %v997
      %1018 = vmatprep.subr.bf16.mxu0 0
      %1019 = vmatpush1.bf16.msra.mxu0 %v998
      %1020 = vmatprep.subr.bf16.mxu0 0
      %1021 = vmatpush1.bf16.msra.mxu0 %v999
      %1022 = vmatprep.subr.bf16.mxu0 0
      %1023 = vmatpush1.bf16.msra.mxu0 %v1000
      %1024 = vmatprep.subr.bf16.mxu0 0
      %1025 = vmatpush1.bf16.msra.mxu0 %v1001
      %1026 = vmatprep.subr.bf16.mxu0 0
      %1027 = vmatpush1.bf16.msra.mxu0 0
      %1028 = vmatprep.subr.bf16.mxu0 0
      %1029 = vmatpush1.bf16.msra.mxu0 0
      %1030 = vmatprep.subr.bf16.mxu0 0
      %1031 = vmatpush1.bf16.msra.mxu0 0
      %1032 = vmatprep.subr.bf16.mxu0 0
      %1033 = vmatpush1.bf16.msra.mxu0 0
      %1034 = vmatprep.subr.bf16.mxu0 0
      %1035 = vmatpush1.bf16.msra.mxu0 0
      %1036 = vmatprep.subr.bf16.mxu0 0
      %1037 = vmatpush1.bf16.msra.mxu0 0
      %1038 = vmatprep.subr.bf16.mxu0 0
      %1039 = vmatpush1.bf16.msra.mxu0 0
      %1040 = vmatprep.subr.bf16.mxu0 0
      %1041 = vmatpush1.bf16.msra.mxu0 0
      %1042 = vmatprep.mubr.bf16.mxu0 0
      %1043 = vmatmul.mubr.bf16.gmra.mrb[0].mxu0 %v935
      %v1044 = vpop.f32.mrb[0].mxu0
      %v1045 = vadd.f32 %v960, %v1044
      %v1046 = vpop.f32.mrb[0].mxu0
      %v1047 = vpop.f32.mrb[0].mxu0
      %v1048 = vadd.f32 %v960, %v1047
      %v1049 = vpop.f32.mrb[0].mxu0
      %1050 = vmatprep.mubr.bf16.mxu0 0
      %1051 = vmatmul.mubr.bf16.gmra.mrb[0].mxu0 %v936
      %v1052 = vpop.f32.mrb[0].mxu0
      %v1053 = vadd.f32 %v960, %v1052
      %v1054 = vpop.f32.mrb[0].mxu0
      %v1055 = vpop.f32.mrb[0].mxu0
      %v1056 = vadd.f32 %v960, %v1055
      %v1057 = vpop.f32.mrb[0].mxu0
      %1058 = vmatprep.mubr.bf16.mxu0 0
      %1059 = vmatmul.mubr.bf16.gmra.mrb[0].mxu0 %v937
      %v1060 = vpop.f32.mrb[0].mxu0
      %v1061 = vadd.f32 %v960, %v1060
      %v1062 = vpop.f32.mrb[0].mxu0
      %v1063 = vpop.f32.mrb[0].mxu0
      %v1064 = vadd.f32 %v960, %v1063
      %v1065 = vpop.f32.mrb[0].mxu0
      %1066 = vmatprep.mubr.bf16.mxu0 0
      %1067 = vmatmul.mubr.bf16.gmra.mrb[0].mxu0 %v938
      %v1068 = vpop.f32.mrb[0].mxu0
      %v1069 = vadd.f32 %v960, %v1068
      %v1070 = vpop.f32.mrb[0].mxu0
      %v1071 = vpop.f32.mrb[0].mxu0
      %v1072 = vadd.f32 %v960, %v1071
      %v1073 = vpop.f32.mrb[0].mxu0
      %1074 = vdwg.mxu0
      %v1075 = vmax.f32 %v1045, 0.0
      %v1076 = vmax.f32 %v1048, 0.0
      %v1077 = vmax.f32 %v1053, 0.0
      %v1078 = vmax.f32 %v1056, 0.0
      %v1079 = vmax.f32 %v1061, 0.0
      %v1080 = vmax.f32 %v1064, 0.0
      %v1081 = vmax.f32 %v1069, 0.0
      %v1082 = vmax.f32 %v1072, 0.0
      %v1083 = vpack.c.bf16 %v1076, %v1075
      %v1084 = vpack.c.bf16 %v1078, %v1077
      %v1085 = vpack.c.bf16 %v1080, %v1079
      %v1086 = vpack.c.bf16 %v1082, %v1081
      %v1091 = vunpack.c.l.b16 %v1083
      %v1092 = vunpack.c.h.b16 %v1083
      %v1093 = vunpack.c.l.b16 %v1084
      %v1094 = vunpack.c.h.b16 %v1084
      %v1095 = vunpack.c.l.b16 %v1085
      %v1096 = vunpack.c.h.b16 %v1085
      %v1097 = vunpack.c.l.b16 %v1086
      %v1098 = vunpack.c.h.b16 %v1086
      %v1099 = vpack.c.b16 %v1091, %v1091
      %v1100 = vpack.c.b16 %v1092, %v1092
      %v1101 = vpack.c.b16 %v1093, %v1093
      %v1102 = vpack.c.b16 %v1094, %v1094
      %v1103 = vpack.c.b16 %v1095, %v1095
      %v1104 = vpack.c.b16 %v1096, %v1096
      %v1105 = vpack.c.b16 %v1097, %v1097
      %v1106 = vpack.c.b16 %v1098, %v1098
      %1115 = vst [vmem:[%s518] sm:$0xf] %v1099
      %1116 = vst [vmem:[%s518 + $0x4] sm:$0xf] %v1100
      %1117 = vst [vmem:[%s518 + $0x8] sm:$0xf] %v1101
      %1118 = vst [vmem:[%s518 + $0xc] sm:$0xf] %v1102
      %1119 = vst [vmem:[%s518 + $0x10] sm:$0xf] %v1103
      %1120 = vst [vmem:[%s518 + $0x14] sm:$0xf] %v1104
      %1121 = vst [vmem:[%s518 + $0x18] sm:$0xf] %v1105
      %1122 = vst [vmem:[%s518 + $0x1c] sm:$0xf] %v1106
      %v1123 = vld [vmem:[%s9] sm:$0xf]
      %v1124 = vld [vmem:[%s9 + $0x4] sm:$0xf]
      %v1125 = vld [vmem:[%s9 + $0x8] sm:$0xf]
      %v1126 = vld [vmem:[%s9 + $0xc] sm:$0xf]
      %v1127 = vld [vmem:[%s9 + $0x10] sm:$0xf]
      %v1128 = vld [vmem:[%s9 + $0x14] sm:$0xf]
      %v1129 = vld [vmem:[%s9 + $0x18] sm:$0xf]
      %v1130 = vld [vmem:[%s9 + $0x1c] sm:$0xf]
      %v1131 = vld [vmem:[%s9 + $0x20] sm:$0xf]
      %v1132 = vld [vmem:[%s9 + $0x24] sm:$0xf]
      %v1133 = vld [vmem:[%s9 + $0x28] sm:$0xf]
      %v1134 = vld [vmem:[%s9 + $0x2c] sm:$0xf]
      %v1135 = vld [vmem:[%s9 + $0x30] sm:$0xf]
      %v1136 = vld [vmem:[%s9 + $0x34] sm:$0xf]
      %v1137 = vld [vmem:[%s9 + $0x38] sm:$0xf]
      %v1138 = vld [vmem:[%s9 + $0x3c] sm:$0xf]
      %v1139 = vld [vmem:[%s10] sm:$0x1]
      %v1141 = vlaneseq
      %v1142 = vshrl.u32 %v1141, 7
      %v1143 = vsub.s32 0, %v1142
      %v1144 = vrot.slane %v1139, %v1143
      %v1162 = vunpack.c.l.b16 %v1123
      %v1163 = vunpack.c.l.b16 %v1124
      %v1164 = vunpack.c.l.b16 %v1125
      %v1165 = vunpack.c.l.b16 %v1126
      %v1166 = vunpack.c.l.b16 %v1127
      %v1167 = vunpack.c.l.b16 %v1128
      %v1168 = vunpack.c.l.b16 %v1129
      %v1169 = vunpack.c.l.b16 %v1130
      %v1170 = vunpack.c.l.b16 %v1131
      %v1171 = vunpack.c.l.b16 %v1132
      %v1172 = vunpack.c.l.b16 %v1133
      %v1173 = vunpack.c.l.b16 %v1134
      %v1174 = vunpack.c.l.b16 %v1135
      %v1175 = vunpack.c.l.b16 %v1136
      %v1176 = vunpack.c.l.b16 %v1137
      %v1177 = vunpack.c.l.b16 %v1138
      %v1178 = vpack.c.b16 %v1163, %v1162
      %v1179 = vpack.c.b16 %v1165, %v1164
      %v1180 = vpack.c.b16 %v1167, %v1166
      %v1181 = vpack.c.b16 %v1169, %v1168
      %v1182 = vpack.c.b16 %v1171, %v1170
      %v1183 = vpack.c.b16 %v1173, %v1172
      %v1184 = vpack.c.b16 %v1175, %v1174
      %v1185 = vpack.c.b16 %v1177, %v1176
      %1194 = vmatprep.subr.bf16.mxu0 0
      %1195 = vmatpush1.bf16.msra.mxu0 %v1178
      %1196 = vmatprep.subr.bf16.mxu0 0
      %1197 = vmatpush1.bf16.msra.mxu0 %v1179
      %1198 = vmatprep.subr.bf16.mxu0 0
      %1199 = vmatpush1.bf16.msra.mxu0 %v1180
      %1200 = vmatprep.subr.bf16.mxu0 0
      %1201 = vmatpush1.bf16.msra.mxu0 %v1181
      %1202 = vmatprep.subr.bf16.mxu0 0
      %1203 = vmatpush1.bf16.msra.mxu0 %v1182
      %1204 = vmatprep.subr.bf16.mxu0 0
      %1205 = vmatpush1.bf16.msra.mxu0 %v1183
      %1206 = vmatprep.subr.bf16.mxu0 0
      %1207 = vmatpush1.bf16.msra.mxu0 %v1184
      %1208 = vmatprep.subr.bf16.mxu0 0
      %1209 = vmatpush1.bf16.msra.mxu0 %v1185
      %1210 = vmatprep.subr.bf16.mxu0 0
      %1211 = vmatpush1.bf16.msra.mxu0 0
      %1212 = vmatprep.subr.bf16.mxu0 0
      %1213 = vmatpush1.bf16.msra.mxu0 0
      %1214 = vmatprep.subr.bf16.mxu0 0
      %1215 = vmatpush1.bf16.msra.mxu0 0
      %1216 = vmatprep.subr.bf16.mxu0 0
      %1217 = vmatpush1.bf16.msra.mxu0 0
      %1218 = vmatprep.subr.bf16.mxu0 0
      %1219 = vmatpush1.bf16.msra.mxu0 0
      %1220 = vmatprep.subr.bf16.mxu0 0
      %1221 = vmatpush1.bf16.msra.mxu0 0
      %1222 = vmatprep.subr.bf16.mxu0 0
      %1223 = vmatpush1.bf16.msra.mxu0 0
      %1224 = vmatprep.subr.bf16.mxu0 0
      %1225 = vmatpush1.bf16.msra.mxu0 0
      %1226 = vmatprep.mubr.bf16.mxu0 0
      %1227 = vmatmul.mubr.bf16.gmra.mrb[0].mxu0 %v1083
      %v1228 = vpop.f32.mrb[0].mxu0
      %v1229 = vadd.f32 %v1144, %v1228
      %v1230 = vpop.f32.mrb[0].mxu0
      %v1231 = vpop.f32.mrb[0].mxu0
      %v1232 = vadd.f32 %v1144, %v1231
      %v1233 = vpop.f32.mrb[0].mxu0
      %1234 = vmatprep.mubr.bf16.mxu0 0
      %1235 = vmatmul.mubr.bf16.gmra.mrb[0].mxu0 %v1084
      %v1236 = vpop.f32.mrb[0].mxu0
      %v1237 = vadd.f32 %v1144, %v1236
      %v1238 = vpop.f32.mrb[0].mxu0
      %v1239 = vpop.f32.mrb[0].mxu0
      %v1240 = vadd.f32 %v1144, %v1239
      %v1241 = vpop.f32.mrb[0].mxu0
      %1242 = vmatprep.mubr.bf16.mxu0 0
      %1243 = vmatmul.mubr.bf16.gmra.mrb[0].mxu0 %v1085
      %v1244 = vpop.f32.mrb[0].mxu0
      %v1245 = vadd.f32 %v1144, %v1244
      %v1246 = vpop.f32.mrb[0].mxu0
      %v1247 = vpop.f32.mrb[0].mxu0
      %v1248 = vadd.f32 %v1144, %v1247
      %v1249 = vpop.f32.mrb[0].mxu0
      %1250 = vmatprep.mubr.bf16.mxu0 0
      %1251 = vmatmul.mubr.bf16.gmra.mrb[0].mxu0 %v1086
      %v1252 = vpop.f32.mrb[0].mxu0
      %v1253 = vadd.f32 %v1144, %v1252
      %v1254 = vpop.f32.mrb[0].mxu0
      %v1255 = vpop.f32.mrb[0].mxu0
      %v1256 = vadd.f32 %v1144, %v1255
      %v1257 = vpop.f32.mrb[0].mxu0
      %1258 = vdwg.mxu0
      %v1259 = vmax.f32 %v1229, 0.0
      %v1260 = vmax.f32 %v1232, 0.0
      %v1261 = vmax.f32 %v1237, 0.0
      %v1262 = vmax.f32 %v1240, 0.0
      %v1263 = vmax.f32 %v1245, 0.0
      %v1264 = vmax.f32 %v1248, 0.0
      %v1265 = vmax.f32 %v1253, 0.0
      %v1266 = vmax.f32 %v1256, 0.0
      %v1267 = vpack.c.bf16 %v1260, %v1259
      %v1268 = vpack.c.bf16 %v1262, %v1261
      %v1269 = vpack.c.bf16 %v1264, %v1263
      %v1270 = vpack.c.bf16 %v1266, %v1265
      %v1271 = vld [vmem:[%s11] sm:$0xff]
      %v1272 = vld [vmem:[%s11 + $0x8] sm:$0xff]
      %v1273 = vld [vmem:[%s11 + $0x10] sm:$0xff]
      %v1274 = vld [vmem:[%s11 + $0x18] sm:$0xff]
      %v1275 = vld [vmem:[%s11 + $0x20] sm:$0xff]
      %v1276 = vld [vmem:[%s11 + $0x28] sm:$0xff]
      %v1277 = vld [vmem:[%s11 + $0x30] sm:$0xff]
      %v1278 = vld [vmem:[%s11 + $0x38] sm:$0xff]
      %v1279 = vld [vmem:[%s11 + $0x40] sm:$0xff]
      %v1280 = vld [vmem:[%s11 + $0x48] sm:$0xff]
      %v1281 = vld [vmem:[%s11 + $0x50] sm:$0xff]
      %v1282 = vld [vmem:[%s11 + $0x58] sm:$0xff]
      %v1283 = vld [vmem:[%s11 + $0x60] sm:$0xff]
      %v1284 = vld [vmem:[%s11 + $0x68] sm:$0xff]
      %v1285 = vld [vmem:[%s11 + $0x70] sm:$0xff]
      %v1286 = vld [vmem:[%s11 + $0x78] sm:$0xff]
      %v1287 = vld [vmem:[%s11 + $0x80] sm:$0xff]
      %v1288 = vld [vmem:[%s11 + $0x88] sm:$0xff]
      %v1289 = vld [vmem:[%s11 + $0x90] sm:$0xff]
      %v1290 = vld [vmem:[%s11 + $0x98] sm:$0xff]
      %v1291 = vld [vmem:[%s11 + $0xa0] sm:$0xff]
      %v1292 = vld [vmem:[%s11 + $0xa8] sm:$0xff]
      %v1293 = vld [vmem:[%s11 + $0xb0] sm:$0xff]
      %v1294 = vld [vmem:[%s11 + $0xb8] sm:$0xff]
      %v1295 = vld [vmem:[%s11 + $0xc0] sm:$0xff]
      %v1296 = vld [vmem:[%s11 + $0xc8] sm:$0xff]
      %v1297 = vld [vmem:[%s11 + $0xd0] sm:$0xff]
      %v1298 = vld [vmem:[%s11 + $0xd8] sm:$0xff]
      %v1299 = vld [vmem:[%s11 + $0xe0] sm:$0xff]
      %v1300 = vld [vmem:[%s11 + $0xe8] sm:$0xff]
      %v1301 = vld [vmem:[%s11 + $0xf0] sm:$0xff]
      %v1302 = vld [vmem:[%s11 + $0xf8] sm:$0xff]
      %v1303 = vld [vmem:[%s11 + $0x100] sm:$0xff]
      %v1304 = vld [vmem:[%s11 + $0x108] sm:$0xff]
      %v1305 = vld [vmem:[%s11 + $0x110] sm:$0xff]
      %v1306 = vld [vmem:[%s11 + $0x118] sm:$0xff]
      %v1307 = vld [vmem:[%s11 + $0x120] sm:$0xff]
      %v1308 = vld [vmem:[%s11 + $0x128] sm:$0xff]
      %v1309 = vld [vmem:[%s11 + $0x130] sm:$0xff]
      %v1310 = vld [vmem:[%s11 + $0x138] sm:$0xff]
      %v1311 = vld [vmem:[%s11 + $0x140] sm:$0xff]
      %v1312 = vld [vmem:[%s11 + $0x148] sm:$0xff]
      %v1313 = vld [vmem:[%s11 + $0x150] sm:$0xff]
      %v1314 = vld [vmem:[%s11 + $0x158] sm:$0xff]
      %v1315 = vld [vmem:[%s11 + $0x160] sm:$0xff]
      %v1316 = vld [vmem:[%s11 + $0x168] sm:$0xff]
      %v1317 = vld [vmem:[%s11 + $0x170] sm:$0xff]
      %v1318 = vld [vmem:[%s11 + $0x178] sm:$0xff]
      %v1319 = vld [vmem:[%s11 + $0x180] sm:$0xff]
      %v1320 = vld [vmem:[%s11 + $0x188] sm:$0xff]
      %v1321 = vld [vmem:[%s11 + $0x190] sm:$0xff]
      %v1322 = vld [vmem:[%s11 + $0x198] sm:$0xff]
      %v1323 = vld [vmem:[%s11 + $0x1a0] sm:$0xff]
      %v1324 = vld [vmem:[%s11 + $0x1a8] sm:$0xff]
      %v1325 = vld [vmem:[%s11 + $0x1b0] sm:$0xff]
      %v1326 = vld [vmem:[%s11 + $0x1b8] sm:$0xff]
      %v1327 = vld [vmem:[%s11 + $0x1c0] sm:$0xff]
      %v1328 = vld [vmem:[%s11 + $0x1c8] sm:$0xff]
      %v1329 = vld [vmem:[%s11 + $0x1d0] sm:$0xff]
      %v1330 = vld [vmem:[%s11 + $0x1d8] sm:$0xff]
      %v1331 = vld [vmem:[%s11 + $0x1e0] sm:$0xff]
      %v1332 = vld [vmem:[%s11 + $0x1e8] sm:$0xff]
      %v1333 = vld [vmem:[%s11 + $0x1f0] sm:$0xff]
      %v1334 = vld [vmem:[%s11 + $0x1f8] sm:$0xff]
      %v1335 = vld [vmem:[%s12] sm:$0xff]
      %v1337 = vlaneseq
      %v1338 = vshrl.u32 %v1337, 7
      %v1339 = vsub.s32 0, %v1338
      %v1340 = vrot.slane %v1335, %v1339
      %v1341 = vlaneseq
      %v1342 = vshrl.u32 %v1341, 7
      %v1343 = vsub.s32 1, %v1342
      %v1344 = vrot.slane %v1335, %v1343
      %v1345 = vlaneseq
      %v1346 = vshrl.u32 %v1345, 7
      %v1347 = vsub.s32 2, %v1346
      %v1348 = vrot.slane %v1335, %v1347
      %v1349 = vlaneseq
      %v1350 = vshrl.u32 %v1349, 7
      %v1351 = vsub.s32 3, %v1350
      %v1352 = vrot.slane %v1335, %v1351
      %v1353 = vlaneseq
      %v1354 = vshrl.u32 %v1353, 7
      %v1355 = vsub.s32 4, %v1354
      %v1356 = vrot.slane %v1335, %v1355
      %v1357 = vlaneseq
      %v1358 = vshrl.u32 %v1357, 7
      %v1359 = vsub.s32 5, %v1358
      %v1360 = vrot.slane %v1335, %v1359
      %v1361 = vlaneseq
      %v1362 = vshrl.u32 %v1361, 7
      %v1363 = vsub.s32 6, %v1362
      %v1364 = vrot.slane %v1335, %v1363
      %v1365 = vlaneseq
      %v1366 = vshrl.u32 %v1365, 7
      %v1367 = vsub.s32 7, %v1366
      %v1368 = vrot.slane %v1335, %v1367
      %v1441 = vunpack.c.l.b16 %v1271
      %v1442 = vunpack.c.h.b16 %v1271
      %v1443 = vunpack.c.l.b16 %v1272
      %v1444 = vunpack.c.h.b16 %v1272
      %v1445 = vunpack.c.l.b16 %v1273
      %v1446 = vunpack.c.h.b16 %v1273
      %v1447 = vunpack.c.l.b16 %v1274
      %v1448 = vunpack.c.h.b16 %v1274
      %v1449 = vunpack.c.l.b16 %v1275
      %v1450 = vunpack.c.h.b16 %v1275
      %v1451 = vunpack.c.l.b16 %v1276
      %v1452 = vunpack.c.h.b16 %v1276
      %v1453 = vunpack.c.l.b16 %v1277
      %v1454 = vunpack.c.h.b16 %v1277
      %v1455 = vunpack.c.l.b16 %v1278
      %v1456 = vunpack.c.h.b16 %v1278
      %v1457 = vunpack.c.l.b16 %v1279
      %v1458 = vunpack.c.h.b16 %v1279
      %v1459 = vunpack.c.l.b16 %v1280
      %v1460 = vunpack.c.h.b16 %v1280
      %v1461 = vunpack.c.l.b16 %v1281
      %v1462 = vunpack.c.h.b16 %v1281
      %v1463 = vunpack.c.l.b16 %v1282
      %v1464 = vunpack.c.h.b16 %v1282
      %v1465 = vunpack.c.l.b16 %v1283
      %v1466 = vunpack.c.h.b16 %v1283
      %v1467 = vunpack.c.l.b16 %v1284
      %v1468 = vunpack.c.h.b16 %v1284
      %v1469 = vunpack.c.l.b16 %v1285
      %v1470 = vunpack.c.h.b16 %v1285
      %v1471 = vunpack.c.l.b16 %v1286
      %v1472 = vunpack.c.h.b16 %v1286
      %v1473 = vunpack.c.l.b16 %v1287
      %v1474 = vunpack.c.h.b16 %v1287
      %v1475 = vunpack.c.l.b16 %v1288
      %v1476 = vunpack.c.h.b16 %v1288
      %v1477 = vunpack.c.l.b16 %v1289
      %v1478 = vunpack.c.h.b16 %v1289
      %v1479 = vunpack.c.l.b16 %v1290
      %v1480 = vunpack.c.h.b16 %v1290
      %v1481 = vunpack.c.l.b16 %v1291
      %v1482 = vunpack.c.h.b16 %v1291
      %v1483 = vunpack.c.l.b16 %v1292
      %v1484 = vunpack.c.h.b16 %v1292
      %v1485 = vunpack.c.l.b16 %v1293
      %v1486 = vunpack.c.h.b16 %v1293
      %v1487 = vunpack.c.l.b16 %v1294
      %v1488 = vunpack.c.h.b16 %v1294
      %v1489 = vunpack.c.l.b16 %v1295
      %v1490 = vunpack.c.h.b16 %v1295
      %v1491 = vunpack.c.l.b16 %v1296
      %v1492 = vunpack.c.h.b16 %v1296
      %v1493 = vunpack.c.l.b16 %v1297
      %v1494 = vunpack.c.h.b16 %v1297
      %v1495 = vunpack.c.l.b16 %v1298
      %v1496 = vunpack.c.h.b16 %v1298
      %v1497 = vunpack.c.l.b16 %v1299
      %v1498 = vunpack.c.h.b16 %v1299
      %v1499 = vunpack.c.l.b16 %v1300
      %v1500 = vunpack.c.h.b16 %v1300
      %v1501 = vunpack.c.l.b16 %v1301
      %v1502 = vunpack.c.h.b16 %v1301
      %v1503 = vunpack.c.l.b16 %v1302
      %v1504 = vunpack.c.h.b16 %v1302
      %v1505 = vunpack.c.l.b16 %v1303
      %v1506 = vunpack.c.h.b16 %v1303
      %v1507 = vunpack.c.l.b16 %v1304
      %v1508 = vunpack.c.h.b16 %v1304
      %v1509 = vunpack.c.l.b16 %v1305
      %v1510 = vunpack.c.h.b16 %v1305
      %v1511 = vunpack.c.l.b16 %v1306
      %v1512 = vunpack.c.h.b16 %v1306
      %v1513 = vunpack.c.l.b16 %v1307
      %v1514 = vunpack.c.h.b16 %v1307
      %v1515 = vunpack.c.l.b16 %v1308
      %v1516 = vunpack.c.h.b16 %v1308
      %v1517 = vunpack.c.l.b16 %v1309
      %v1518 = vunpack.c.h.b16 %v1309
      %v1519 = vunpack.c.l.b16 %v1310
      %v1520 = vunpack.c.h.b16 %v1310
      %v1521 = vunpack.c.l.b16 %v1311
      %v1522 = vunpack.c.h.b16 %v1311
      %v1523 = vunpack.c.l.b16 %v1312
      %v1524 = vunpack.c.h.b16 %v1312
      %v1525 = vunpack.c.l.b16 %v1313
      %v1526 = vunpack.c.h.b16 %v1313
      %v1527 = vunpack.c.l.b16 %v1314
      %v1528 = vunpack.c.h.b16 %v1314
      %v1529 = vunpack.c.l.b16 %v1315
      %v1530 = vunpack.c.h.b16 %v1315
      %v1531 = vunpack.c.l.b16 %v1316
      %v1532 = vunpack.c.h.b16 %v1316
      %v1533 = vunpack.c.l.b16 %v1317
      %v1534 = vunpack.c.h.b16 %v1317
      %v1535 = vunpack.c.l.b16 %v1318
      %v1536 = vunpack.c.h.b16 %v1318
      %v1537 = vunpack.c.l.b16 %v1319
      %v1538 = vunpack.c.h.b16 %v1319
      %v1539 = vunpack.c.l.b16 %v1320
      %v1540 = vunpack.c.h.b16 %v1320
      %v1541 = vunpack.c.l.b16 %v1321
      %v1542 = vunpack.c.h.b16 %v1321
      %v1543 = vunpack.c.l.b16 %v1322
      %v1544 = vunpack.c.h.b16 %v1322
      %v1545 = vunpack.c.l.b16 %v1323
      %v1546 = vunpack.c.h.b16 %v1323
      %v1547 = vunpack.c.l.b16 %v1324
      %v1548 = vunpack.c.h.b16 %v1324
      %v1549 = vunpack.c.l.b16 %v1325
      %v1550 = vunpack.c.h.b16 %v1325
      %v1551 = vunpack.c.l.b16 %v1326
      %v1552 = vunpack.c.h.b16 %v1326
      %v1553 = vunpack.c.l.b16 %v1327
      %v1554 = vunpack.c.h.b16 %v1327
      %v1555 = vunpack.c.l.b16 %v1328
      %v1556 = vunpack.c.h.b16 %v1328
      %v1557 = vunpack.c.l.b16 %v1329
      %v1558 = vunpack.c.h.b16 %v1329
      %v1559 = vunpack.c.l.b16 %v1330
      %v1560 = vunpack.c.h.b16 %v1330
      %v1561 = vunpack.c.l.b16 %v1331
      %v1562 = vunpack.c.h.b16 %v1331
      %v1563 = vunpack.c.l.b16 %v1332
      %v1564 = vunpack.c.h.b16 %v1332
      %v1565 = vunpack.c.l.b16 %v1333
      %v1566 = vunpack.c.h.b16 %v1333
      %v1567 = vunpack.c.l.b16 %v1334
      %v1568 = vunpack.c.h.b16 %v1334
      %v1569 = vpack.c.b16 %v1449, %v1441
      %v1570 = vpack.c.b16 %v1450, %v1442
      %v1571 = vpack.c.b16 %v1451, %v1443
      %v1572 = vpack.c.b16 %v1452, %v1444
      %v1573 = vpack.c.b16 %v1453, %v1445
      %v1574 = vpack.c.b16 %v1454, %v1446
      %v1575 = vpack.c.b16 %v1455, %v1447
      %v1576 = vpack.c.b16 %v1456, %v1448
      %v1577 = vpack.c.b16 %v1465, %v1457
      %v1578 = vpack.c.b16 %v1466, %v1458
      %v1579 = vpack.c.b16 %v1467, %v1459
      %v1580 = vpack.c.b16 %v1468, %v1460
      %v1581 = vpack.c.b16 %v1469, %v1461
      %v1582 = vpack.c.b16 %v1470, %v1462
      %v1583 = vpack.c.b16 %v1471, %v1463
      %v1584 = vpack.c.b16 %v1472, %v1464
      %v1585 = vpack.c.b16 %v1481, %v1473
      %v1586 = vpack.c.b16 %v1482, %v1474
      %v1587 = vpack.c.b16 %v1483, %v1475
      %v1588 = vpack.c.b16 %v1484, %v1476
      %v1589 = vpack.c.b16 %v1485, %v1477
      %v1590 = vpack.c.b16 %v1486, %v1478
      %v1591 = vpack.c.b16 %v1487, %v1479
      %v1592 = vpack.c.b16 %v1488, %v1480
      %v1593 = vpack.c.b16 %v1497, %v1489
      %v1594 = vpack.c.b16 %v1498, %v1490
      %v1595 = vpack.c.b16 %v1499, %v1491
      %v1596 = vpack.c.b16 %v1500, %v1492
      %v1597 = vpack.c.b16 %v1501, %v1493
      %v1598 = vpack.c.b16 %v1502, %v1494
      %v1599 = vpack.c.b16 %v1503, %v1495
      %v1600 = vpack.c.b16 %v1504, %v1496
      %v1601 = vpack.c.b16 %v1513, %v1505
      %v1602 = vpack.c.b16 %v1514, %v1506
      %v1603 = vpack.c.b16 %v1515, %v1507
      %v1604 = vpack.c.b16 %v1516, %v1508
      %v1605 = vpack.c.b16 %v1517, %v1509
      %v1606 = vpack.c.b16 %v1518, %v1510
      %v1607 = vpack.c.b16 %v1519, %v1511
      %v1608 = vpack.c.b16 %v1520, %v1512
      %v1609 = vpack.c.b16 %v1529, %v1521
      %v1610 = vpack.c.b16 %v1530, %v1522
      %v1611 = vpack.c.b16 %v1531, %v1523
      %v1612 = vpack.c.b16 %v1532, %v1524
      %v1613 = vpack.c.b16 %v1533, %v1525
      %v1614 = vpack.c.b16 %v1534, %v1526
      %v1615 = vpack.c.b16 %v1535, %v1527
      %v1616 = vpack.c.b16 %v1536, %v1528
      %v1617 = vpack.c.b16 %v1545, %v1537
      %v1618 = vpack.c.b16 %v1546, %v1538
      %v1619 = vpack.c.b16 %v1547, %v1539
      %v1620 = vpack.c.b16 %v1548, %v1540
      %v1621 = vpack.c.b16 %v1549, %v1541
      %v1622 = vpack.c.b16 %v1550, %v1542
      %v1623 = vpack.c.b16 %v1551, %v1543
      %v1624 = vpack.c.b16 %v1552, %v1544
      %v1625 = vpack.c.b16 %v1561, %v1553
      %v1626 = vpack.c.b16 %v1562, %v1554
      %v1627 = vpack.c.b16 %v1563, %v1555
      %v1628 = vpack.c.b16 %v1564, %v1556
      %v1629 = vpack.c.b16 %v1565, %v1557
      %v1630 = vpack.c.b16 %v1566, %v1558
      %v1631 = vpack.c.b16 %v1567, %v1559
      %v1632 = vpack.c.b16 %v1568, %v1560
      %1697 = vmatprep.subr.bf16.mxu0 %v1570
      %1698 = vmatpush1.bf16.msra.mxu0 %v1569
      %1699 = vmatprep.subr.bf16.mxu0 %v1578
      %1700 = vmatpush1.bf16.msra.mxu0 %v1577
      %1701 = vmatprep.subr.bf16.mxu0 %v1586
      %1702 = vmatpush1.bf16.msra.mxu0 %v1585
      %1703 = vmatprep.subr.bf16.mxu0 %v1594
      %1704 = vmatpush1.bf16.msra.mxu0 %v1593
      %1705 = vmatprep.subr.bf16.mxu0 %v1602
      %1706 = vmatpush1.bf16.msra.mxu0 %v1601
      %1707 = vmatprep.subr.bf16.mxu0 %v1610
      %1708 = vmatpush1.bf16.msra.mxu0 %v1609
      %1709 = vmatprep.subr.bf16.mxu0 %v1618
      %1710 = vmatpush1.bf16.msra.mxu0 %v1617
      %1711 = vmatprep.subr.bf16.mxu0 %v1626
      %1712 = vmatpush1.bf16.msra.mxu0 %v1625
      %1713 = vmatprep.subr.bf16.mxu0 0
      %1714 = vmatpush1.bf16.msra.mxu0 0
      %1715 = vmatprep.subr.bf16.mxu0 0
      %1716 = vmatpush1.bf16.msra.mxu0 0
      %1717 = vmatprep.subr.bf16.mxu0 0
      %1718 = vmatpush1.bf16.msra.mxu0 0
      %1719 = vmatprep.subr.bf16.mxu0 0
      %1720 = vmatpush1.bf16.msra.mxu0 0
      %1721 = vmatprep.subr.bf16.mxu0 0
      %1722 = vmatpush1.bf16.msra.mxu0 0
      %1723 = vmatprep.subr.bf16.mxu0 0
      %1724 = vmatpush1.bf16.msra.mxu0 0
      %1725 = vmatprep.subr.bf16.mxu0 0
      %1726 = vmatpush1.bf16.msra.mxu0 0
      %1727 = vmatprep.subr.bf16.mxu0 0
      %1728 = vmatpush1.bf16.msra.mxu0 0
      %1729 = vmatprep.mubr.bf16.mxu0 0
      %1730 = vmatmul.mubr.bf16.gmra.mrb[0].mxu0 %v1267
      %v1731 = vpop.f32.mrb[0].mxu0
      %v1732 = vadd.f32 %v1340, %v1731
      %v1733 = vpop.f32.mrb[0].mxu0
      %v1734 = vadd.f32 %v1344, %v1733
      %v1735 = vpop.f32.mrb[0].mxu0
      %v1736 = vadd.f32 %v1340, %v1735
      %v1737 = vpop.f32.mrb[0].mxu0
      %v1738 = vadd.f32 %v1344, %v1737
      %1739 = vmatprep.mubr.bf16.mxu0 0
      %1740 = vmatmul.mubr.bf16.gmra.mrb[0].mxu0 %v1268
      %v1741 = vpop.f32.mrb[0].mxu0
      %v1742 = vadd.f32 %v1340, %v1741
      %v1743 = vpop.f32.mrb[0].mxu0
      %v1744 = vadd.f32 %v1344, %v1743
      %v1745 = vpop.f32.mrb[0].mxu0
      %v1746 = vadd.f32 %v1340, %v1745
      %v1747 = vpop.f32.mrb[0].mxu0
      %v1748 = vadd.f32 %v1344, %v1747
      %1749 = vmatprep.mubr.bf16.mxu0 0
      %1750 = vmatmul.mubr.bf16.gmra.mrb[0].mxu0 %v1269
      %v1751 = vpop.f32.mrb[0].mxu0
      %v1752 = vadd.f32 %v1340, %v1751
      %v1753 = vpop.f32.mrb[0].mxu0
      %v1754 = vadd.f32 %v1344, %v1753
      %v1755 = vpop.f32.mrb[0].mxu0
      %v1756 = vadd.f32 %v1340, %v1755
      %v1757 = vpop.f32.mrb[0].mxu0
      %v1758 = vadd.f32 %v1344, %v1757
      %1759 = vmatprep.mubr.bf16.mxu0 0
      %1760 = vmatmul.mubr.bf16.gmra.mrb[0].mxu0 %v1270
      %v1761 = vpop.f32.mrb[0].mxu0
      %v1762 = vadd.f32 %v1340, %v1761
      %v1763 = vpop.f32.mrb[0].mxu0
      %v1764 = vadd.f32 %v1344, %v1763
      %v1765 = vpop.f32.mrb[0].mxu0
      %v1766 = vadd.f32 %v1340, %v1765
      %v1767 = vpop.f32.mrb[0].mxu0
      %v1768 = vadd.f32 %v1344, %v1767
      %1769 = vdwg.mxu0
      %1770 = vmatprep.subr.bf16.mxu0 %v1572
      %1771 = vmatpush1.bf16.msra.mxu0 %v1571
      %1772 = vmatprep.subr.bf16.mxu0 %v1580
      %1773 = vmatpush1.bf16.msra.mxu0 %v1579
      %1774 = vmatprep.subr.bf16.mxu0 %v1588
      %1775 = vmatpush1.bf16.msra.mxu0 %v1587
      %1776 = vmatprep.subr.bf16.mxu0 %v1596
      %1777 = vmatpush1.bf16.msra.mxu0 %v1595
      %1778 = vmatprep.subr.bf16.mxu0 %v1604
      %1779 = vmatpush1.bf16.msra.mxu0 %v1603
      %1780 = vmatprep.subr.bf16.mxu0 %v1612
      %1781 = vmatpush1.bf16.msra.mxu0 %v1611
      %1782 = vmatprep.subr.bf16.mxu0 %v1620
      %1783 = vmatpush1.bf16.msra.mxu0 %v1619
      %1784 = vmatprep.subr.bf16.mxu0 %v1628
      %1785 = vmatpush1.bf16.msra.mxu0 %v1627
      %1786 = vmatprep.subr.bf16.mxu0 0
      %1787 = vmatpush1.bf16.msra.mxu0 0
      %1788 = vmatprep.subr.bf16.mxu0 0
      %1789 = vmatpush1.bf16.msra.mxu0 0
      %1790 = vmatprep.subr.bf16.mxu0 0
      %1791 = vmatpush1.bf16.msra.mxu0 0
      %1792 = vmatprep.subr.bf16.mxu0 0
      %1793 = vmatpush1.bf16.msra.mxu0 0
      %1794 = vmatprep.subr.bf16.mxu0 0
      %1795 = vmatpush1.bf16.msra.mxu0 0
      %1796 = vmatprep.subr.bf16.mxu0 0
      %1797 = vmatpush1.bf16.msra.mxu0 0
      %1798 = vmatprep.subr.bf16.mxu0 0
      %1799 = vmatpush1.bf16.msra.mxu0 0
      %1800 = vmatprep.subr.bf16.mxu0 0
      %1801 = vmatpush1.bf16.msra.mxu0 0
      %1802 = vmatprep.mubr.bf16.mxu0 0
      %1803 = vmatmul.mubr.bf16.gmra.mrb[0].mxu0 %v1267
      %v1804 = vpop.f32.mrb[0].mxu0
      %v1805 = vadd.f32 %v1348, %v1804
      %v1806 = vpop.f32.mrb[0].mxu0
      %v1807 = vadd.f32 %v1352, %v1806
      %v1808 = vpop.f32.mrb[0].mxu0
      %v1809 = vadd.f32 %v1348, %v1808
      %v1810 = vpop.f32.mrb[0].mxu0
      %v1811 = vadd.f32 %v1352, %v1810
      %1812 = vmatprep.mubr.bf16.mxu0 0
      %1813 = vmatmul.mubr.bf16.gmra.mrb[0].mxu0 %v1268
      %v1814 = vpop.f32.mrb[0].mxu0
      %v1815 = vadd.f32 %v1348, %v1814
      %v1816 = vpop.f32.mrb[0].mxu0
      %v1817 = vadd.f32 %v1352, %v1816
      %v1818 = vpop.f32.mrb[0].mxu0
      %v1819 = vadd.f32 %v1348, %v1818
      %v1820 = vpop.f32.mrb[0].mxu0
      %v1821 = vadd.f32 %v1352, %v1820
      %1822 = vmatprep.mubr.bf16.mxu0 0
      %1823 = vmatmul.mubr.bf16.gmra.mrb[0].mxu0 %v1269
      %v1824 = vpop.f32.mrb[0].mxu0
      %v1825 = vadd.f32 %v1348, %v1824
      %v1826 = vpop.f32.mrb[0].mxu0
      %v1827 = vadd.f32 %v1352, %v1826
      %v1828 = vpop.f32.mrb[0].mxu0
      %v1829 = vadd.f32 %v1348, %v1828
      %v1830 = vpop.f32.mrb[0].mxu0
      %v1831 = vadd.f32 %v1352, %v1830
      %1832 = vmatprep.mubr.bf16.mxu0 0
      %1833 = vmatmul.mubr.bf16.gmra.mrb[0].mxu0 %v1270
      %v1834 = vpop.f32.mrb[0].mxu0
      %v1835 = vadd.f32 %v1348, %v1834
      %v1836 = vpop.f32.mrb[0].mxu0
      %v1837 = vadd.f32 %v1352, %v1836
      %v1838 = vpop.f32.mrb[0].mxu0
      %v1839 = vadd.f32 %v1348, %v1838
      %v1840 = vpop.f32.mrb[0].mxu0
      %v1841 = vadd.f32 %v1352, %v1840
      %1842 = vdwg.mxu0
      %1843 = vmatprep.subr.bf16.mxu0 %v1574
      %1844 = vmatpush1.bf16.msra.mxu0 %v1573
      %1845 = vmatprep.subr.bf16.mxu0 %v1582
      %1846 = vmatpush1.bf16.msra.mxu0 %v1581
      %1847 = vmatprep.subr.bf16.mxu0 %v1590
      %1848 = vmatpush1.bf16.msra.mxu0 %v1589
      %1849 = vmatprep.subr.bf16.mxu0 %v1598
      %1850 = vmatpush1.bf16.msra.mxu0 %v1597
      %1851 = vmatprep.subr.bf16.mxu0 %v1606
      %1852 = vmatpush1.bf16.msra.mxu0 %v1605
      %1853 = vmatprep.subr.bf16.mxu0 %v1614
      %1854 = vmatpush1.bf16.msra.mxu0 %v1613
      %1855 = vmatprep.subr.bf16.mxu0 %v1622
      %1856 = vmatpush1.bf16.msra.mxu0 %v1621
      %1857 = vmatprep.subr.bf16.mxu0 %v1630
      %1858 = vmatpush1.bf16.msra.mxu0 %v1629
      %1859 = vmatprep.subr.bf16.mxu0 0
      %1860 = vmatpush1.bf16.msra.mxu0 0
      %1861 = vmatprep.subr.bf16.mxu0 0
      %1862 = vmatpush1.bf16.msra.mxu0 0
      %1863 = vmatprep.subr.bf16.mxu0 0
      %1864 = vmatpush1.bf16.msra.mxu0 0
      %1865 = vmatprep.subr.bf16.mxu0 0
      %1866 = vmatpush1.bf16.msra.mxu0 0
      %1867 = vmatprep.subr.bf16.mxu0 0
      %1868 = vmatpush1.bf16.msra.mxu0 0
      %1869 = vmatprep.subr.bf16.mxu0 0
      %1870 = vmatpush1.bf16.msra.mxu0 0
      %1871 = vmatprep.subr.bf16.mxu0 0
      %1872 = vmatpush1.bf16.msra.mxu0 0
      %1873 = vmatprep.subr.bf16.mxu0 0
      %1874 = vmatpush1.bf16.msra.mxu0 0
      %1875 = vmatprep.mubr.bf16.mxu0 0
      %1876 = vmatmul.mubr.bf16.gmra.mrb[0].mxu0 %v1267
      %v1877 = vpop.f32.mrb[0].mxu0
      %v1878 = vadd.f32 %v1356, %v1877
      %v1879 = vpop.f32.mrb[0].mxu0
      %v1880 = vadd.f32 %v1360, %v1879
      %v1881 = vpop.f32.mrb[0].mxu0
      %v1882 = vadd.f32 %v1356, %v1881
      %v1883 = vpop.f32.mrb[0].mxu0
      %v1884 = vadd.f32 %v1360, %v1883
      %1885 = vmatprep.mubr.bf16.mxu0 0
      %1886 = vmatmul.mubr.bf16.gmra.mrb[0].mxu0 %v1268
      %v1887 = vpop.f32.mrb[0].mxu0
      %v1888 = vadd.f32 %v1356, %v1887
      %v1889 = vpop.f32.mrb[0].mxu0
      %v1890 = vadd.f32 %v1360, %v1889
      %v1891 = vpop.f32.mrb[0].mxu0
      %v1892 = vadd.f32 %v1356, %v1891
      %v1893 = vpop.f32.mrb[0].mxu0
      %v1894 = vadd.f32 %v1360, %v1893
      %1895 = vmatprep.mubr.bf16.mxu0 0
      %1896 = vmatmul.mubr.bf16.gmra.mrb[0].mxu0 %v1269
      %v1897 = vpop.f32.mrb[0].mxu0
      %v1898 = vadd.f32 %v1356, %v1897
      %v1899 = vpop.f32.mrb[0].mxu0
      %v1900 = vadd.f32 %v1360, %v1899
      %v1901 = vpop.f32.mrb[0].mxu0
      %v1902 = vadd.f32 %v1356, %v1901
      %v1903 = vpop.f32.mrb[0].mxu0
      %v1904 = vadd.f32 %v1360, %v1903
      %1905 = vmatprep.mubr.bf16.mxu0 0
      %1906 = vmatmul.mubr.bf16.gmra.mrb[0].mxu0 %v1270
      %v1907 = vpop.f32.mrb[0].mxu0
      %v1908 = vadd.f32 %v1356, %v1907
      %v1909 = vpop.f32.mrb[0].mxu0
      %v1910 = vadd.f32 %v1360, %v1909
      %v1911 = vpop.f32.mrb[0].mxu0
      %v1912 = vadd.f32 %v1356, %v1911
      %v1913 = vpop.f32.mrb[0].mxu0
      %v1914 = vadd.f32 %v1360, %v1913
      %1915 = vdwg.mxu0
      %1916 = vmatprep.subr.bf16.mxu0 %v1576
      %1917 = vmatpush1.bf16.msra.mxu0 %v1575
      %1918 = vmatprep.subr.bf16.mxu0 %v1584
      %1919 = vmatpush1.bf16.msra.mxu0 %v1583
      %1920 = vmatprep.subr.bf16.mxu0 %v1592
      %1921 = vmatpush1.bf16.msra.mxu0 %v1591
      %1922 = vmatprep.subr.bf16.mxu0 %v1600
      %1923 = vmatpush1.bf16.msra.mxu0 %v1599
      %1924 = vmatprep.subr.bf16.mxu0 %v1608
      %1925 = vmatpush1.bf16.msra.mxu0 %v1607
      %1926 = vmatprep.subr.bf16.mxu0 %v1616
      %1927 = vmatpush1.bf16.msra.mxu0 %v1615
      %1928 = vmatprep.subr.bf16.mxu0 %v1624
      %1929 = vmatpush1.bf16.msra.mxu0 %v1623
      %1930 = vmatprep.subr.bf16.mxu0 %v1632
      %1931 = vmatpush1.bf16.msra.mxu0 %v1631
      %1932 = vmatprep.subr.bf16.mxu0 0
      %1933 = vmatpush1.bf16.msra.mxu0 0
      %1934 = vmatprep.subr.bf16.mxu0 0
      %1935 = vmatpush1.bf16.msra.mxu0 0
      %1936 = vmatprep.subr.bf16.mxu0 0
      %1937 = vmatpush1.bf16.msra.mxu0 0
      %1938 = vmatprep.subr.bf16.mxu0 0
      %1939 = vmatpush1.bf16.msra.mxu0 0
      %1940 = vmatprep.subr.bf16.mxu0 0
      %1941 = vmatpush1.bf16.msra.mxu0 0
      %1942 = vmatprep.subr.bf16.mxu0 0
      %1943 = vmatpush1.bf16.msra.mxu0 0
      %1944 = vmatprep.subr.bf16.mxu0 0
      %1945 = vmatpush1.bf16.msra.mxu0 0
      %1946 = vmatprep.subr.bf16.mxu0 0
      %1947 = vmatpush1.bf16.msra.mxu0 0
      %1948 = vmatprep.mubr.bf16.mxu0 0
      %1949 = vmatmul.mubr.bf16.gmra.mrb[0].mxu0 %v1267
      %v1950 = vpop.f32.mrb[0].mxu0
      %v1951 = vadd.f32 %v1364, %v1950
      %v1952 = vpop.f32.mrb[0].mxu0
      %v1953 = vadd.f32 %v1368, %v1952
      %v1954 = vpop.f32.mrb[0].mxu0
      %v1955 = vadd.f32 %v1364, %v1954
      %v1956 = vpop.f32.mrb[0].mxu0
      %v1957 = vadd.f32 %v1368, %v1956
      %1958 = vmatprep.mubr.bf16.mxu0 0
      %1959 = vmatmul.mubr.bf16.gmra.mrb[0].mxu0 %v1268
      %v1960 = vpop.f32.mrb[0].mxu0
      %v1961 = vadd.f32 %v1364, %v1960
      %v1962 = vpop.f32.mrb[0].mxu0
      %v1963 = vadd.f32 %v1368, %v1962
      %v1964 = vpop.f32.mrb[0].mxu0
      %v1965 = vadd.f32 %v1364, %v1964
      %v1966 = vpop.f32.mrb[0].mxu0
      %v1967 = vadd.f32 %v1368, %v1966
      %1968 = vmatprep.mubr.bf16.mxu0 0
      %1969 = vmatmul.mubr.bf16.gmra.mrb[0].mxu0 %v1269
      %v1970 = vpop.f32.mrb[0].mxu0
      %v1971 = vadd.f32 %v1364, %v1970
      %v1972 = vpop.f32.mrb[0].mxu0
      %v1973 = vadd.f32 %v1368, %v1972
      %v1974 = vpop.f32.mrb[0].mxu0
      %v1975 = vadd.f32 %v1364, %v1974
      %v1976 = vpop.f32.mrb[0].mxu0
      %v1977 = vadd.f32 %v1368, %v1976
      %1978 = vmatprep.mubr.bf16.mxu0 0
      %1979 = vmatmul.mubr.bf16.gmra.mrb[0].mxu0 %v1270
      %v1980 = vpop.f32.mrb[0].mxu0
      %v1981 = vadd.f32 %v1364, %v1980
      %v1982 = vpop.f32.mrb[0].mxu0
      %v1983 = vadd.f32 %v1368, %v1982
      %v1984 = vpop.f32.mrb[0].mxu0
      %v1985 = vadd.f32 %v1364, %v1984
      %v1986 = vpop.f32.mrb[0].mxu0
      %v1987 = vadd.f32 %v1368, %v1986
      %1988 = vdwg.mxu0
      %v1989 = vmax.f32 %v1732, 0.0
      %v1990 = vmax.f32 %v1734, 0.0
      %v1991 = vmax.f32 %v1805, 0.0
      %v1992 = vmax.f32 %v1807, 0.0
      %v1993 = vmax.f32 %v1878, 0.0
      %v1994 = vmax.f32 %v1880, 0.0
      %v1995 = vmax.f32 %v1951, 0.0
      %v1996 = vmax.f32 %v1953, 0.0
      %v1997 = vmax.f32 %v1736, 0.0
      %v1998 = vmax.f32 %v1738, 0.0
      %v1999 = vmax.f32 %v1809, 0.0
      %v2000 = vmax.f32 %v1811, 0.0
      %v2001 = vmax.f32 %v1882, 0.0
      %v2002 = vmax.f32 %v1884, 0.0
      %v2003 = vmax.f32 %v1955, 0.0
      %v2004 = vmax.f32 %v1957, 0.0
      %v2005 = vmax.f32 %v1742, 0.0
      %v2006 = vmax.f32 %v1744, 0.0
      %v2007 = vmax.f32 %v1815, 0.0
      %v2008 = vmax.f32 %v1817, 0.0
      %v2009 = vmax.f32 %v1888, 0.0
      %v2010 = vmax.f32 %v1890, 0.0
      %v2011 = vmax.f32 %v1961, 0.0
      %v2012 = vmax.f32 %v1963, 0.0
      %v2013 = vmax.f32 %v1746, 0.0
      %v2014 = vmax.f32 %v1748, 0.0
      %v2015 = vmax.f32 %v1819, 0.0
      %v2016 = vmax.f32 %v1821, 0.0
      %v2017 = vmax.f32 %v1892, 0.0
      %v2018 = vmax.f32 %v1894, 0.0
      %v2019 = vmax.f32 %v1965, 0.0
      %v2020 = vmax.f32 %v1967, 0.0
      %v2021 = vmax.f32 %v1752, 0.0
      %v2022 = vmax.f32 %v1754, 0.0
      %v2023 = vmax.f32 %v1825, 0.0
      %v2024 = vmax.f32 %v1827, 0.0
      %v2025 = vmax.f32 %v1898, 0.0
      %v2026 = vmax.f32 %v1900, 0.0
      %v2027 = vmax.f32 %v1971, 0.0
      %v2028 = vmax.f32 %v1973, 0.0
      %v2029 = vmax.f32 %v1756, 0.0
      %v2030 = vmax.f32 %v1758, 0.0
      %v2031 = vmax.f32 %v1829, 0.0
      %v2032 = vmax.f32 %v1831, 0.0
      %v2033 = vmax.f32 %v1902, 0.0
      %v2034 = vmax.f32 %v1904, 0.0
      %v2035 = vmax.f32 %v1975, 0.0
      %v2036 = vmax.f32 %v1977, 0.0
      %v2037 = vmax.f32 %v1762, 0.0
      %v2038 = vmax.f32 %v1764, 0.0
      %v2039 = vmax.f32 %v1835, 0.0
      %v2040 = vmax.f32 %v1837, 0.0
      %v2041 = vmax.f32 %v1908, 0.0
      %v2042 = vmax.f32 %v1910, 0.0
      %v2043 = vmax.f32 %v1981, 0.0
      %v2044 = vmax.f32 %v1983, 0.0
      %v2045 = vmax.f32 %v1766, 0.0
      %v2046 = vmax.f32 %v1768, 0.0
      %v2047 = vmax.f32 %v1839, 0.0
      %v2048 = vmax.f32 %v1841, 0.0
      %v2049 = vmax.f32 %v1912, 0.0
      %v2050 = vmax.f32 %v1914, 0.0
      %v2051 = vmax.f32 %v1985, 0.0
      %v2052 = vmax.f32 %v1987, 0.0
      %v2053 = vadd.f32 %v1989, %v1997
      %v2054 = vadd.f32 %v2053, %v2005
      %v2055 = vadd.f32 %v2054, %v2013
      %v2056 = vadd.f32 %v2055, %v2021
      %v2057 = vadd.f32 %v2056, %v2029
      %v2058 = vadd.f32 %v2057, %v2037
      %v2059 = vadd.f32 %v2058, %v2045
      %v2060 = vrot.slane %v2059, 4
      %v2061 = vadd.f32 %v2059, %v2060
      %v2062 = vrot.slane %v2061, 2
      %v2063 = vadd.f32 %v2061, %v2062
      %v2064 = vrot.slane %v2063, 1
      %v2065 = vadd.f32 %v2063, %v2064
      %v2066 = vadd.f32 %v1990, %v1998
      %v2067 = vadd.f32 %v2066, %v2006
      %v2068 = vadd.f32 %v2067, %v2014
      %v2069 = vadd.f32 %v2068, %v2022
      %v2070 = vadd.f32 %v2069, %v2030
      %v2071 = vadd.f32 %v2070, %v2038
      %v2072 = vadd.f32 %v2071, %v2046
      %v2073 = vrot.slane %v2072, 4
      %v2074 = vadd.f32 %v2072, %v2073
      %v2075 = vrot.slane %v2074, 2
      %v2076 = vadd.f32 %v2074, %v2075
      %v2077 = vrot.slane %v2076, 1
      %v2078 = vadd.f32 %v2076, %v2077
      %v2079 = vadd.f32 %v1991, %v1999
      %v2080 = vadd.f32 %v2079, %v2007
      %v2081 = vadd.f32 %v2080, %v2015
      %v2082 = vadd.f32 %v2081, %v2023
      %v2083 = vadd.f32 %v2082, %v2031
      %v2084 = vadd.f32 %v2083, %v2039
      %v2085 = vadd.f32 %v2084, %v2047
      %v2086 = vrot.slane %v2085, 4
      %v2087 = vadd.f32 %v2085, %v2086
      %v2088 = vrot.slane %v2087, 2
      %v2089 = vadd.f32 %v2087, %v2088
      %v2090 = vrot.slane %v2089, 1
      %v2091 = vadd.f32 %v2089, %v2090
      %v2092 = vadd.f32 %v1992, %v2000
      %v2093 = vadd.f32 %v2092, %v2008
      %v2094 = vadd.f32 %v2093, %v2016
      %v2095 = vadd.f32 %v2094, %v2024
      %v2096 = vadd.f32 %v2095, %v2032
      %v2097 = vadd.f32 %v2096, %v2040
      %v2098 = vadd.f32 %v2097, %v2048
      %v2099 = vrot.slane %v2098, 4
      %v2100 = vadd.f32 %v2098, %v2099
      %v2101 = vrot.slane %v2100, 2
      %v2102 = vadd.f32 %v2100, %v2101
      %v2103 = vrot.slane %v2102, 1
      %v2104 = vadd.f32 %v2102, %v2103
      %v2105 = vadd.f32 %v1993, %v2001
      %v2106 = vadd.f32 %v2105, %v2009
      %v2107 = vadd.f32 %v2106, %v2017
      %v2108 = vadd.f32 %v2107, %v2025
      %v2109 = vadd.f32 %v2108, %v2033
      %v2110 = vadd.f32 %v2109, %v2041
      %v2111 = vadd.f32 %v2110, %v2049
      %v2112 = vrot.slane %v2111, 4
      %v2113 = vadd.f32 %v2111, %v2112
      %v2114 = vrot.slane %v2113, 2
      %v2115 = vadd.f32 %v2113, %v2114
      %v2116 = vrot.slane %v2115, 1
      %v2117 = vadd.f32 %v2115, %v2116
      %v2118 = vadd.f32 %v1994, %v2002
      %v2119 = vadd.f32 %v2118, %v2010
      %v2120 = vadd.f32 %v2119, %v2018
      %v2121 = vadd.f32 %v2120, %v2026
      %v2122 = vadd.f32 %v2121, %v2034
      %v2123 = vadd.f32 %v2122, %v2042
      %v2124 = vadd.f32 %v2123, %v2050
      %v2125 = vrot.slane %v2124, 4
      %v2126 = vadd.f32 %v2124, %v2125
      %v2127 = vrot.slane %v2126, 2
      %v2128 = vadd.f32 %v2126, %v2127
      %v2129 = vrot.slane %v2128, 1
      %v2130 = vadd.f32 %v2128, %v2129
      %v2131 = vadd.f32 %v1995, %v2003
      %v2132 = vadd.f32 %v2131, %v2011
      %v2133 = vadd.f32 %v2132, %v2019
      %v2134 = vadd.f32 %v2133, %v2027
      %v2135 = vadd.f32 %v2134, %v2035
      %v2136 = vadd.f32 %v2135, %v2043
      %v2137 = vadd.f32 %v2136, %v2051
      %v2138 = vrot.slane %v2137, 4
      %v2139 = vadd.f32 %v2137, %v2138
      %v2140 = vrot.slane %v2139, 2
      %v2141 = vadd.f32 %v2139, %v2140
      %v2142 = vrot.slane %v2141, 1
      %v2143 = vadd.f32 %v2141, %v2142
      %v2144 = vadd.f32 %v1996, %v2004
      %v2145 = vadd.f32 %v2144, %v2012
      %v2146 = vadd.f32 %v2145, %v2020
      %v2147 = vadd.f32 %v2146, %v2028
      %v2148 = vadd.f32 %v2147, %v2036
      %v2149 = vadd.f32 %v2148, %v2044
      %v2150 = vadd.f32 %v2149, %v2052
      %v2151 = vrot.slane %v2150, 4
      %v2152 = vadd.f32 %v2150, %v2151
      %v2153 = vrot.slane %v2152, 2
      %v2154 = vadd.f32 %v2152, %v2153
      %v2155 = vrot.slane %v2154, 1
      %v2156 = vadd.f32 %v2154, %v2155
      %v2165 = vcombine.low %v2065, %v2078
      %v2166 = vcombine.low %v2091, %v2104
      %v2167 = vcombine.low %v2117, %v2130
      %v2168 = vcombine.low %v2143, %v2156
      %v2170 = vunpack.c.l.s4 1966171168
      %v2171 = vunpack.c.0.s8 %v2170
      %v2172 = vlaneseq
      %v2173 = vshrl.u32 %v2172, 7
      %v2174 = vsub.s32 %v2171, %v2173
      %v2175 = vrot.slane %v2165, %v2174
      %v2177 = vunpack.c.l.s4 1966171168
      %v2178 = vunpack.c.0.s8 %v2177
      %v2179 = vlaneseq
      %v2180 = vshrl.u32 %v2179, 7
      %v2181 = vsub.s32 %v2178, %v2180
      %v2182 = vrot.slane %v2166, %v2181
      %v2184 = vunpack.c.l.s4 1966171168
      %v2185 = vunpack.c.0.s8 %v2184
      %v2186 = vlaneseq
      %v2187 = vshrl.u32 %v2186, 7
      %v2188 = vsub.s32 %v2185, %v2187
      %v2189 = vrot.slane %v2167, %v2188
      %v2191 = vunpack.c.l.s4 1966171168
      %v2192 = vunpack.c.0.s8 %v2191
      %v2193 = vlaneseq
      %v2194 = vshrl.u32 %v2193, 7
      %v2195 = vsub.s32 %v2192, %v2194
      %v2196 = vrot.slane %v2168, %v2195
      %v2197 = vcombine.low %v2175, %v2182
      %v2198 = vcombine.low %v2189, %v2196
      %v2200 = vunpack.c.l.s4 1966171168
      %v2201 = vunpack.c.0.s8 %v2200
      %v2202 = vlaneseq
      %v2203 = vshrl.u32 %v2202, 7
      %v2204 = vsub.s32 %v2201, %v2203
      %v2205 = vrot.slane %v2197, %v2204
      %v2207 = vunpack.c.l.s4 1966171168
      %v2208 = vunpack.c.0.s8 %v2207
      %v2209 = vlaneseq
      %v2210 = vshrl.u32 %v2209, 7
      %v2211 = vsub.s32 %v2208, %v2210
      %v2212 = vrot.slane %v2198, %v2211
      %v2213 = vcombine.low %v2205, %v2212
      %2215 = vst [vmem:[%s527] sm:$0xff] %v2213
      %s2216 = smul.u32 8, %s31
      %p2217 = scmp.lt.s32.totalorder %s30, 1
      %s2218 = scalar_select %p2217, %s30, 1
      %p2219 = scmp.lt.s32.totalorder %s2216, 7
      %s2220 = scalar_select %p2219, %s2216, 7
      %s2221 = smul.addr %s2218, 8
      %s2222 = sadd.s32 %s2220, %s2221
      %s2223 = smul.addr %s2222, 4
      %s2224 = scalar_lea.vmem %s13, %s2223
      %p2225 = scmp.lt.s32.totalorder %s30, 1
      %s2226 = scalar_select %p2225, %s30, 1
      %p2227 = scmp.lt.s32.totalorder %s31, 0
      %s2228 = scalar_select %p2227, %s31, 0
      %s2229 = smul.addr %s2228, 8
      %s2230 = smul.addr %s2226, 8
      %s2231 = sadd.s32 %s2229, %s2230
      %s2232 = scalar_lea.vmem %s14, %s2231
      // Predicated region
      $region73: #{deformnet_forward.4} parent=71 // pred_check
        %p2233 = pneg %p338
      $region74: #{deformnet_forward.4} parent=71 // pred_check_branch
        %2235 = sbr.rel (%p2233) target = $region76
      $region75: #{deformnet_forward.4} parent=71 // pred_region
        %s2236 = smul.u32 8, %s31
      $region76: #{deformnet_forward.4} parent=71 // pred_fallthru
        _
      // Predicated region
      $region77: #{deformnet_forward.4} parent=71 // pred_check
        %p2237 = pneg %p366
      $region78: #{deformnet_forward.4} parent=71 // pred_check_branch
        %2239 = sbr.rel (%p2237) target = $region80
      $region79: #{deformnet_forward.4} parent=71 // pred_region
        _
      $region80: #{deformnet_forward.4} parent=71 // pred_fallthru
        _
    $region72: #{deformnet_forward.4} parent=5 // pred_fallthru
      _
    %p2240 = scmp.le.s32.totalorder 2, %s21
    // Predicated region
    $region81: #{deformnet_forward.4} parent=5 // pred_check
      %p2241 = pneg %p2240
    $region82: #{deformnet_forward.4} parent=5 // pred_check_branch
      %2243 = sbr.rel (%p2241) target = $region84
    $region83: #{deformnet_forward.4} parent=5 // pred_region
      %s2244 = ssub.s32 %s21, 2
      // Predicated region
      $region85: #{deformnet_forward.4} parent=83 // pred_check
        %p2245 = pneg %p344
      $region86: #{deformnet_forward.4} parent=83 // pred_check_branch
        %2247 = sbr.rel (%p2245) target = $region88
      $region87: #{deformnet_forward.4} parent=83 // pred_region
        %s2248 = smul.u32 8, %s33
        %p2249 = scmp.lt.s32.totalorder %s32, 1
        %s2250 = scalar_select %p2249, %s32, 1
        %p2251 = scmp.lt.s32.totalorder %s2248, 7
        %s2252 = scalar_select %p2251, %s2248, 7
        %s2253 = smul.addr %s2250, 8
        %s2254 = sadd.s32 %s2252, %s2253
        %s2255 = smul.addr %s2254, 4
        %s2256 = scalar_lea.vmem %s13, %s2255
      $region88: #{deformnet_forward.4} parent=83 // pred_fallthru
        _
      // Predicated region
      $region89: #{deformnet_forward.4} parent=83 // pred_check
        %p2257 = pneg %p372
      $region90: #{deformnet_forward.4} parent=83 // pred_check_branch
        %2259 = sbr.rel (%p2257) target = $region92
      $region91: #{deformnet_forward.4} parent=83 // pred_region
        %p2260 = scmp.lt.s32.totalorder %s32, 1
        %s2261 = scalar_select %p2260, %s32, 1
        %p2262 = scmp.lt.s32.totalorder %s33, 0
        %s2263 = scalar_select %p2262, %s33, 0
        %s2264 = smul.addr %s2263, 8
        %s2265 = smul.addr %s2261, 8
        %s2266 = sadd.s32 %s2264, %s2265
        %s2267 = scalar_lea.vmem %s14, %s2266
      $region92: #{deformnet_forward.4} parent=83 // pred_fallthru
        _
    $region84: #{deformnet_forward.4} parent=5 // pred_fallthru
      _
  $region6: #{deformnet_forward.4} parent=0 // loop_footer
    %s25 = sadd.s32 1, %s21
  $region7: #{deformnet_forward.4} parent=0 // loop_footer_branch
    %20 = sbr.rel target = $region3
  $region8: #{deformnet_forward.4} parent=0 // loop_exit
    _

// kernel: deformnet_forward.5
$region0: #{deformnet_forward.5}
  #allocation0 [shape = 'u32[]', space=smem, size = 0x4, offset = 0x4, fixed_abs, tag = 'smem constant byte address 0x4 - core index']
  #allocation1 [shape = 'u32[144,128]{1,0:T(1,128)}', space=vmem, size = 0x12000, scoped, tag = 'internal scratch']
  %s0 = inlined_call_operand.vmem [shape: f32[2,64,3], index: 0, kind: input, shape index: {}]
  %s1 = inlined_call_operand.vmem [shape: bf16[3,64], index: 1, kind: input, shape index: {}]
  %s2 = inlined_call_operand.vmem [shape: f32[1,64], index: 2, kind: input, shape index: {}]
  %s3 = inlined_call_operand.vmem [shape: bf16[64,64], index: 3, kind: input, shape index: {}]
  %s4 = inlined_call_operand.vmem [shape: f32[1,64], index: 4, kind: input, shape index: {}]
  %s5 = inlined_call_operand.vmem [shape: bf16[64,128], index: 5, kind: input, shape index: {}]
  %s6 = inlined_call_operand.vmem [shape: f32[1,128], index: 6, kind: input, shape index: {}]
  %s7 = inlined_call_operand.vmem [shape: bf16[128,128], index: 7, kind: input, shape index: {}]
  %s8 = inlined_call_operand.vmem [shape: f32[1,128], index: 8, kind: input, shape index: {}]
  %s9 = inlined_call_operand.vmem [shape: bf16[128,1024], index: 9, kind: input, shape index: {}]
  %s10 = inlined_call_operand.vmem [shape: f32[1,1024], index: 10, kind: input, shape index: {}]
  %s11 = inlined_call_operand.vmem [shape: bf16[2,64,128], index: 11, kind: output, shape index: {0}]
  %s12 = inlined_call_operand.vmem [shape: f32[2,1,1024], index: 12, kind: output, shape index: {1}]
  %13 = xla_tuple %s11, %s12
  %s14 = sld [smem:[#allocation0]]
  $region85: #{deformnet_forward.5} parent=0
    _
  %s16 = ssub.s32 1, %s14
  %s17 = scalar_select 0, %s16, %s14
  loop: start=0, step=1, limit=4
  $region2: #{deformnet_forward.5} parent=0 // loop_pre_header
    _
  $region3: #{deformnet_forward.5} parent=0 // loop_header
    %s19 = sphi 0, %s23
    %p20 = scmp.ge.s32.totalorder %s19, 4
    %s26 = sphi 0, %s38
    %s27 = sphi 0, %s34
    %s28 = sphi 0, %s26
    %s29 = sphi 0, %s27
    %s30 = sphi 0, %s28
    %s31 = sphi 0, %s29
    %s43 = sphi 0, %s45
    %s46 = sphi 0, %s43
    %s47 = sphi 0, %s46
    %s63 = sphi 0, %s47
    %s67 = sphi 0, %s67
    %s69 = sphi 0, %s67
    %s70 = sphi 0, %s69
    %s84 = sphi 0, %s70
    %s88 = sphi 0, %s88
    %s90 = sphi 0, %s88
    %s91 = sphi 0, %s90
    %s105 = sphi 0, %s91
    %s109 = sphi 0, %s109
    %s111 = sphi 0, %s109
    %s112 = sphi 0, %s111
    %s126 = sphi 0, %s112
    %s130 = sphi 0, %s130
    %s132 = sphi 0, %s130
    %s133 = sphi 0, %s132
    %s147 = sphi 0, %s133
    %s151 = sphi 0, %s151
    %s153 = sphi 0, %s151
    %s154 = sphi 0, %s153
    %s168 = sphi 0, %s154
    %s172 = sphi 0, %s172
    %s174 = sphi 0, %s172
    %s175 = sphi 0, %s174
    %s189 = sphi 0, %s175
    %s193 = sphi 0, %s193
    %s195 = sphi 0, %s193
    %s196 = sphi 0, %s195
    %s210 = sphi 0, %s196
    %s214 = sphi 0, %s214
    %s216 = sphi 0, %s214
    %s217 = sphi 0, %s216
    %s231 = sphi 0, %s217
    %s235 = sphi 0, %s235
    %s237 = sphi 0, %s235
    %s238 = sphi 0, %s237
    %s252 = sphi 0, %s238
    %s256 = sphi 0, %s256
    %s258 = sphi 0, %s256
    %s259 = sphi 0, %s258
    %s273 = sphi 0, %s259
    %s281 = sphi 0, %s283
    %s284 = sphi 0, %s281
    %s285 = sphi 0, %s284
    %s301 = sphi 0, %s285
    %s309 = sphi 0, %s311
    %s312 = sphi 0, %s309
    %s313 = sphi 0, %s312
    %s329 = sphi 0, %s313
  $region4: #{deformnet_forward.5} parent=0 // loop_header_branch
    %22 = sbr.rel (%p20) target = $region8
  $region5: #{deformnet_forward.5} parent=0 // loop_body
    %s24 = ssub.s32 %s19, 1
    %s25 = ssub.s32 %s19, 2
    %s32 = sadd.s32 1, %s27
    %p33 = scmp.ge.s32.totalorder %s32, 1
    %s34 = scalar_select %p33, 0, %s32
    %s35 = sadd.s32 1, %s26
    %s36 = scalar_select %p33, %s35, %s26
    %p37 = scmp.ge.s32.totalorder %s36, 2
    %s38 = scalar_select %p37, 0, %s36
    %s39 = ssub.s32 %s26, %s38
    %s40 = ssub.s32 %s27, %s34
    %s41 = sor.u32 %s39, %s40
    %p42 = scmp.eq.s32.totalorder %s41, 0
    %s44 = sadd.s32 %s43, 1
    %s45 = scalar_select %p42, %s43, %s44
    %p48 = pneg %p42
    %p49 = scmp.eq.s32.totalorder %s19, 1
    %p50 = por %p48, %p49
    %p51 = scmp.ne.s32.totalorder %s43, %s46
    %p52 = scmp.eq.s32.totalorder %s19, 0
    %p53 = por %p51, %p52
    %p54 = scmp.ne.s32.totalorder %s43, %s46
    %p55 = scmp.eq.s32.totalorder %s24, 1
    %p56 = por %p54, %p55
    %p57 = scmp.ne.s32.totalorder %s46, %s47
    %p58 = scmp.eq.s32.totalorder %s24, 0
    %p59 = por %p57, %p58
    %p60 = scmp.ne.s32.totalorder %s46, %s47
    %p61 = scmp.eq.s32.totalorder %s25, 1
    %p62 = por %p60, %p61
    %p64 = scmp.ne.s32.totalorder %s47, %s63
    %p65 = scmp.eq.s32.totalorder %s25, 0
    %p66 = por %p64, %p65
    %s68 = sadd.s32 %s67, 1
    %p71 = scmp.eq.s32.totalorder %s19, 1
    %p72 = scmp.ne.s32.totalorder %s67, %s69
    %p73 = scmp.eq.s32.totalorder %s19, 0
    %p74 = por %p72, %p73
    %p75 = scmp.ne.s32.totalorder %s67, %s69
    %p76 = scmp.eq.s32.totalorder %s24, 1
    %p77 = por %p75, %p76
    %p78 = scmp.ne.s32.totalorder %s69, %s70
    %p79 = scmp.eq.s32.totalorder %s24, 0
    %p80 = por %p78, %p79
    %p81 = scmp.ne.s32.totalorder %s69, %s70
    %p82 = scmp.eq.s32.totalorder %s25, 1
    %p83 = por %p81, %p82
    %p85 = scmp.ne.s32.totalorder %s70, %s84
    %p86 = scmp.eq.s32.totalorder %s25, 0
    %p87 = por %p85, %p86
    %s89 = sadd.s32 %s88, 1
    %p92 = scmp.eq.s32.totalorder %s19, 1
    %p93 = scmp.ne.s32.totalorder %s88, %s90
    %p94 = scmp.eq.s32.totalorder %s19, 0
    %p95 = por %p93, %p94
    %p96 = scmp.ne.s32.totalorder %s88, %s90
    %p97 = scmp.eq.s32.totalorder %s24, 1
    %p98 = por %p96, %p97
    %p99 = scmp.ne.s32.totalorder %s90, %s91
    %p100 = scmp.eq.s32.totalorder %s24, 0
    %p101 = por %p99, %p100
    %p102 = scmp.ne.s32.totalorder %s90, %s91
    %p103 = scmp.eq.s32.totalorder %s25, 1
    %p104 = por %p102, %p103
    %p106 = scmp.ne.s32.totalorder %s91, %s105
    %p107 = scmp.eq.s32.totalorder %s25, 0
    %p108 = por %p106, %p107
    %s110 = sadd.s32 %s109, 1
    %p113 = scmp.eq.s32.totalorder %s19, 1
    %p114 = scmp.ne.s32.totalorder %s109, %s111
    %p115 = scmp.eq.s32.totalorder %s19, 0
    %p116 = por %p114, %p115
    %p117 = scmp.ne.s32.totalorder %s109, %s111
    %p118 = scmp.eq.s32.totalorder %s24, 1
    %p119 = por %p117, %p118
    %p120 = scmp.ne.s32.totalorder %s111, %s112
    %p121 = scmp.eq.s32.totalorder %s24, 0
    %p122 = por %p120, %p121
    %p123 = scmp.ne.s32.totalorder %s111, %s112
    %p124 = scmp.eq.s32.totalorder %s25, 1
    %p125 = por %p123, %p124
    %p127 = scmp.ne.s32.totalorder %s112, %s126
    %p128 = scmp.eq.s32.totalorder %s25, 0
    %p129 = por %p127, %p128
    %s131 = sadd.s32 %s130, 1
    %p134 = scmp.eq.s32.totalorder %s19, 1
    %p135 = scmp.ne.s32.totalorder %s130, %s132
    %p136 = scmp.eq.s32.totalorder %s19, 0
    %p137 = por %p135, %p136
    %p138 = scmp.ne.s32.totalorder %s130, %s132
    %p139 = scmp.eq.s32.totalorder %s24, 1
    %p140 = por %p138, %p139
    %p141 = scmp.ne.s32.totalorder %s132, %s133
    %p142 = scmp.eq.s32.totalorder %s24, 0
    %p143 = por %p141, %p142
    %p144 = scmp.ne.s32.totalorder %s132, %s133
    %p145 = scmp.eq.s32.totalorder %s25, 1
    %p146 = por %p144, %p145
    %p148 = scmp.ne.s32.totalorder %s133, %s147
    %p149 = scmp.eq.s32.totalorder %s25, 0
    %p150 = por %p148, %p149
    %s152 = sadd.s32 %s151, 1
    %p155 = scmp.eq.s32.totalorder %s19, 1
    %p156 = scmp.ne.s32.totalorder %s151, %s153
    %p157 = scmp.eq.s32.totalorder %s19, 0
    %p158 = por %p156, %p157
    %p159 = scmp.ne.s32.totalorder %s151, %s153
    %p160 = scmp.eq.s32.totalorder %s24, 1
    %p161 = por %p159, %p160
    %p162 = scmp.ne.s32.totalorder %s153, %s154
    %p163 = scmp.eq.s32.totalorder %s24, 0
    %p164 = por %p162, %p163
    %p165 = scmp.ne.s32.totalorder %s153, %s154
    %p166 = scmp.eq.s32.totalorder %s25, 1
    %p167 = por %p165, %p166
    %p169 = scmp.ne.s32.totalorder %s154, %s168
    %p170 = scmp.eq.s32.totalorder %s25, 0
    %p171 = por %p169, %p170
    %s173 = sadd.s32 %s172, 1
    %p176 = scmp.eq.s32.totalorder %s19, 1
    %p177 = scmp.ne.s32.totalorder %s172, %s174
    %p178 = scmp.eq.s32.totalorder %s19, 0
    %p179 = por %p177, %p178
    %p180 = scmp.ne.s32.totalorder %s172, %s174
    %p181 = scmp.eq.s32.totalorder %s24, 1
    %p182 = por %p180, %p181
    %p183 = scmp.ne.s32.totalorder %s174, %s175
    %p184 = scmp.eq.s32.totalorder %s24, 0
    %p185 = por %p183, %p184
    %p186 = scmp.ne.s32.totalorder %s174, %s175
    %p187 = scmp.eq.s32.totalorder %s25, 1
    %p188 = por %p186, %p187
    %p190 = scmp.ne.s32.totalorder %s175, %s189
    %p191 = scmp.eq.s32.totalorder %s25, 0
    %p192 = por %p190, %p191
    %s194 = sadd.s32 %s193, 1
    %p197 = scmp.eq.s32.totalorder %s19, 1
    %p198 = scmp.ne.s32.totalorder %s193, %s195
    %p199 = scmp.eq.s32.totalorder %s19, 0
    %p200 = por %p198, %p199
    %p201 = scmp.ne.s32.totalorder %s193, %s195
    %p202 = scmp.eq.s32.totalorder %s24, 1
    %p203 = por %p201, %p202
    %p204 = scmp.ne.s32.totalorder %s195, %s196
    %p205 = scmp.eq.s32.totalorder %s24, 0
    %p206 = por %p204, %p205
    %p207 = scmp.ne.s32.totalorder %s195, %s196
    %p208 = scmp.eq.s32.totalorder %s25, 1
    %p209 = por %p207, %p208
    %p211 = scmp.ne.s32.totalorder %s196, %s210
    %p212 = scmp.eq.s32.totalorder %s25, 0
    %p213 = por %p211, %p212
    %s215 = sadd.s32 %s214, 1
    %p218 = scmp.eq.s32.totalorder %s19, 1
    %p219 = scmp.ne.s32.totalorder %s214, %s216
    %p220 = scmp.eq.s32.totalorder %s19, 0
    %p221 = por %p219, %p220
    %p222 = scmp.ne.s32.totalorder %s214, %s216
    %p223 = scmp.eq.s32.totalorder %s24, 1
    %p224 = por %p222, %p223
    %p225 = scmp.ne.s32.totalorder %s216, %s217
    %p226 = scmp.eq.s32.totalorder %s24, 0
    %p227 = por %p225, %p226
    %p228 = scmp.ne.s32.totalorder %s216, %s217
    %p229 = scmp.eq.s32.totalorder %s25, 1
    %p230 = por %p228, %p229
    %p232 = scmp.ne.s32.totalorder %s217, %s231
    %p233 = scmp.eq.s32.totalorder %s25, 0
    %p234 = por %p232, %p233
    %s236 = sadd.s32 %s235, 1
    %p239 = scmp.eq.s32.totalorder %s19, 1
    %p240 = scmp.ne.s32.totalorder %s235, %s237
    %p241 = scmp.eq.s32.totalorder %s19, 0
    %p242 = por %p240, %p241
    %p243 = scmp.ne.s32.totalorder %s235, %s237
    %p244 = scmp.eq.s32.totalorder %s24, 1
    %p245 = por %p243, %p244
    %p246 = scmp.ne.s32.totalorder %s237, %s238
    %p247 = scmp.eq.s32.totalorder %s24, 0
    %p248 = por %p246, %p247
    %p249 = scmp.ne.s32.totalorder %s237, %s238
    %p250 = scmp.eq.s32.totalorder %s25, 1
    %p251 = por %p249, %p250
    %p253 = scmp.ne.s32.totalorder %s238, %s252
    %p254 = scmp.eq.s32.totalorder %s25, 0
    %p255 = por %p253, %p254
    %s257 = sadd.s32 %s256, 1
    %p260 = scmp.eq.s32.totalorder %s19, 1
    %p261 = scmp.ne.s32.totalorder %s256, %s258
    %p262 = scmp.eq.s32.totalorder %s19, 0
    %p263 = por %p261, %p262
    %p264 = scmp.ne.s32.totalorder %s256, %s258
    %p265 = scmp.eq.s32.totalorder %s24, 1
    %p266 = por %p264, %p265
    %p267 = scmp.ne.s32.totalorder %s258, %s259
    %p268 = scmp.eq.s32.totalorder %s24, 0
    %p269 = por %p267, %p268
    %p270 = scmp.ne.s32.totalorder %s258, %s259
    %p271 = scmp.eq.s32.totalorder %s25, 1
    %p272 = por %p270, %p271
    %p274 = scmp.ne.s32.totalorder %s259, %s273
    %p275 = scmp.eq.s32.totalorder %s25, 0
    %p276 = por %p274, %p275
    %s277 = ssub.s32 %s26, %s38
    %s278 = ssub.s32 %s27, %s34
    %s279 = sor.u32 %s277, %s278
    %p280 = scmp.eq.s32.totalorder %s279, 0
    %s282 = sadd.s32 %s281, 1
    %s283 = scalar_select %p280, %s281, %s282
    %p286 = pneg %p280
    %p287 = scmp.eq.s32.totalorder %s19, 1
    %p288 = por %p286, %p287
    %p289 = scmp.ne.s32.totalorder %s281, %s284
    %p290 = scmp.eq.s32.totalorder %s19, 0
    %p291 = por %p289, %p290
    %p292 = scmp.ne.s32.totalorder %s281, %s284
    %p293 = scmp.eq.s32.totalorder %s24, 1
    %p294 = por %p292, %p293
    %p295 = scmp.ne.s32.totalorder %s284, %s285
    %p296 = scmp.eq.s32.totalorder %s24, 0
    %p297 = por %p295, %p296
    %p298 = scmp.ne.s32.totalorder %s284, %s285
    %p299 = scmp.eq.s32.totalorder %s25, 1
    %p300 = por %p298, %p299
    %p302 = scmp.ne.s32.totalorder %s285, %s301
    %p303 = scmp.eq.s32.totalorder %s25, 0
    %p304 = por %p302, %p303
    %s305 = ssub.s32 %s26, %s38
    %s306 = ssub.s32 %s27, %s34
    %s307 = sor.u32 %s305, %s306
    %p308 = scmp.eq.s32.totalorder %s307, 0
    %s310 = sadd.s32 %s309, 1
    %s311 = scalar_select %p308, %s309, %s310
    %p314 = pneg %p308
    %p315 = scmp.eq.s32.totalorder %s19, 1
    %p316 = por %p314, %p315
    %p317 = scmp.ne.s32.totalorder %s309, %s312
    %p318 = scmp.eq.s32.totalorder %s19, 0
    %p319 = por %p317, %p318
    %p320 = scmp.ne.s32.totalorder %s309, %s312
    %p321 = scmp.eq.s32.totalorder %s24, 1
    %p322 = por %p320, %p321
    %p323 = scmp.ne.s32.totalorder %s312, %s313
    %p324 = scmp.eq.s32.totalorder %s24, 0
    %p325 = por %p323, %p324
    %p326 = scmp.ne.s32.totalorder %s312, %s313
    %p327 = scmp.eq.s32.totalorder %s25, 1
    %p328 = por %p326, %p327
    %p330 = scmp.ne.s32.totalorder %s313, %s329
    %p331 = scmp.eq.s32.totalorder %s25, 0
    %p332 = por %p330, %p331
    %p333 = scmp.le.s32.totalorder 1, %s19
    %p334 = scmp.lt.s32.totalorder %s19, 3
    %p335 = pnand %p333, %p334
    %p336 = pneg %p335
    // Predicated region
    $region9: #{deformnet_forward.5} parent=5 // pred_check
      _
    $region10: #{deformnet_forward.5} parent=5 // pred_check_branch
      %338 = sbr.rel (%p335) target = $region12
    $region11: #{deformnet_forward.5} parent=5 // pred_region
      %s339 = ssub.s32 %s19, 1
      // Predicated region
      $region13: #{deformnet_forward.5} parent=11 // pred_check
        %p340 = pneg %p80
      $region14: #{deformnet_forward.5} parent=11 // pred_check_branch
        %342 = sbr.rel (%p340) target = $region16
      $region15: #{deformnet_forward.5} parent=11 // pred_region
        _
      $region16: #{deformnet_forward.5} parent=11 // pred_fallthru
        _
      // Predicated region
      $region17: #{deformnet_forward.5} parent=11 // pred_check
        %p343 = pneg %p101
      $region18: #{deformnet_forward.5} parent=11 // pred_check_branch
        %345 = sbr.rel (%p343) target = $region20
      $region19: #{deformnet_forward.5} parent=11 // pred_region
        _
      $region20: #{deformnet_forward.5} parent=11 // pred_fallthru
        _
      // Predicated region
      $region21: #{deformnet_forward.5} parent=11 // pred_check
        %p346 = pneg %p122
      $region22: #{deformnet_forward.5} parent=11 // pred_check_branch
        %348 = sbr.rel (%p346) target = $region24
      $region23: #{deformnet_forward.5} parent=11 // pred_region
        _
      $region24: #{deformnet_forward.5} parent=11 // pred_fallthru
        _
      // Predicated region
      $region25: #{deformnet_forward.5} parent=11 // pred_check
        %p349 = pneg %p143
      $region26: #{deformnet_forward.5} parent=11 // pred_check_branch
        %351 = sbr.rel (%p349) target = $region28
      $region27: #{deformnet_forward.5} parent=11 // pred_region
        _
      $region28: #{deformnet_forward.5} parent=11 // pred_fallthru
        _
      // Predicated region
      $region29: #{deformnet_forward.5} parent=11 // pred_check
        %p352 = pneg %p164
      $region30: #{deformnet_forward.5} parent=11 // pred_check_branch
        %354 = sbr.rel (%p352) target = $region32
      $region31: #{deformnet_forward.5} parent=11 // pred_region
        _
      $region32: #{deformnet_forward.5} parent=11 // pred_fallthru
        _
      // Predicated region
      $region33: #{deformnet_forward.5} parent=11 // pred_check
        %p355 = pneg %p185
      $region34: #{deformnet_forward.5} parent=11 // pred_check_branch
        %357 = sbr.rel (%p355) target = $region36
      $region35: #{deformnet_forward.5} parent=11 // pred_region
        _
      $region36: #{deformnet_forward.5} parent=11 // pred_fallthru
        _
      // Predicated region
      $region37: #{deformnet_forward.5} parent=11 // pred_check
        %p358 = pneg %p206
      $region38: #{deformnet_forward.5} parent=11 // pred_check_branch
        %360 = sbr.rel (%p358) target = $region40
      $region39: #{deformnet_forward.5} parent=11 // pred_region
        _
      $region40: #{deformnet_forward.5} parent=11 // pred_fallthru
        _
      // Predicated region
      $region41: #{deformnet_forward.5} parent=11 // pred_check
        %p361 = pneg %p227
      $region42: #{deformnet_forward.5} parent=11 // pred_check_branch
        %363 = sbr.rel (%p361) target = $region44
      $region43: #{deformnet_forward.5} parent=11 // pred_region
        _
      $region44: #{deformnet_forward.5} parent=11 // pred_fallthru
        _
      // Predicated region
      $region45: #{deformnet_forward.5} parent=11 // pred_check
        %p364 = pneg %p248
      $region46: #{deformnet_forward.5} parent=11 // pred_check_branch
        %366 = sbr.rel (%p364) target = $region48
      $region47: #{deformnet_forward.5} parent=11 // pred_region
        _
      $region48: #{deformnet_forward.5} parent=11 // pred_fallthru
        _
      // Predicated region
      $region49: #{deformnet_forward.5} parent=11 // pred_check
        %p367 = pneg %p269
      $region50: #{deformnet_forward.5} parent=11 // pred_check_branch
        %369 = sbr.rel (%p367) target = $region52
      $region51: #{deformnet_forward.5} parent=11 // pred_region
        _
      $region52: #{deformnet_forward.5} parent=11 // pred_fallthru
        _
    $region12: #{deformnet_forward.5} parent=5 // pred_fallthru
      _
    %p370 = scmp.lt.s32.totalorder %s19, 2
    // Predicated region
    $region53: #{deformnet_forward.5} parent=5 // pred_check
      %p371 = pneg %p370
    $region54: #{deformnet_forward.5} parent=5 // pred_check_branch
      %373 = sbr.rel (%p371) target = $region56
    $region55: #{deformnet_forward.5} parent=5 // pred_region
      // Predicated region
      $region57: #{deformnet_forward.5} parent=55 // pred_check
        %p374 = pneg %p53
      $region58: #{deformnet_forward.5} parent=55 // pred_check_branch
        %376 = sbr.rel (%p374) target = $region60
      $region59: #{deformnet_forward.5} parent=55 // pred_region
        %s377 = smul.u32 8, %s27
        %p378 = scmp.lt.s32.totalorder %s26, 1
        %s379 = scalar_select %p378, %s26, 1
        %p380 = scmp.lt.s32.totalorder %s377, 7
        %s381 = scalar_select %p380, %s377, 7
        %s382 = smul.addr %s379, 8
        %s383 = sadd.s32 %s381, %s382
        %s384 = smul.addr %s383, 8
        %s385 = scalar_lea.vmem %s0, %s384
        %s386 = smul.u32 8, %s27
      $region60: #{deformnet_forward.5} parent=55 // pred_fallthru
        _
    $region56: #{deformnet_forward.5} parent=5 // pred_fallthru
      _
    %p387 = scmp.le.s32.totalorder 1, %s19
    %p388 = scmp.lt.s32.totalorder %s19, 3
    %p389 = pnand %p387, %p388
    %p390 = pneg %p389
    // Predicated region
    $region61: #{deformnet_forward.5} parent=5 // pred_check
      _
    $region62: #{deformnet_forward.5} parent=5 // pred_check_branch
      %392 = sbr.rel (%p389) target = $region64
    $region63: #{deformnet_forward.5} parent=5 // pred_region
      %s393 = ssub.s32 %s19, 1
      %s394 = smul.u32 8, %s29
      %p395 = scmp.lt.s32.totalorder %s28, 1
      %s396 = scalar_select %p395, %s28, 1
      %p397 = scmp.lt.s32.totalorder %s394, 7
      %s398 = scalar_select %p397, %s394, 7
      %s399 = smul.addr %s396, 8
      %s400 = sadd.s32 %s398, %s399
      %s401 = smul.addr %s400, 8
      %s402 = scalar_lea.vmem %s0, %s401
      %p403 = pneg %p59
      %p404 = pneg %p56
      %p405 = pneg %p80
      %p406 = pneg %p77
      %p407 = pneg %p101
      %p408 = pneg %p98
      %p409 = pneg %p122
      %p410 = pneg %p119
      %p411 = pneg %p143
      %p412 = pneg %p140
      %p413 = pneg %p164
      %p414 = pneg %p161
      %p415 = pneg %p185
      %p416 = pneg %p182
      %p417 = pneg %p206
      %p418 = pneg %p203
      %p419 = pneg %p227
      %p420 = pneg %p224
      %p421 = pneg %p248
      %p422 = pneg %p245
      %p423 = pneg %p269
      %p424 = pneg %p266
      %p425 = pneg %p297
      %p426 = pneg %p294
      %s427 = smul.u32 8, %s29
      %p428 = scmp.lt.s32.totalorder %s28, 1
      %s429 = scalar_select %p428, %s28, 1
      %p430 = scmp.lt.s32.totalorder %s427, 7
      %s431 = scalar_select %p430, %s427, 7
      %s432 = smul.addr %s429, 8
      %s433 = sadd.s32 %s431, %s432
      %s434 = smul.addr %s433, 4
      %s435 = scalar_lea.vmem %s11, %s434
      %p436 = pneg %p325
      %p437 = pneg %p322
      %p438 = scmp.lt.s32.totalorder %s28, 1
      %s439 = scalar_select %p438, %s28, 1
      %p440 = scmp.lt.s32.totalorder %s29, 0
      %s441 = scalar_select %p440, %s29, 0
      %s442 = smul.addr %s441, 8
      %s443 = smul.addr %s439, 8
      %s444 = sadd.s32 %s442, %s443
      %s445 = scalar_lea.vmem %s12, %s444
      %s446 = smul.u32 8, %s29
      %p447 = scmp.lt.s32.totalorder %s28, 1
      %s448 = scalar_select %p447, %s28, 1
      %p449 = scmp.lt.s32.totalorder %s446, 7
      %s450 = scalar_select %p449, %s446, 7
      %s451 = smul.addr %s448, 8
      %s452 = sadd.s32 %s450, %s451
      %s453 = smul.addr %s452, 8
      %s454 = scalar_lea.vmem %s0, %s453
      %s455 = smul.u32 8, %s29
      %s456 = smul.u32 8, %s29
      %p457 = scmp.lt.s32.totalorder %s28, 1
      %s458 = scalar_select %p457, %s28, 1
      %p459 = scmp.lt.s32.totalorder %s456, 7
      %s460 = scalar_select %p459, %s456, 7
      %s461 = smul.addr %s458, 8
      %s462 = sadd.s32 %s460, %s461
      %s463 = smul.addr %s462, 4
      %s464 = scalar_lea.vmem %s11, %s463
      %s465 = smul.u32 8, %s29
      %p466 = scmp.lt.s32.totalorder %s28, 1
      %s467 = scalar_select %p466, %s28, 1
      %p468 = scmp.lt.s32.totalorder %s29, 0
      %s469 = scalar_select %p468, %s29, 0
      %s470 = smul.addr %s469, 8
      %s471 = smul.addr %s467, 8
      %s472 = sadd.s32 %s470, %s471
      %s473 = scalar_lea.vmem %s12, %s472
      %v475 = vld [vmem:[%s454] sm:$0xff]
      %v476 = vld [vmem:[%s454 + $0x8] sm:$0xff]
      %v477 = vld [vmem:[%s454 + $0x10] sm:$0xff]
      %v478 = vld [vmem:[%s454 + $0x18] sm:$0xff]
      %v479 = vld [vmem:[%s454 + $0x20] sm:$0xff]
      %v480 = vld [vmem:[%s454 + $0x28] sm:$0xff]
      %v481 = vld [vmem:[%s454 + $0x30] sm:$0xff]
      %v482 = vld [vmem:[%s454 + $0x38] sm:$0xff]
      %v483 = vpack.c.bf16 %v476, %v475
      %v484 = vpack.c.bf16 %v478, %v477
      %v485 = vpack.c.bf16 %v480, %v479
      %v486 = vpack.c.bf16 %v482, %v481
      %v487 = vld [vmem:[%s1] sm:$0x3]
      %v488 = vld [vmem:[%s2] sm:$0x1]
      %v490 = vlaneseq
      %v491 = vshrl.u32 %v490, 7
      %v492 = vsub.s32 0, %v491
      %v493 = vrot.slane %v488, %v492
      %vm495 = vcmask 23552
      %v497 = vsel %vm495, %v483, 0
      %v500 = vsel %vm495, %v484, 0
      %v503 = vsel %vm495, %v485, 0
      %v506 = vsel %vm495, %v486, 0
      %vm508 = vcmask 1040384
      %vm509 = vcmask 1041408
      %v510 = vsel %vm508, 4294967295, 65535
      %v511 = vsel %vm509, %v510, 0
      %v513 = vand.u32 %v487, %v511
      %515 = vmatprep.subr.bf16.mxu0 0
      %516 = vmatpush1.bf16.msra.mxu0 %v513
      %517 = vmatprep.subr.bf16.mxu0 0
      %518 = vmatpush1.bf16.msra.mxu0 0
      %519 = vmatprep.subr.bf16.mxu0 0
      %520 = vmatpush1.bf16.msra.mxu0 0
      %521 = vmatprep.subr.bf16.mxu0 0
      %522 = vmatpush1.bf16.msra.mxu0 0
      %523 = vmatprep.subr.bf16.mxu0 0
      %524 = vmatpush1.bf16.msra.mxu0 0
      %525 = vmatprep.subr.bf16.mxu0 0
      %526 = vmatpush1.bf16.msra.mxu0 0
      %527 = vmatprep.subr.bf16.mxu0 0
      %528 = vmatpush1.bf16.msra.mxu0 0
      %529 = vmatprep.subr.bf16.mxu0 0
      %530 = vmatpush1.bf16.msra.mxu0 0
      %531 = vmatprep.subr.bf16.mxu0 0
      %532 = vmatpush1.bf16.msra.mxu0 0
      %533 = vmatprep.subr.bf16.mxu0 0
      %534 = vmatpush1.bf16.msra.mxu0 0
      %535 = vmatprep.subr.bf16.mxu0 0
      %536 = vmatpush1.bf16.msra.mxu0 0
      %537 = vmatprep.subr.bf16.mxu0 0
      %538 = vmatpush1.bf16.msra.mxu0 0
      %539 = vmatprep.subr.bf16.mxu0 0
      %540 = vmatpush1.bf16.msra.mxu0 0
      %541 = vmatprep.subr.bf16.mxu0 0
      %542 = vmatpush1.bf16.msra.mxu0 0
      %543 = vmatprep.subr.bf16.mxu0 0
      %544 = vmatpush1.bf16.msra.mxu0 0
      %545 = vmatprep.subr.bf16.mxu0 0
      %546 = vmatpush1.bf16.msra.mxu0 0
      %547 = vmatprep.mubr.bf16.mxu0 0
      %548 = vmatmul.mubr.bf16.gmra.mrb[0].mxu0 %v497
      %v549 = vpop.f32.mrb[0].mxu0
      %v550 = vadd.f32 %v493, %v549
      %v551 = vpop.f32.mrb[0].mxu0
      %v552 = vpop.f32.mrb[0].mxu0
      %v553 = vadd.f32 %v493, %v552
      %v554 = vpop.f32.mrb[0].mxu0
      %555 = vmatprep.mubr.bf16.mxu0 0
      %556 = vmatmul.mubr.bf16.gmra.mrb[0].mxu0 %v500
      %v557 = vpop.f32.mrb[0].mxu0
      %v558 = vadd.f32 %v493, %v557
      %v559 = vpop.f32.mrb[0].mxu0
      %v560 = vpop.f32.mrb[0].mxu0
      %v561 = vadd.f32 %v493, %v560
      %v562 = vpop.f32.mrb[0].mxu0
      %563 = vmatprep.mubr.bf16.mxu0 0
      %564 = vmatmul.mubr.bf16.gmra.mrb[0].mxu0 %v503
      %v565 = vpop.f32.mrb[0].mxu0
      %v566 = vadd.f32 %v493, %v565
      %v567 = vpop.f32.mrb[0].mxu0
      %v568 = vpop.f32.mrb[0].mxu0
      %v569 = vadd.f32 %v493, %v568
      %v570 = vpop.f32.mrb[0].mxu0
      %571 = vmatprep.mubr.bf16.mxu0 0
      %572 = vmatmul.mubr.bf16.gmra.mrb[0].mxu0 %v506
      %v573 = vpop.f32.mrb[0].mxu0
      %v574 = vadd.f32 %v493, %v573
      %v575 = vpop.f32.mrb[0].mxu0
      %v576 = vpop.f32.mrb[0].mxu0
      %v577 = vadd.f32 %v493, %v576
      %v578 = vpop.f32.mrb[0].mxu0
      %579 = vdwg.mxu0
      %v580 = vmax.f32 %v550, 0.0
      %v581 = vmax.f32 %v553, 0.0
      %v582 = vmax.f32 %v558, 0.0
      %v583 = vmax.f32 %v561, 0.0
      %v584 = vmax.f32 %v566, 0.0
      %v585 = vmax.f32 %v569, 0.0
      %v586 = vmax.f32 %v574, 0.0
      %v587 = vmax.f32 %v577, 0.0
      %v588 = vpack.c.bf16 %v581, %v580
      %v589 = vpack.c.bf16 %v583, %v582
      %v590 = vpack.c.bf16 %v585, %v584
      %v591 = vpack.c.bf16 %v587, %v586
      %v592 = vld [vmem:[%s3] sm:$0xf]
      %v593 = vld [vmem:[%s3 + $0x4] sm:$0xf]
      %v594 = vld [vmem:[%s3 + $0x8] sm:$0xf]
      %v595 = vld [vmem:[%s3 + $0xc] sm:$0xf]
      %v596 = vld [vmem:[%s3 + $0x10] sm:$0xf]
      %v597 = vld [vmem:[%s3 + $0x14] sm:$0xf]
      %v598 = vld [vmem:[%s3 + $0x18] sm:$0xf]
      %v599 = vld [vmem:[%s3 + $0x1c] sm:$0xf]
      %v600 = vld [vmem:[%s4] sm:$0x1]
      %v602 = vlaneseq
      %v603 = vshrl.u32 %v602, 7
      %v604 = vsub.s32 0, %v603
      %v605 = vrot.slane %v600, %v604
      %v615 = vunpack.c.l.b16 %v592
      %v616 = vunpack.c.l.b16 %v593
      %v617 = vunpack.c.l.b16 %v594
      %v618 = vunpack.c.l.b16 %v595
      %v619 = vunpack.c.l.b16 %v596
      %v620 = vunpack.c.l.b16 %v597
      %v621 = vunpack.c.l.b16 %v598
      %v622 = vunpack.c.l.b16 %v599
      %v623 = vpack.c.b16 %v616, %v615
      %v624 = vpack.c.b16 %v618, %v617
      %v625 = vpack.c.b16 %v620, %v619
      %v626 = vpack.c.b16 %v622, %v621
      %vm631 = vcmask 523264
      %v633 = vsel %vm631, %v588, 0
      %v636 = vsel %vm631, %v589, 0
      %v639 = vsel %vm631, %v590, 0
      %v642 = vsel %vm631, %v591, 0
      %644 = vmatprep.subr.bf16.mxu0 0
      %645 = vmatpush1.bf16.msra.mxu0 %v623
      %646 = vmatprep.subr.bf16.mxu0 0
      %647 = vmatpush1.bf16.msra.mxu0 %v624
      %648 = vmatprep.subr.bf16.mxu0 0
      %649 = vmatpush1.bf16.msra.mxu0 %v625
      %650 = vmatprep.subr.bf16.mxu0 0
      %651 = vmatpush1.bf16.msra.mxu0 %v626
      %652 = vmatprep.subr.bf16.mxu0 0
      %653 = vmatpush1.bf16.msra.mxu0 0
      %654 = vmatprep.subr.bf16.mxu0 0
      %655 = vmatpush1.bf16.msra.mxu0 0
      %656 = vmatprep.subr.bf16.mxu0 0
      %657 = vmatpush1.bf16.msra.mxu0 0
      %658 = vmatprep.subr.bf16.mxu0 0
      %659 = vmatpush1.bf16.msra.mxu0 0
      %660 = vmatprep.subr.bf16.mxu0 0
      %661 = vmatpush1.bf16.msra.mxu0 0
      %662 = vmatprep.subr.bf16.mxu0 0
      %663 = vmatpush1.bf16.msra.mxu0 0
      %664 = vmatprep.subr.bf16.mxu0 0
      %665 = vmatpush1.bf16.msra.mxu0 0
      %666 = vmatprep.subr.bf16.mxu0 0
      %667 = vmatpush1.bf16.msra.mxu0 0
      %668 = vmatprep.subr.bf16.mxu0 0
      %669 = vmatpush1.bf16.msra.mxu0 0
      %670 = vmatprep.subr.bf16.mxu0 0
      %671 = vmatpush1.bf16.msra.mxu0 0
      %672 = vmatprep.subr.bf16.mxu0 0
      %673 = vmatpush1.bf16.msra.mxu0 0
      %674 = vmatprep.subr.bf16.mxu0 0
      %675 = vmatpush1.bf16.msra.mxu0 0
      %676 = vmatprep.mubr.bf16.mxu0 0
      %677 = vmatmul.mubr.bf16.gmra.mrb[0].mxu0 %v633
      %v678 = vpop.f32.mrb[0].mxu0
      %v679 = vadd.f32 %v605, %v678
      %v680 = vpop.f32.mrb[0].mxu0
      %v681 = vpop.f32.mrb[0].mxu0
      %v682 = vadd.f32 %v605, %v681
      %v683 = vpop.f32.mrb[0].mxu0
      %684 = vmatprep.mubr.bf16.mxu0 0
      %685 = vmatmul.mubr.bf16.gmra.mrb[0].mxu0 %v636
      %v686 = vpop.f32.mrb[0].mxu0
      %v687 = vadd.f32 %v605, %v686
      %v688 = vpop.f32.mrb[0].mxu0
      %v689 = vpop.f32.mrb[0].mxu0
      %v690 = vadd.f32 %v605, %v689
      %v691 = vpop.f32.mrb[0].mxu0
      %692 = vmatprep.mubr.bf16.mxu0 0
      %693 = vmatmul.mubr.bf16.gmra.mrb[0].mxu0 %v639
      %v694 = vpop.f32.mrb[0].mxu0
      %v695 = vadd.f32 %v605, %v694
      %v696 = vpop.f32.mrb[0].mxu0
      %v697 = vpop.f32.mrb[0].mxu0
      %v698 = vadd.f32 %v605, %v697
      %v699 = vpop.f32.mrb[0].mxu0
      %700 = vmatprep.mubr.bf16.mxu0 0
      %701 = vmatmul.mubr.bf16.gmra.mrb[0].mxu0 %v642
      %v702 = vpop.f32.mrb[0].mxu0
      %v703 = vadd.f32 %v605, %v702
      %v704 = vpop.f32.mrb[0].mxu0
      %v705 = vpop.f32.mrb[0].mxu0
      %v706 = vadd.f32 %v605, %v705
      %v707 = vpop.f32.mrb[0].mxu0
      %708 = vdwg.mxu0
      %v709 = vmax.f32 %v679, 0.0
      %v710 = vmax.f32 %v682, 0.0
      %v711 = vmax.f32 %v687, 0.0
      %v712 = vmax.f32 %v690, 0.0
      %v713 = vmax.f32 %v695, 0.0
      %v714 = vmax.f32 %v698, 0.0
      %v715 = vmax.f32 %v703, 0.0
      %v716 = vmax.f32 %v706, 0.0
      %v717 = vpack.c.bf16 %v710, %v709
      %v718 = vpack.c.bf16 %v712, %v711
      %v719 = vpack.c.bf16 %v714, %v713
      %v720 = vpack.c.bf16 %v716, %v715
      %v721 = vld [vmem:[%s5] sm:$0xf]
      %v722 = vld [vmem:[%s5 + $0x4] sm:$0xf]
      %v723 = vld [vmem:[%s5 + $0x8] sm:$0xf]
      %v724 = vld [vmem:[%s5 + $0xc] sm:$0xf]
      %v725 = vld [vmem:[%s5 + $0x10] sm:$0xf]
      %v726 = vld [vmem:[%s5 + $0x14] sm:$0xf]
      %v727 = vld [vmem:[%s5 + $0x18] sm:$0xf]
      %v728 = vld [vmem:[%s5 + $0x1c] sm:$0xf]
      %v729 = vld [vmem:[%s6] sm:$0x1]
      %v731 = vlaneseq
      %v732 = vshrl.u32 %v731, 7
      %v733 = vsub.s32 0, %v732
      %v734 = vrot.slane %v729, %v733
      %v744 = vunpack.c.l.b16 %v721
      %v745 = vunpack.c.l.b16 %v722
      %v746 = vunpack.c.l.b16 %v723
      %v747 = vunpack.c.l.b16 %v724
      %v748 = vunpack.c.l.b16 %v725
      %v749 = vunpack.c.l.b16 %v726
      %v750 = vunpack.c.l.b16 %v727
      %v751 = vunpack.c.l.b16 %v728
      %v752 = vpack.c.b16 %v745, %v744
      %v753 = vpack.c.b16 %v747, %v746
      %v754 = vpack.c.b16 %v749, %v748
      %v755 = vpack.c.b16 %v751, %v750
      %v761 = vsel %vm631, %v717, 0
      %v764 = vsel %vm631, %v718, 0
      %v767 = vsel %vm631, %v719, 0
      %v770 = vsel %vm631, %v720, 0
      %772 = vmatprep.subr.bf16.mxu0 0
      %773 = vmatpush1.bf16.msra.mxu0 %v752
      %774 = vmatprep.subr.bf16.mxu0 0
      %775 = vmatpush1.bf16.msra.mxu0 %v753
      %776 = vmatprep.subr.bf16.mxu0 0
      %777 = vmatpush1.bf16.msra.mxu0 %v754
      %778 = vmatprep.subr.bf16.mxu0 0
      %779 = vmatpush1.bf16.msra.mxu0 %v755
      %780 = vmatprep.subr.bf16.mxu0 0
      %781 = vmatpush1.bf16.msra.mxu0 0
      %782 = vmatprep.subr.bf16.mxu0 0
      %783 = vmatpush1.bf16.msra.mxu0 0
      %784 = vmatprep.subr.bf16.mxu0 0
      %785 = vmatpush1.bf16.msra.mxu0 0
      %786 = vmatprep.subr.bf16.mxu0 0
      %787 = vmatpush1.bf16.msra.mxu0 0
      %788 = vmatprep.subr.bf16.mxu0 0
      %789 = vmatpush1.bf16.msra.mxu0 0
      %790 = vmatprep.subr.bf16.mxu0 0
      %791 = vmatpush1.bf16.msra.mxu0 0
      %792 = vmatprep.subr.bf16.mxu0 0
      %793 = vmatpush1.bf16.msra.mxu0 0
      %794 = vmatprep.subr.bf16.mxu0 0
      %795 = vmatpush1.bf16.msra.mxu0 0
      %796 = vmatprep.subr.bf16.mxu0 0
      %797 = vmatpush1.bf16.msra.mxu0 0
      %798 = vmatprep.subr.bf16.mxu0 0
      %799 = vmatpush1.bf16.msra.mxu0 0
      %800 = vmatprep.subr.bf16.mxu0 0
      %801 = vmatpush1.bf16.msra.mxu0 0
      %802 = vmatprep.subr.bf16.mxu0 0
      %803 = vmatpush1.bf16.msra.mxu0 0
      %804 = vmatprep.mubr.bf16.mxu0 0
      %805 = vmatmul.mubr.bf16.gmra.mrb[0].mxu0 %v761
      %v806 = vpop.f32.mrb[0].mxu0
      %v807 = vadd.f32 %v734, %v806
      %v808 = vpop.f32.mrb[0].mxu0
      %v809 = vpop.f32.mrb[0].mxu0
      %v810 = vadd.f32 %v734, %v809
      %v811 = vpop.f32.mrb[0].mxu0
      %812 = vmatprep.mubr.bf16.mxu0 0
      %813 = vmatmul.mubr.bf16.gmra.mrb[0].mxu0 %v764
      %v814 = vpop.f32.mrb[0].mxu0
      %v815 = vadd.f32 %v734, %v814
      %v816 = vpop.f32.mrb[0].mxu0
      %v817 = vpop.f32.mrb[0].mxu0
      %v818 = vadd.f32 %v734, %v817
      %v819 = vpop.f32.mrb[0].mxu0
      %820 = vmatprep.mubr.bf16.mxu0 0
      %821 = vmatmul.mubr.bf16.gmra.mrb[0].mxu0 %v767
      %v822 = vpop.f32.mrb[0].mxu0
      %v823 = vadd.f32 %v734, %v822
      %v824 = vpop.f32.mrb[0].mxu0
      %v825 = vpop.f32.mrb[0].mxu0
      %v826 = vadd.f32 %v734, %v825
      %v827 = vpop.f32.mrb[0].mxu0
      %828 = vmatprep.mubr.bf16.mxu0 0
      %829 = vmatmul.mubr.bf16.gmra.mrb[0].mxu0 %v770
      %v830 = vpop.f32.mrb[0].mxu0
      %v831 = vadd.f32 %v734, %v830
      %v832 = vpop.f32.mrb[0].mxu0
      %v833 = vpop.f32.mrb[0].mxu0
      %v834 = vadd.f32 %v734, %v833
      %v835 = vpop.f32.mrb[0].mxu0
      %836 = vdwg.mxu0
      %v837 = vmax.f32 %v807, 0.0
      %v838 = vmax.f32 %v810, 0.0
      %v839 = vmax.f32 %v815, 0.0
      %v840 = vmax.f32 %v818, 0.0
      %v841 = vmax.f32 %v823, 0.0
      %v842 = vmax.f32 %v826, 0.0
      %v843 = vmax.f32 %v831, 0.0
      %v844 = vmax.f32 %v834, 0.0
      %v845 = vpack.c.bf16 %v838, %v837
      %v846 = vpack.c.bf16 %v840, %v839
      %v847 = vpack.c.bf16 %v842, %v841
      %v848 = vpack.c.bf16 %v844, %v843
      %v853 = vunpack.c.l.b16 %v845
      %v854 = vunpack.c.h.b16 %v845
      %v855 = vunpack.c.l.b16 %v846
      %v856 = vunpack.c.h.b16 %v846
      %v857 = vunpack.c.l.b16 %v847
      %v858 = vunpack.c.h.b16 %v847
      %v859 = vunpack.c.l.b16 %v848
      %v860 = vunpack.c.h.b16 %v848
      %v861 = vpack.c.b16 %v853, %v853
      %v862 = vpack.c.b16 %v854, %v854
      %v863 = vpack.c.b16 %v855, %v855
      %v864 = vpack.c.b16 %v856, %v856
      %v865 = vpack.c.b16 %v857, %v857
      %v866 = vpack.c.b16 %v858, %v858
      %v867 = vpack.c.b16 %v859, %v859
      %v868 = vpack.c.b16 %v860, %v860
      %877 = vst [vmem:[%s464] sm:$0xf] %v861
      %878 = vst [vmem:[%s464 + $0x4] sm:$0xf] %v862
      %879 = vst [vmem:[%s464 + $0x8] sm:$0xf] %v863
      %880 = vst [vmem:[%s464 + $0xc] sm:$0xf] %v864
      %881 = vst [vmem:[%s464 + $0x10] sm:$0xf] %v865
      %882 = vst [vmem:[%s464 + $0x14] sm:$0xf] %v866
      %883 = vst [vmem:[%s464 + $0x18] sm:$0xf] %v867
      %884 = vst [vmem:[%s464 + $0x1c] sm:$0xf] %v868
      %v885 = vld [vmem:[%s7] sm:$0xf]
      %v886 = vld [vmem:[%s7 + $0x4] sm:$0xf]
      %v887 = vld [vmem:[%s7 + $0x8] sm:$0xf]
      %v888 = vld [vmem:[%s7 + $0xc] sm:$0xf]
      %v889 = vld [vmem:[%s7 + $0x10] sm:$0xf]
      %v890 = vld [vmem:[%s7 + $0x14] sm:$0xf]
      %v891 = vld [vmem:[%s7 + $0x18] sm:$0xf]
      %v892 = vld [vmem:[%s7 + $0x1c] sm:$0xf]
      %v893 = vld [vmem:[%s7 + $0x20] sm:$0xf]
      %v894 = vld [vmem:[%s7 + $0x24] sm:$0xf]
      %v895 = vld [vmem:[%s7 + $0x28] sm:$0xf]
      %v896 = vld [vmem:[%s7 + $0x2c] sm:$0xf]
      %v897 = vld [vmem:[%s7 + $0x30] sm:$0xf]
      %v898 = vld [vmem:[%s7 + $0x34] sm:$0xf]
      %v899 = vld [vmem:[%s7 + $0x38] sm:$0xf]
      %v900 = vld [vmem:[%s7 + $0x3c] sm:$0xf]
      %v901 = vld [vmem:[%s8] sm:$0x1]
      %v903 = vlaneseq
      %v904 = vshrl.u32 %v903, 7
      %v905 = vsub.s32 0, %v904
      %v906 = vrot.slane %v901, %v905
      %v924 = vunpack.c.l.b16 %v885
      %v925 = vunpack.c.l.b16 %v886
      %v926 = vunpack.c.l.b16 %v887
      %v927 = vunpack.c.l.b16 %v888
      %v928 = vunpack.c.l.b16 %v889
      %v929 = vunpack.c.l.b16 %v890
      %v930 = vunpack.c.l.b16 %v891
      %v931 = vunpack.c.l.b16 %v892
      %v932 = vunpack.c.l.b16 %v893
      %v933 = vunpack.c.l.b16 %v894
      %v934 = vunpack.c.l.b16 %v895
      %v935 = vunpack.c.l.b16 %v896
      %v936 = vunpack.c.l.b16 %v897
      %v937 = vunpack.c.l.b16 %v898
      %v938 = vunpack.c.l.b16 %v899
      %v939 = vunpack.c.l.b16 %v900
      %v940 = vpack.c.b16 %v925, %v924
      %v941 = vpack.c.b16 %v927, %v926
      %v942 = vpack.c.b16 %v929, %v928
      %v943 = vpack.c.b16 %v931, %v930
      %v944 = vpack.c.b16 %v933, %v932
      %v945 = vpack.c.b16 %v935, %v934
      %v946 = vpack.c.b16 %v937, %v936
      %v947 = vpack.c.b16 %v939, %v938
      %956 = vmatprep.subr.bf16.mxu0 0
      %957 = vmatpush1.bf16.msra.mxu0 %v940
      %958 = vmatprep.subr.bf16.mxu0 0
      %959 = vmatpush1.bf16.msra.mxu0 %v941
      %960 = vmatprep.subr.bf16.mxu0 0
      %961 = vmatpush1.bf16.msra.mxu0 %v942
      %962 = vmatprep.subr.bf16.mxu0 0
      %963 = vmatpush1.bf16.msra.mxu0 %v943
      %964 = vmatprep.subr.bf16.mxu0 0
      %965 = vmatpush1.bf16.msra.mxu0 %v944
      %966 = vmatprep.subr.bf16.mxu0 0
      %967 = vmatpush1.bf16.msra.mxu0 %v945
      %968 = vmatprep.subr.bf16.mxu0 0
      %969 = vmatpush1.bf16.msra.mxu0 %v946
      %970 = vmatprep.subr.bf16.mxu0 0
      %971 = vmatpush1.bf16.msra.mxu0 %v947
      %972 = vmatprep.subr.bf16.mxu0 0
      %973 = vmatpush1.bf16.msra.mxu0 0
      %974 = vmatprep.subr.bf16.mxu0 0
      %975 = vmatpush1.bf16.msra.mxu0 0
      %976 = vmatprep.subr.bf16.mxu0 0
      %977 = vmatpush1.bf16.msra.mxu0 0
      %978 = vmatprep.subr.bf16.mxu0 0
      %979 = vmatpush1.bf16.msra.mxu0 0
      %980 = vmatprep.subr.bf16.mxu0 0
      %981 = vmatpush1.bf16.msra.mxu0 0
      %982 = vmatprep.subr.bf16.mxu0 0
      %983 = vmatpush1.bf16.msra.mxu0 0
      %984 = vmatprep.subr.bf16.mxu0 0
      %985 = vmatpush1.bf16.msra.mxu0 0
      %986 = vmatprep.subr.bf16.mxu0 0
      %987 = vmatpush1.bf16.msra.mxu0 0
      %988 = vmatprep.mubr.bf16.mxu0 0
      %989 = vmatmul.mubr.bf16.gmra.mrb[0].mxu0 %v845
      %v990 = vpop.f32.mrb[0].mxu0
      %v991 = vadd.f32 %v906, %v990
      %v992 = vpop.f32.mrb[0].mxu0
      %v993 = vpop.f32.mrb[0].mxu0
      %v994 = vadd.f32 %v906, %v993
      %v995 = vpop.f32.mrb[0].mxu0
      %996 = vmatprep.mubr.bf16.mxu0 0
      %997 = vmatmul.mubr.bf16.gmra.mrb[0].mxu0 %v846
      %v998 = vpop.f32.mrb[0].mxu0
      %v999 = vadd.f32 %v906, %v998
      %v1000 = vpop.f32.mrb[0].mxu0
      %v1001 = vpop.f32.mrb[0].mxu0
      %v1002 = vadd.f32 %v906, %v1001
      %v1003 = vpop.f32.mrb[0].mxu0
      %1004 = vmatprep.mubr.bf16.mxu0 0
      %1005 = vmatmul.mubr.bf16.gmra.mrb[0].mxu0 %v847
      %v1006 = vpop.f32.mrb[0].mxu0
      %v1007 = vadd.f32 %v906, %v1006
      %v1008 = vpop.f32.mrb[0].mxu0
      %v1009 = vpop.f32.mrb[0].mxu0
      %v1010 = vadd.f32 %v906, %v1009
      %v1011 = vpop.f32.mrb[0].mxu0
      %1012 = vmatprep.mubr.bf16.mxu0 0
      %1013 = vmatmul.mubr.bf16.gmra.mrb[0].mxu0 %v848
      %v1014 = vpop.f32.mrb[0].mxu0
      %v1015 = vadd.f32 %v906, %v1014
      %v1016 = vpop.f32.mrb[0].mxu0
      %v1017 = vpop.f32.mrb[0].mxu0
      %v1018 = vadd.f32 %v906, %v1017
      %v1019 = vpop.f32.mrb[0].mxu0
      %1020 = vdwg.mxu0
      %v1021 = vmax.f32 %v991, 0.0
      %v1022 = vmax.f32 %v994, 0.0
      %v1023 = vmax.f32 %v999, 0.0
      %v1024 = vmax.f32 %v1002, 0.0
      %v1025 = vmax.f32 %v1007, 0.0
      %v1026 = vmax.f32 %v1010, 0.0
      %v1027 = vmax.f32 %v1015, 0.0
      %v1028 = vmax.f32 %v1018, 0.0
      %v1029 = vpack.c.bf16 %v1022, %v1021
      %v1030 = vpack.c.bf16 %v1024, %v1023
      %v1031 = vpack.c.bf16 %v1026, %v1025
      %v1032 = vpack.c.bf16 %v1028, %v1027
      %v1033 = vld [vmem:[%s9] sm:$0xff]
      %v1034 = vld [vmem:[%s9 + $0x8] sm:$0xff]
      %v1035 = vld [vmem:[%s9 + $0x10] sm:$0xff]
      %v1036 = vld [vmem:[%s9 + $0x18] sm:$0xff]
      %v1037 = vld [vmem:[%s9 + $0x20] sm:$0xff]
      %v1038 = vld [vmem:[%s9 + $0x28] sm:$0xff]
      %v1039 = vld [vmem:[%s9 + $0x30] sm:$0xff]
      %v1040 = vld [vmem:[%s9 + $0x38] sm:$0xff]
      %v1041 = vld [vmem:[%s9 + $0x40] sm:$0xff]
      %v1042 = vld [vmem:[%s9 + $0x48] sm:$0xff]
      %v1043 = vld [vmem:[%s9 + $0x50] sm:$0xff]
      %v1044 = vld [vmem:[%s9 + $0x58] sm:$0xff]
      %v1045 = vld [vmem:[%s9 + $0x60] sm:$0xff]
      %v1046 = vld [vmem:[%s9 + $0x68] sm:$0xff]
      %v1047 = vld [vmem:[%s9 + $0x70] sm:$0xff]
      %v1048 = vld [vmem:[%s9 + $0x78] sm:$0xff]
      %v1049 = vld [vmem:[%s9 + $0x80] sm:$0xff]
      %v1050 = vld [vmem:[%s9 + $0x88] sm:$0xff]
      %v1051 = vld [vmem:[%s9 + $0x90] sm:$0xff]
      %v1052 = vld [vmem:[%s9 + $0x98] sm:$0xff]
      %v1053 = vld [vmem:[%s9 + $0xa0] sm:$0xff]
      %v1054 = vld [vmem:[%s9 + $0xa8] sm:$0xff]
      %v1055 = vld [vmem:[%s9 + $0xb0] sm:$0xff]
      %v1056 = vld [vmem:[%s9 + $0xb8] sm:$0xff]
      %v1057 = vld [vmem:[%s9 + $0xc0] sm:$0xff]
      %v1058 = vld [vmem:[%s9 + $0xc8] sm:$0xff]
      %v1059 = vld [vmem:[%s9 + $0xd0] sm:$0xff]
      %v1060 = vld [vmem:[%s9 + $0xd8] sm:$0xff]
      %v1061 = vld [vmem:[%s9 + $0xe0] sm:$0xff]
      %v1062 = vld [vmem:[%s9 + $0xe8] sm:$0xff]
      %v1063 = vld [vmem:[%s9 + $0xf0] sm:$0xff]
      %v1064 = vld [vmem:[%s9 + $0xf8] sm:$0xff]
      %v1065 = vld [vmem:[%s9 + $0x100] sm:$0xff]
      %v1066 = vld [vmem:[%s9 + $0x108] sm:$0xff]
      %v1067 = vld [vmem:[%s9 + $0x110] sm:$0xff]
      %v1068 = vld [vmem:[%s9 + $0x118] sm:$0xff]
      %v1069 = vld [vmem:[%s9 + $0x120] sm:$0xff]
      %v1070 = vld [vmem:[%s9 + $0x128] sm:$0xff]
      %v1071 = vld [vmem:[%s9 + $0x130] sm:$0xff]
      %v1072 = vld [vmem:[%s9 + $0x138] sm:$0xff]
      %v1073 = vld [vmem:[%s9 + $0x140] sm:$0xff]
      %v1074 = vld [vmem:[%s9 + $0x148] sm:$0xff]
      %v1075 = vld [vmem:[%s9 + $0x150] sm:$0xff]
      %v1076 = vld [vmem:[%s9 + $0x158] sm:$0xff]
      %v1077 = vld [vmem:[%s9 + $0x160] sm:$0xff]
      %v1078 = vld [vmem:[%s9 + $0x168] sm:$0xff]
      %v1079 = vld [vmem:[%s9 + $0x170] sm:$0xff]
      %v1080 = vld [vmem:[%s9 + $0x178] sm:$0xff]
      %v1081 = vld [vmem:[%s9 + $0x180] sm:$0xff]
      %v1082 = vld [vmem:[%s9 + $0x188] sm:$0xff]
      %v1083 = vld [vmem:[%s9 + $0x190] sm:$0xff]
      %v1084 = vld [vmem:[%s9 + $0x198] sm:$0xff]
      %v1085 = vld [vmem:[%s9 + $0x1a0] sm:$0xff]
      %v1086 = vld [vmem:[%s9 + $0x1a8] sm:$0xff]
      %v1087 = vld [vmem:[%s9 + $0x1b0] sm:$0xff]
      %v1088 = vld [vmem:[%s9 + $0x1b8] sm:$0xff]
      %v1089 = vld [vmem:[%s9 + $0x1c0] sm:$0xff]
      %v1090 = vld [vmem:[%s9 + $0x1c8] sm:$0xff]
      %v1091 = vld [vmem:[%s9 + $0x1d0] sm:$0xff]
      %v1092 = vld [vmem:[%s9 + $0x1d8] sm:$0xff]
      %v1093 = vld [vmem:[%s9 + $0x1e0] sm:$0xff]
      %v1094 = vld [vmem:[%s9 + $0x1e8] sm:$0xff]
      %v1095 = vld [vmem:[%s9 + $0x1f0] sm:$0xff]
      %v1096 = vld [vmem:[%s9 + $0x1f8] sm:$0xff]
      %v1097 = vld [vmem:[%s10] sm:$0xff]
      %v1099 = vlaneseq
      %v1100 = vshrl.u32 %v1099, 7
      %v1101 = vsub.s32 0, %v1100
      %v1102 = vrot.slane %v1097, %v1101
      %v1103 = vlaneseq
      %v1104 = vshrl.u32 %v1103, 7
      %v1105 = vsub.s32 1, %v1104
      %v1106 = vrot.slane %v1097, %v1105
      %v1107 = vlaneseq
      %v1108 = vshrl.u32 %v1107, 7
      %v1109 = vsub.s32 2, %v1108
      %v1110 = vrot.slane %v1097, %v1109
      %v1111 = vlaneseq
      %v1112 = vshrl.u32 %v1111, 7
      %v1113 = vsub.s32 3, %v1112
      %v1114 = vrot.slane %v1097, %v1113
      %v1115 = vlaneseq
      %v1116 = vshrl.u32 %v1115, 7
      %v1117 = vsub.s32 4, %v1116
      %v1118 = vrot.slane %v1097, %v1117
      %v1119 = vlaneseq
      %v1120 = vshrl.u32 %v1119, 7
      %v1121 = vsub.s32 5, %v1120
      %v1122 = vrot.slane %v1097, %v1121
      %v1123 = vlaneseq
      %v1124 = vshrl.u32 %v1123, 7
      %v1125 = vsub.s32 6, %v1124
      %v1126 = vrot.slane %v1097, %v1125
      %v1127 = vlaneseq
      %v1128 = vshrl.u32 %v1127, 7
      %v1129 = vsub.s32 7, %v1128
      %v1130 = vrot.slane %v1097, %v1129
      %v1203 = vunpack.c.l.b16 %v1033
      %v1204 = vunpack.c.h.b16 %v1033
      %v1205 = vunpack.c.l.b16 %v1034
      %v1206 = vunpack.c.h.b16 %v1034
      %v1207 = vunpack.c.l.b16 %v1035
      %v1208 = vunpack.c.h.b16 %v1035
      %v1209 = vunpack.c.l.b16 %v1036
      %v1210 = vunpack.c.h.b16 %v1036
      %v1211 = vunpack.c.l.b16 %v1037
      %v1212 = vunpack.c.h.b16 %v1037
      %v1213 = vunpack.c.l.b16 %v1038
      %v1214 = vunpack.c.h.b16 %v1038
      %v1215 = vunpack.c.l.b16 %v1039
      %v1216 = vunpack.c.h.b16 %v1039
      %v1217 = vunpack.c.l.b16 %v1040
      %v1218 = vunpack.c.h.b16 %v1040
      %v1219 = vunpack.c.l.b16 %v1041
      %v1220 = vunpack.c.h.b16 %v1041
      %v1221 = vunpack.c.l.b16 %v1042
      %v1222 = vunpack.c.h.b16 %v1042
      %v1223 = vunpack.c.l.b16 %v1043
      %v1224 = vunpack.c.h.b16 %v1043
      %v1225 = vunpack.c.l.b16 %v1044
      %v1226 = vunpack.c.h.b16 %v1044
      %v1227 = vunpack.c.l.b16 %v1045
      %v1228 = vunpack.c.h.b16 %v1045
      %v1229 = vunpack.c.l.b16 %v1046
      %v1230 = vunpack.c.h.b16 %v1046
      %v1231 = vunpack.c.l.b16 %v1047
      %v1232 = vunpack.c.h.b16 %v1047
      %v1233 = vunpack.c.l.b16 %v1048
      %v1234 = vunpack.c.h.b16 %v1048
      %v1235 = vunpack.c.l.b16 %v1049
      %v1236 = vunpack.c.h.b16 %v1049
      %v1237 = vunpack.c.l.b16 %v1050
      %v1238 = vunpack.c.h.b16 %v1050
      %v1239 = vunpack.c.l.b16 %v1051
      %v1240 = vunpack.c.h.b16 %v1051
      %v1241 = vunpack.c.l.b16 %v1052
      %v1242 = vunpack.c.h.b16 %v1052
      %v1243 = vunpack.c.l.b16 %v1053
      %v1244 = vunpack.c.h.b16 %v1053
      %v1245 = vunpack.c.l.b16 %v1054
      %v1246 = vunpack.c.h.b16 %v1054
      %v1247 = vunpack.c.l.b16 %v1055
      %v1248 = vunpack.c.h.b16 %v1055
      %v1249 = vunpack.c.l.b16 %v1056
      %v1250 = vunpack.c.h.b16 %v1056
      %v1251 = vunpack.c.l.b16 %v1057
      %v1252 = vunpack.c.h.b16 %v1057
      %v1253 = vunpack.c.l.b16 %v1058
      %v1254 = vunpack.c.h.b16 %v1058
      %v1255 = vunpack.c.l.b16 %v1059
      %v1256 = vunpack.c.h.b16 %v1059
      %v1257 = vunpack.c.l.b16 %v1060
      %v1258 = vunpack.c.h.b16 %v1060
      %v1259 = vunpack.c.l.b16 %v1061
      %v1260 = vunpack.c.h.b16 %v1061
      %v1261 = vunpack.c.l.b16 %v1062
      %v1262 = vunpack.c.h.b16 %v1062
      %v1263 = vunpack.c.l.b16 %v1063
      %v1264 = vunpack.c.h.b16 %v1063
      %v1265 = vunpack.c.l.b16 %v1064
      %v1266 = vunpack.c.h.b16 %v1064
      %v1267 = vunpack.c.l.b16 %v1065
      %v1268 = vunpack.c.h.b16 %v1065
      %v1269 = vunpack.c.l.b16 %v1066
      %v1270 = vunpack.c.h.b16 %v1066
      %v1271 = vunpack.c.l.b16 %v1067
      %v1272 = vunpack.c.h.b16 %v1067
      %v1273 = vunpack.c.l.b16 %v1068
      %v1274 = vunpack.c.h.b16 %v1068
      %v1275 = vunpack.c.l.b16 %v1069
      %v1276 = vunpack.c.h.b16 %v1069
      %v1277 = vunpack.c.l.b16 %v1070
      %v1278 = vunpack.c.h.b16 %v1070
      %v1279 = vunpack.c.l.b16 %v1071
      %v1280 = vunpack.c.h.b16 %v1071
      %v1281 = vunpack.c.l.b16 %v1072
      %v1282 = vunpack.c.h.b16 %v1072
      %v1283 = vunpack.c.l.b16 %v1073
      %v1284 = vunpack.c.h.b16 %v1073
      %v1285 = vunpack.c.l.b16 %v1074
      %v1286 = vunpack.c.h.b16 %v1074
      %v1287 = vunpack.c.l.b16 %v1075
      %v1288 = vunpack.c.h.b16 %v1075
      %v1289 = vunpack.c.l.b16 %v1076
      %v1290 = vunpack.c.h.b16 %v1076
      %v1291 = vunpack.c.l.b16 %v1077
      %v1292 = vunpack.c.h.b16 %v1077
      %v1293 = vunpack.c.l.b16 %v1078
      %v1294 = vunpack.c.h.b16 %v1078
      %v1295 = vunpack.c.l.b16 %v1079
      %v1296 = vunpack.c.h.b16 %v1079
      %v1297 = vunpack.c.l.b16 %v1080
      %v1298 = vunpack.c.h.b16 %v1080
      %v1299 = vunpack.c.l.b16 %v1081
      %v1300 = vunpack.c.h.b16 %v1081
      %v1301 = vunpack.c.l.b16 %v1082
      %v1302 = vunpack.c.h.b16 %v1082
      %v1303 = vunpack.c.l.b16 %v1083
      %v1304 = vunpack.c.h.b16 %v1083
      %v1305 = vunpack.c.l.b16 %v1084
      %v1306 = vunpack.c.h.b16 %v1084
      %v1307 = vunpack.c.l.b16 %v1085
      %v1308 = vunpack.c.h.b16 %v1085
      %v1309 = vunpack.c.l.b16 %v1086
      %v1310 = vunpack.c.h.b16 %v1086
      %v1311 = vunpack.c.l.b16 %v1087
      %v1312 = vunpack.c.h.b16 %v1087
      %v1313 = vunpack.c.l.b16 %v1088
      %v1314 = vunpack.c.h.b16 %v1088
      %v1315 = vunpack.c.l.b16 %v1089
      %v1316 = vunpack.c.h.b16 %v1089
      %v1317 = vunpack.c.l.b16 %v1090
      %v1318 = vunpack.c.h.b16 %v1090
      %v1319 = vunpack.c.l.b16 %v1091
      %v1320 = vunpack.c.h.b16 %v1091
      %v1321 = vunpack.c.l.b16 %v1092
      %v1322 = vunpack.c.h.b16 %v1092
      %v1323 = vunpack.c.l.b16 %v1093
      %v1324 = vunpack.c.h.b16 %v1093
      %v1325 = vunpack.c.l.b16 %v1094
      %v1326 = vunpack.c.h.b16 %v1094
      %v1327 = vunpack.c.l.b16 %v1095
      %v1328 = vunpack.c.h.b16 %v1095
      %v1329 = vunpack.c.l.b16 %v1096
      %v1330 = vunpack.c.h.b16 %v1096
      %v1331 = vpack.c.b16 %v1211, %v1203
      %v1332 = vpack.c.b16 %v1212, %v1204
      %v1333 = vpack.c.b16 %v1213, %v1205
      %v1334 = vpack.c.b16 %v1214, %v1206
      %v1335 = vpack.c.b16 %v1215, %v1207
      %v1336 = vpack.c.b16 %v1216, %v1208
      %v1337 = vpack.c.b16 %v1217, %v1209
      %v1338 = vpack.c.b16 %v1218, %v1210
      %v1339 = vpack.c.b16 %v1227, %v1219
      %v1340 = vpack.c.b16 %v1228, %v1220
      %v1341 = vpack.c.b16 %v1229, %v1221
      %v1342 = vpack.c.b16 %v1230, %v1222
      %v1343 = vpack.c.b16 %v1231, %v1223
      %v1344 = vpack.c.b16 %v1232, %v1224
      %v1345 = vpack.c.b16 %v1233, %v1225
      %v1346 = vpack.c.b16 %v1234, %v1226
      %v1347 = vpack.c.b16 %v1243, %v1235
      %v1348 = vpack.c.b16 %v1244, %v1236
      %v1349 = vpack.c.b16 %v1245, %v1237
      %v1350 = vpack.c.b16 %v1246, %v1238
      %v1351 = vpack.c.b16 %v1247, %v1239
      %v1352 = vpack.c.b16 %v1248, %v1240
      %v1353 = vpack.c.b16 %v1249, %v1241
      %v1354 = vpack.c.b16 %v1250, %v1242
      %v1355 = vpack.c.b16 %v1259, %v1251
      %v1356 = vpack.c.b16 %v1260, %v1252
      %v1357 = vpack.c.b16 %v1261, %v1253
      %v1358 = vpack.c.b16 %v1262, %v1254
      %v1359 = vpack.c.b16 %v1263, %v1255
      %v1360 = vpack.c.b16 %v1264, %v1256
      %v1361 = vpack.c.b16 %v1265, %v1257
      %v1362 = vpack.c.b16 %v1266, %v1258
      %v1363 = vpack.c.b16 %v1275, %v1267
      %v1364 = vpack.c.b16 %v1276, %v1268
      %v1365 = vpack.c.b16 %v1277, %v1269
      %v1366 = vpack.c.b16 %v1278, %v1270
      %v1367 = vpack.c.b16 %v1279, %v1271
      %v1368 = vpack.c.b16 %v1280, %v1272
      %v1369 = vpack.c.b16 %v1281, %v1273
      %v1370 = vpack.c.b16 %v1282, %v1274
      %v1371 = vpack.c.b16 %v1291, %v1283
      %v1372 = vpack.c.b16 %v1292, %v1284
      %v1373 = vpack.c.b16 %v1293, %v1285
      %v1374 = vpack.c.b16 %v1294, %v1286
      %v1375 = vpack.c.b16 %v1295, %v1287
      %v1376 = vpack.c.b16 %v1296, %v1288
      %v1377 = vpack.c.b16 %v1297, %v1289
      %v1378 = vpack.c.b16 %v1298, %v1290
      %v1379 = vpack.c.b16 %v1307, %v1299
      %v1380 = vpack.c.b16 %v1308, %v1300
      %v1381 = vpack.c.b16 %v1309, %v1301
      %v1382 = vpack.c.b16 %v1310, %v1302
      %v1383 = vpack.c.b16 %v1311, %v1303
      %v1384 = vpack.c.b16 %v1312, %v1304
      %v1385 = vpack.c.b16 %v1313, %v1305
      %v1386 = vpack.c.b16 %v1314, %v1306
      %v1387 = vpack.c.b16 %v1323, %v1315
      %v1388 = vpack.c.b16 %v1324, %v1316
      %v1389 = vpack.c.b16 %v1325, %v1317
      %v1390 = vpack.c.b16 %v1326, %v1318
      %v1391 = vpack.c.b16 %v1327, %v1319
      %v1392 = vpack.c.b16 %v1328, %v1320
      %v1393 = vpack.c.b16 %v1329, %v1321
      %v1394 = vpack.c.b16 %v1330, %v1322
      %1459 = vmatprep.subr.bf16.mxu0 %v1332
      %1460 = vmatpush1.bf16.msra.mxu0 %v1331
      %1461 = vmatprep.subr.bf16.mxu0 %v1340
      %1462 = vmatpush1.bf16.msra.mxu0 %v1339
      %1463 = vmatprep.subr.bf16.mxu0 %v1348
      %1464 = vmatpush1.bf16.msra.mxu0 %v1347
      %1465 = vmatprep.subr.bf16.mxu0 %v1356
      %1466 = vmatpush1.bf16.msra.mxu0 %v1355
      %1467 = vmatprep.subr.bf16.mxu0 %v1364
      %1468 = vmatpush1.bf16.msra.mxu0 %v1363
      %1469 = vmatprep.subr.bf16.mxu0 %v1372
      %1470 = vmatpush1.bf16.msra.mxu0 %v1371
      %1471 = vmatprep.subr.bf16.mxu0 %v1380
      %1472 = vmatpush1.bf16.msra.mxu0 %v1379
      %1473 = vmatprep.subr.bf16.mxu0 %v1388
      %1474 = vmatpush1.bf16.msra.mxu0 %v1387
      %1475 = vmatprep.subr.bf16.mxu0 0
      %1476 = vmatpush1.bf16.msra.mxu0 0
      %1477 = vmatprep.subr.bf16.mxu0 0
      %1478 = vmatpush1.bf16.msra.mxu0 0
      %1479 = vmatprep.subr.bf16.mxu0 0
      %1480 = vmatpush1.bf16.msra.mxu0 0
      %1481 = vmatprep.subr.bf16.mxu0 0
      %1482 = vmatpush1.bf16.msra.mxu0 0
      %1483 = vmatprep.subr.bf16.mxu0 0
      %1484 = vmatpush1.bf16.msra.mxu0 0
      %1485 = vmatprep.subr.bf16.mxu0 0
      %1486 = vmatpush1.bf16.msra.mxu0 0
      %1487 = vmatprep.subr.bf16.mxu0 0
      %1488 = vmatpush1.bf16.msra.mxu0 0
      %1489 = vmatprep.subr.bf16.mxu0 0
      %1490 = vmatpush1.bf16.msra.mxu0 0
      %1491 = vmatprep.mubr.bf16.mxu0 0
      %1492 = vmatmul.mubr.bf16.gmra.mrb[0].mxu0 %v1029
      %v1493 = vpop.f32.mrb[0].mxu0
      %v1494 = vadd.f32 %v1102, %v1493
      %v1495 = vpop.f32.mrb[0].mxu0
      %v1496 = vadd.f32 %v1106, %v1495
      %v1497 = vpop.f32.mrb[0].mxu0
      %v1498 = vadd.f32 %v1102, %v1497
      %v1499 = vpop.f32.mrb[0].mxu0
      %v1500 = vadd.f32 %v1106, %v1499
      %1501 = vmatprep.mubr.bf16.mxu0 0
      %1502 = vmatmul.mubr.bf16.gmra.mrb[0].mxu0 %v1030
      %v1503 = vpop.f32.mrb[0].mxu0
      %v1504 = vadd.f32 %v1102, %v1503
      %v1505 = vpop.f32.mrb[0].mxu0
      %v1506 = vadd.f32 %v1106, %v1505
      %v1507 = vpop.f32.mrb[0].mxu0
      %v1508 = vadd.f32 %v1102, %v1507
      %v1509 = vpop.f32.mrb[0].mxu0
      %v1510 = vadd.f32 %v1106, %v1509
      %1511 = vmatprep.mubr.bf16.mxu0 0
      %1512 = vmatmul.mubr.bf16.gmra.mrb[0].mxu0 %v1031
      %v1513 = vpop.f32.mrb[0].mxu0
      %v1514 = vadd.f32 %v1102, %v1513
      %v1515 = vpop.f32.mrb[0].mxu0
      %v1516 = vadd.f32 %v1106, %v1515
      %v1517 = vpop.f32.mrb[0].mxu0
      %v1518 = vadd.f32 %v1102, %v1517
      %v1519 = vpop.f32.mrb[0].mxu0
      %v1520 = vadd.f32 %v1106, %v1519
      %1521 = vmatprep.mubr.bf16.mxu0 0
      %1522 = vmatmul.mubr.bf16.gmra.mrb[0].mxu0 %v1032
      %v1523 = vpop.f32.mrb[0].mxu0
      %v1524 = vadd.f32 %v1102, %v1523
      %v1525 = vpop.f32.mrb[0].mxu0
      %v1526 = vadd.f32 %v1106, %v1525
      %v1527 = vpop.f32.mrb[0].mxu0
      %v1528 = vadd.f32 %v1102, %v1527
      %v1529 = vpop.f32.mrb[0].mxu0
      %v1530 = vadd.f32 %v1106, %v1529
      %1531 = vdwg.mxu0
      %1532 = vmatprep.subr.bf16.mxu0 %v1334
      %1533 = vmatpush1.bf16.msra.mxu0 %v1333
      %1534 = vmatprep.subr.bf16.mxu0 %v1342
      %1535 = vmatpush1.bf16.msra.mxu0 %v1341
      %1536 = vmatprep.subr.bf16.mxu0 %v1350
      %1537 = vmatpush1.bf16.msra.mxu0 %v1349
      %1538 = vmatprep.subr.bf16.mxu0 %v1358
      %1539 = vmatpush1.bf16.msra.mxu0 %v1357
      %1540 = vmatprep.subr.bf16.mxu0 %v1366
      %1541 = vmatpush1.bf16.msra.mxu0 %v1365
      %1542 = vmatprep.subr.bf16.mxu0 %v1374
      %1543 = vmatpush1.bf16.msra.mxu0 %v1373
      %1544 = vmatprep.subr.bf16.mxu0 %v1382
      %1545 = vmatpush1.bf16.msra.mxu0 %v1381
      %1546 = vmatprep.subr.bf16.mxu0 %v1390
      %1547 = vmatpush1.bf16.msra.mxu0 %v1389
      %1548 = vmatprep.subr.bf16.mxu0 0
      %1549 = vmatpush1.bf16.msra.mxu0 0
      %1550 = vmatprep.subr.bf16.mxu0 0
      %1551 = vmatpush1.bf16.msra.mxu0 0
      %1552 = vmatprep.subr.bf16.mxu0 0
      %1553 = vmatpush1.bf16.msra.mxu0 0
      %1554 = vmatprep.subr.bf16.mxu0 0
      %1555 = vmatpush1.bf16.msra.mxu0 0
      %1556 = vmatprep.subr.bf16.mxu0 0
      %1557 = vmatpush1.bf16.msra.mxu0 0
      %1558 = vmatprep.subr.bf16.mxu0 0
      %1559 = vmatpush1.bf16.msra.mxu0 0
      %1560 = vmatprep.subr.bf16.mxu0 0
      %1561 = vmatpush1.bf16.msra.mxu0 0
      %1562 = vmatprep.subr.bf16.mxu0 0
      %1563 = vmatpush1.bf16.msra.mxu0 0
      %1564 = vmatprep.mubr.bf16.mxu0 0
      %1565 = vmatmul.mubr.bf16.gmra.mrb[0].mxu0 %v1029
      %v1566 = vpop.f32.mrb[0].mxu0
      %v1567 = vadd.f32 %v1110, %v1566
      %v1568 = vpop.f32.mrb[0].mxu0
      %v1569 = vadd.f32 %v1114, %v1568
      %v1570 = vpop.f32.mrb[0].mxu0
      %v1571 = vadd.f32 %v1110, %v1570
      %v1572 = vpop.f32.mrb[0].mxu0
      %v1573 = vadd.f32 %v1114, %v1572
      %1574 = vmatprep.mubr.bf16.mxu0 0
      %1575 = vmatmul.mubr.bf16.gmra.mrb[0].mxu0 %v1030
      %v1576 = vpop.f32.mrb[0].mxu0
      %v1577 = vadd.f32 %v1110, %v1576
      %v1578 = vpop.f32.mrb[0].mxu0
      %v1579 = vadd.f32 %v1114, %v1578
      %v1580 = vpop.f32.mrb[0].mxu0
      %v1581 = vadd.f32 %v1110, %v1580
      %v1582 = vpop.f32.mrb[0].mxu0
      %v1583 = vadd.f32 %v1114, %v1582
      %1584 = vmatprep.mubr.bf16.mxu0 0
      %1585 = vmatmul.mubr.bf16.gmra.mrb[0].mxu0 %v1031
      %v1586 = vpop.f32.mrb[0].mxu0
      %v1587 = vadd.f32 %v1110, %v1586
      %v1588 = vpop.f32.mrb[0].mxu0
      %v1589 = vadd.f32 %v1114, %v1588
      %v1590 = vpop.f32.mrb[0].mxu0
      %v1591 = vadd.f32 %v1110, %v1590
      %v1592 = vpop.f32.mrb[0].mxu0
      %v1593 = vadd.f32 %v1114, %v1592
      %1594 = vmatprep.mubr.bf16.mxu0 0
      %1595 = vmatmul.mubr.bf16.gmra.mrb[0].mxu0 %v1032
      %v1596 = vpop.f32.mrb[0].mxu0
      %v1597 = vadd.f32 %v1110, %v1596
      %v1598 = vpop.f32.mrb[0].mxu0
      %v1599 = vadd.f32 %v1114, %v1598
      %v1600 = vpop.f32.mrb[0].mxu0
      %v1601 = vadd.f32 %v1110, %v1600
      %v1602 = vpop.f32.mrb[0].mxu0
      %v1603 = vadd.f32 %v1114, %v1602
      %1604 = vdwg.mxu0
      %1605 = vmatprep.subr.bf16.mxu0 %v1336
      %1606 = vmatpush1.bf16.msra.mxu0 %v1335
      %1607 = vmatprep.subr.bf16.mxu0 %v1344
      %1608 = vmatpush1.bf16.msra.mxu0 %v1343
      %1609 = vmatprep.subr.bf16.mxu0 %v1352
      %1610 = vmatpush1.bf16.msra.mxu0 %v1351
      %1611 = vmatprep.subr.bf16.mxu0 %v1360
      %1612 = vmatpush1.bf16.msra.mxu0 %v1359
      %1613 = vmatprep.subr.bf16.mxu0 %v1368
      %1614 = vmatpush1.bf16.msra.mxu0 %v1367
      %1615 = vmatprep.subr.bf16.mxu0 %v1376
      %1616 = vmatpush1.bf16.msra.mxu0 %v1375
      %1617 = vmatprep.subr.bf16.mxu0 %v1384
      %1618 = vmatpush1.bf16.msra.mxu0 %v1383
      %1619 = vmatprep.subr.bf16.mxu0 %v1392
      %1620 = vmatpush1.bf16.msra.mxu0 %v1391
      %1621 = vmatprep.subr.bf16.mxu0 0
      %1622 = vmatpush1.bf16.msra.mxu0 0
      %1623 = vmatprep.subr.bf16.mxu0 0
      %1624 = vmatpush1.bf16.msra.mxu0 0
      %1625 = vmatprep.subr.bf16.mxu0 0
      %1626 = vmatpush1.bf16.msra.mxu0 0
      %1627 = vmatprep.subr.bf16.mxu0 0
      %1628 = vmatpush1.bf16.msra.mxu0 0
      %1629 = vmatprep.subr.bf16.mxu0 0
      %1630 = vmatpush1.bf16.msra.mxu0 0
      %1631 = vmatprep.subr.bf16.mxu0 0
      %1632 = vmatpush1.bf16.msra.mxu0 0
      %1633 = vmatprep.subr.bf16.mxu0 0
      %1634 = vmatpush1.bf16.msra.mxu0 0
      %1635 = vmatprep.subr.bf16.mxu0 0
      %1636 = vmatpush1.bf16.msra.mxu0 0
      %1637 = vmatprep.mubr.bf16.mxu0 0
      %1638 = vmatmul.mubr.bf16.gmra.mrb[0].mxu0 %v1029
      %v1639 = vpop.f32.mrb[0].mxu0
      %v1640 = vadd.f32 %v1118, %v1639
      %v1641 = vpop.f32.mrb[0].mxu0
      %v1642 = vadd.f32 %v1122, %v1641
      %v1643 = vpop.f32.mrb[0].mxu0
      %v1644 = vadd.f32 %v1118, %v1643
      %v1645 = vpop.f32.mrb[0].mxu0
      %v1646 = vadd.f32 %v1122, %v1645
      %1647 = vmatprep.mubr.bf16.mxu0 0
      %1648 = vmatmul.mubr.bf16.gmra.mrb[0].mxu0 %v1030
      %v1649 = vpop.f32.mrb[0].mxu0
      %v1650 = vadd.f32 %v1118, %v1649
      %v1651 = vpop.f32.mrb[0].mxu0
      %v1652 = vadd.f32 %v1122, %v1651
      %v1653 = vpop.f32.mrb[0].mxu0
      %v1654 = vadd.f32 %v1118, %v1653
      %v1655 = vpop.f32.mrb[0].mxu0
      %v1656 = vadd.f32 %v1122, %v1655
      %1657 = vmatprep.mubr.bf16.mxu0 0
      %1658 = vmatmul.mubr.bf16.gmra.mrb[0].mxu0 %v1031
      %v1659 = vpop.f32.mrb[0].mxu0
      %v1660 = vadd.f32 %v1118, %v1659
      %v1661 = vpop.f32.mrb[0].mxu0
      %v1662 = vadd.f32 %v1122, %v1661
      %v1663 = vpop.f32.mrb[0].mxu0
      %v1664 = vadd.f32 %v1118, %v1663
      %v1665 = vpop.f32.mrb[0].mxu0
      %v1666 = vadd.f32 %v1122, %v1665
      %1667 = vmatprep.mubr.bf16.mxu0 0
      %1668 = vmatmul.mubr.bf16.gmra.mrb[0].mxu0 %v1032
      %v1669 = vpop.f32.mrb[0].mxu0
      %v1670 = vadd.f32 %v1118, %v1669
      %v1671 = vpop.f32.mrb[0].mxu0
      %v1672 = vadd.f32 %v1122, %v1671
      %v1673 = vpop.f32.mrb[0].mxu0
      %v1674 = vadd.f32 %v1118, %v1673
      %v1675 = vpop.f32.mrb[0].mxu0
      %v1676 = vadd.f32 %v1122, %v1675
      %1677 = vdwg.mxu0
      %1678 = vmatprep.subr.bf16.mxu0 %v1338
      %1679 = vmatpush1.bf16.msra.mxu0 %v1337
      %1680 = vmatprep.subr.bf16.mxu0 %v1346
      %1681 = vmatpush1.bf16.msra.mxu0 %v1345
      %1682 = vmatprep.subr.bf16.mxu0 %v1354
      %1683 = vmatpush1.bf16.msra.mxu0 %v1353
      %1684 = vmatprep.subr.bf16.mxu0 %v1362
      %1685 = vmatpush1.bf16.msra.mxu0 %v1361
      %1686 = vmatprep.subr.bf16.mxu0 %v1370
      %1687 = vmatpush1.bf16.msra.mxu0 %v1369
      %1688 = vmatprep.subr.bf16.mxu0 %v1378
      %1689 = vmatpush1.bf16.msra.mxu0 %v1377
      %1690 = vmatprep.subr.bf16.mxu0 %v1386
      %1691 = vmatpush1.bf16.msra.mxu0 %v1385
      %1692 = vmatprep.subr.bf16.mxu0 %v1394
      %1693 = vmatpush1.bf16.msra.mxu0 %v1393
      %1694 = vmatprep.subr.bf16.mxu0 0
      %1695 = vmatpush1.bf16.msra.mxu0 0
      %1696 = vmatprep.subr.bf16.mxu0 0
      %1697 = vmatpush1.bf16.msra.mxu0 0
      %1698 = vmatprep.subr.bf16.mxu0 0
      %1699 = vmatpush1.bf16.msra.mxu0 0
      %1700 = vmatprep.subr.bf16.mxu0 0
      %1701 = vmatpush1.bf16.msra.mxu0 0
      %1702 = vmatprep.subr.bf16.mxu0 0
      %1703 = vmatpush1.bf16.msra.mxu0 0
      %1704 = vmatprep.subr.bf16.mxu0 0
      %1705 = vmatpush1.bf16.msra.mxu0 0
      %1706 = vmatprep.subr.bf16.mxu0 0
      %1707 = vmatpush1.bf16.msra.mxu0 0
      %1708 = vmatprep.subr.bf16.mxu0 0
      %1709 = vmatpush1.bf16.msra.mxu0 0
      %1710 = vmatprep.mubr.bf16.mxu0 0
      %1711 = vmatmul.mubr.bf16.gmra.mrb[0].mxu0 %v1029
      %v1712 = vpop.f32.mrb[0].mxu0
      %v1713 = vadd.f32 %v1126, %v1712
      %v1714 = vpop.f32.mrb[0].mxu0
      %v1715 = vadd.f32 %v1130, %v1714
      %v1716 = vpop.f32.mrb[0].mxu0
      %v1717 = vadd.f32 %v1126, %v1716
      %v1718 = vpop.f32.mrb[0].mxu0
      %v1719 = vadd.f32 %v1130, %v1718
      %1720 = vmatprep.mubr.bf16.mxu0 0
      %1721 = vmatmul.mubr.bf16.gmra.mrb[0].mxu0 %v1030
      %v1722 = vpop.f32.mrb[0].mxu0
      %v1723 = vadd.f32 %v1126, %v1722
      %v1724 = vpop.f32.mrb[0].mxu0
      %v1725 = vadd.f32 %v1130, %v1724
      %v1726 = vpop.f32.mrb[0].mxu0
      %v1727 = vadd.f32 %v1126, %v1726
      %v1728 = vpop.f32.mrb[0].mxu0
      %v1729 = vadd.f32 %v1130, %v1728
      %1730 = vmatprep.mubr.bf16.mxu0 0
      %1731 = vmatmul.mubr.bf16.gmra.mrb[0].mxu0 %v1031
      %v1732 = vpop.f32.mrb[0].mxu0
      %v1733 = vadd.f32 %v1126, %v1732
      %v1734 = vpop.f32.mrb[0].mxu0
      %v1735 = vadd.f32 %v1130, %v1734
      %v1736 = vpop.f32.mrb[0].mxu0
      %v1737 = vadd.f32 %v1126, %v1736
      %v1738 = vpop.f32.mrb[0].mxu0
      %v1739 = vadd.f32 %v1130, %v1738
      %1740 = vmatprep.mubr.bf16.mxu0 0
      %1741 = vmatmul.mubr.bf16.gmra.mrb[0].mxu0 %v1032
      %v1742 = vpop.f32.mrb[0].mxu0
      %v1743 = vadd.f32 %v1126, %v1742
      %v1744 = vpop.f32.mrb[0].mxu0
      %v1745 = vadd.f32 %v1130, %v1744
      %v1746 = vpop.f32.mrb[0].mxu0
      %v1747 = vadd.f32 %v1126, %v1746
      %v1748 = vpop.f32.mrb[0].mxu0
      %v1749 = vadd.f32 %v1130, %v1748
      %1750 = vdwg.mxu0
      %v1751 = vmax.f32 %v1494, 0.0
      %v1752 = vmax.f32 %v1496, 0.0
      %v1753 = vmax.f32 %v1567, 0.0
      %v1754 = vmax.f32 %v1569, 0.0
      %v1755 = vmax.f32 %v1640, 0.0
      %v1756 = vmax.f32 %v1642, 0.0
      %v1757 = vmax.f32 %v1713, 0.0
      %v1758 = vmax.f32 %v1715, 0.0
      %v1759 = vmax.f32 %v1498, 0.0
      %v1760 = vmax.f32 %v1500, 0.0
      %v1761 = vmax.f32 %v1571, 0.0
      %v1762 = vmax.f32 %v1573, 0.0
      %v1763 = vmax.f32 %v1644, 0.0
      %v1764 = vmax.f32 %v1646, 0.0
      %v1765 = vmax.f32 %v1717, 0.0
      %v1766 = vmax.f32 %v1719, 0.0
      %v1767 = vmax.f32 %v1504, 0.0
      %v1768 = vmax.f32 %v1506, 0.0
      %v1769 = vmax.f32 %v1577, 0.0
      %v1770 = vmax.f32 %v1579, 0.0
      %v1771 = vmax.f32 %v1650, 0.0
      %v1772 = vmax.f32 %v1652, 0.0
      %v1773 = vmax.f32 %v1723, 0.0
      %v1774 = vmax.f32 %v1725, 0.0
      %v1775 = vmax.f32 %v1508, 0.0
      %v1776 = vmax.f32 %v1510, 0.0
      %v1777 = vmax.f32 %v1581, 0.0
      %v1778 = vmax.f32 %v1583, 0.0
      %v1779 = vmax.f32 %v1654, 0.0
      %v1780 = vmax.f32 %v1656, 0.0
      %v1781 = vmax.f32 %v1727, 0.0
      %v1782 = vmax.f32 %v1729, 0.0
      %v1783 = vmax.f32 %v1514, 0.0
      %v1784 = vmax.f32 %v1516, 0.0
      %v1785 = vmax.f32 %v1587, 0.0
      %v1786 = vmax.f32 %v1589, 0.0
      %v1787 = vmax.f32 %v1660, 0.0
      %v1788 = vmax.f32 %v1662, 0.0
      %v1789 = vmax.f32 %v1733, 0.0
      %v1790 = vmax.f32 %v1735, 0.0
      %v1791 = vmax.f32 %v1518, 0.0
      %v1792 = vmax.f32 %v1520, 0.0
      %v1793 = vmax.f32 %v1591, 0.0
      %v1794 = vmax.f32 %v1593, 0.0
      %v1795 = vmax.f32 %v1664, 0.0
      %v1796 = vmax.f32 %v1666, 0.0
      %v1797 = vmax.f32 %v1737, 0.0
      %v1798 = vmax.f32 %v1739, 0.0
      %v1799 = vmax.f32 %v1524, 0.0
      %v1800 = vmax.f32 %v1526, 0.0
      %v1801 = vmax.f32 %v1597, 0.0
      %v1802 = vmax.f32 %v1599, 0.0
      %v1803 = vmax.f32 %v1670, 0.0
      %v1804 = vmax.f32 %v1672, 0.0
      %v1805 = vmax.f32 %v1743, 0.0
      %v1806 = vmax.f32 %v1745, 0.0
      %v1807 = vmax.f32 %v1528, 0.0
      %v1808 = vmax.f32 %v1530, 0.0
      %v1809 = vmax.f32 %v1601, 0.0
      %v1810 = vmax.f32 %v1603, 0.0
      %v1811 = vmax.f32 %v1674, 0.0
      %v1812 = vmax.f32 %v1676, 0.0
      %v1813 = vmax.f32 %v1747, 0.0
      %v1814 = vmax.f32 %v1749, 0.0
      %v1815 = vadd.f32 %v1751, %v1759
      %v1816 = vadd.f32 %v1815, %v1767
      %v1817 = vadd.f32 %v1816, %v1775
      %v1818 = vadd.f32 %v1817, %v1783
      %v1819 = vadd.f32 %v1818, %v1791
      %v1820 = vadd.f32 %v1819, %v1799
      %v1821 = vadd.f32 %v1820, %v1807
      %v1822 = vrot.slane %v1821, 4
      %v1823 = vadd.f32 %v1821, %v1822
      %v1824 = vrot.slane %v1823, 2
      %v1825 = vadd.f32 %v1823, %v1824
      %v1826 = vrot.slane %v1825, 1
      %v1827 = vadd.f32 %v1825, %v1826
      %v1828 = vadd.f32 %v1752, %v1760
      %v1829 = vadd.f32 %v1828, %v1768
      %v1830 = vadd.f32 %v1829, %v1776
      %v1831 = vadd.f32 %v1830, %v1784
      %v1832 = vadd.f32 %v1831, %v1792
      %v1833 = vadd.f32 %v1832, %v1800
      %v1834 = vadd.f32 %v1833, %v1808
      %v1835 = vrot.slane %v1834, 4
      %v1836 = vadd.f32 %v1834, %v1835
      %v1837 = vrot.slane %v1836, 2
      %v1838 = vadd.f32 %v1836, %v1837
      %v1839 = vrot.slane %v1838, 1
      %v1840 = vadd.f32 %v1838, %v1839
      %v1841 = vadd.f32 %v1753, %v1761
      %v1842 = vadd.f32 %v1841, %v1769
      %v1843 = vadd.f32 %v1842, %v1777
      %v1844 = vadd.f32 %v1843, %v1785
      %v1845 = vadd.f32 %v1844, %v1793
      %v1846 = vadd.f32 %v1845, %v1801
      %v1847 = vadd.f32 %v1846, %v1809
      %v1848 = vrot.slane %v1847, 4
      %v1849 = vadd.f32 %v1847, %v1848
      %v1850 = vrot.slane %v1849, 2
      %v1851 = vadd.f32 %v1849, %v1850
      %v1852 = vrot.slane %v1851, 1
      %v1853 = vadd.f32 %v1851, %v1852
      %v1854 = vadd.f32 %v1754, %v1762
      %v1855 = vadd.f32 %v1854, %v1770
      %v1856 = vadd.f32 %v1855, %v1778
      %v1857 = vadd.f32 %v1856, %v1786
      %v1858 = vadd.f32 %v1857, %v1794
      %v1859 = vadd.f32 %v1858, %v1802
      %v1860 = vadd.f32 %v1859, %v1810
      %v1861 = vrot.slane %v1860, 4
      %v1862 = vadd.f32 %v1860, %v1861
      %v1863 = vrot.slane %v1862, 2
      %v1864 = vadd.f32 %v1862, %v1863
      %v1865 = vrot.slane %v1864, 1
      %v1866 = vadd.f32 %v1864, %v1865
      %v1867 = vadd.f32 %v1755, %v1763
      %v1868 = vadd.f32 %v1867, %v1771
      %v1869 = vadd.f32 %v1868, %v1779
      %v1870 = vadd.f32 %v1869, %v1787
      %v1871 = vadd.f32 %v1870, %v1795
      %v1872 = vadd.f32 %v1871, %v1803
      %v1873 = vadd.f32 %v1872, %v1811
      %v1874 = vrot.slane %v1873, 4
      %v1875 = vadd.f32 %v1873, %v1874
      %v1876 = vrot.slane %v1875, 2
      %v1877 = vadd.f32 %v1875, %v1876
      %v1878 = vrot.slane %v1877, 1
      %v1879 = vadd.f32 %v1877, %v1878
      %v1880 = vadd.f32 %v1756, %v1764
      %v1881 = vadd.f32 %v1880, %v1772
      %v1882 = vadd.f32 %v1881, %v1780
      %v1883 = vadd.f32 %v1882, %v1788
      %v1884 = vadd.f32 %v1883, %v1796
      %v1885 = vadd.f32 %v1884, %v1804
      %v1886 = vadd.f32 %v1885, %v1812
      %v1887 = vrot.slane %v1886, 4
      %v1888 = vadd.f32 %v1886, %v1887
      %v1889 = vrot.slane %v1888, 2
      %v1890 = vadd.f32 %v1888, %v1889
      %v1891 = vrot.slane %v1890, 1
      %v1892 = vadd.f32 %v1890, %v1891
      %v1893 = vadd.f32 %v1757, %v1765
      %v1894 = vadd.f32 %v1893, %v1773
      %v1895 = vadd.f32 %v1894, %v1781
      %v1896 = vadd.f32 %v1895, %v1789
      %v1897 = vadd.f32 %v1896, %v1797
      %v1898 = vadd.f32 %v1897, %v1805
      %v1899 = vadd.f32 %v1898, %v1813
      %v1900 = vrot.slane %v1899, 4
      %v1901 = vadd.f32 %v1899, %v1900
      %v1902 = vrot.slane %v1901, 2
      %v1903 = vadd.f32 %v1901, %v1902
      %v1904 = vrot.slane %v1903, 1
      %v1905 = vadd.f32 %v1903, %v1904
      %v1906 = vadd.f32 %v1758, %v1766
      %v1907 = vadd.f32 %v1906, %v1774
      %v1908 = vadd.f32 %v1907, %v1782
      %v1909 = vadd.f32 %v1908, %v1790
      %v1910 = vadd.f32 %v1909, %v1798
      %v1911 = vadd.f32 %v1910, %v1806
      %v1912 = vadd.f32 %v1911, %v1814
      %v1913 = vrot.slane %v1912, 4
      %v1914 = vadd.f32 %v1912, %v1913
      %v1915 = vrot.slane %v1914, 2
      %v1916 = vadd.f32 %v1914, %v1915
      %v1917 = vrot.slane %v1916, 1
      %v1918 = vadd.f32 %v1916, %v1917
      %v1927 = vcombine.low %v1827, %v1840
      %v1928 = vcombine.low %v1853, %v1866
      %v1929 = vcombine.low %v1879, %v1892
      %v1930 = vcombine.low %v1905, %v1918
      %v1932 = vunpack.c.l.s4 1966171168
      %v1933 = vunpack.c.0.s8 %v1932
      %v1934 = vlaneseq
      %v1935 = vshrl.u32 %v1934, 7
      %v1936 = vsub.s32 %v1933, %v1935
      %v1937 = vrot.slane %v1927, %v1936
      %v1939 = vunpack.c.l.s4 1966171168
      %v1940 = vunpack.c.0.s8 %v1939
      %v1941 = vlaneseq
      %v1942 = vshrl.u32 %v1941, 7
      %v1943 = vsub.s32 %v1940, %v1942
      %v1944 = vrot.slane %v1928, %v1943
      %v1946 = vunpack.c.l.s4 1966171168
      %v1947 = vunpack.c.0.s8 %v1946
      %v1948 = vlaneseq
      %v1949 = vshrl.u32 %v1948, 7
      %v1950 = vsub.s32 %v1947, %v1949
      %v1951 = vrot.slane %v1929, %v1950
      %v1953 = vunpack.c.l.s4 1966171168
      %v1954 = vunpack.c.0.s8 %v1953
      %v1955 = vlaneseq
      %v1956 = vshrl.u32 %v1955, 7
      %v1957 = vsub.s32 %v1954, %v1956
      %v1958 = vrot.slane %v1930, %v1957
      %v1959 = vcombine.low %v1937, %v1944
      %v1960 = vcombine.low %v1951, %v1958
      %v1962 = vunpack.c.l.s4 1966171168
      %v1963 = vunpack.c.0.s8 %v1962
      %v1964 = vlaneseq
      %v1965 = vshrl.u32 %v1964, 7
      %v1966 = vsub.s32 %v1963, %v1965
      %v1967 = vrot.slane %v1959, %v1966
      %v1969 = vunpack.c.l.s4 1966171168
      %v1970 = vunpack.c.0.s8 %v1969
      %v1971 = vlaneseq
      %v1972 = vshrl.u32 %v1971, 7
      %v1973 = vsub.s32 %v1970, %v1972
      %v1974 = vrot.slane %v1960, %v1973
      %v1975 = vcombine.low %v1967, %v1974
      %1977 = vst [vmem:[%s473] sm:$0xff] %v1975
      %s1978 = smul.u32 8, %s29
      %p1979 = scmp.lt.s32.totalorder %s28, 1
      %s1980 = scalar_select %p1979, %s28, 1
      %p1981 = scmp.lt.s32.totalorder %s1978, 7
      %s1982 = scalar_select %p1981, %s1978, 7
      %s1983 = smul.addr %s1980, 8
      %s1984 = sadd.s32 %s1982, %s1983
      %s1985 = smul.addr %s1984, 4
      %s1986 = scalar_lea.vmem %s11, %s1985
      %p1987 = scmp.lt.s32.totalorder %s28, 1
      %s1988 = scalar_select %p1987, %s28, 1
      %p1989 = scmp.lt.s32.totalorder %s29, 0
      %s1990 = scalar_select %p1989, %s29, 0
      %s1991 = smul.addr %s1990, 8
      %s1992 = smul.addr %s1988, 8
      %s1993 = sadd.s32 %s1991, %s1992
      %s1994 = scalar_lea.vmem %s12, %s1993
      // Predicated region
      $region65: #{deformnet_forward.5} parent=63 // pred_check
        %p1995 = pneg %p294
      $region66: #{deformnet_forward.5} parent=63 // pred_check_branch
        %1997 = sbr.rel (%p1995) target = $region68
      $region67: #{deformnet_forward.5} parent=63 // pred_region
        %s1998 = smul.u32 8, %s29
      $region68: #{deformnet_forward.5} parent=63 // pred_fallthru
        _
      // Predicated region
      $region69: #{deformnet_forward.5} parent=63 // pred_check
        %p1999 = pneg %p322
      $region70: #{deformnet_forward.5} parent=63 // pred_check_branch
        %2001 = sbr.rel (%p1999) target = $region72
      $region71: #{deformnet_forward.5} parent=63 // pred_region
        _
      $region72: #{deformnet_forward.5} parent=63 // pred_fallthru
        _
    $region64: #{deformnet_forward.5} parent=5 // pred_fallthru
      _
    %p2002 = scmp.le.s32.totalorder 2, %s19
    // Predicated region
    $region73: #{deformnet_forward.5} parent=5 // pred_check
      %p2003 = pneg %p2002
    $region74: #{deformnet_forward.5} parent=5 // pred_check_branch
      %2005 = sbr.rel (%p2003) target = $region76
    $region75: #{deformnet_forward.5} parent=5 // pred_region
      %s2006 = ssub.s32 %s19, 2
      // Predicated region
      $region77: #{deformnet_forward.5} parent=75 // pred_check
        %p2007 = pneg %p300
      $region78: #{deformnet_forward.5} parent=75 // pred_check_branch
        %2009 = sbr.rel (%p2007) target = $region80
      $region79: #{deformnet_forward.5} parent=75 // pred_region
        %s2010 = smul.u32 8, %s31
        %p2011 = scmp.lt.s32.totalorder %s30, 1
        %s2012 = scalar_select %p2011, %s30, 1
        %p2013 = scmp.lt.s32.totalorder %s2010, 7
        %s2014 = scalar_select %p2013, %s2010, 7
        %s2015 = smul.addr %s2012, 8
        %s2016 = sadd.s32 %s2014, %s2015
        %s2017 = smul.addr %s2016, 4
        %s2018 = scalar_lea.vmem %s11, %s2017
      $region80: #{deformnet_forward.5} parent=75 // pred_fallthru
        _
      // Predicated region
      $region81: #{deformnet_forward.5} parent=75 // pred_check
        %p2019 = pneg %p328
      $region82: #{deformnet_forward.5} parent=75 // pred_check_branch
        %2021 = sbr.rel (%p2019) target = $region84
      $region83: #{deformnet_forward.5} parent=75 // pred_region
        %p2022 = scmp.lt.s32.totalorder %s30, 1
        %s2023 = scalar_select %p2022, %s30, 1
        %p2024 = scmp.lt.s32.totalorder %s31, 0
        %s2025 = scalar_select %p2024, %s31, 0
        %s2026 = smul.addr %s2025, 8
        %s2027 = smul.addr %s2023, 8
        %s2028 = sadd.s32 %s2026, %s2027
        %s2029 = scalar_lea.vmem %s12, %s2028
      $region84: #{deformnet_forward.5} parent=75 // pred_fallthru
        _
    $region76: #{deformnet_forward.5} parent=5 // pred_fallthru
      _
  $region6: #{deformnet_forward.5} parent=0 // loop_footer
    %s23 = sadd.s32 1, %s19
  $region7: #{deformnet_forward.5} parent=0 // loop_footer_branch
    %18 = sbr.rel target = $region3
  $region8: #{deformnet_forward.5} parent=0 // loop_exit
    _

// kernel: deformnet_forward.6
$region0: #{deformnet_forward.6}
  #allocation0 [shape = 'u32[]', space=smem, size = 0x4, offset = 0x4, fixed_abs, tag = 'smem constant byte address 0x4 - core index']
  #allocation1 [shape = 'u32[144,128]{1,0:T(1,128)}', space=vmem, size = 0x12000, scoped, tag = 'internal scratch']
  #allocation2 [shape = 's32[1]{0}', space=sflag, size = 0x4, scoped, tag = 'scoped memory for deformnet_forward.6']
  #allocation3 [shape = 'u8[512]{0}', space=smem, size = 0x200, scoped, tag = 'prefetched SMEM operand 0']
  %s0 = inlined_call_operand.vmem [shape: s32[2], index: 0, kind: input, shape index: {}]
  %s1 = inlined_call_operand.vmem [shape: bf16[2,64,128], index: 1, kind: input, shape index: {}]
  %s2 = inlined_call_operand.vmem [shape: f32[2,1,512], index: 2, kind: input, shape index: {}]
  %s3 = inlined_call_operand.vmem [shape: bf16[128,512], index: 3, kind: input, shape index: {}]
  %s4 = inlined_call_operand.vmem [shape: bf16[512,256], index: 4, kind: input, shape index: {}]
  %s5 = inlined_call_operand.vmem [shape: f32[1,256], index: 5, kind: input, shape index: {}]
  %s6 = inlined_call_operand.vmem [shape: bf16[6,256,128], index: 6, kind: input, shape index: {}]
  %s7 = inlined_call_operand.vmem [shape: f32[6,1,128], index: 7, kind: input, shape index: {}]
  %s8 = inlined_call_operand.hbm [shape: f32[2,64,128], index: 8, kind: output, shape index: {}]
  %s9 = sld [smem:[#allocation0]]
  $region61: #{deformnet_forward.6} parent=0
    _
  %s11 = ssub.s32 1, %s9
  %s12 = scalar_select 0, %s11, %s9
  %s13 = sshll.u32 %s0, 4
  %s14 = int_to_ptr.vmem [resolvable:$true] %s13
  %16 = dma.vmem_to_smem %s14, 16, [#allocation3], [#allocation2]
  %17 = dma.done [#allocation2], 16
  %18 = sfence
  $region1: #{deformnet_forward.6} parent=0
    #allocation4 [shape = 'u8[65536]{0}', space=vmem, size = 0x10000, scoped, tag = 'output window, operand 0']
    #allocation5 [shape = 's32[2]{0}', space=sflag, size = 0x8, scoped, tag = 'scoped memory for deformnet_forward.6']
    %19 = vsyncpa [#allocation5], 0
    %s20 = scalar_lea.sflag [#allocation5], 1
    %21 = vsyncpa %s20, 0
    loop: start=0, step=1, limit=4
    $region2: #{deformnet_forward.6} parent=1 // loop_pre_header
      _
    $region3: #{deformnet_forward.6} parent=1 // loop_header
      %s23 = sphi 0, %s27
      %p24 = scmp.ge.s32.totalorder %s23, 4
      %s30 = sphi 0, %s42
      %s31 = sphi 0, %s38
      %s32 = sphi 0, %s30
      %s33 = sphi 0, %s31
      %s34 = sphi 0, %s32
      %s35 = sphi 0, %s33
      %s47 = sphi 0, %s49
      %s50 = sphi 0, %s47
      %s51 = sphi 0, %s50
      %s67 = sphi 0, %s51
      %s73 = sphi 0, %s75
      %s76 = sphi 0, %s73
      %s77 = sphi 0, %s76
      %s93 = sphi 0, %s77
      %s97 = sphi 0, %s97
      %s99 = sphi 0, %s97
      %s100 = sphi 0, %s99
      %s114 = sphi 0, %s100
      %s118 = sphi 0, %s118
      %s120 = sphi 0, %s118
      %s121 = sphi 0, %s120
      %s135 = sphi 0, %s121
      %s139 = sphi 0, %s139
      %s141 = sphi 0, %s139
      %s142 = sphi 0, %s141
      %s156 = sphi 0, %s142
      %s164 = sphi 0, %s166
      %s167 = sphi 0, %s164
      %s168 = sphi 0, %s167
      %s184 = sphi 0, %s168
      %s192 = sphi 0, %s194
      %s195 = sphi 0, %s192
      %s196 = sphi 0, %s195
      %s212 = sphi 0, %s196
      %s220 = sphi 0, %s222
      %s223 = sphi 0, %s220
      %s224 = sphi 0, %s223
      %s240 = sphi 0, %s224
    $region4: #{deformnet_forward.6} parent=1 // loop_header_branch
      %26 = sbr.rel (%p24) target = $region8
    $region5: #{deformnet_forward.6} parent=1 // loop_body
      %s28 = ssub.s32 %s23, 1
      %s29 = ssub.s32 %s23, 2
      %s36 = sadd.s32 1, %s31
      %p37 = scmp.ge.s32.totalorder %s36, 1
      %s38 = scalar_select %p37, 0, %s36
      %s39 = sadd.s32 1, %s30
      %s40 = scalar_select %p37, %s39, %s30
      %p41 = scmp.ge.s32.totalorder %s40, 2
      %s42 = scalar_select %p41, 0, %s40
      %s43 = ssub.s32 %s30, %s42
      %s44 = ssub.s32 %s31, %s38
      %s45 = sor.u32 %s43, %s44
      %p46 = scmp.eq.s32.totalorder %s45, 0
      %s48 = sadd.s32 %s47, 1
      %s49 = scalar_select %p46, %s47, %s48
      %p52 = pneg %p46
      %p53 = scmp.eq.s32.totalorder %s23, 1
      %p54 = por %p52, %p53
      %p55 = scmp.ne.s32.totalorder %s47, %s50
      %p56 = scmp.eq.s32.totalorder %s23, 0
      %p57 = por %p55, %p56
      %p58 = scmp.ne.s32.totalorder %s47, %s50
      %p59 = scmp.eq.s32.totalorder %s28, 1
      %p60 = por %p58, %p59
      %p61 = scmp.ne.s32.totalorder %s50, %s51
      %p62 = scmp.eq.s32.totalorder %s28, 0
      %p63 = por %p61, %p62
      %p64 = scmp.ne.s32.totalorder %s50, %s51
      %p65 = scmp.eq.s32.totalorder %s29, 1
      %p66 = por %p64, %p65
      %p68 = scmp.ne.s32.totalorder %s51, %s67
      %p69 = scmp.eq.s32.totalorder %s29, 0
      %p70 = por %p68, %p69
      %s71 = ssub.s32 %s30, %s42
      %p72 = scmp.eq.s32.totalorder %s71, 0
      %s74 = sadd.s32 %s73, 1
      %s75 = scalar_select %p72, %s73, %s74
      %p78 = pneg %p72
      %p79 = scmp.eq.s32.totalorder %s23, 1
      %p80 = por %p78, %p79
      %p81 = scmp.ne.s32.totalorder %s73, %s76
      %p82 = scmp.eq.s32.totalorder %s23, 0
      %p83 = por %p81, %p82
      %p84 = scmp.ne.s32.totalorder %s73, %s76
      %p85 = scmp.eq.s32.totalorder %s28, 1
      %p86 = por %p84, %p85
      %p87 = scmp.ne.s32.totalorder %s76, %s77
      %p88 = scmp.eq.s32.totalorder %s28, 0
      %p89 = por %p87, %p88
      %p90 = scmp.ne.s32.totalorder %s76, %s77
      %p91 = scmp.eq.s32.totalorder %s29, 1
      %p92 = por %p90, %p91
      %p94 = scmp.ne.s32.totalorder %s77, %s93
      %p95 = scmp.eq.s32.totalorder %s29, 0
      %p96 = por %p94, %p95
      %s98 = sadd.s32 %s97, 1
      %p101 = scmp.eq.s32.totalorder %s23, 1
      %p102 = scmp.ne.s32.totalorder %s97, %s99
      %p103 = scmp.eq.s32.totalorder %s23, 0
      %p104 = por %p102, %p103
      %p105 = scmp.ne.s32.totalorder %s97, %s99
      %p106 = scmp.eq.s32.totalorder %s28, 1
      %p107 = por %p105, %p106
      %p108 = scmp.ne.s32.totalorder %s99, %s100
      %p109 = scmp.eq.s32.totalorder %s28, 0
      %p110 = por %p108, %p109
      %p111 = scmp.ne.s32.totalorder %s99, %s100
      %p112 = scmp.eq.s32.totalorder %s29, 1
      %p113 = por %p111, %p112
      %p115 = scmp.ne.s32.totalorder %s100, %s114
      %p116 = scmp.eq.s32.totalorder %s29, 0
      %p117 = por %p115, %p116
      %s119 = sadd.s32 %s118, 1
      %p122 = scmp.eq.s32.totalorder %s23, 1
      %p123 = scmp.ne.s32.totalorder %s118, %s120
      %p124 = scmp.eq.s32.totalorder %s23, 0
      %p125 = por %p123, %p124
      %p126 = scmp.ne.s32.totalorder %s118, %s120
      %p127 = scmp.eq.s32.totalorder %s28, 1
      %p128 = por %p126, %p127
      %p129 = scmp.ne.s32.totalorder %s120, %s121
      %p130 = scmp.eq.s32.totalorder %s28, 0
      %p131 = por %p129, %p130
      %p132 = scmp.ne.s32.totalorder %s120, %s121
      %p133 = scmp.eq.s32.totalorder %s29, 1
      %p134 = por %p132, %p133
      %p136 = scmp.ne.s32.totalorder %s121, %s135
      %p137 = scmp.eq.s32.totalorder %s29, 0
      %p138 = por %p136, %p137
      %s140 = sadd.s32 %s139, 1
      %p143 = scmp.eq.s32.totalorder %s23, 1
      %p144 = scmp.ne.s32.totalorder %s139, %s141
      %p145 = scmp.eq.s32.totalorder %s23, 0
      %p146 = por %p144, %p145
      %p147 = scmp.ne.s32.totalorder %s139, %s141
      %p148 = scmp.eq.s32.totalorder %s28, 1
      %p149 = por %p147, %p148
      %p150 = scmp.ne.s32.totalorder %s141, %s142
      %p151 = scmp.eq.s32.totalorder %s28, 0
      %p152 = por %p150, %p151
      %p153 = scmp.ne.s32.totalorder %s141, %s142
      %p154 = scmp.eq.s32.totalorder %s29, 1
      %p155 = por %p153, %p154
      %p157 = scmp.ne.s32.totalorder %s142, %s156
      %p158 = scmp.eq.s32.totalorder %s29, 0
      %p159 = por %p157, %p158
      %s160 = sld [smem:[#allocation3 + %s30]]
      %s161 = sld [smem:[#allocation3 + %s42]]
      %s162 = ssub.s32 %s160, %s161
      %p163 = scmp.eq.s32.totalorder %s162, 0
      %s165 = sadd.s32 %s164, 1
      %s166 = scalar_select %p163, %s164, %s165
      %p169 = pneg %p163
      %p170 = scmp.eq.s32.totalorder %s23, 1
      %p171 = por %p169, %p170
      %p172 = scmp.ne.s32.totalorder %s164, %s167
      %p173 = scmp.eq.s32.totalorder %s23, 0
      %p174 = por %p172, %p173
      %p175 = scmp.ne.s32.totalorder %s164, %s167
      %p176 = scmp.eq.s32.totalorder %s28, 1
      %p177 = por %p175, %p176
      %p178 = scmp.ne.s32.totalorder %s167, %s168
      %p179 = scmp.eq.s32.totalorder %s28, 0
      %p180 = por %p178, %p179
      %p181 = scmp.ne.s32.totalorder %s167, %s168
      %p182 = scmp.eq.s32.totalorder %s29, 1
      %p183 = por %p181, %p182
      %p185 = scmp.ne.s32.totalorder %s168, %s184
      %p186 = scmp.eq.s32.totalorder %s29, 0
      %p187 = por %p185, %p186
      %s188 = sld [smem:[#allocation3 + %s30]]
      %s189 = sld [smem:[#allocation3 + %s42]]
      %s190 = ssub.s32 %s188, %s189
      %p191 = scmp.eq.s32.totalorder %s190, 0
      %s193 = sadd.s32 %s192, 1
      %s194 = scalar_select %p191, %s192, %s193
      %p197 = pneg %p191
      %p198 = scmp.eq.s32.totalorder %s23, 1
      %p199 = por %p197, %p198
      %p200 = scmp.ne.s32.totalorder %s192, %s195
      %p201 = scmp.eq.s32.totalorder %s23, 0
      %p202 = por %p200, %p201
      %p203 = scmp.ne.s32.totalorder %s192, %s195
      %p204 = scmp.eq.s32.totalorder %s28, 1
      %p205 = por %p203, %p204
      %p206 = scmp.ne.s32.totalorder %s195, %s196
      %p207 = scmp.eq.s32.totalorder %s28, 0
      %p208 = por %p206, %p207
      %p209 = scmp.ne.s32.totalorder %s195, %s196
      %p210 = scmp.eq.s32.totalorder %s29, 1
      %p211 = por %p209, %p210
      %p213 = scmp.ne.s32.totalorder %s196, %s212
      %p214 = scmp.eq.s32.totalorder %s29, 0
      %p215 = por %p213, %p214
      %s216 = ssub.s32 %s30, %s42
      %s217 = ssub.s32 %s31, %s38
      %s218 = sor.u32 %s216, %s217
      %p219 = scmp.eq.s32.totalorder %s218, 0
      %s221 = sadd.s32 %s220, 1
      %s222 = scalar_select %p219, %s220, %s221
      %p225 = pneg %p219
      %p226 = scmp.eq.s32.totalorder %s23, 1
      %p227 = por %p225, %p226
      %p228 = scmp.ne.s32.totalorder %s220, %s223
      %p229 = scmp.eq.s32.totalorder %s23, 0
      %p230 = por %p228, %p229
      %p231 = scmp.ne.s32.totalorder %s220, %s223
      %p232 = scmp.eq.s32.totalorder %s28, 1
      %p233 = por %p231, %p232
      %p234 = scmp.ne.s32.totalorder %s223, %s224
      %p235 = scmp.eq.s32.totalorder %s28, 0
      %p236 = por %p234, %p235
      %p237 = scmp.ne.s32.totalorder %s223, %s224
      %p238 = scmp.eq.s32.totalorder %s29, 1
      %p239 = por %p237, %p238
      %p241 = scmp.ne.s32.totalorder %s224, %s240
      %p242 = scmp.eq.s32.totalorder %s29, 0
      %p243 = por %p241, %p242
      %p244 = scmp.le.s32.totalorder 1, %s23
      %p245 = scmp.lt.s32.totalorder %s23, 3
      %p246 = pnand %p244, %p245
      %p247 = pneg %p246
      // Predicated region
      $region9: #{deformnet_forward.6} parent=5 // pred_check
        _
      $region10: #{deformnet_forward.6} parent=5 // pred_check_branch
        %249 = sbr.rel (%p246) target = $region12
      $region11: #{deformnet_forward.6} parent=5 // pred_region
        %s250 = ssub.s32 %s23, 1
        // Predicated region
        $region13: #{deformnet_forward.6} parent=11 // pred_check
          %p251 = pneg %p110
        $region14: #{deformnet_forward.6} parent=11 // pred_check_branch
          %253 = sbr.rel (%p251) target = $region16
        $region15: #{deformnet_forward.6} parent=11 // pred_region
          _
        $region16: #{deformnet_forward.6} parent=11 // pred_fallthru
          _
        // Predicated region
        $region17: #{deformnet_forward.6} parent=11 // pred_check
          %p254 = pneg %p131
        $region18: #{deformnet_forward.6} parent=11 // pred_check_branch
          %256 = sbr.rel (%p254) target = $region20
        $region19: #{deformnet_forward.6} parent=11 // pred_region
          _
        $region20: #{deformnet_forward.6} parent=11 // pred_fallthru
          _
        // Predicated region
        $region21: #{deformnet_forward.6} parent=11 // pred_check
          %p257 = pneg %p152
        $region22: #{deformnet_forward.6} parent=11 // pred_check_branch
          %259 = sbr.rel (%p257) target = $region24
        $region23: #{deformnet_forward.6} parent=11 // pred_region
          _
        $region24: #{deformnet_forward.6} parent=11 // pred_fallthru
          _
      $region12: #{deformnet_forward.6} parent=5 // pred_fallthru
        _
      %p260 = scmp.lt.s32.totalorder %s23, 2
      // Predicated region
      $region25: #{deformnet_forward.6} parent=5 // pred_check
        %p261 = pneg %p260
      $region26: #{deformnet_forward.6} parent=5 // pred_check_branch
        %263 = sbr.rel (%p261) target = $region28
      $region27: #{deformnet_forward.6} parent=5 // pred_region
        // Predicated region
        $region29: #{deformnet_forward.6} parent=27 // pred_check
          %p264 = pneg %p57
        $region30: #{deformnet_forward.6} parent=27 // pred_check_branch
          %266 = sbr.rel (%p264) target = $region32
        $region31: #{deformnet_forward.6} parent=27 // pred_region
          %s267 = smul.u32 8, %s31
          %p268 = scmp.lt.s32.totalorder %s30, 1
          %s269 = scalar_select %p268, %s30, 1
          %p270 = scmp.lt.s32.totalorder %s267, 7
          %s271 = scalar_select %p270, %s267, 7
          %s272 = smul.addr %s269, 8
          %s273 = sadd.s32 %s271, %s272
          %s274 = smul.addr %s273, 4
          %s275 = scalar_lea.vmem %s1, %s274
          %s276 = smul.u32 8, %s31
        $region32: #{deformnet_forward.6} parent=27 // pred_fallthru
          _
        // Predicated region
        $region33: #{deformnet_forward.6} parent=27 // pred_check
          %p277 = pneg %p83
        $region34: #{deformnet_forward.6} parent=27 // pred_check_branch
          %279 = sbr.rel (%p277) target = $region36
        $region35: #{deformnet_forward.6} parent=27 // pred_region
          %p280 = scmp.lt.s32.totalorder %s30, 1
          %s281 = scalar_select %p280, %s30, 1
          %s282 = smul.addr %s281, 4
          %s283 = scalar_lea.vmem %s2, %s282
        $region36: #{deformnet_forward.6} parent=27 // pred_fallthru
          _
        // Predicated region
        $region37: #{deformnet_forward.6} parent=27 // pred_check
          %p284 = pneg %p174
        $region38: #{deformnet_forward.6} parent=27 // pred_check_branch
          %286 = sbr.rel (%p284) target = $region40
        $region39: #{deformnet_forward.6} parent=27 // pred_region
          %s287 = sld [smem:[#allocation3 + %s30]]
          %p288 = scmp.lt.s32.totalorder %s287, 5
          %s289 = scalar_select %p288, %s287, 5
          %s290 = smul.addr %s289, 32
          %s291 = smul.addr %s290, 4
          %s292 = scalar_lea.vmem %s6, %s291
          %s293 = sld [smem:[#allocation3 + %s30]]
        $region40: #{deformnet_forward.6} parent=27 // pred_fallthru
          _
        // Predicated region
        $region41: #{deformnet_forward.6} parent=27 // pred_check
          %p294 = pneg %p202
        $region42: #{deformnet_forward.6} parent=27 // pred_check_branch
          %296 = sbr.rel (%p294) target = $region44
        $region43: #{deformnet_forward.6} parent=27 // pred_region
          %s297 = sld [smem:[#allocation3 + %s30]]
          %p298 = scmp.lt.s32.totalorder %s297, 5
          %s299 = scalar_select %p298, %s297, 5
          %s300 = scalar_lea.vmem %s7, %s299
          %s301 = sld [smem:[#allocation3 + %s30]]
        $region44: #{deformnet_forward.6} parent=27 // pred_fallthru
          _
      $region28: #{deformnet_forward.6} parent=5 // pred_fallthru
        _
      %p302 = scmp.le.s32.totalorder 1, %s23
      %p303 = scmp.lt.s32.totalorder %s23, 3
      %p304 = pnand %p302, %p303
      %p305 = pneg %p304
      // Predicated region
      $region45: #{deformnet_forward.6} parent=5 // pred_check
        _
      $region46: #{deformnet_forward.6} parent=5 // pred_check_branch
        %307 = sbr.rel (%p304) target = $region48
      $region47: #{deformnet_forward.6} parent=5 // pred_region
        %s308 = ssub.s32 %s23, 1
        %s309 = smul.u32 8, %s33
        %p310 = scmp.lt.s32.totalorder %s32, 1
        %s311 = scalar_select %p310, %s32, 1
        %p312 = scmp.lt.s32.totalorder %s309, 7
        %s313 = scalar_select %p312, %s309, 7
        %s314 = smul.addr %s311, 8
        %s315 = sadd.s32 %s313, %s314
        %s316 = smul.addr %s315, 4
        %s317 = scalar_lea.vmem %s1, %s316
        %p318 = pneg %p63
        %p319 = pneg %p60
        %p320 = scmp.lt.s32.totalorder %s32, 1
        %s321 = scalar_select %p320, %s32, 1
        %s322 = smul.addr %s321, 4
        %s323 = scalar_lea.vmem %s2, %s322
        %p324 = pneg %p89
        %p325 = pneg %p86
        %p326 = pneg %p110
        %p327 = pneg %p107
        %p328 = pneg %p131
        %p329 = pneg %p128
        %p330 = pneg %p152
        %p331 = pneg %p149
        %s332 = sld [smem:[#allocation3 + %s32]]
        %p333 = scmp.lt.s32.totalorder %s332, 5
        %s334 = scalar_select %p333, %s332, 5
        %s335 = smul.addr %s334, 32
        %s336 = smul.addr %s335, 4
        %s337 = scalar_lea.vmem %s6, %s336
        %p338 = pneg %p180
        %p339 = pneg %p177
        %s340 = sld [smem:[#allocation3 + %s32]]
        %p341 = scmp.lt.s32.totalorder %s340, 5
        %s342 = scalar_select %p341, %s340, 5
        %s343 = scalar_lea.vmem %s7, %s342
        %p344 = pneg %p208
        %p345 = pneg %p205
        %p346 = pneg %p236
        %p347 = pneg %p233
        %s348 = sand.u32 %s223, 1
        %s349 = scalar_lea.sflag [#allocation5], %s348
        %s350 = sand.u32 %s223, 1
        %s351 = smul.addr %s350, 64
        %s352 = scalar_lea.vmem [#allocation4], %s351
        %s353 = smul.u32 8, %s33
        %p354 = scmp.lt.s32.totalorder %s32, 1
        %s355 = scalar_select %p354, %s32, 1
        %p356 = scmp.lt.s32.totalorder %s353, 7
        %s357 = scalar_select %p356, %s353, 7
        %s358 = smul.addr %s355, 8
        %s359 = sadd.s32 %s357, %s358
        %s360 = smul.addr %s359, 4
        %s361 = scalar_lea.vmem %s1, %s360
        %s362 = smul.u32 8, %s33
        %p363 = scmp.lt.s32.totalorder %s32, 1
        %s364 = scalar_select %p363, %s32, 1
        %s365 = smul.addr %s364, 4
        %s366 = scalar_lea.vmem %s2, %s365
        %s367 = sld [smem:[#allocation3 + %s32]]
        %p368 = scmp.lt.s32.totalorder %s367, 5
        %s369 = scalar_select %p368, %s367, 5
        %s370 = smul.addr %s369, 32
        %s371 = smul.addr %s370, 4
        %s372 = scalar_lea.vmem %s6, %s371
        %s373 = sld [smem:[#allocation3 + %s32]]
        %s374 = sld [smem:[#allocation3 + %s32]]
        %p375 = scmp.lt.s32.totalorder %s374, 5
        %s376 = scalar_select %p375, %s374, 5
        %s377 = scalar_lea.vmem %s7, %s376
        %s378 = sld [smem:[#allocation3 + %s32]]
        %s379 = smul.u32 8, %s33
        %v381 = vld [vmem:[%s361] sm:$0xf]
        %v382 = vld [vmem:[%s361 + $0x4] sm:$0xf]
        %v383 = vld [vmem:[%s361 + $0x8] sm:$0xf]
        %v384 = vld [vmem:[%s361 + $0xc] sm:$0xf]
        %v385 = vld [vmem:[%s361 + $0x10] sm:$0xf]
        %v386 = vld [vmem:[%s361 + $0x14] sm:$0xf]
        %v387 = vld [vmem:[%s361 + $0x18] sm:$0xf]
        %v388 = vld [vmem:[%s361 + $0x1c] sm:$0xf]
        %v389 = vld [vmem:[%s3] sm:$0xff]
        %v390 = vld [vmem:[%s3 + $0x8] sm:$0xff]
        %v391 = vld [vmem:[%s3 + $0x10] sm:$0xff]
        %v392 = vld [vmem:[%s3 + $0x18] sm:$0xff]
        %v393 = vld [vmem:[%s3 + $0x20] sm:$0xff]
        %v394 = vld [vmem:[%s3 + $0x28] sm:$0xff]
        %v395 = vld [vmem:[%s3 + $0x30] sm:$0xff]
        %v396 = vld [vmem:[%s3 + $0x38] sm:$0xff]
        %v397 = vld [vmem:[%s3 + $0x40] sm:$0xff]
        %v398 = vld [vmem:[%s3 + $0x48] sm:$0xff]
        %v399 = vld [vmem:[%s3 + $0x50] sm:$0xff]
        %v400 = vld [vmem:[%s3 + $0x58] sm:$0xff]
        %v401 = vld [vmem:[%s3 + $0x60] sm:$0xff]
        %v402 = vld [vmem:[%s3 + $0x68] sm:$0xff]
        %v403 = vld [vmem:[%s3 + $0x70] sm:$0xff]
        %v404 = vld [vmem:[%s3 + $0x78] sm:$0xff]
        %v405 = vld [vmem:[%s3 + $0x80] sm:$0xff]
        %v406 = vld [vmem:[%s3 + $0x88] sm:$0xff]
        %v407 = vld [vmem:[%s3 + $0x90] sm:$0xff]
        %v408 = vld [vmem:[%s3 + $0x98] sm:$0xff]
        %v409 = vld [vmem:[%s3 + $0xa0] sm:$0xff]
        %v410 = vld [vmem:[%s3 + $0xa8] sm:$0xff]
        %v411 = vld [vmem:[%s3 + $0xb0] sm:$0xff]
        %v412 = vld [vmem:[%s3 + $0xb8] sm:$0xff]
        %v413 = vld [vmem:[%s3 + $0xc0] sm:$0xff]
        %v414 = vld [vmem:[%s3 + $0xc8] sm:$0xff]
        %v415 = vld [vmem:[%s3 + $0xd0] sm:$0xff]
        %v416 = vld [vmem:[%s3 + $0xd8] sm:$0xff]
        %v417 = vld [vmem:[%s3 + $0xe0] sm:$0xff]
        %v418 = vld [vmem:[%s3 + $0xe8] sm:$0xff]
        %v419 = vld [vmem:[%s3 + $0xf0] sm:$0xff]
        %v420 = vld [vmem:[%s3 + $0xf8] sm:$0xff]
        %v421 = vld [vmem:[%s366] sm:$0xf]
        %v423 = vlaneseq
        %v424 = vshrl.u32 %v423, 7
        %v425 = vsub.s32 0, %v424
        %v426 = vrot.slane %v421, %v425
        %v427 = vlaneseq
        %v428 = vshrl.u32 %v427, 7
        %v429 = vsub.s32 1, %v428
        %v430 = vrot.slane %v421, %v429
        %v431 = vlaneseq
        %v432 = vshrl.u32 %v431, 7
        %v433 = vsub.s32 2, %v432
        %v434 = vrot.slane %v421, %v433
        %v435 = vlaneseq
        %v436 = vshrl.u32 %v435, 7
        %v437 = vsub.s32 3, %v436
        %v438 = vrot.slane %v421, %v437
        %v451 = vunpack.c.l.b16 %v381
        %v452 = vunpack.c.l.b16 %v382
        %v453 = vunpack.c.l.b16 %v383
        %v454 = vunpack.c.l.b16 %v384
        %v455 = vunpack.c.l.b16 %v385
        %v456 = vunpack.c.l.b16 %v386
        %v457 = vunpack.c.l.b16 %v387
        %v458 = vunpack.c.l.b16 %v388
        %v459 = vpack.c.b16 %v452, %v451
        %v460 = vpack.c.b16 %v454, %v453
        %v461 = vpack.c.b16 %v456, %v455
        %v462 = vpack.c.b16 %v458, %v457
        %v499 = vunpack.c.l.b16 %v389
        %v500 = vunpack.c.h.b16 %v389
        %v501 = vunpack.c.l.b16 %v390
        %v502 = vunpack.c.h.b16 %v390
        %v503 = vunpack.c.l.b16 %v391
        %v504 = vunpack.c.h.b16 %v391
        %v505 = vunpack.c.l.b16 %v392
        %v506 = vunpack.c.h.b16 %v392
        %v507 = vunpack.c.l.b16 %v393
        %v508 = vunpack.c.h.b16 %v393
        %v509 = vunpack.c.l.b16 %v394
        %v510 = vunpack.c.h.b16 %v394
        %v511 = vunpack.c.l.b16 %v395
        %v512 = vunpack.c.h.b16 %v395
        %v513 = vunpack.c.l.b16 %v396
        %v514 = vunpack.c.h.b16 %v396
        %v515 = vunpack.c.l.b16 %v397
        %v516 = vunpack.c.h.b16 %v397
        %v517 = vunpack.c.l.b16 %v398
        %v518 = vunpack.c.h.b16 %v398
        %v519 = vunpack.c.l.b16 %v399
        %v520 = vunpack.c.h.b16 %v399
        %v521 = vunpack.c.l.b16 %v400
        %v522 = vunpack.c.h.b16 %v400
        %v523 = vunpack.c.l.b16 %v401
        %v524 = vunpack.c.h.b16 %v401
        %v525 = vunpack.c.l.b16 %v402
        %v526 = vunpack.c.h.b16 %v402
        %v527 = vunpack.c.l.b16 %v403
        %v528 = vunpack.c.h.b16 %v403
        %v529 = vunpack.c.l.b16 %v404
        %v530 = vunpack.c.h.b16 %v404
        %v531 = vunpack.c.l.b16 %v405
        %v532 = vunpack.c.h.b16 %v405
        %v533 = vunpack.c.l.b16 %v406
        %v534 = vunpack.c.h.b16 %v406
        %v535 = vunpack.c.l.b16 %v407
        %v536 = vunpack.c.h.b16 %v407
        %v537 = vunpack.c.l.b16 %v408
        %v538 = vunpack.c.h.b16 %v408
        %v539 = vunpack.c.l.b16 %v409
        %v540 = vunpack.c.h.b16 %v409
        %v541 = vunpack.c.l.b16 %v410
        %v542 = vunpack.c.h.b16 %v410
        %v543 = vunpack.c.l.b16 %v411
        %v544 = vunpack.c.h.b16 %v411
        %v545 = vunpack.c.l.b16 %v412
        %v546 = vunpack.c.h.b16 %v412
        %v547 = vunpack.c.l.b16 %v413
        %v548 = vunpack.c.h.b16 %v413
        %v549 = vunpack.c.l.b16 %v414
        %v550 = vunpack.c.h.b16 %v414
        %v551 = vunpack.c.l.b16 %v415
        %v552 = vunpack.c.h.b16 %v415
        %v553 = vunpack.c.l.b16 %v416
        %v554 = vunpack.c.h.b16 %v416
        %v555 = vunpack.c.l.b16 %v417
        %v556 = vunpack.c.h.b16 %v417
        %v557 = vunpack.c.l.b16 %v418
        %v558 = vunpack.c.h.b16 %v418
        %v559 = vunpack.c.l.b16 %v419
        %v560 = vunpack.c.h.b16 %v419
        %v561 = vunpack.c.l.b16 %v420
        %v562 = vunpack.c.h.b16 %v420
        %v563 = vpack.c.b16 %v503, %v499
        %v564 = vpack.c.b16 %v504, %v500
        %v565 = vpack.c.b16 %v505, %v501
        %v566 = vpack.c.b16 %v506, %v502
        %v567 = vpack.c.b16 %v511, %v507
        %v568 = vpack.c.b16 %v512, %v508
        %v569 = vpack.c.b16 %v513, %v509
        %v570 = vpack.c.b16 %v514, %v510
        %v571 = vpack.c.b16 %v519, %v515
        %v572 = vpack.c.b16 %v520, %v516
        %v573 = vpack.c.b16 %v521, %v517
        %v574 = vpack.c.b16 %v522, %v518
        %v575 = vpack.c.b16 %v527, %v523
        %v576 = vpack.c.b16 %v528, %v524
        %v577 = vpack.c.b16 %v529, %v525
        %v578 = vpack.c.b16 %v530, %v526
        %v579 = vpack.c.b16 %v535, %v531
        %v580 = vpack.c.b16 %v536, %v532
        %v581 = vpack.c.b16 %v537, %v533
        %v582 = vpack.c.b16 %v538, %v534
        %v583 = vpack.c.b16 %v543, %v539
        %v584 = vpack.c.b16 %v544, %v540
        %v585 = vpack.c.b16 %v545, %v541
        %v586 = vpack.c.b16 %v546, %v542
        %v587 = vpack.c.b16 %v551, %v547
        %v588 = vpack.c.b16 %v552, %v548
        %v589 = vpack.c.b16 %v553, %v549
        %v590 = vpack.c.b16 %v554, %v550
        %v591 = vpack.c.b16 %v559, %v555
        %v592 = vpack.c.b16 %v560, %v556
        %v593 = vpack.c.b16 %v561, %v557
        %v594 = vpack.c.b16 %v562, %v558
        %627 = vmatprep.subr.bf16.mxu0 %v564
        %628 = vmatpush1.bf16.msra.mxu0 %v563
        %629 = vmatprep.subr.bf16.mxu0 %v568
        %630 = vmatpush1.bf16.msra.mxu0 %v567
        %631 = vmatprep.subr.bf16.mxu0 %v572
        %632 = vmatpush1.bf16.msra.mxu0 %v571
        %633 = vmatprep.subr.bf16.mxu0 %v576
        %634 = vmatpush1.bf16.msra.mxu0 %v575
        %635 = vmatprep.subr.bf16.mxu0 %v580
        %636 = vmatpush1.bf16.msra.mxu0 %v579
        %637 = vmatprep.subr.bf16.mxu0 %v584
        %638 = vmatpush1.bf16.msra.mxu0 %v583
        %639 = vmatprep.subr.bf16.mxu0 %v588
        %640 = vmatpush1.bf16.msra.mxu0 %v587
        %641 = vmatprep.subr.bf16.mxu0 %v592
        %642 = vmatpush1.bf16.msra.mxu0 %v591
        %643 = vmatprep.subr.bf16.mxu0 0
        %644 = vmatpush1.bf16.msra.mxu0 0
        %645 = vmatprep.subr.bf16.mxu0 0
        %646 = vmatpush1.bf16.msra.mxu0 0
        %647 = vmatprep.subr.bf16.mxu0 0
        %648 = vmatpush1.bf16.msra.mxu0 0
        %649 = vmatprep.subr.bf16.mxu0 0
        %650 = vmatpush1.bf16.msra.mxu0 0
        %651 = vmatprep.subr.bf16.mxu0 0
        %652 = vmatpush1.bf16.msra.mxu0 0
        %653 = vmatprep.subr.bf16.mxu0 0
        %654 = vmatpush1.bf16.msra.mxu0 0
        %655 = vmatprep.subr.bf16.mxu0 0
        %656 = vmatpush1.bf16.msra.mxu0 0
        %657 = vmatprep.subr.bf16.mxu0 0
        %658 = vmatpush1.bf16.msra.mxu0 0
        %659 = vmatprep.mubr.bf16.mxu0 0
        %660 = vmatmul.mubr.bf16.gmra.mrb[0].mxu0 %v459
        %v661 = vpop.f32.mrb[0].mxu0
        %v662 = vadd.f32 %v426, %v661
        %v663 = vpop.f32.mrb[0].mxu0
        %v664 = vadd.f32 %v430, %v663
        %v665 = vpop.f32.mrb[0].mxu0
        %v666 = vadd.f32 %v426, %v665
        %v667 = vpop.f32.mrb[0].mxu0
        %v668 = vadd.f32 %v430, %v667
        %669 = vmatprep.mubr.bf16.mxu0 0
        %670 = vmatmul.mubr.bf16.gmra.mrb[0].mxu0 %v460
        %v671 = vpop.f32.mrb[0].mxu0
        %v672 = vadd.f32 %v426, %v671
        %v673 = vpop.f32.mrb[0].mxu0
        %v674 = vadd.f32 %v430, %v673
        %v675 = vpop.f32.mrb[0].mxu0
        %v676 = vadd.f32 %v426, %v675
        %v677 = vpop.f32.mrb[0].mxu0
        %v678 = vadd.f32 %v430, %v677
        %679 = vmatprep.mubr.bf16.mxu0 0
        %680 = vmatmul.mubr.bf16.gmra.mrb[0].mxu0 %v461
        %v681 = vpop.f32.mrb[0].mxu0
        %v682 = vadd.f32 %v426, %v681
        %v683 = vpop.f32.mrb[0].mxu0
        %v684 = vadd.f32 %v430, %v683
        %v685 = vpop.f32.mrb[0].mxu0
        %v686 = vadd.f32 %v426, %v685
        %v687 = vpop.f32.mrb[0].mxu0
        %v688 = vadd.f32 %v430, %v687
        %689 = vmatprep.mubr.bf16.mxu0 0
        %690 = vmatmul.mubr.bf16.gmra.mrb[0].mxu0 %v462
        %v691 = vpop.f32.mrb[0].mxu0
        %v692 = vadd.f32 %v426, %v691
        %v693 = vpop.f32.mrb[0].mxu0
        %v694 = vadd.f32 %v430, %v693
        %v695 = vpop.f32.mrb[0].mxu0
        %v696 = vadd.f32 %v426, %v695
        %v697 = vpop.f32.mrb[0].mxu0
        %v698 = vadd.f32 %v430, %v697
        %699 = vdwg.mxu0
        %700 = vmatprep.subr.bf16.mxu0 %v566
        %701 = vmatpush1.bf16.msra.mxu0 %v565
        %702 = vmatprep.subr.bf16.mxu0 %v570
        %703 = vmatpush1.bf16.msra.mxu0 %v569
        %704 = vmatprep.subr.bf16.mxu0 %v574
        %705 = vmatpush1.bf16.msra.mxu0 %v573
        %706 = vmatprep.subr.bf16.mxu0 %v578
        %707 = vmatpush1.bf16.msra.mxu0 %v577
        %708 = vmatprep.subr.bf16.mxu0 %v582
        %709 = vmatpush1.bf16.msra.mxu0 %v581
        %710 = vmatprep.subr.bf16.mxu0 %v586
        %711 = vmatpush1.bf16.msra.mxu0 %v585
        %712 = vmatprep.subr.bf16.mxu0 %v590
        %713 = vmatpush1.bf16.msra.mxu0 %v589
        %714 = vmatprep.subr.bf16.mxu0 %v594
        %715 = vmatpush1.bf16.msra.mxu0 %v593
        %716 = vmatprep.subr.bf16.mxu0 0
        %717 = vmatpush1.bf16.msra.mxu0 0
        %718 = vmatprep.subr.bf16.mxu0 0
        %719 = vmatpush1.bf16.msra.mxu0 0
        %720 = vmatprep.subr.bf16.mxu0 0
        %721 = vmatpush1.bf16.msra.mxu0 0
        %722 = vmatprep.subr.bf16.mxu0 0
        %723 = vmatpush1.bf16.msra.mxu0 0
        %724 = vmatprep.subr.bf16.mxu0 0
        %725 = vmatpush1.bf16.msra.mxu0 0
        %726 = vmatprep.subr.bf16.mxu0 0
        %727 = vmatpush1.bf16.msra.mxu0 0
        %728 = vmatprep.subr.bf16.mxu0 0
        %729 = vmatpush1.bf16.msra.mxu0 0
        %730 = vmatprep.subr.bf16.mxu0 0
        %731 = vmatpush1.bf16.msra.mxu0 0
        %732 = vmatprep.mubr.bf16.mxu0 0
        %733 = vmatmul.mubr.bf16.gmra.mrb[0].mxu0 %v459
        %v734 = vpop.f32.mrb[0].mxu0
        %v735 = vadd.f32 %v434, %v734
        %v736 = vpop.f32.mrb[0].mxu0
        %v737 = vadd.f32 %v438, %v736
        %v738 = vpop.f32.mrb[0].mxu0
        %v739 = vadd.f32 %v434, %v738
        %v740 = vpop.f32.mrb[0].mxu0
        %v741 = vadd.f32 %v438, %v740
        %742 = vmatprep.mubr.bf16.mxu0 0
        %743 = vmatmul.mubr.bf16.gmra.mrb[0].mxu0 %v460
        %v744 = vpop.f32.mrb[0].mxu0
        %v745 = vadd.f32 %v434, %v744
        %v746 = vpop.f32.mrb[0].mxu0
        %v747 = vadd.f32 %v438, %v746
        %v748 = vpop.f32.mrb[0].mxu0
        %v749 = vadd.f32 %v434, %v748
        %v750 = vpop.f32.mrb[0].mxu0
        %v751 = vadd.f32 %v438, %v750
        %752 = vmatprep.mubr.bf16.mxu0 0
        %753 = vmatmul.mubr.bf16.gmra.mrb[0].mxu0 %v461
        %v754 = vpop.f32.mrb[0].mxu0
        %v755 = vadd.f32 %v434, %v754
        %v756 = vpop.f32.mrb[0].mxu0
        %v757 = vadd.f32 %v438, %v756
        %v758 = vpop.f32.mrb[0].mxu0
        %v759 = vadd.f32 %v434, %v758
        %v760 = vpop.f32.mrb[0].mxu0
        %v761 = vadd.f32 %v438, %v760
        %762 = vmatprep.mubr.bf16.mxu0 0
        %763 = vmatmul.mubr.bf16.gmra.mrb[0].mxu0 %v462
        %v764 = vpop.f32.mrb[0].mxu0
        %v765 = vadd.f32 %v434, %v764
        %v766 = vpop.f32.mrb[0].mxu0
        %v767 = vadd.f32 %v438, %v766
        %v768 = vpop.f32.mrb[0].mxu0
        %v769 = vadd.f32 %v434, %v768
        %v770 = vpop.f32.mrb[0].mxu0
        %v771 = vadd.f32 %v438, %v770
        %772 = vdwg.mxu0
        %v773 = vmax.f32 %v662, 0.0
        %v774 = vmax.f32 %v664, 0.0
        %v775 = vmax.f32 %v735, 0.0
        %v776 = vmax.f32 %v737, 0.0
        %v777 = vmax.f32 %v666, 0.0
        %v778 = vmax.f32 %v668, 0.0
        %v779 = vmax.f32 %v739, 0.0
        %v780 = vmax.f32 %v741, 0.0
        %v781 = vmax.f32 %v672, 0.0
        %v782 = vmax.f32 %v674, 0.0
        %v783 = vmax.f32 %v745, 0.0
        %v784 = vmax.f32 %v747, 0.0
        %v785 = vmax.f32 %v676, 0.0
        %v786 = vmax.f32 %v678, 0.0
        %v787 = vmax.f32 %v749, 0.0
        %v788 = vmax.f32 %v751, 0.0
        %v789 = vmax.f32 %v682, 0.0
        %v790 = vmax.f32 %v684, 0.0
        %v791 = vmax.f32 %v755, 0.0
        %v792 = vmax.f32 %v757, 0.0
        %v793 = vmax.f32 %v686, 0.0
        %v794 = vmax.f32 %v688, 0.0
        %v795 = vmax.f32 %v759, 0.0
        %v796 = vmax.f32 %v761, 0.0
        %v797 = vmax.f32 %v692, 0.0
        %v798 = vmax.f32 %v694, 0.0
        %v799 = vmax.f32 %v765, 0.0
        %v800 = vmax.f32 %v767, 0.0
        %v801 = vmax.f32 %v696, 0.0
        %v802 = vmax.f32 %v698, 0.0
        %v803 = vmax.f32 %v769, 0.0
        %v804 = vmax.f32 %v771, 0.0
        %v805 = vpack.c.bf16 %v777, %v773
        %v806 = vpack.c.bf16 %v778, %v774
        %v807 = vpack.c.bf16 %v779, %v775
        %v808 = vpack.c.bf16 %v780, %v776
        %v809 = vpack.c.bf16 %v785, %v781
        %v810 = vpack.c.bf16 %v786, %v782
        %v811 = vpack.c.bf16 %v787, %v783
        %v812 = vpack.c.bf16 %v788, %v784
        %v813 = vpack.c.bf16 %v793, %v789
        %v814 = vpack.c.bf16 %v794, %v790
        %v815 = vpack.c.bf16 %v795, %v791
        %v816 = vpack.c.bf16 %v796, %v792
        %v817 = vpack.c.bf16 %v801, %v797
        %v818 = vpack.c.bf16 %v802, %v798
        %v819 = vpack.c.bf16 %v803, %v799
        %v820 = vpack.c.bf16 %v804, %v800
        %v821 = vld [vmem:[%s4] sm:$0xff]
        %v822 = vld [vmem:[%s4 + $0x8] sm:$0xff]
        %v823 = vld [vmem:[%s4 + $0x10] sm:$0xff]
        %v824 = vld [vmem:[%s4 + $0x18] sm:$0xff]
        %v825 = vld [vmem:[%s4 + $0x20] sm:$0xff]
        %v826 = vld [vmem:[%s4 + $0x28] sm:$0xff]
        %v827 = vld [vmem:[%s4 + $0x30] sm:$0xff]
        %v828 = vld [vmem:[%s4 + $0x38] sm:$0xff]
        %v829 = vld [vmem:[%s4 + $0x40] sm:$0xff]
        %v830 = vld [vmem:[%s4 + $0x48] sm:$0xff]
        %v831 = vld [vmem:[%s4 + $0x50] sm:$0xff]
        %v832 = vld [vmem:[%s4 + $0x58] sm:$0xff]
        %v833 = vld [vmem:[%s4 + $0x60] sm:$0xff]
        %v834 = vld [vmem:[%s4 + $0x68] sm:$0xff]
        %v835 = vld [vmem:[%s4 + $0x70] sm:$0xff]
        %v836 = vld [vmem:[%s4 + $0x78] sm:$0xff]
        %v837 = vld [vmem:[%s4 + $0x80] sm:$0xff]
        %v838 = vld [vmem:[%s4 + $0x88] sm:$0xff]
        %v839 = vld [vmem:[%s4 + $0x90] sm:$0xff]
        %v840 = vld [vmem:[%s4 + $0x98] sm:$0xff]
        %v841 = vld [vmem:[%s4 + $0xa0] sm:$0xff]
        %v842 = vld [vmem:[%s4 + $0xa8] sm:$0xff]
        %v843 = vld [vmem:[%s4 + $0xb0] sm:$0xff]
        %v844 = vld [vmem:[%s4 + $0xb8] sm:$0xff]
        %v845 = vld [vmem:[%s4 + $0xc0] sm:$0xff]
        %v846 = vld [vmem:[%s4 + $0xc8] sm:$0xff]
        %v847 = vld [vmem:[%s4 + $0xd0] sm:$0xff]
        %v848 = vld [vmem:[%s4 + $0xd8] sm:$0xff]
        %v849 = vld [vmem:[%s4 + $0xe0] sm:$0xff]
        %v850 = vld [vmem:[%s4 + $0xe8] sm:$0xff]
        %v851 = vld [vmem:[%s4 + $0xf0] sm:$0xff]
        %v852 = vld [vmem:[%s4 + $0xf8] sm:$0xff]
        %v853 = vld [vmem:[%s4 + $0x100] sm:$0xff]
        %v854 = vld [vmem:[%s4 + $0x108] sm:$0xff]
        %v855 = vld [vmem:[%s4 + $0x110] sm:$0xff]
        %v856 = vld [vmem:[%s4 + $0x118] sm:$0xff]
        %v857 = vld [vmem:[%s4 + $0x120] sm:$0xff]
        %v858 = vld [vmem:[%s4 + $0x128] sm:$0xff]
        %v859 = vld [vmem:[%s4 + $0x130] sm:$0xff]
        %v860 = vld [vmem:[%s4 + $0x138] sm:$0xff]
        %v861 = vld [vmem:[%s4 + $0x140] sm:$0xff]
        %v862 = vld [vmem:[%s4 + $0x148] sm:$0xff]
        %v863 = vld [vmem:[%s4 + $0x150] sm:$0xff]
        %v864 = vld [vmem:[%s4 + $0x158] sm:$0xff]
        %v865 = vld [vmem:[%s4 + $0x160] sm:$0xff]
        %v866 = vld [vmem:[%s4 + $0x168] sm:$0xff]
        %v867 = vld [vmem:[%s4 + $0x170] sm:$0xff]
        %v868 = vld [vmem:[%s4 + $0x178] sm:$0xff]
        %v869 = vld [vmem:[%s4 + $0x180] sm:$0xff]
        %v870 = vld [vmem:[%s4 + $0x188] sm:$0xff]
        %v871 = vld [vmem:[%s4 + $0x190] sm:$0xff]
        %v872 = vld [vmem:[%s4 + $0x198] sm:$0xff]
        %v873 = vld [vmem:[%s4 + $0x1a0] sm:$0xff]
        %v874 = vld [vmem:[%s4 + $0x1a8] sm:$0xff]
        %v875 = vld [vmem:[%s4 + $0x1b0] sm:$0xff]
        %v876 = vld [vmem:[%s4 + $0x1b8] sm:$0xff]
        %v877 = vld [vmem:[%s4 + $0x1c0] sm:$0xff]
        %v878 = vld [vmem:[%s4 + $0x1c8] sm:$0xff]
        %v879 = vld [vmem:[%s4 + $0x1d0] sm:$0xff]
        %v880 = vld [vmem:[%s4 + $0x1d8] sm:$0xff]
        %v881 = vld [vmem:[%s4 + $0x1e0] sm:$0xff]
        %v882 = vld [vmem:[%s4 + $0x1e8] sm:$0xff]
        %v883 = vld [vmem:[%s4 + $0x1f0] sm:$0xff]
        %v884 = vld [vmem:[%s4 + $0x1f8] sm:$0xff]
        %v885 = vld [vmem:[%s5] sm:$0x3]
        %v887 = vlaneseq
        %v888 = vshrl.u32 %v887, 7
        %v889 = vsub.s32 0, %v888
        %v890 = vrot.slane %v885, %v889
        %v891 = vlaneseq
        %v892 = vshrl.u32 %v891, 7
        %v893 = vsub.s32 1, %v892
        %v894 = vrot.slane %v885, %v893
        %v961 = vunpack.c.l.b16 %v821
        %v962 = vunpack.c.h.b16 %v821
        %v963 = vunpack.c.l.b16 %v822
        %v964 = vunpack.c.h.b16 %v822
        %v965 = vunpack.c.l.b16 %v823
        %v966 = vunpack.c.h.b16 %v823
        %v967 = vunpack.c.l.b16 %v824
        %v968 = vunpack.c.h.b16 %v824
        %v969 = vunpack.c.l.b16 %v825
        %v970 = vunpack.c.h.b16 %v825
        %v971 = vunpack.c.l.b16 %v826
        %v972 = vunpack.c.h.b16 %v826
        %v973 = vunpack.c.l.b16 %v827
        %v974 = vunpack.c.h.b16 %v827
        %v975 = vunpack.c.l.b16 %v828
        %v976 = vunpack.c.h.b16 %v828
        %v977 = vunpack.c.l.b16 %v829
        %v978 = vunpack.c.h.b16 %v829
        %v979 = vunpack.c.l.b16 %v830
        %v980 = vunpack.c.h.b16 %v830
        %v981 = vunpack.c.l.b16 %v831
        %v982 = vunpack.c.h.b16 %v831
        %v983 = vunpack.c.l.b16 %v832
        %v984 = vunpack.c.h.b16 %v832
        %v985 = vunpack.c.l.b16 %v833
        %v986 = vunpack.c.h.b16 %v833
        %v987 = vunpack.c.l.b16 %v834
        %v988 = vunpack.c.h.b16 %v834
        %v989 = vunpack.c.l.b16 %v835
        %v990 = vunpack.c.h.b16 %v835
        %v991 = vunpack.c.l.b16 %v836
        %v992 = vunpack.c.h.b16 %v836
        %v993 = vunpack.c.l.b16 %v837
        %v994 = vunpack.c.h.b16 %v837
        %v995 = vunpack.c.l.b16 %v838
        %v996 = vunpack.c.h.b16 %v838
        %v997 = vunpack.c.l.b16 %v839
        %v998 = vunpack.c.h.b16 %v839
        %v999 = vunpack.c.l.b16 %v840
        %v1000 = vunpack.c.h.b16 %v840
        %v1001 = vunpack.c.l.b16 %v841
        %v1002 = vunpack.c.h.b16 %v841
        %v1003 = vunpack.c.l.b16 %v842
        %v1004 = vunpack.c.h.b16 %v842
        %v1005 = vunpack.c.l.b16 %v843
        %v1006 = vunpack.c.h.b16 %v843
        %v1007 = vunpack.c.l.b16 %v844
        %v1008 = vunpack.c.h.b16 %v844
        %v1009 = vunpack.c.l.b16 %v845
        %v1010 = vunpack.c.h.b16 %v845
        %v1011 = vunpack.c.l.b16 %v846
        %v1012 = vunpack.c.h.b16 %v846
        %v1013 = vunpack.c.l.b16 %v847
        %v1014 = vunpack.c.h.b16 %v847
        %v1015 = vunpack.c.l.b16 %v848
        %v1016 = vunpack.c.h.b16 %v848
        %v1017 = vunpack.c.l.b16 %v849
        %v1018 = vunpack.c.h.b16 %v849
        %v1019 = vunpack.c.l.b16 %v850
        %v1020 = vunpack.c.h.b16 %v850
        %v1021 = vunpack.c.l.b16 %v851
        %v1022 = vunpack.c.h.b16 %v851
        %v1023 = vunpack.c.l.b16 %v852
        %v1024 = vunpack.c.h.b16 %v852
        %v1025 = vunpack.c.l.b16 %v853
        %v1026 = vunpack.c.h.b16 %v853
        %v1027 = vunpack.c.l.b16 %v854
        %v1028 = vunpack.c.h.b16 %v854
        %v1029 = vunpack.c.l.b16 %v855
        %v1030 = vunpack.c.h.b16 %v855
        %v1031 = vunpack.c.l.b16 %v856
        %v1032 = vunpack.c.h.b16 %v856
        %v1033 = vunpack.c.l.b16 %v857
        %v1034 = vunpack.c.h.b16 %v857
        %v1035 = vunpack.c.l.b16 %v858
        %v1036 = vunpack.c.h.b16 %v858
        %v1037 = vunpack.c.l.b16 %v859
        %v1038 = vunpack.c.h.b16 %v859
        %v1039 = vunpack.c.l.b16 %v860
        %v1040 = vunpack.c.h.b16 %v860
        %v1041 = vunpack.c.l.b16 %v861
        %v1042 = vunpack.c.h.b16 %v861
        %v1043 = vunpack.c.l.b16 %v862
        %v1044 = vunpack.c.h.b16 %v862
        %v1045 = vunpack.c.l.b16 %v863
        %v1046 = vunpack.c.h.b16 %v863
        %v1047 = vunpack.c.l.b16 %v864
        %v1048 = vunpack.c.h.b16 %v864
        %v1049 = vunpack.c.l.b16 %v865
        %v1050 = vunpack.c.h.b16 %v865
        %v1051 = vunpack.c.l.b16 %v866
        %v1052 = vunpack.c.h.b16 %v866
        %v1053 = vunpack.c.l.b16 %v867
        %v1054 = vunpack.c.h.b16 %v867
        %v1055 = vunpack.c.l.b16 %v868
        %v1056 = vunpack.c.h.b16 %v868
        %v1057 = vunpack.c.l.b16 %v869
        %v1058 = vunpack.c.h.b16 %v869
        %v1059 = vunpack.c.l.b16 %v870
        %v1060 = vunpack.c.h.b16 %v870
        %v1061 = vunpack.c.l.b16 %v871
        %v1062 = vunpack.c.h.b16 %v871
        %v1063 = vunpack.c.l.b16 %v872
        %v1064 = vunpack.c.h.b16 %v872
        %v1065 = vunpack.c.l.b16 %v873
        %v1066 = vunpack.c.h.b16 %v873
        %v1067 = vunpack.c.l.b16 %v874
        %v1068 = vunpack.c.h.b16 %v874
        %v1069 = vunpack.c.l.b16 %v875
        %v1070 = vunpack.c.h.b16 %v875
        %v1071 = vunpack.c.l.b16 %v876
        %v1072 = vunpack.c.h.b16 %v876
        %v1073 = vunpack.c.l.b16 %v877
        %v1074 = vunpack.c.h.b16 %v877
        %v1075 = vunpack.c.l.b16 %v878
        %v1076 = vunpack.c.h.b16 %v878
        %v1077 = vunpack.c.l.b16 %v879
        %v1078 = vunpack.c.h.b16 %v879
        %v1079 = vunpack.c.l.b16 %v880
        %v1080 = vunpack.c.h.b16 %v880
        %v1081 = vunpack.c.l.b16 %v881
        %v1082 = vunpack.c.h.b16 %v881
        %v1083 = vunpack.c.l.b16 %v882
        %v1084 = vunpack.c.h.b16 %v882
        %v1085 = vunpack.c.l.b16 %v883
        %v1086 = vunpack.c.h.b16 %v883
        %v1087 = vunpack.c.l.b16 %v884
        %v1088 = vunpack.c.h.b16 %v884
        %v1089 = vpack.c.b16 %v963, %v961
        %v1090 = vpack.c.b16 %v964, %v962
        %v1091 = vpack.c.b16 %v967, %v965
        %v1092 = vpack.c.b16 %v968, %v966
        %v1093 = vpack.c.b16 %v971, %v969
        %v1094 = vpack.c.b16 %v972, %v970
        %v1095 = vpack.c.b16 %v975, %v973
        %v1096 = vpack.c.b16 %v976, %v974
        %v1097 = vpack.c.b16 %v979, %v977
        %v1098 = vpack.c.b16 %v980, %v978
        %v1099 = vpack.c.b16 %v983, %v981
        %v1100 = vpack.c.b16 %v984, %v982
        %v1101 = vpack.c.b16 %v987, %v985
        %v1102 = vpack.c.b16 %v988, %v986
        %v1103 = vpack.c.b16 %v991, %v989
        %v1104 = vpack.c.b16 %v992, %v990
        %v1105 = vpack.c.b16 %v995, %v993
        %v1106 = vpack.c.b16 %v996, %v994
        %v1107 = vpack.c.b16 %v999, %v997
        %v1108 = vpack.c.b16 %v1000, %v998
        %v1109 = vpack.c.b16 %v1003, %v1001
        %v1110 = vpack.c.b16 %v1004, %v1002
        %v1111 = vpack.c.b16 %v1007, %v1005
        %v1112 = vpack.c.b16 %v1008, %v1006
        %v1113 = vpack.c.b16 %v1011, %v1009
        %v1114 = vpack.c.b16 %v1012, %v1010
        %v1115 = vpack.c.b16 %v1015, %v1013
        %v1116 = vpack.c.b16 %v1016, %v1014
        %v1117 = vpack.c.b16 %v1019, %v1017
        %v1118 = vpack.c.b16 %v1020, %v1018
        %v1119 = vpack.c.b16 %v1023, %v1021
        %v1120 = vpack.c.b16 %v1024, %v1022
        %v1121 = vpack.c.b16 %v1027, %v1025
        %v1122 = vpack.c.b16 %v1028, %v1026
        %v1123 = vpack.c.b16 %v1031, %v1029
        %v1124 = vpack.c.b16 %v1032, %v1030
        %v1125 = vpack.c.b16 %v1035, %v1033
        %v1126 = vpack.c.b16 %v1036, %v1034
        %v1127 = vpack.c.b16 %v1039, %v1037
        %v1128 = vpack.c.b16 %v1040, %v1038
        %v1129 = vpack.c.b16 %v1043, %v1041
        %v1130 = vpack.c.b16 %v1044, %v1042
        %v1131 = vpack.c.b16 %v1047, %v1045
        %v1132 = vpack.c.b16 %v1048, %v1046
        %v1133 = vpack.c.b16 %v1051, %v1049
        %v1134 = vpack.c.b16 %v1052, %v1050
        %v1135 = vpack.c.b16 %v1055, %v1053
        %v1136 = vpack.c.b16 %v1056, %v1054
        %v1137 = vpack.c.b16 %v1059, %v1057
        %v1138 = vpack.c.b16 %v1060, %v1058
        %v1139 = vpack.c.b16 %v1063, %v1061
        %v1140 = vpack.c.b16 %v1064, %v1062
        %v1141 = vpack.c.b16 %v1067, %v1065
        %v1142 = vpack.c.b16 %v1068, %v1066
        %v1143 = vpack.c.b16 %v1071, %v1069
        %v1144 = vpack.c.b16 %v1072, %v1070
        %v1145 = vpack.c.b16 %v1075, %v1073
        %v1146 = vpack.c.b16 %v1076, %v1074
        %v1147 = vpack.c.b16 %v1079, %v1077
        %v1148 = vpack.c.b16 %v1080, %v1078
        %v1149 = vpack.c.b16 %v1083, %v1081
        %v1150 = vpack.c.b16 %v1084, %v1082
        %v1151 = vpack.c.b16 %v1087, %v1085
        %v1152 = vpack.c.b16 %v1088, %v1086
        %1217 = vmatprep.subr.bf16.mxu0 %v1090
        %1218 = vmatpush1.bf16.msra.mxu0 %v1089
        %1219 = vmatprep.subr.bf16.mxu0 %v1092
        %1220 = vmatpush1.bf16.msra.mxu0 %v1091
        %1221 = vmatprep.subr.bf16.mxu0 %v1094
        %1222 = vmatpush1.bf16.msra.mxu0 %v1093
        %1223 = vmatprep.subr.bf16.mxu0 %v1096
        %1224 = vmatpush1.bf16.msra.mxu0 %v1095
        %1225 = vmatprep.subr.bf16.mxu0 %v1098
        %1226 = vmatpush1.bf16.msra.mxu0 %v1097
        %1227 = vmatprep.subr.bf16.mxu0 %v1100
        %1228 = vmatpush1.bf16.msra.mxu0 %v1099
        %1229 = vmatprep.subr.bf16.mxu0 %v1102
        %1230 = vmatpush1.bf16.msra.mxu0 %v1101
        %1231 = vmatprep.subr.bf16.mxu0 %v1104
        %1232 = vmatpush1.bf16.msra.mxu0 %v1103
        %1233 = vmatprep.subr.bf16.mxu0 %v1106
        %1234 = vmatpush1.bf16.msra.mxu0 %v1105
        %1235 = vmatprep.subr.bf16.mxu0 %v1108
        %1236 = vmatpush1.bf16.msra.mxu0 %v1107
        %1237 = vmatprep.subr.bf16.mxu0 %v1110
        %1238 = vmatpush1.bf16.msra.mxu0 %v1109
        %1239 = vmatprep.subr.bf16.mxu0 %v1112
        %1240 = vmatpush1.bf16.msra.mxu0 %v1111
        %1241 = vmatprep.subr.bf16.mxu0 %v1114
        %1242 = vmatpush1.bf16.msra.mxu0 %v1113
        %1243 = vmatprep.subr.bf16.mxu0 %v1116
        %1244 = vmatpush1.bf16.msra.mxu0 %v1115
        %1245 = vmatprep.subr.bf16.mxu0 %v1118
        %1246 = vmatpush1.bf16.msra.mxu0 %v1117
        %1247 = vmatprep.subr.bf16.mxu0 %v1120
        %1248 = vmatpush1.bf16.msra.mxu0 %v1119
        %1249 = vmatprep.mubr.bf16.mxu0 %v806
        %1250 = vmatmul.mubr.bf16.gmra.mrb[0].mxu0 %v805
        %v1251 = vpop.f32.mrb[0].mxu0
        %v1252 = vadd.f32 %v890, %v1251
        %v1253 = vpop.f32.mrb[0].mxu0
        %v1254 = vadd.f32 %v894, %v1253
        %v1255 = vpop.f32.mrb[0].mxu0
        %v1256 = vadd.f32 %v890, %v1255
        %v1257 = vpop.f32.mrb[0].mxu0
        %v1258 = vadd.f32 %v894, %v1257
        %1259 = vmatprep.mubr.bf16.mxu0 %v810
        %1260 = vmatmul.mubr.bf16.gmra.mrb[0].mxu0 %v809
        %v1261 = vpop.f32.mrb[0].mxu0
        %v1262 = vadd.f32 %v890, %v1261
        %v1263 = vpop.f32.mrb[0].mxu0
        %v1264 = vadd.f32 %v894, %v1263
        %v1265 = vpop.f32.mrb[0].mxu0
        %v1266 = vadd.f32 %v890, %v1265
        %v1267 = vpop.f32.mrb[0].mxu0
        %v1268 = vadd.f32 %v894, %v1267
        %1269 = vmatprep.mubr.bf16.mxu0 %v814
        %1270 = vmatmul.mubr.bf16.gmra.mrb[0].mxu0 %v813
        %v1271 = vpop.f32.mrb[0].mxu0
        %v1272 = vadd.f32 %v890, %v1271
        %v1273 = vpop.f32.mrb[0].mxu0
        %v1274 = vadd.f32 %v894, %v1273
        %v1275 = vpop.f32.mrb[0].mxu0
        %v1276 = vadd.f32 %v890, %v1275
        %v1277 = vpop.f32.mrb[0].mxu0
        %v1278 = vadd.f32 %v894, %v1277
        %1279 = vmatprep.mubr.bf16.mxu0 %v818
        %1280 = vmatmul.mubr.bf16.gmra.mrb[0].mxu0 %v817
        %v1281 = vpop.f32.mrb[0].mxu0
        %v1282 = vadd.f32 %v890, %v1281
        %v1283 = vpop.f32.mrb[0].mxu0
        %v1284 = vadd.f32 %v894, %v1283
        %v1285 = vpop.f32.mrb[0].mxu0
        %v1286 = vadd.f32 %v890, %v1285
        %v1287 = vpop.f32.mrb[0].mxu0
        %v1288 = vadd.f32 %v894, %v1287
        %1289 = vdwg.mxu0
        %1290 = vmatprep.subr.bf16.mxu0 %v1122
        %1291 = vmatpush1.bf16.msra.mxu0 %v1121
        %1292 = vmatprep.subr.bf16.mxu0 %v1124
        %1293 = vmatpush1.bf16.msra.mxu0 %v1123
        %1294 = vmatprep.subr.bf16.mxu0 %v1126
        %1295 = vmatpush1.bf16.msra.mxu0 %v1125
        %1296 = vmatprep.subr.bf16.mxu0 %v1128
        %1297 = vmatpush1.bf16.msra.mxu0 %v1127
        %1298 = vmatprep.subr.bf16.mxu0 %v1130
        %1299 = vmatpush1.bf16.msra.mxu0 %v1129
        %1300 = vmatprep.subr.bf16.mxu0 %v1132
        %1301 = vmatpush1.bf16.msra.mxu0 %v1131
        %1302 = vmatprep.subr.bf16.mxu0 %v1134
        %1303 = vmatpush1.bf16.msra.mxu0 %v1133
        %1304 = vmatprep.subr.bf16.mxu0 %v1136
        %1305 = vmatpush1.bf16.msra.mxu0 %v1135
        %1306 = vmatprep.subr.bf16.mxu0 %v1138
        %1307 = vmatpush1.bf16.msra.mxu0 %v1137
        %1308 = vmatprep.subr.bf16.mxu0 %v1140
        %1309 = vmatpush1.bf16.msra.mxu0 %v1139
        %1310 = vmatprep.subr.bf16.mxu0 %v1142
        %1311 = vmatpush1.bf16.msra.mxu0 %v1141
        %1312 = vmatprep.subr.bf16.mxu0 %v1144
        %1313 = vmatpush1.bf16.msra.mxu0 %v1143
        %1314 = vmatprep.subr.bf16.mxu0 %v1146
        %1315 = vmatpush1.bf16.msra.mxu0 %v1145
        %1316 = vmatprep.subr.bf16.mxu0 %v1148
        %1317 = vmatpush1.bf16.msra.mxu0 %v1147
        %1318 = vmatprep.subr.bf16.mxu0 %v1150
        %1319 = vmatpush1.bf16.msra.mxu0 %v1149
        %1320 = vmatprep.subr.bf16.mxu0 %v1152
        %1321 = vmatpush1.bf16.msra.mxu0 %v1151
        %1322 = vmatprep.mubr.bf16.mxu0 %v808
        %1323 = vmatmul.mubr.bf16.gmra.mrb[0].mxu0 %v807
        %v1324 = vpop.f32.mrb[0].mxu0
        %v1325 = vadd.f32 %v1252, %v1324
        %v1326 = vpop.f32.mrb[0].mxu0
        %v1327 = vadd.f32 %v1254, %v1326
        %v1328 = vpop.f32.mrb[0].mxu0
        %v1329 = vadd.f32 %v1256, %v1328
        %v1330 = vpop.f32.mrb[0].mxu0
        %v1331 = vadd.f32 %v1258, %v1330
        %1332 = vmatprep.mubr.bf16.mxu0 %v812
        %1333 = vmatmul.mubr.bf16.gmra.mrb[0].mxu0 %v811
        %v1334 = vpop.f32.mrb[0].mxu0
        %v1335 = vadd.f32 %v1262, %v1334
        %v1336 = vpop.f32.mrb[0].mxu0
        %v1337 = vadd.f32 %v1264, %v1336
        %v1338 = vpop.f32.mrb[0].mxu0
        %v1339 = vadd.f32 %v1266, %v1338
        %v1340 = vpop.f32.mrb[0].mxu0
        %v1341 = vadd.f32 %v1268, %v1340
        %1342 = vmatprep.mubr.bf16.mxu0 %v816
        %1343 = vmatmul.mubr.bf16.gmra.mrb[0].mxu0 %v815
        %v1344 = vpop.f32.mrb[0].mxu0
        %v1345 = vadd.f32 %v1272, %v1344
        %v1346 = vpop.f32.mrb[0].mxu0
        %v1347 = vadd.f32 %v1274, %v1346
        %v1348 = vpop.f32.mrb[0].mxu0
        %v1349 = vadd.f32 %v1276, %v1348
        %v1350 = vpop.f32.mrb[0].mxu0
        %v1351 = vadd.f32 %v1278, %v1350
        %1352 = vmatprep.mubr.bf16.mxu0 %v820
        %1353 = vmatmul.mubr.bf16.gmra.mrb[0].mxu0 %v819
        %v1354 = vpop.f32.mrb[0].mxu0
        %v1355 = vadd.f32 %v1282, %v1354
        %v1356 = vpop.f32.mrb[0].mxu0
        %v1357 = vadd.f32 %v1284, %v1356
        %v1358 = vpop.f32.mrb[0].mxu0
        %v1359 = vadd.f32 %v1286, %v1358
        %v1360 = vpop.f32.mrb[0].mxu0
        %v1361 = vadd.f32 %v1288, %v1360
        %1362 = vdwg.mxu0
        %v1363 = vmax.f32 %v1325, 0.0
        %v1364 = vmax.f32 %v1327, 0.0
        %v1365 = vmax.f32 %v1329, 0.0
        %v1366 = vmax.f32 %v1331, 0.0
        %v1367 = vmax.f32 %v1335, 0.0
        %v1368 = vmax.f32 %v1337, 0.0
        %v1369 = vmax.f32 %v1339, 0.0
        %v1370 = vmax.f32 %v1341, 0.0
        %v1371 = vmax.f32 %v1345, 0.0
        %v1372 = vmax.f32 %v1347, 0.0
        %v1373 = vmax.f32 %v1349, 0.0
        %v1374 = vmax.f32 %v1351, 0.0
        %v1375 = vmax.f32 %v1355, 0.0
        %v1376 = vmax.f32 %v1357, 0.0
        %v1377 = vmax.f32 %v1359, 0.0
        %v1378 = vmax.f32 %v1361, 0.0
        %v1379 = vpack.c.bf16 %v1365, %v1363
        %v1380 = vpack.c.bf16 %v1366, %v1364
        %v1381 = vpack.c.bf16 %v1369, %v1367
        %v1382 = vpack.c.bf16 %v1370, %v1368
        %v1383 = vpack.c.bf16 %v1373, %v1371
        %v1384 = vpack.c.bf16 %v1374, %v1372
        %v1385 = vpack.c.bf16 %v1377, %v1375
        %v1386 = vpack.c.bf16 %v1378, %v1376
        %v1387 = vld [vmem:[%s372] sm:$0xf]
        %v1388 = vld [vmem:[%s372 + $0x4] sm:$0xf]
        %v1389 = vld [vmem:[%s372 + $0x8] sm:$0xf]
        %v1390 = vld [vmem:[%s372 + $0xc] sm:$0xf]
        %v1391 = vld [vmem:[%s372 + $0x10] sm:$0xf]
        %v1392 = vld [vmem:[%s372 + $0x14] sm:$0xf]
        %v1393 = vld [vmem:[%s372 + $0x18] sm:$0xf]
        %v1394 = vld [vmem:[%s372 + $0x1c] sm:$0xf]
        %v1395 = vld [vmem:[%s372 + $0x20] sm:$0xf]
        %v1396 = vld [vmem:[%s372 + $0x24] sm:$0xf]
        %v1397 = vld [vmem:[%s372 + $0x28] sm:$0xf]
        %v1398 = vld [vmem:[%s372 + $0x2c] sm:$0xf]
        %v1399 = vld [vmem:[%s372 + $0x30] sm:$0xf]
        %v1400 = vld [vmem:[%s372 + $0x34] sm:$0xf]
        %v1401 = vld [vmem:[%s372 + $0x38] sm:$0xf]
        %v1402 = vld [vmem:[%s372 + $0x3c] sm:$0xf]
        %v1403 = vld [vmem:[%s372 + $0x40] sm:$0xf]
        %v1404 = vld [vmem:[%s372 + $0x44] sm:$0xf]
        %v1405 = vld [vmem:[%s372 + $0x48] sm:$0xf]
        %v1406 = vld [vmem:[%s372 + $0x4c] sm:$0xf]
        %v1407 = vld [vmem:[%s372 + $0x50] sm:$0xf]
        %v1408 = vld [vmem:[%s372 + $0x54] sm:$0xf]
        %v1409 = vld [vmem:[%s372 + $0x58] sm:$0xf]
        %v1410 = vld [vmem:[%s372 + $0x5c] sm:$0xf]
        %v1411 = vld [vmem:[%s372 + $0x60] sm:$0xf]
        %v1412 = vld [vmem:[%s372 + $0x64] sm:$0xf]
        %v1413 = vld [vmem:[%s372 + $0x68] sm:$0xf]
        %v1414 = vld [vmem:[%s372 + $0x6c] sm:$0xf]
        %v1415 = vld [vmem:[%s372 + $0x70] sm:$0xf]
        %v1416 = vld [vmem:[%s372 + $0x74] sm:$0xf]
        %v1417 = vld [vmem:[%s372 + $0x78] sm:$0xf]
        %v1418 = vld [vmem:[%s372 + $0x7c] sm:$0xf]
        %v1419 = vld [vmem:[%s377] sm:$0x1]
        %v1421 = vlaneseq
        %v1422 = vshrl.u32 %v1421, 7
        %v1423 = vsub.s32 0, %v1422
        %v1424 = vrot.slane %v1419, %v1423
        %v1458 = vunpack.c.l.b16 %v1387
        %v1459 = vunpack.c.l.b16 %v1388
        %v1460 = vunpack.c.l.b16 %v1389
        %v1461 = vunpack.c.l.b16 %v1390
        %v1462 = vunpack.c.l.b16 %v1391
        %v1463 = vunpack.c.l.b16 %v1392
        %v1464 = vunpack.c.l.b16 %v1393
        %v1465 = vunpack.c.l.b16 %v1394
        %v1466 = vunpack.c.l.b16 %v1395
        %v1467 = vunpack.c.l.b16 %v1396
        %v1468 = vunpack.c.l.b16 %v1397
        %v1469 = vunpack.c.l.b16 %v1398
        %v1470 = vunpack.c.l.b16 %v1399
        %v1471 = vunpack.c.l.b16 %v1400
        %v1472 = vunpack.c.l.b16 %v1401
        %v1473 = vunpack.c.l.b16 %v1402
        %v1474 = vunpack.c.l.b16 %v1403
        %v1475 = vunpack.c.l.b16 %v1404
        %v1476 = vunpack.c.l.b16 %v1405
        %v1477 = vunpack.c.l.b16 %v1406
        %v1478 = vunpack.c.l.b16 %v1407
        %v1479 = vunpack.c.l.b16 %v1408
        %v1480 = vunpack.c.l.b16 %v1409
        %v1481 = vunpack.c.l.b16 %v1410
        %v1482 = vunpack.c.l.b16 %v1411
        %v1483 = vunpack.c.l.b16 %v1412
        %v1484 = vunpack.c.l.b16 %v1413
        %v1485 = vunpack.c.l.b16 %v1414
        %v1486 = vunpack.c.l.b16 %v1415
        %v1487 = vunpack.c.l.b16 %v1416
        %v1488 = vunpack.c.l.b16 %v1417
        %v1489 = vunpack.c.l.b16 %v1418
        %v1490 = vpack.c.b16 %v1459, %v1458
        %v1491 = vpack.c.b16 %v1461, %v1460
        %v1492 = vpack.c.b16 %v1463, %v1462
        %v1493 = vpack.c.b16 %v1465, %v1464
        %v1494 = vpack.c.b16 %v1467, %v1466
        %v1495 = vpack.c.b16 %v1469, %v1468
        %v1496 = vpack.c.b16 %v1471, %v1470
        %v1497 = vpack.c.b16 %v1473, %v1472
        %v1498 = vpack.c.b16 %v1475, %v1474
        %v1499 = vpack.c.b16 %v1477, %v1476
        %v1500 = vpack.c.b16 %v1479, %v1478
        %v1501 = vpack.c.b16 %v1481, %v1480
        %v1502 = vpack.c.b16 %v1483, %v1482
        %v1503 = vpack.c.b16 %v1485, %v1484
        %v1504 = vpack.c.b16 %v1487, %v1486
        %v1505 = vpack.c.b16 %v1489, %v1488
        %1522 = vmatprep.subr.bf16.mxu0 0
        %1523 = vmatpush1.bf16.msra.mxu0 %v1490
        %1524 = vmatprep.subr.bf16.mxu0 0
        %1525 = vmatpush1.bf16.msra.mxu0 %v1491
        %1526 = vmatprep.subr.bf16.mxu0 0
        %1527 = vmatpush1.bf16.msra.mxu0 %v1492
        %1528 = vmatprep.subr.bf16.mxu0 0
        %1529 = vmatpush1.bf16.msra.mxu0 %v1493
        %1530 = vmatprep.subr.bf16.mxu0 0
        %1531 = vmatpush1.bf16.msra.mxu0 %v1494
        %1532 = vmatprep.subr.bf16.mxu0 0
        %1533 = vmatpush1.bf16.msra.mxu0 %v1495
        %1534 = vmatprep.subr.bf16.mxu0 0
        %1535 = vmatpush1.bf16.msra.mxu0 %v1496
        %1536 = vmatprep.subr.bf16.mxu0 0
        %1537 = vmatpush1.bf16.msra.mxu0 %v1497
        %1538 = vmatprep.subr.bf16.mxu0 0
        %1539 = vmatpush1.bf16.msra.mxu0 %v1498
        %1540 = vmatprep.subr.bf16.mxu0 0
        %1541 = vmatpush1.bf16.msra.mxu0 %v1499
        %1542 = vmatprep.subr.bf16.mxu0 0
        %1543 = vmatpush1.bf16.msra.mxu0 %v1500
        %1544 = vmatprep.subr.bf16.mxu0 0
        %1545 = vmatpush1.bf16.msra.mxu0 %v1501
        %1546 = vmatprep.subr.bf16.mxu0 0
        %1547 = vmatpush1.bf16.msra.mxu0 %v1502
        %1548 = vmatprep.subr.bf16.mxu0 0
        %1549 = vmatpush1.bf16.msra.mxu0 %v1503
        %1550 = vmatprep.subr.bf16.mxu0 0
        %1551 = vmatpush1.bf16.msra.mxu0 %v1504
        %1552 = vmatprep.subr.bf16.mxu0 0
        %1553 = vmatpush1.bf16.msra.mxu0 %v1505
        %1554 = vmatprep.mubr.bf16.mxu0 %v1380
        %1555 = vmatmul.mubr.bf16.gmra.mrb[0].mxu0 %v1379
        %v1556 = vpop.f32.mrb[0].mxu0
        %v1557 = vadd.f32 %v1424, %v1556
        %v1558 = vpop.f32.mrb[0].mxu0
        %v1559 = vpop.f32.mrb[0].mxu0
        %v1560 = vadd.f32 %v1424, %v1559
        %v1561 = vpop.f32.mrb[0].mxu0
        %1562 = vmatprep.mubr.bf16.mxu0 %v1382
        %1563 = vmatmul.mubr.bf16.gmra.mrb[0].mxu0 %v1381
        %v1564 = vpop.f32.mrb[0].mxu0
        %v1565 = vadd.f32 %v1424, %v1564
        %v1566 = vpop.f32.mrb[0].mxu0
        %v1567 = vpop.f32.mrb[0].mxu0
        %v1568 = vadd.f32 %v1424, %v1567
        %v1569 = vpop.f32.mrb[0].mxu0
        %1570 = vmatprep.mubr.bf16.mxu0 %v1384
        %1571 = vmatmul.mubr.bf16.gmra.mrb[0].mxu0 %v1383
        %v1572 = vpop.f32.mrb[0].mxu0
        %v1573 = vadd.f32 %v1424, %v1572
        %v1574 = vpop.f32.mrb[0].mxu0
        %v1575 = vpop.f32.mrb[0].mxu0
        %v1576 = vadd.f32 %v1424, %v1575
        %v1577 = vpop.f32.mrb[0].mxu0
        %1578 = vmatprep.mubr.bf16.mxu0 %v1386
        %1579 = vmatmul.mubr.bf16.gmra.mrb[0].mxu0 %v1385
        %v1580 = vpop.f32.mrb[0].mxu0
        %v1581 = vadd.f32 %v1424, %v1580
        %v1582 = vpop.f32.mrb[0].mxu0
        %v1583 = vpop.f32.mrb[0].mxu0
        %v1584 = vadd.f32 %v1424, %v1583
        %v1585 = vpop.f32.mrb[0].mxu0
        %1586 = vdwg.mxu0
        %1587 = vst [vmem:[%s352] sm:$0xff] %v1557
        %1588 = vst [vmem:[%s352 + $0x8] sm:$0xff] %v1560
        %1589 = vst [vmem:[%s352 + $0x10] sm:$0xff] %v1565
        %1590 = vst [vmem:[%s352 + $0x18] sm:$0xff] %v1568
        %1591 = vst [vmem:[%s352 + $0x20] sm:$0xff] %v1573
        %1592 = vst [vmem:[%s352 + $0x28] sm:$0xff] %v1576
        %1593 = vst [vmem:[%s352 + $0x30] sm:$0xff] %v1581
        %1594 = vst [vmem:[%s352 + $0x38] sm:$0xff] %v1584
        %s1595 = sand.u32 %s223, 1
        %s1596 = scalar_lea.sflag [#allocation5], %s1595
        %s1597 = sand.u32 %s223, 1
        %s1598 = smul.addr %s1597, 64
        %s1599 = scalar_lea.vmem [#allocation4], %s1598
        // Predicated region
        $region49: #{deformnet_forward.6} parent=47 // pred_check
          %p1600 = pneg %p233
        $region50: #{deformnet_forward.6} parent=47 // pred_check_branch
          %1602 = sbr.rel (%p1600) target = $region52
        $region51: #{deformnet_forward.6} parent=47 // pred_region
          %s1603 = smul.u32 8, %s33
          %s1605 = ssub.s32 1024, 1024
          %1606 = vsyncadd %s1596, %s1605
          %s1607 = smul.addr %s32, 8
          %s1608 = sadd.s32 %s1603, %s1607
          %s1609 = smul.addr %s1608, 128
          %s1610 = scalar_lea.hbm %s8, %s1609
          %s1611 = sshll.u32 %s1599, 4
          %s1612 = int_to_ptr.vmem [resolvable:$true] %s1611
          %1617 = dma.vmem_to_hbm [thread:$0]  %s1612, 1024, %s1610, %s1596, 128, 128, 8
        $region52: #{deformnet_forward.6} parent=47 // pred_fallthru
          _
      $region48: #{deformnet_forward.6} parent=5 // pred_fallthru
        _
      %p1618 = scmp.le.s32.totalorder 2, %s23
      // Predicated region
      $region53: #{deformnet_forward.6} parent=5 // pred_check
        %p1619 = pneg %p1618
      $region54: #{deformnet_forward.6} parent=5 // pred_check_branch
        %1621 = sbr.rel (%p1619) target = $region56
      $region55: #{deformnet_forward.6} parent=5 // pred_region
        %s1622 = ssub.s32 %s23, 2
        // Predicated region
        $region57: #{deformnet_forward.6} parent=55 // pred_check
          %p1623 = pneg %p239
        $region58: #{deformnet_forward.6} parent=55 // pred_check_branch
          %1625 = sbr.rel (%p1623) target = $region60
        $region59: #{deformnet_forward.6} parent=55 // pred_region
          %s1626 = sand.u32 %s224, 1
          %s1627 = scalar_lea.sflag [#allocation5], %s1626
          %s1628 = sand.u32 %s224, 1
          %s1629 = smul.addr %s1628, 64
          %s1630 = scalar_lea.vmem [#allocation4], %s1629
          %1631 = dma.done %s1627, 1024
        $region60: #{deformnet_forward.6} parent=55 // pred_fallthru
          _
      $region56: #{deformnet_forward.6} parent=5 // pred_fallthru
        _
    $region6: #{deformnet_forward.6} parent=1 // loop_footer
      %s27 = sadd.s32 1, %s23
    $region7: #{deformnet_forward.6} parent=1 // loop_footer_branch
      %22 = sbr.rel target = $region3
    $region8: #{deformnet_forward.6} parent=1 // loop_exit
      _
    %1632 = vsyncpa [#allocation5], 1
    %s1633 = scalar_lea.sflag [#allocation5], 1
    %1634 = vsyncpa %s1633, 1

// kernel: deformnet_forward.7
$region0: #{deformnet_forward.7}
  #allocation0 [shape = 'u32[]', space=smem, size = 0x4, offset = 0x4, fixed_abs, tag = 'smem constant byte address 0x4 - core index']
  #allocation1 [shape = 'u32[144,128]{1,0:T(1,128)}', space=vmem, size = 0x12000, scoped, tag = 'internal scratch']
  #allocation2 [shape = 's32[1]{0}', space=sflag, size = 0x4, scoped, tag = 'scoped memory for deformnet_forward.7']
  #allocation3 [shape = 'u8[512]{0}', space=smem, size = 0x200, scoped, tag = 'prefetched SMEM operand 0']
  %s0 = inlined_call_operand.vmem [shape: s32[2], index: 0, kind: input, shape index: {}]
  %s1 = inlined_call_operand.vmem [shape: bf16[2,64,128], index: 1, kind: input, shape index: {}]
  %s2 = inlined_call_operand.vmem [shape: f32[2,1,512], index: 2, kind: input, shape index: {}]
  %s3 = inlined_call_operand.vmem [shape: bf16[128,512], index: 3, kind: input, shape index: {}]
  %s4 = inlined_call_operand.vmem [shape: bf16[512,256], index: 4, kind: input, shape index: {}]
  %s5 = inlined_call_operand.vmem [shape: f32[1,256], index: 5, kind: input, shape index: {}]
  %s6 = inlined_call_operand.vmem [shape: bf16[6,256,128], index: 6, kind: input, shape index: {}]
  %s7 = inlined_call_operand.vmem [shape: f32[6,1,128], index: 7, kind: input, shape index: {}]
  %s8 = inlined_call_operand.vmem [shape: f32[2,64,128], index: 8, kind: output, shape index: {}]
  %s9 = sld [smem:[#allocation0]]
  $region61: #{deformnet_forward.7} parent=0
    _
  %s11 = ssub.s32 1, %s9
  %s12 = scalar_select 0, %s11, %s9
  %s13 = sshll.u32 %s0, 4
  %s14 = int_to_ptr.vmem [resolvable:$true] %s13
  %16 = dma.vmem_to_smem %s14, 16, [#allocation3], [#allocation2]
  %17 = dma.done [#allocation2], 16
  %18 = sfence
  loop: start=0, step=1, limit=4
  $region2: #{deformnet_forward.7} parent=0 // loop_pre_header
    _
  $region3: #{deformnet_forward.7} parent=0 // loop_header
    %s20 = sphi 0, %s24
    %p21 = scmp.ge.s32.totalorder %s20, 4
    %s27 = sphi 0, %s39
    %s28 = sphi 0, %s35
    %s29 = sphi 0, %s27
    %s30 = sphi 0, %s28
    %s31 = sphi 0, %s29
    %s32 = sphi 0, %s30
    %s44 = sphi 0, %s46
    %s47 = sphi 0, %s44
    %s48 = sphi 0, %s47
    %s64 = sphi 0, %s48
    %s70 = sphi 0, %s72
    %s73 = sphi 0, %s70
    %s74 = sphi 0, %s73
    %s90 = sphi 0, %s74
    %s94 = sphi 0, %s94
    %s96 = sphi 0, %s94
    %s97 = sphi 0, %s96
    %s111 = sphi 0, %s97
    %s115 = sphi 0, %s115
    %s117 = sphi 0, %s115
    %s118 = sphi 0, %s117
    %s132 = sphi 0, %s118
    %s136 = sphi 0, %s136
    %s138 = sphi 0, %s136
    %s139 = sphi 0, %s138
    %s153 = sphi 0, %s139
    %s161 = sphi 0, %s163
    %s164 = sphi 0, %s161
    %s165 = sphi 0, %s164
    %s181 = sphi 0, %s165
    %s189 = sphi 0, %s191
    %s192 = sphi 0, %s189
    %s193 = sphi 0, %s192
    %s209 = sphi 0, %s193
    %s217 = sphi 0, %s219
    %s220 = sphi 0, %s217
    %s221 = sphi 0, %s220
    %s237 = sphi 0, %s221
  $region4: #{deformnet_forward.7} parent=0 // loop_header_branch
    %23 = sbr.rel (%p21) target = $region8
  $region5: #{deformnet_forward.7} parent=0 // loop_body
    %s25 = ssub.s32 %s20, 1
    %s26 = ssub.s32 %s20, 2
    %s33 = sadd.s32 1, %s28
    %p34 = scmp.ge.s32.totalorder %s33, 1
    %s35 = scalar_select %p34, 0, %s33
    %s36 = sadd.s32 1, %s27
    %s37 = scalar_select %p34, %s36, %s27
    %p38 = scmp.ge.s32.totalorder %s37, 2
    %s39 = scalar_select %p38, 0, %s37
    %s40 = ssub.s32 %s27, %s39
    %s41 = ssub.s32 %s28, %s35
    %s42 = sor.u32 %s40, %s41
    %p43 = scmp.eq.s32.totalorder %s42, 0
    %s45 = sadd.s32 %s44, 1
    %s46 = scalar_select %p43, %s44, %s45
    %p49 = pneg %p43
    %p50 = scmp.eq.s32.totalorder %s20, 1
    %p51 = por %p49, %p50
    %p52 = scmp.ne.s32.totalorder %s44, %s47
    %p53 = scmp.eq.s32.totalorder %s20, 0
    %p54 = por %p52, %p53
    %p55 = scmp.ne.s32.totalorder %s44, %s47
    %p56 = scmp.eq.s32.totalorder %s25, 1
    %p57 = por %p55, %p56
    %p58 = scmp.ne.s32.totalorder %s47, %s48
    %p59 = scmp.eq.s32.totalorder %s25, 0
    %p60 = por %p58, %p59
    %p61 = scmp.ne.s32.totalorder %s47, %s48
    %p62 = scmp.eq.s32.totalorder %s26, 1
    %p63 = por %p61, %p62
    %p65 = scmp.ne.s32.totalorder %s48, %s64
    %p66 = scmp.eq.s32.totalorder %s26, 0
    %p67 = por %p65, %p66
    %s68 = ssub.s32 %s27, %s39
    %p69 = scmp.eq.s32.totalorder %s68, 0
    %s71 = sadd.s32 %s70, 1
    %s72 = scalar_select %p69, %s70, %s71
    %p75 = pneg %p69
    %p76 = scmp.eq.s32.totalorder %s20, 1
    %p77 = por %p75, %p76
    %p78 = scmp.ne.s32.totalorder %s70, %s73
    %p79 = scmp.eq.s32.totalorder %s20, 0
    %p80 = por %p78, %p79
    %p81 = scmp.ne.s32.totalorder %s70, %s73
    %p82 = scmp.eq.s32.totalorder %s25, 1
    %p83 = por %p81, %p82
    %p84 = scmp.ne.s32.totalorder %s73, %s74
    %p85 = scmp.eq.s32.totalorder %s25, 0
    %p86 = por %p84, %p85
    %p87 = scmp.ne.s32.totalorder %s73, %s74
    %p88 = scmp.eq.s32.totalorder %s26, 1
    %p89 = por %p87, %p88
    %p91 = scmp.ne.s32.totalorder %s74, %s90
    %p92 = scmp.eq.s32.totalorder %s26, 0
    %p93 = por %p91, %p92
    %s95 = sadd.s32 %s94, 1
    %p98 = scmp.eq.s32.totalorder %s20, 1
    %p99 = scmp.ne.s32.totalorder %s94, %s96
    %p100 = scmp.eq.s32.totalorder %s20, 0
    %p101 = por %p99, %p100
    %p102 = scmp.ne.s32.totalorder %s94, %s96
    %p103 = scmp.eq.s32.totalorder %s25, 1
    %p104 = por %p102, %p103
    %p105 = scmp.ne.s32.totalorder %s96, %s97
    %p106 = scmp.eq.s32.totalorder %s25, 0
    %p107 = por %p105, %p106
    %p108 = scmp.ne.s32.totalorder %s96, %s97
    %p109 = scmp.eq.s32.totalorder %s26, 1
    %p110 = por %p108, %p109
    %p112 = scmp.ne.s32.totalorder %s97, %s111
    %p113 = scmp.eq.s32.totalorder %s26, 0
    %p114 = por %p112, %p113
    %s116 = sadd.s32 %s115, 1
    %p119 = scmp.eq.s32.totalorder %s20, 1
    %p120 = scmp.ne.s32.totalorder %s115, %s117
    %p121 = scmp.eq.s32.totalorder %s20, 0
    %p122 = por %p120, %p121
    %p123 = scmp.ne.s32.totalorder %s115, %s117
    %p124 = scmp.eq.s32.totalorder %s25, 1
    %p125 = por %p123, %p124
    %p126 = scmp.ne.s32.totalorder %s117, %s118
    %p127 = scmp.eq.s32.totalorder %s25, 0
    %p128 = por %p126, %p127
    %p129 = scmp.ne.s32.totalorder %s117, %s118
    %p130 = scmp.eq.s32.totalorder %s26, 1
    %p131 = por %p129, %p130
    %p133 = scmp.ne.s32.totalorder %s118, %s132
    %p134 = scmp.eq.s32.totalorder %s26, 0
    %p135 = por %p133, %p134
    %s137 = sadd.s32 %s136, 1
    %p140 = scmp.eq.s32.totalorder %s20, 1
    %p141 = scmp.ne.s32.totalorder %s136, %s138
    %p142 = scmp.eq.s32.totalorder %s20, 0
    %p143 = por %p141, %p142
    %p144 = scmp.ne.s32.totalorder %s136, %s138
    %p145 = scmp.eq.s32.totalorder %s25, 1
    %p146 = por %p144, %p145
    %p147 = scmp.ne.s32.totalorder %s138, %s139
    %p148 = scmp.eq.s32.totalorder %s25, 0
    %p149 = por %p147, %p148
    %p150 = scmp.ne.s32.totalorder %s138, %s139
    %p151 = scmp.eq.s32.totalorder %s26, 1
    %p152 = por %p150, %p151
    %p154 = scmp.ne.s32.totalorder %s139, %s153
    %p155 = scmp.eq.s32.totalorder %s26, 0
    %p156 = por %p154, %p155
    %s157 = sld [smem:[#allocation3 + %s27]]
    %s158 = sld [smem:[#allocation3 + %s39]]
    %s159 = ssub.s32 %s157, %s158
    %p160 = scmp.eq.s32.totalorder %s159, 0
    %s162 = sadd.s32 %s161, 1
    %s163 = scalar_select %p160, %s161, %s162
    %p166 = pneg %p160
    %p167 = scmp.eq.s32.totalorder %s20, 1
    %p168 = por %p166, %p167
    %p169 = scmp.ne.s32.totalorder %s161, %s164
    %p170 = scmp.eq.s32.totalorder %s20, 0
    %p171 = por %p169, %p170
    %p172 = scmp.ne.s32.totalorder %s161, %s164
    %p173 = scmp.eq.s32.totalorder %s25, 1
    %p174 = por %p172, %p173
    %p175 = scmp.ne.s32.totalorder %s164, %s165
    %p176 = scmp.eq.s32.totalorder %s25, 0
    %p177 = por %p175, %p176
    %p178 = scmp.ne.s32.totalorder %s164, %s165
    %p179 = scmp.eq.s32.totalorder %s26, 1
    %p180 = por %p178, %p179
    %p182 = scmp.ne.s32.totalorder %s165, %s181
    %p183 = scmp.eq.s32.totalorder %s26, 0
    %p184 = por %p182, %p183
    %s185 = sld [smem:[#allocation3 + %s27]]
    %s186 = sld [smem:[#allocation3 + %s39]]
    %s187 = ssub.s32 %s185, %s186
    %p188 = scmp.eq.s32.totalorder %s187, 0
    %s190 = sadd.s32 %s189, 1
    %s191 = scalar_select %p188, %s189, %s190
    %p194 = pneg %p188
    %p195 = scmp.eq.s32.totalorder %s20, 1
    %p196 = por %p194, %p195
    %p197 = scmp.ne.s32.totalorder %s189, %s192
    %p198 = scmp.eq.s32.totalorder %s20, 0
    %p199 = por %p197, %p198
    %p200 = scmp.ne.s32.totalorder %s189, %s192
    %p201 = scmp.eq.s32.totalorder %s25, 1
    %p202 = por %p200, %p201
    %p203 = scmp.ne.s32.totalorder %s192, %s193
    %p204 = scmp.eq.s32.totalorder %s25, 0
    %p205 = por %p203, %p204
    %p206 = scmp.ne.s32.totalorder %s192, %s193
    %p207 = scmp.eq.s32.totalorder %s26, 1
    %p208 = por %p206, %p207
    %p210 = scmp.ne.s32.totalorder %s193, %s209
    %p211 = scmp.eq.s32.totalorder %s26, 0
    %p212 = por %p210, %p211
    %s213 = ssub.s32 %s27, %s39
    %s214 = ssub.s32 %s28, %s35
    %s215 = sor.u32 %s213, %s214
    %p216 = scmp.eq.s32.totalorder %s215, 0
    %s218 = sadd.s32 %s217, 1
    %s219 = scalar_select %p216, %s217, %s218
    %p222 = pneg %p216
    %p223 = scmp.eq.s32.totalorder %s20, 1
    %p224 = por %p222, %p223
    %p225 = scmp.ne.s32.totalorder %s217, %s220
    %p226 = scmp.eq.s32.totalorder %s20, 0
    %p227 = por %p225, %p226
    %p228 = scmp.ne.s32.totalorder %s217, %s220
    %p229 = scmp.eq.s32.totalorder %s25, 1
    %p230 = por %p228, %p229
    %p231 = scmp.ne.s32.totalorder %s220, %s221
    %p232 = scmp.eq.s32.totalorder %s25, 0
    %p233 = por %p231, %p232
    %p234 = scmp.ne.s32.totalorder %s220, %s221
    %p235 = scmp.eq.s32.totalorder %s26, 1
    %p236 = por %p234, %p235
    %p238 = scmp.ne.s32.totalorder %s221, %s237
    %p239 = scmp.eq.s32.totalorder %s26, 0
    %p240 = por %p238, %p239
    %p241 = scmp.le.s32.totalorder 1, %s20
    %p242 = scmp.lt.s32.totalorder %s20, 3
    %p243 = pnand %p241, %p242
    %p244 = pneg %p243
    // Predicated region
    $region9: #{deformnet_forward.7} parent=5 // pred_check
      _
    $region10: #{deformnet_forward.7} parent=5 // pred_check_branch
      %246 = sbr.rel (%p243) target = $region12
    $region11: #{deformnet_forward.7} parent=5 // pred_region
      %s247 = ssub.s32 %s20, 1
      // Predicated region
      $region13: #{deformnet_forward.7} parent=11 // pred_check
        %p248 = pneg %p107
      $region14: #{deformnet_forward.7} parent=11 // pred_check_branch
        %250 = sbr.rel (%p248) target = $region16
      $region15: #{deformnet_forward.7} parent=11 // pred_region
        _
      $region16: #{deformnet_forward.7} parent=11 // pred_fallthru
        _
      // Predicated region
      $region17: #{deformnet_forward.7} parent=11 // pred_check
        %p251 = pneg %p128
      $region18: #{deformnet_forward.7} parent=11 // pred_check_branch
        %253 = sbr.rel (%p251) target = $region20
      $region19: #{deformnet_forward.7} parent=11 // pred_region
        _
      $region20: #{deformnet_forward.7} parent=11 // pred_fallthru
        _
      // Predicated region
      $region21: #{deformnet_forward.7} parent=11 // pred_check
        %p254 = pneg %p149
      $region22: #{deformnet_forward.7} parent=11 // pred_check_branch
        %256 = sbr.rel (%p254) target = $region24
      $region23: #{deformnet_forward.7} parent=11 // pred_region
        _
      $region24: #{deformnet_forward.7} parent=11 // pred_fallthru
        _
    $region12: #{deformnet_forward.7} parent=5 // pred_fallthru
      _
    %p257 = scmp.lt.s32.totalorder %s20, 2
    // Predicated region
    $region25: #{deformnet_forward.7} parent=5 // pred_check
      %p258 = pneg %p257
    $region26: #{deformnet_forward.7} parent=5 // pred_check_branch
      %260 = sbr.rel (%p258) target = $region28
    $region27: #{deformnet_forward.7} parent=5 // pred_region
      // Predicated region
      $region29: #{deformnet_forward.7} parent=27 // pred_check
        %p261 = pneg %p54
      $region30: #{deformnet_forward.7} parent=27 // pred_check_branch
        %263 = sbr.rel (%p261) target = $region32
      $region31: #{deformnet_forward.7} parent=27 // pred_region
        %s264 = smul.u32 8, %s28
        %p265 = scmp.lt.s32.totalorder %s27, 1
        %s266 = scalar_select %p265, %s27, 1
        %p267 = scmp.lt.s32.totalorder %s264, 7
        %s268 = scalar_select %p267, %s264, 7
        %s269 = smul.addr %s266, 8
        %s270 = sadd.s32 %s268, %s269
        %s271 = smul.addr %s270, 4
        %s272 = scalar_lea.vmem %s1, %s271
        %s273 = smul.u32 8, %s28
      $region32: #{deformnet_forward.7} parent=27 // pred_fallthru
        _
      // Predicated region
      $region33: #{deformnet_forward.7} parent=27 // pred_check
        %p274 = pneg %p80
      $region34: #{deformnet_forward.7} parent=27 // pred_check_branch
        %276 = sbr.rel (%p274) target = $region36
      $region35: #{deformnet_forward.7} parent=27 // pred_region
        %p277 = scmp.lt.s32.totalorder %s27, 1
        %s278 = scalar_select %p277, %s27, 1
        %s279 = smul.addr %s278, 4
        %s280 = scalar_lea.vmem %s2, %s279
      $region36: #{deformnet_forward.7} parent=27 // pred_fallthru
        _
      // Predicated region
      $region37: #{deformnet_forward.7} parent=27 // pred_check
        %p281 = pneg %p171
      $region38: #{deformnet_forward.7} parent=27 // pred_check_branch
        %283 = sbr.rel (%p281) target = $region40
      $region39: #{deformnet_forward.7} parent=27 // pred_region
        %s284 = sld [smem:[#allocation3 + %s27]]
        %p285 = scmp.lt.s32.totalorder %s284, 5
        %s286 = scalar_select %p285, %s284, 5
        %s287 = smul.addr %s286, 32
        %s288 = smul.addr %s287, 4
        %s289 = scalar_lea.vmem %s6, %s288
        %s290 = sld [smem:[#allocation3 + %s27]]
      $region40: #{deformnet_forward.7} parent=27 // pred_fallthru
        _
      // Predicated region
      $region41: #{deformnet_forward.7} parent=27 // pred_check
        %p291 = pneg %p199
      $region42: #{deformnet_forward.7} parent=27 // pred_check_branch
        %293 = sbr.rel (%p291) target = $region44
      $region43: #{deformnet_forward.7} parent=27 // pred_region
        %s294 = sld [smem:[#allocation3 + %s27]]
        %p295 = scmp.lt.s32.totalorder %s294, 5
        %s296 = scalar_select %p295, %s294, 5
        %s297 = scalar_lea.vmem %s7, %s296
        %s298 = sld [smem:[#allocation3 + %s27]]
      $region44: #{deformnet_forward.7} parent=27 // pred_fallthru
        _
    $region28: #{deformnet_forward.7} parent=5 // pred_fallthru
      _
    %p299 = scmp.le.s32.totalorder 1, %s20
    %p300 = scmp.lt.s32.totalorder %s20, 3
    %p301 = pnand %p299, %p300
    %p302 = pneg %p301
    // Predicated region
    $region45: #{deformnet_forward.7} parent=5 // pred_check
      _
    $region46: #{deformnet_forward.7} parent=5 // pred_check_branch
      %304 = sbr.rel (%p301) target = $region48
    $region47: #{deformnet_forward.7} parent=5 // pred_region
      %s305 = ssub.s32 %s20, 1
      %s306 = smul.u32 8, %s30
      %p307 = scmp.lt.s32.totalorder %s29, 1
      %s308 = scalar_select %p307, %s29, 1
      %p309 = scmp.lt.s32.totalorder %s306, 7
      %s310 = scalar_select %p309, %s306, 7
      %s311 = smul.addr %s308, 8
      %s312 = sadd.s32 %s310, %s311
      %s313 = smul.addr %s312, 4
      %s314 = scalar_lea.vmem %s1, %s313
      %p315 = pneg %p60
      %p316 = pneg %p57
      %p317 = scmp.lt.s32.totalorder %s29, 1
      %s318 = scalar_select %p317, %s29, 1
      %s319 = smul.addr %s318, 4
      %s320 = scalar_lea.vmem %s2, %s319
      %p321 = pneg %p86
      %p322 = pneg %p83
      %p323 = pneg %p107
      %p324 = pneg %p104
      %p325 = pneg %p128
      %p326 = pneg %p125
      %p327 = pneg %p149
      %p328 = pneg %p146
      %s329 = sld [smem:[#allocation3 + %s29]]
      %p330 = scmp.lt.s32.totalorder %s329, 5
      %s331 = scalar_select %p330, %s329, 5
      %s332 = smul.addr %s331, 32
      %s333 = smul.addr %s332, 4
      %s334 = scalar_lea.vmem %s6, %s333
      %p335 = pneg %p177
      %p336 = pneg %p174
      %s337 = sld [smem:[#allocation3 + %s29]]
      %p338 = scmp.lt.s32.totalorder %s337, 5
      %s339 = scalar_select %p338, %s337, 5
      %s340 = scalar_lea.vmem %s7, %s339
      %p341 = pneg %p205
      %p342 = pneg %p202
      %p343 = pneg %p233
      %p344 = pneg %p230
      %s345 = smul.u32 8, %s30
      %p346 = scmp.lt.s32.totalorder %s29, 1
      %s347 = scalar_select %p346, %s29, 1
      %p348 = scmp.lt.s32.totalorder %s345, 7
      %s349 = scalar_select %p348, %s345, 7
      %s350 = smul.addr %s347, 8
      %s351 = sadd.s32 %s349, %s350
      %s352 = smul.addr %s351, 8
      %s353 = scalar_lea.vmem %s8, %s352
      %s354 = smul.u32 8, %s30
      %p355 = scmp.lt.s32.totalorder %s29, 1
      %s356 = scalar_select %p355, %s29, 1
      %p357 = scmp.lt.s32.totalorder %s354, 7
      %s358 = scalar_select %p357, %s354, 7
      %s359 = smul.addr %s356, 8
      %s360 = sadd.s32 %s358, %s359
      %s361 = smul.addr %s360, 4
      %s362 = scalar_lea.vmem %s1, %s361
      %s363 = smul.u32 8, %s30
      %p364 = scmp.lt.s32.totalorder %s29, 1
      %s365 = scalar_select %p364, %s29, 1
      %s366 = smul.addr %s365, 4
      %s367 = scalar_lea.vmem %s2, %s366
      %s368 = sld [smem:[#allocation3 + %s29]]
      %p369 = scmp.lt.s32.totalorder %s368, 5
      %s370 = scalar_select %p369, %s368, 5
      %s371 = smul.addr %s370, 32
      %s372 = smul.addr %s371, 4
      %s373 = scalar_lea.vmem %s6, %s372
      %s374 = sld [smem:[#allocation3 + %s29]]
      %s375 = sld [smem:[#allocation3 + %s29]]
      %p376 = scmp.lt.s32.totalorder %s375, 5
      %s377 = scalar_select %p376, %s375, 5
      %s378 = scalar_lea.vmem %s7, %s377
      %s379 = sld [smem:[#allocation3 + %s29]]
      %s380 = smul.u32 8, %s30
      %p381 = scmp.lt.s32.totalorder %s29, 1
      %s382 = scalar_select %p381, %s29, 1
      %p383 = scmp.lt.s32.totalorder %s380, 7
      %s384 = scalar_select %p383, %s380, 7
      %s385 = smul.addr %s382, 8
      %s386 = sadd.s32 %s384, %s385
      %s387 = smul.addr %s386, 8
      %s388 = scalar_lea.vmem %s8, %s387
      %s389 = smul.u32 8, %s30
      %v391 = vld [vmem:[%s362] sm:$0xf]
      %v392 = vld [vmem:[%s362 + $0x4] sm:$0xf]
      %v393 = vld [vmem:[%s362 + $0x8] sm:$0xf]
      %v394 = vld [vmem:[%s362 + $0xc] sm:$0xf]
      %v395 = vld [vmem:[%s362 + $0x10] sm:$0xf]
      %v396 = vld [vmem:[%s362 + $0x14] sm:$0xf]
      %v397 = vld [vmem:[%s362 + $0x18] sm:$0xf]
      %v398 = vld [vmem:[%s362 + $0x1c] sm:$0xf]
      %v399 = vld [vmem:[%s3] sm:$0xff]
      %v400 = vld [vmem:[%s3 + $0x8] sm:$0xff]
      %v401 = vld [vmem:[%s3 + $0x10] sm:$0xff]
      %v402 = vld [vmem:[%s3 + $0x18] sm:$0xff]
      %v403 = vld [vmem:[%s3 + $0x20] sm:$0xff]
      %v404 = vld [vmem:[%s3 + $0x28] sm:$0xff]
      %v405 = vld [vmem:[%s3 + $0x30] sm:$0xff]
      %v406 = vld [vmem:[%s3 + $0x38] sm:$0xff]
      %v407 = vld [vmem:[%s3 + $0x40] sm:$0xff]
      %v408 = vld [vmem:[%s3 + $0x48] sm:$0xff]
      %v409 = vld [vmem:[%s3 + $0x50] sm:$0xff]
      %v410 = vld [vmem:[%s3 + $0x58] sm:$0xff]
      %v411 = vld [vmem:[%s3 + $0x60] sm:$0xff]
      %v412 = vld [vmem:[%s3 + $0x68] sm:$0xff]
      %v413 = vld [vmem:[%s3 + $0x70] sm:$0xff]
      %v414 = vld [vmem:[%s3 + $0x78] sm:$0xff]
      %v415 = vld [vmem:[%s3 + $0x80] sm:$0xff]
      %v416 = vld [vmem:[%s3 + $0x88] sm:$0xff]
      %v417 = vld [vmem:[%s3 + $0x90] sm:$0xff]
      %v418 = vld [vmem:[%s3 + $0x98] sm:$0xff]
      %v419 = vld [vmem:[%s3 + $0xa0] sm:$0xff]
      %v420 = vld [vmem:[%s3 + $0xa8] sm:$0xff]
      %v421 = vld [vmem:[%s3 + $0xb0] sm:$0xff]
      %v422 = vld [vmem:[%s3 + $0xb8] sm:$0xff]
      %v423 = vld [vmem:[%s3 + $0xc0] sm:$0xff]
      %v424 = vld [vmem:[%s3 + $0xc8] sm:$0xff]
      %v425 = vld [vmem:[%s3 + $0xd0] sm:$0xff]
      %v426 = vld [vmem:[%s3 + $0xd8] sm:$0xff]
      %v427 = vld [vmem:[%s3 + $0xe0] sm:$0xff]
      %v428 = vld [vmem:[%s3 + $0xe8] sm:$0xff]
      %v429 = vld [vmem:[%s3 + $0xf0] sm:$0xff]
      %v430 = vld [vmem:[%s3 + $0xf8] sm:$0xff]
      %v431 = vld [vmem:[%s367] sm:$0xf]
      %v433 = vlaneseq
      %v434 = vshrl.u32 %v433, 7
      %v435 = vsub.s32 0, %v434
      %v436 = vrot.slane %v431, %v435
      %v437 = vlaneseq
      %v438 = vshrl.u32 %v437, 7
      %v439 = vsub.s32 1, %v438
      %v440 = vrot.slane %v431, %v439
      %v441 = vlaneseq
      %v442 = vshrl.u32 %v441, 7
      %v443 = vsub.s32 2, %v442
      %v444 = vrot.slane %v431, %v443
      %v445 = vlaneseq
      %v446 = vshrl.u32 %v445, 7
      %v447 = vsub.s32 3, %v446
      %v448 = vrot.slane %v431, %v447
      %v461 = vunpack.c.l.b16 %v391
      %v462 = vunpack.c.l.b16 %v392
      %v463 = vunpack.c.l.b16 %v393
      %v464 = vunpack.c.l.b16 %v394
      %v465 = vunpack.c.l.b16 %v395
      %v466 = vunpack.c.l.b16 %v396
      %v467 = vunpack.c.l.b16 %v397
      %v468 = vunpack.c.l.b16 %v398
      %v469 = vpack.c.b16 %v462, %v461
      %v470 = vpack.c.b16 %v464, %v463
      %v471 = vpack.c.b16 %v466, %v465
      %v472 = vpack.c.b16 %v468, %v467
      %v509 = vunpack.c.l.b16 %v399
      %v510 = vunpack.c.h.b16 %v399
      %v511 = vunpack.c.l.b16 %v400
      %v512 = vunpack.c.h.b16 %v400
      %v513 = vunpack.c.l.b16 %v401
      %v514 = vunpack.c.h.b16 %v401
      %v515 = vunpack.c.l.b16 %v402
      %v516 = vunpack.c.h.b16 %v402
      %v517 = vunpack.c.l.b16 %v403
      %v518 = vunpack.c.h.b16 %v403
      %v519 = vunpack.c.l.b16 %v404
      %v520 = vunpack.c.h.b16 %v404
      %v521 = vunpack.c.l.b16 %v405
      %v522 = vunpack.c.h.b16 %v405
      %v523 = vunpack.c.l.b16 %v406
      %v524 = vunpack.c.h.b16 %v406
      %v525 = vunpack.c.l.b16 %v407
      %v526 = vunpack.c.h.b16 %v407
      %v527 = vunpack.c.l.b16 %v408
      %v528 = vunpack.c.h.b16 %v408
      %v529 = vunpack.c.l.b16 %v409
      %v530 = vunpack.c.h.b16 %v409
      %v531 = vunpack.c.l.b16 %v410
      %v532 = vunpack.c.h.b16 %v410
      %v533 = vunpack.c.l.b16 %v411
      %v534 = vunpack.c.h.b16 %v411
      %v535 = vunpack.c.l.b16 %v412
      %v536 = vunpack.c.h.b16 %v412
      %v537 = vunpack.c.l.b16 %v413
      %v538 = vunpack.c.h.b16 %v413
      %v539 = vunpack.c.l.b16 %v414
      %v540 = vunpack.c.h.b16 %v414
      %v541 = vunpack.c.l.b16 %v415
      %v542 = vunpack.c.h.b16 %v415
      %v543 = vunpack.c.l.b16 %v416
      %v544 = vunpack.c.h.b16 %v416
      %v545 = vunpack.c.l.b16 %v417
      %v546 = vunpack.c.h.b16 %v417
      %v547 = vunpack.c.l.b16 %v418
      %v548 = vunpack.c.h.b16 %v418
      %v549 = vunpack.c.l.b16 %v419
      %v550 = vunpack.c.h.b16 %v419
      %v551 = vunpack.c.l.b16 %v420
      %v552 = vunpack.c.h.b16 %v420
      %v553 = vunpack.c.l.b16 %v421
      %v554 = vunpack.c.h.b16 %v421
      %v555 = vunpack.c.l.b16 %v422
      %v556 = vunpack.c.h.b16 %v422
      %v557 = vunpack.c.l.b16 %v423
      %v558 = vunpack.c.h.b16 %v423
      %v559 = vunpack.c.l.b16 %v424
      %v560 = vunpack.c.h.b16 %v424
      %v561 = vunpack.c.l.b16 %v425
      %v562 = vunpack.c.h.b16 %v425
      %v563 = vunpack.c.l.b16 %v426
      %v564 = vunpack.c.h.b16 %v426
      %v565 = vunpack.c.l.b16 %v427
      %v566 = vunpack.c.h.b16 %v427
      %v567 = vunpack.c.l.b16 %v428
      %v568 = vunpack.c.h.b16 %v428
      %v569 = vunpack.c.l.b16 %v429
      %v570 = vunpack.c.h.b16 %v429
      %v571 = vunpack.c.l.b16 %v430
      %v572 = vunpack.c.h.b16 %v430
      %v573 = vpack.c.b16 %v513, %v509
      %v574 = vpack.c.b16 %v514, %v510
      %v575 = vpack.c.b16 %v515, %v511
      %v576 = vpack.c.b16 %v516, %v512
      %v577 = vpack.c.b16 %v521, %v517
      %v578 = vpack.c.b16 %v522, %v518
      %v579 = vpack.c.b16 %v523, %v519
      %v580 = vpack.c.b16 %v524, %v520
      %v581 = vpack.c.b16 %v529, %v525
      %v582 = vpack.c.b16 %v530, %v526
      %v583 = vpack.c.b16 %v531, %v527
      %v584 = vpack.c.b16 %v532, %v528
      %v585 = vpack.c.b16 %v537, %v533
      %v586 = vpack.c.b16 %v538, %v534
      %v587 = vpack.c.b16 %v539, %v535
      %v588 = vpack.c.b16 %v540, %v536
      %v589 = vpack.c.b16 %v545, %v541
      %v590 = vpack.c.b16 %v546, %v542
      %v591 = vpack.c.b16 %v547, %v543
      %v592 = vpack.c.b16 %v548, %v544
      %v593 = vpack.c.b16 %v553, %v549
      %v594 = vpack.c.b16 %v554, %v550
      %v595 = vpack.c.b16 %v555, %v551
      %v596 = vpack.c.b16 %v556, %v552
      %v597 = vpack.c.b16 %v561, %v557
      %v598 = vpack.c.b16 %v562, %v558
      %v599 = vpack.c.b16 %v563, %v559
      %v600 = vpack.c.b16 %v564, %v560
      %v601 = vpack.c.b16 %v569, %v565
      %v602 = vpack.c.b16 %v570, %v566
      %v603 = vpack.c.b16 %v571, %v567
      %v604 = vpack.c.b16 %v572, %v568
      %637 = vmatprep.subr.bf16.mxu0 %v574
      %638 = vmatpush1.bf16.msra.mxu0 %v573
      %639 = vmatprep.subr.bf16.mxu0 %v578
      %640 = vmatpush1.bf16.msra.mxu0 %v577
      %641 = vmatprep.subr.bf16.mxu0 %v582
      %642 = vmatpush1.bf16.msra.mxu0 %v581
      %643 = vmatprep.subr.bf16.mxu0 %v586
      %644 = vmatpush1.bf16.msra.mxu0 %v585
      %645 = vmatprep.subr.bf16.mxu0 %v590
      %646 = vmatpush1.bf16.msra.mxu0 %v589
      %647 = vmatprep.subr.bf16.mxu0 %v594
      %648 = vmatpush1.bf16.msra.mxu0 %v593
      %649 = vmatprep.subr.bf16.mxu0 %v598
      %650 = vmatpush1.bf16.msra.mxu0 %v597
      %651 = vmatprep.subr.bf16.mxu0 %v602
      %652 = vmatpush1.bf16.msra.mxu0 %v601
      %653 = vmatprep.subr.bf16.mxu0 0
      %654 = vmatpush1.bf16.msra.mxu0 0
      %655 = vmatprep.subr.bf16.mxu0 0
      %656 = vmatpush1.bf16.msra.mxu0 0
      %657 = vmatprep.subr.bf16.mxu0 0
      %658 = vmatpush1.bf16.msra.mxu0 0
      %659 = vmatprep.subr.bf16.mxu0 0
      %660 = vmatpush1.bf16.msra.mxu0 0
      %661 = vmatprep.subr.bf16.mxu0 0
      %662 = vmatpush1.bf16.msra.mxu0 0
      %663 = vmatprep.subr.bf16.mxu0 0
      %664 = vmatpush1.bf16.msra.mxu0 0
      %665 = vmatprep.subr.bf16.mxu0 0
      %666 = vmatpush1.bf16.msra.mxu0 0
      %667 = vmatprep.subr.bf16.mxu0 0
      %668 = vmatpush1.bf16.msra.mxu0 0
      %669 = vmatprep.mubr.bf16.mxu0 0
      %670 = vmatmul.mubr.bf16.gmra.mrb[0].mxu0 %v469
      %v671 = vpop.f32.mrb[0].mxu0
      %v672 = vadd.f32 %v436, %v671
      %v673 = vpop.f32.mrb[0].mxu0
      %v674 = vadd.f32 %v440, %v673
      %v675 = vpop.f32.mrb[0].mxu0
      %v676 = vadd.f32 %v436, %v675
      %v677 = vpop.f32.mrb[0].mxu0
      %v678 = vadd.f32 %v440, %v677
      %679 = vmatprep.mubr.bf16.mxu0 0
      %680 = vmatmul.mubr.bf16.gmra.mrb[0].mxu0 %v470
      %v681 = vpop.f32.mrb[0].mxu0
      %v682 = vadd.f32 %v436, %v681
      %v683 = vpop.f32.mrb[0].mxu0
      %v684 = vadd.f32 %v440, %v683
      %v685 = vpop.f32.mrb[0].mxu0
      %v686 = vadd.f32 %v436, %v685
      %v687 = vpop.f32.mrb[0].mxu0
      %v688 = vadd.f32 %v440, %v687
      %689 = vmatprep.mubr.bf16.mxu0 0
      %690 = vmatmul.mubr.bf16.gmra.mrb[0].mxu0 %v471
      %v691 = vpop.f32.mrb[0].mxu0
      %v692 = vadd.f32 %v436, %v691
      %v693 = vpop.f32.mrb[0].mxu0
      %v694 = vadd.f32 %v440, %v693
      %v695 = vpop.f32.mrb[0].mxu0
      %v696 = vadd.f32 %v436, %v695
      %v697 = vpop.f32.mrb[0].mxu0
      %v698 = vadd.f32 %v440, %v697
      %699 = vmatprep.mubr.bf16.mxu0 0
      %700 = vmatmul.mubr.bf16.gmra.mrb[0].mxu0 %v472
      %v701 = vpop.f32.mrb[0].mxu0
      %v702 = vadd.f32 %v436, %v701
      %v703 = vpop.f32.mrb[0].mxu0
      %v704 = vadd.f32 %v440, %v703
      %v705 = vpop.f32.mrb[0].mxu0
      %v706 = vadd.f32 %v436, %v705
      %v707 = vpop.f32.mrb[0].mxu0
      %v708 = vadd.f32 %v440, %v707
      %709 = vdwg.mxu0
      %710 = vmatprep.subr.bf16.mxu0 %v576
      %711 = vmatpush1.bf16.msra.mxu0 %v575
      %712 = vmatprep.subr.bf16.mxu0 %v580
      %713 = vmatpush1.bf16.msra.mxu0 %v579
      %714 = vmatprep.subr.bf16.mxu0 %v584
      %715 = vmatpush1.bf16.msra.mxu0 %v583
      %716 = vmatprep.subr.bf16.mxu0 %v588
      %717 = vmatpush1.bf16.msra.mxu0 %v587
      %718 = vmatprep.subr.bf16.mxu0 %v592
      %719 = vmatpush1.bf16.msra.mxu0 %v591
      %720 = vmatprep.subr.bf16.mxu0 %v596
      %721 = vmatpush1.bf16.msra.mxu0 %v595
      %722 = vmatprep.subr.bf16.mxu0 %v600
      %723 = vmatpush1.bf16.msra.mxu0 %v599
      %724 = vmatprep.subr.bf16.mxu0 %v604
      %725 = vmatpush1.bf16.msra.mxu0 %v603
      %726 = vmatprep.subr.bf16.mxu0 0
      %727 = vmatpush1.bf16.msra.mxu0 0
      %728 = vmatprep.subr.bf16.mxu0 0
      %729 = vmatpush1.bf16.msra.mxu0 0
      %730 = vmatprep.subr.bf16.mxu0 0
      %731 = vmatpush1.bf16.msra.mxu0 0
      %732 = vmatprep.subr.bf16.mxu0 0
      %733 = vmatpush1.bf16.msra.mxu0 0
      %734 = vmatprep.subr.bf16.mxu0 0
      %735 = vmatpush1.bf16.msra.mxu0 0
      %736 = vmatprep.subr.bf16.mxu0 0
      %737 = vmatpush1.bf16.msra.mxu0 0
      %738 = vmatprep.subr.bf16.mxu0 0
      %739 = vmatpush1.bf16.msra.mxu0 0
      %740 = vmatprep.subr.bf16.mxu0 0
      %741 = vmatpush1.bf16.msra.mxu0 0
      %742 = vmatprep.mubr.bf16.mxu0 0
      %743 = vmatmul.mubr.bf16.gmra.mrb[0].mxu0 %v469
      %v744 = vpop.f32.mrb[0].mxu0
      %v745 = vadd.f32 %v444, %v744
      %v746 = vpop.f32.mrb[0].mxu0
      %v747 = vadd.f32 %v448, %v746
      %v748 = vpop.f32.mrb[0].mxu0
      %v749 = vadd.f32 %v444, %v748
      %v750 = vpop.f32.mrb[0].mxu0
      %v751 = vadd.f32 %v448, %v750
      %752 = vmatprep.mubr.bf16.mxu0 0
      %753 = vmatmul.mubr.bf16.gmra.mrb[0].mxu0 %v470
      %v754 = vpop.f32.mrb[0].mxu0
      %v755 = vadd.f32 %v444, %v754
      %v756 = vpop.f32.mrb[0].mxu0
      %v757 = vadd.f32 %v448, %v756
      %v758 = vpop.f32.mrb[0].mxu0
      %v759 = vadd.f32 %v444, %v758
      %v760 = vpop.f32.mrb[0].mxu0
      %v761 = vadd.f32 %v448, %v760
      %762 = vmatprep.mubr.bf16.mxu0 0
      %763 = vmatmul.mubr.bf16.gmra.mrb[0].mxu0 %v471
      %v764 = vpop.f32.mrb[0].mxu0
      %v765 = vadd.f32 %v444, %v764
      %v766 = vpop.f32.mrb[0].mxu0
      %v767 = vadd.f32 %v448, %v766
      %v768 = vpop.f32.mrb[0].mxu0
      %v769 = vadd.f32 %v444, %v768
      %v770 = vpop.f32.mrb[0].mxu0
      %v771 = vadd.f32 %v448, %v770
      %772 = vmatprep.mubr.bf16.mxu0 0
      %773 = vmatmul.mubr.bf16.gmra.mrb[0].mxu0 %v472
      %v774 = vpop.f32.mrb[0].mxu0
      %v775 = vadd.f32 %v444, %v774
      %v776 = vpop.f32.mrb[0].mxu0
      %v777 = vadd.f32 %v448, %v776
      %v778 = vpop.f32.mrb[0].mxu0
      %v779 = vadd.f32 %v444, %v778
      %v780 = vpop.f32.mrb[0].mxu0
      %v781 = vadd.f32 %v448, %v780
      %782 = vdwg.mxu0
      %v783 = vmax.f32 %v672, 0.0
      %v784 = vmax.f32 %v674, 0.0
      %v785 = vmax.f32 %v745, 0.0
      %v786 = vmax.f32 %v747, 0.0
      %v787 = vmax.f32 %v676, 0.0
      %v788 = vmax.f32 %v678, 0.0
      %v789 = vmax.f32 %v749, 0.0
      %v790 = vmax.f32 %v751, 0.0
      %v791 = vmax.f32 %v682, 0.0
      %v792 = vmax.f32 %v684, 0.0
      %v793 = vmax.f32 %v755, 0.0
      %v794 = vmax.f32 %v757, 0.0
      %v795 = vmax.f32 %v686, 0.0
      %v796 = vmax.f32 %v688, 0.0
      %v797 = vmax.f32 %v759, 0.0
      %v798 = vmax.f32 %v761, 0.0
      %v799 = vmax.f32 %v692, 0.0
      %v800 = vmax.f32 %v694, 0.0
      %v801 = vmax.f32 %v765, 0.0
      %v802 = vmax.f32 %v767, 0.0
      %v803 = vmax.f32 %v696, 0.0
      %v804 = vmax.f32 %v698, 0.0
      %v805 = vmax.f32 %v769, 0.0
      %v806 = vmax.f32 %v771, 0.0
      %v807 = vmax.f32 %v702, 0.0
      %v808 = vmax.f32 %v704, 0.0
      %v809 = vmax.f32 %v775, 0.0
      %v810 = vmax.f32 %v777, 0.0
      %v811 = vmax.f32 %v706, 0.0
      %v812 = vmax.f32 %v708, 0.0
      %v813 = vmax.f32 %v779, 0.0
      %v814 = vmax.f32 %v781, 0.0
      %v815 = vpack.c.bf16 %v787, %v783
      %v816 = vpack.c.bf16 %v788, %v784
      %v817 = vpack.c.bf16 %v789, %v785
      %v818 = vpack.c.bf16 %v790, %v786
      %v819 = vpack.c.bf16 %v795, %v791
      %v820 = vpack.c.bf16 %v796, %v792
      %v821 = vpack.c.bf16 %v797, %v793
      %v822 = vpack.c.bf16 %v798, %v794
      %v823 = vpack.c.bf16 %v803, %v799
      %v824 = vpack.c.bf16 %v804, %v800
      %v825 = vpack.c.bf16 %v805, %v801
      %v826 = vpack.c.bf16 %v806, %v802
      %v827 = vpack.c.bf16 %v811, %v807
      %v828 = vpack.c.bf16 %v812, %v808
      %v829 = vpack.c.bf16 %v813, %v809
      %v830 = vpack.c.bf16 %v814, %v810
      %v831 = vld [vmem:[%s4] sm:$0xff]
      %v832 = vld [vmem:[%s4 + $0x8] sm:$0xff]
      %v833 = vld [vmem:[%s4 + $0x10] sm:$0xff]
      %v834 = vld [vmem:[%s4 + $0x18] sm:$0xff]
      %v835 = vld [vmem:[%s4 + $0x20] sm:$0xff]
      %v836 = vld [vmem:[%s4 + $0x28] sm:$0xff]
      %v837 = vld [vmem:[%s4 + $0x30] sm:$0xff]
      %v838 = vld [vmem:[%s4 + $0x38] sm:$0xff]
      %v839 = vld [vmem:[%s4 + $0x40] sm:$0xff]
      %v840 = vld [vmem:[%s4 + $0x48] sm:$0xff]
      %v841 = vld [vmem:[%s4 + $0x50] sm:$0xff]
      %v842 = vld [vmem:[%s4 + $0x58] sm:$0xff]
      %v843 = vld [vmem:[%s4 + $0x60] sm:$0xff]
      %v844 = vld [vmem:[%s4 + $0x68] sm:$0xff]
      %v845 = vld [vmem:[%s4 + $0x70] sm:$0xff]
      %v846 = vld [vmem:[%s4 + $0x78] sm:$0xff]
      %v847 = vld [vmem:[%s4 + $0x80] sm:$0xff]
      %v848 = vld [vmem:[%s4 + $0x88] sm:$0xff]
      %v849 = vld [vmem:[%s4 + $0x90] sm:$0xff]
      %v850 = vld [vmem:[%s4 + $0x98] sm:$0xff]
      %v851 = vld [vmem:[%s4 + $0xa0] sm:$0xff]
      %v852 = vld [vmem:[%s4 + $0xa8] sm:$0xff]
      %v853 = vld [vmem:[%s4 + $0xb0] sm:$0xff]
      %v854 = vld [vmem:[%s4 + $0xb8] sm:$0xff]
      %v855 = vld [vmem:[%s4 + $0xc0] sm:$0xff]
      %v856 = vld [vmem:[%s4 + $0xc8] sm:$0xff]
      %v857 = vld [vmem:[%s4 + $0xd0] sm:$0xff]
      %v858 = vld [vmem:[%s4 + $0xd8] sm:$0xff]
      %v859 = vld [vmem:[%s4 + $0xe0] sm:$0xff]
      %v860 = vld [vmem:[%s4 + $0xe8] sm:$0xff]
      %v861 = vld [vmem:[%s4 + $0xf0] sm:$0xff]
      %v862 = vld [vmem:[%s4 + $0xf8] sm:$0xff]
      %v863 = vld [vmem:[%s4 + $0x100] sm:$0xff]
      %v864 = vld [vmem:[%s4 + $0x108] sm:$0xff]
      %v865 = vld [vmem:[%s4 + $0x110] sm:$0xff]
      %v866 = vld [vmem:[%s4 + $0x118] sm:$0xff]
      %v867 = vld [vmem:[%s4 + $0x120] sm:$0xff]
      %v868 = vld [vmem:[%s4 + $0x128] sm:$0xff]
      %v869 = vld [vmem:[%s4 + $0x130] sm:$0xff]
      %v870 = vld [vmem:[%s4 + $0x138] sm:$0xff]
      %v871 = vld [vmem:[%s4 + $0x140] sm:$0xff]
      %v872 = vld [vmem:[%s4 + $0x148] sm:$0xff]
      %v873 = vld [vmem:[%s4 + $0x150] sm:$0xff]
      %v874 = vld [vmem:[%s4 + $0x158] sm:$0xff]
      %v875 = vld [vmem:[%s4 + $0x160] sm:$0xff]
      %v876 = vld [vmem:[%s4 + $0x168] sm:$0xff]
      %v877 = vld [vmem:[%s4 + $0x170] sm:$0xff]
      %v878 = vld [vmem:[%s4 + $0x178] sm:$0xff]
      %v879 = vld [vmem:[%s4 + $0x180] sm:$0xff]
      %v880 = vld [vmem:[%s4 + $0x188] sm:$0xff]
      %v881 = vld [vmem:[%s4 + $0x190] sm:$0xff]
      %v882 = vld [vmem:[%s4 + $0x198] sm:$0xff]
      %v883 = vld [vmem:[%s4 + $0x1a0] sm:$0xff]
      %v884 = vld [vmem:[%s4 + $0x1a8] sm:$0xff]
      %v885 = vld [vmem:[%s4 + $0x1b0] sm:$0xff]
      %v886 = vld [vmem:[%s4 + $0x1b8] sm:$0xff]
      %v887 = vld [vmem:[%s4 + $0x1c0] sm:$0xff]
      %v888 = vld [vmem:[%s4 + $0x1c8] sm:$0xff]
      %v889 = vld [vmem:[%s4 + $0x1d0] sm:$0xff]
      %v890 = vld [vmem:[%s4 + $0x1d8] sm:$0xff]
      %v891 = vld [vmem:[%s4 + $0x1e0] sm:$0xff]
      %v892 = vld [vmem:[%s4 + $0x1e8] sm:$0xff]
      %v893 = vld [vmem:[%s4 + $0x1f0] sm:$0xff]
      %v894 = vld [vmem:[%s4 + $0x1f8] sm:$0xff]
      %v895 = vld [vmem:[%s5] sm:$0x3]
      %v897 = vlaneseq
      %v898 = vshrl.u32 %v897, 7
      %v899 = vsub.s32 0, %v898
      %v900 = vrot.slane %v895, %v899
      %v901 = vlaneseq
      %v902 = vshrl.u32 %v901, 7
      %v903 = vsub.s32 1, %v902
      %v904 = vrot.slane %v895, %v903
      %v971 = vunpack.c.l.b16 %v831
      %v972 = vunpack.c.h.b16 %v831
      %v973 = vunpack.c.l.b16 %v832
      %v974 = vunpack.c.h.b16 %v832
      %v975 = vunpack.c.l.b16 %v833
      %v976 = vunpack.c.h.b16 %v833
      %v977 = vunpack.c.l.b16 %v834
      %v978 = vunpack.c.h.b16 %v834
      %v979 = vunpack.c.l.b16 %v835
      %v980 = vunpack.c.h.b16 %v835
      %v981 = vunpack.c.l.b16 %v836
      %v982 = vunpack.c.h.b16 %v836
      %v983 = vunpack.c.l.b16 %v837
      %v984 = vunpack.c.h.b16 %v837
      %v985 = vunpack.c.l.b16 %v838
      %v986 = vunpack.c.h.b16 %v838
      %v987 = vunpack.c.l.b16 %v839
      %v988 = vunpack.c.h.b16 %v839
      %v989 = vunpack.c.l.b16 %v840
      %v990 = vunpack.c.h.b16 %v840
      %v991 = vunpack.c.l.b16 %v841
      %v992 = vunpack.c.h.b16 %v841
      %v993 = vunpack.c.l.b16 %v842
      %v994 = vunpack.c.h.b16 %v842
      %v995 = vunpack.c.l.b16 %v843
      %v996 = vunpack.c.h.b16 %v843
      %v997 = vunpack.c.l.b16 %v844
      %v998 = vunpack.c.h.b16 %v844
      %v999 = vunpack.c.l.b16 %v845
      %v1000 = vunpack.c.h.b16 %v845
      %v1001 = vunpack.c.l.b16 %v846
      %v1002 = vunpack.c.h.b16 %v846
      %v1003 = vunpack.c.l.b16 %v847
      %v1004 = vunpack.c.h.b16 %v847
      %v1005 = vunpack.c.l.b16 %v848
      %v1006 = vunpack.c.h.b16 %v848
      %v1007 = vunpack.c.l.b16 %v849
      %v1008 = vunpack.c.h.b16 %v849
      %v1009 = vunpack.c.l.b16 %v850
      %v1010 = vunpack.c.h.b16 %v850
      %v1011 = vunpack.c.l.b16 %v851
      %v1012 = vunpack.c.h.b16 %v851
      %v1013 = vunpack.c.l.b16 %v852
      %v1014 = vunpack.c.h.b16 %v852
      %v1015 = vunpack.c.l.b16 %v853
      %v1016 = vunpack.c.h.b16 %v853
      %v1017 = vunpack.c.l.b16 %v854
      %v1018 = vunpack.c.h.b16 %v854
      %v1019 = vunpack.c.l.b16 %v855
      %v1020 = vunpack.c.h.b16 %v855
      %v1021 = vunpack.c.l.b16 %v856
      %v1022 = vunpack.c.h.b16 %v856
      %v1023 = vunpack.c.l.b16 %v857
      %v1024 = vunpack.c.h.b16 %v857
      %v1025 = vunpack.c.l.b16 %v858
      %v1026 = vunpack.c.h.b16 %v858
      %v1027 = vunpack.c.l.b16 %v859
      %v1028 = vunpack.c.h.b16 %v859
      %v1029 = vunpack.c.l.b16 %v860
      %v1030 = vunpack.c.h.b16 %v860
      %v1031 = vunpack.c.l.b16 %v861
      %v1032 = vunpack.c.h.b16 %v861
      %v1033 = vunpack.c.l.b16 %v862
      %v1034 = vunpack.c.h.b16 %v862
      %v1035 = vunpack.c.l.b16 %v863
      %v1036 = vunpack.c.h.b16 %v863
      %v1037 = vunpack.c.l.b16 %v864
      %v1038 = vunpack.c.h.b16 %v864
      %v1039 = vunpack.c.l.b16 %v865
      %v1040 = vunpack.c.h.b16 %v865
      %v1041 = vunpack.c.l.b16 %v866
      %v1042 = vunpack.c.h.b16 %v866
      %v1043 = vunpack.c.l.b16 %v867
      %v1044 = vunpack.c.h.b16 %v867
      %v1045 = vunpack.c.l.b16 %v868
      %v1046 = vunpack.c.h.b16 %v868
      %v1047 = vunpack.c.l.b16 %v869
      %v1048 = vunpack.c.h.b16 %v869
      %v1049 = vunpack.c.l.b16 %v870
      %v1050 = vunpack.c.h.b16 %v870
      %v1051 = vunpack.c.l.b16 %v871
      %v1052 = vunpack.c.h.b16 %v871
      %v1053 = vunpack.c.l.b16 %v872
      %v1054 = vunpack.c.h.b16 %v872
      %v1055 = vunpack.c.l.b16 %v873
      %v1056 = vunpack.c.h.b16 %v873
      %v1057 = vunpack.c.l.b16 %v874
      %v1058 = vunpack.c.h.b16 %v874
      %v1059 = vunpack.c.l.b16 %v875
      %v1060 = vunpack.c.h.b16 %v875
      %v1061 = vunpack.c.l.b16 %v876
      %v1062 = vunpack.c.h.b16 %v876
      %v1063 = vunpack.c.l.b16 %v877
      %v1064 = vunpack.c.h.b16 %v877
      %v1065 = vunpack.c.l.b16 %v878
      %v1066 = vunpack.c.h.b16 %v878
      %v1067 = vunpack.c.l.b16 %v879
      %v1068 = vunpack.c.h.b16 %v879
      %v1069 = vunpack.c.l.b16 %v880
      %v1070 = vunpack.c.h.b16 %v880
      %v1071 = vunpack.c.l.b16 %v881
      %v1072 = vunpack.c.h.b16 %v881
      %v1073 = vunpack.c.l.b16 %v882
      %v1074 = vunpack.c.h.b16 %v882
      %v1075 = vunpack.c.l.b16 %v883
      %v1076 = vunpack.c.h.b16 %v883
      %v1077 = vunpack.c.l.b16 %v884
      %v1078 = vunpack.c.h.b16 %v884
      %v1079 = vunpack.c.l.b16 %v885
      %v1080 = vunpack.c.h.b16 %v885
      %v1081 = vunpack.c.l.b16 %v886
      %v1082 = vunpack.c.h.b16 %v886
      %v1083 = vunpack.c.l.b16 %v887
      %v1084 = vunpack.c.h.b16 %v887
      %v1085 = vunpack.c.l.b16 %v888
      %v1086 = vunpack.c.h.b16 %v888
      %v1087 = vunpack.c.l.b16 %v889
      %v1088 = vunpack.c.h.b16 %v889
      %v1089 = vunpack.c.l.b16 %v890
      %v1090 = vunpack.c.h.b16 %v890
      %v1091 = vunpack.c.l.b16 %v891
      %v1092 = vunpack.c.h.b16 %v891
      %v1093 = vunpack.c.l.b16 %v892
      %v1094 = vunpack.c.h.b16 %v892
      %v1095 = vunpack.c.l.b16 %v893
      %v1096 = vunpack.c.h.b16 %v893
      %v1097 = vunpack.c.l.b16 %v894
      %v1098 = vunpack.c.h.b16 %v894
      %v1099 = vpack.c.b16 %v973, %v971
      %v1100 = vpack.c.b16 %v974, %v972
      %v1101 = vpack.c.b16 %v977, %v975
      %v1102 = vpack.c.b16 %v978, %v976
      %v1103 = vpack.c.b16 %v981, %v979
      %v1104 = vpack.c.b16 %v982, %v980
      %v1105 = vpack.c.b16 %v985, %v983
      %v1106 = vpack.c.b16 %v986, %v984
      %v1107 = vpack.c.b16 %v989, %v987
      %v1108 = vpack.c.b16 %v990, %v988
      %v1109 = vpack.c.b16 %v993, %v991
      %v1110 = vpack.c.b16 %v994, %v992
      %v1111 = vpack.c.b16 %v997, %v995
      %v1112 = vpack.c.b16 %v998, %v996
      %v1113 = vpack.c.b16 %v1001, %v999
      %v1114 = vpack.c.b16 %v1002, %v1000
      %v1115 = vpack.c.b16 %v1005, %v1003
      %v1116 = vpack.c.b16 %v1006, %v1004
      %v1117 = vpack.c.b16 %v1009, %v1007
      %v1118 = vpack.c.b16 %v1010, %v1008
      %v1119 = vpack.c.b16 %v1013, %v1011
      %v1120 = vpack.c.b16 %v1014, %v1012
      %v1121 = vpack.c.b16 %v1017, %v1015
      %v1122 = vpack.c.b16 %v1018, %v1016
      %v1123 = vpack.c.b16 %v1021, %v1019
      %v1124 = vpack.c.b16 %v1022, %v1020
      %v1125 = vpack.c.b16 %v1025, %v1023
      %v1126 = vpack.c.b16 %v1026, %v1024
      %v1127 = vpack.c.b16 %v1029, %v1027
      %v1128 = vpack.c.b16 %v1030, %v1028
      %v1129 = vpack.c.b16 %v1033, %v1031
      %v1130 = vpack.c.b16 %v1034, %v1032
      %v1131 = vpack.c.b16 %v1037, %v1035
      %v1132 = vpack.c.b16 %v1038, %v1036
      %v1133 = vpack.c.b16 %v1041, %v1039
      %v1134 = vpack.c.b16 %v1042, %v1040
      %v1135 = vpack.c.b16 %v1045, %v1043
      %v1136 = vpack.c.b16 %v1046, %v1044
      %v1137 = vpack.c.b16 %v1049, %v1047
      %v1138 = vpack.c.b16 %v1050, %v1048
      %v1139 = vpack.c.b16 %v1053, %v1051
      %v1140 = vpack.c.b16 %v1054, %v1052
      %v1141 = vpack.c.b16 %v1057, %v1055
      %v1142 = vpack.c.b16 %v1058, %v1056
      %v1143 = vpack.c.b16 %v1061, %v1059
      %v1144 = vpack.c.b16 %v1062, %v1060
      %v1145 = vpack.c.b16 %v1065, %v1063
      %v1146 = vpack.c.b16 %v1066, %v1064
      %v1147 = vpack.c.b16 %v1069, %v1067
      %v1148 = vpack.c.b16 %v1070, %v1068
      %v1149 = vpack.c.b16 %v1073, %v1071
      %v1150 = vpack.c.b16 %v1074, %v1072
      %v1151 = vpack.c.b16 %v1077, %v1075
      %v1152 = vpack.c.b16 %v1078, %v1076
      %v1153 = vpack.c.b16 %v1081, %v1079
      %v1154 = vpack.c.b16 %v1082, %v1080
      %v1155 = vpack.c.b16 %v1085, %v1083
      %v1156 = vpack.c.b16 %v1086, %v1084
      %v1157 = vpack.c.b16 %v1089, %v1087
      %v1158 = vpack.c.b16 %v1090, %v1088
      %v1159 = vpack.c.b16 %v1093, %v1091
      %v1160 = vpack.c.b16 %v1094, %v1092
      %v1161 = vpack.c.b16 %v1097, %v1095
      %v1162 = vpack.c.b16 %v1098, %v1096
      %1227 = vmatprep.subr.bf16.mxu0 %v1100
      %1228 = vmatpush1.bf16.msra.mxu0 %v1099
      %1229 = vmatprep.subr.bf16.mxu0 %v1102
      %1230 = vmatpush1.bf16.msra.mxu0 %v1101
      %1231 = vmatprep.subr.bf16.mxu0 %v1104
      %1232 = vmatpush1.bf16.msra.mxu0 %v1103
      %1233 = vmatprep.subr.bf16.mxu0 %v1106
      %1234 = vmatpush1.bf16.msra.mxu0 %v1105
      %1235 = vmatprep.subr.bf16.mxu0 %v1108
      %1236 = vmatpush1.bf16.msra.mxu0 %v1107
      %1237 = vmatprep.subr.bf16.mxu0 %v1110
      %1238 = vmatpush1.bf16.msra.mxu0 %v1109
      %1239 = vmatprep.subr.bf16.mxu0 %v1112
      %1240 = vmatpush1.bf16.msra.mxu0 %v1111
      %1241 = vmatprep.subr.bf16.mxu0 %v1114
      %1242 = vmatpush1.bf16.msra.mxu0 %v1113
      %1243 = vmatprep.subr.bf16.mxu0 %v1116
      %1244 = vmatpush1.bf16.msra.mxu0 %v1115
      %1245 = vmatprep.subr.bf16.mxu0 %v1118
      %1246 = vmatpush1.bf16.msra.mxu0 %v1117
      %1247 = vmatprep.subr.bf16.mxu0 %v1120
      %1248 = vmatpush1.bf16.msra.mxu0 %v1119
      %1249 = vmatprep.subr.bf16.mxu0 %v1122
      %1250 = vmatpush1.bf16.msra.mxu0 %v1121
      %1251 = vmatprep.subr.bf16.mxu0 %v1124
      %1252 = vmatpush1.bf16.msra.mxu0 %v1123
      %1253 = vmatprep.subr.bf16.mxu0 %v1126
      %1254 = vmatpush1.bf16.msra.mxu0 %v1125
      %1255 = vmatprep.subr.bf16.mxu0 %v1128
      %1256 = vmatpush1.bf16.msra.mxu0 %v1127
      %1257 = vmatprep.subr.bf16.mxu0 %v1130
      %1258 = vmatpush1.bf16.msra.mxu0 %v1129
      %1259 = vmatprep.mubr.bf16.mxu0 %v816
      %1260 = vmatmul.mubr.bf16.gmra.mrb[0].mxu0 %v815
      %v1261 = vpop.f32.mrb[0].mxu0
      %v1262 = vadd.f32 %v900, %v1261
      %v1263 = vpop.f32.mrb[0].mxu0
      %v1264 = vadd.f32 %v904, %v1263
      %v1265 = vpop.f32.mrb[0].mxu0
      %v1266 = vadd.f32 %v900, %v1265
      %v1267 = vpop.f32.mrb[0].mxu0
      %v1268 = vadd.f32 %v904, %v1267
      %1269 = vmatprep.mubr.bf16.mxu0 %v820
      %1270 = vmatmul.mubr.bf16.gmra.mrb[0].mxu0 %v819
      %v1271 = vpop.f32.mrb[0].mxu0
      %v1272 = vadd.f32 %v900, %v1271
      %v1273 = vpop.f32.mrb[0].mxu0
      %v1274 = vadd.f32 %v904, %v1273
      %v1275 = vpop.f32.mrb[0].mxu0
      %v1276 = vadd.f32 %v900, %v1275
      %v1277 = vpop.f32.mrb[0].mxu0
      %v1278 = vadd.f32 %v904, %v1277
      %1279 = vmatprep.mubr.bf16.mxu0 %v824
      %1280 = vmatmul.mubr.bf16.gmra.mrb[0].mxu0 %v823
      %v1281 = vpop.f32.mrb[0].mxu0
      %v1282 = vadd.f32 %v900, %v1281
      %v1283 = vpop.f32.mrb[0].mxu0
      %v1284 = vadd.f32 %v904, %v1283
      %v1285 = vpop.f32.mrb[0].mxu0
      %v1286 = vadd.f32 %v900, %v1285
      %v1287 = vpop.f32.mrb[0].mxu0
      %v1288 = vadd.f32 %v904, %v1287
      %1289 = vmatprep.mubr.bf16.mxu0 %v828
      %1290 = vmatmul.mubr.bf16.gmra.mrb[0].mxu0 %v827
      %v1291 = vpop.f32.mrb[0].mxu0
      %v1292 = vadd.f32 %v900, %v1291
      %v1293 = vpop.f32.mrb[0].mxu0
      %v1294 = vadd.f32 %v904, %v1293
      %v1295 = vpop.f32.mrb[0].mxu0
      %v1296 = vadd.f32 %v900, %v1295
      %v1297 = vpop.f32.mrb[0].mxu0
      %v1298 = vadd.f32 %v904, %v1297
      %1299 = vdwg.mxu0
      %1300 = vmatprep.subr.bf16.mxu0 %v1132
      %1301 = vmatpush1.bf16.msra.mxu0 %v1131
      %1302 = vmatprep.subr.bf16.mxu0 %v1134
      %1303 = vmatpush1.bf16.msra.mxu0 %v1133
      %1304 = vmatprep.subr.bf16.mxu0 %v1136
      %1305 = vmatpush1.bf16.msra.mxu0 %v1135
      %1306 = vmatprep.subr.bf16.mxu0 %v1138
      %1307 = vmatpush1.bf16.msra.mxu0 %v1137
      %1308 = vmatprep.subr.bf16.mxu0 %v1140
      %1309 = vmatpush1.bf16.msra.mxu0 %v1139
      %1310 = vmatprep.subr.bf16.mxu0 %v1142
      %1311 = vmatpush1.bf16.msra.mxu0 %v1141
      %1312 = vmatprep.subr.bf16.mxu0 %v1144
      %1313 = vmatpush1.bf16.msra.mxu0 %v1143
      %1314 = vmatprep.subr.bf16.mxu0 %v1146
      %1315 = vmatpush1.bf16.msra.mxu0 %v1145
      %1316 = vmatprep.subr.bf16.mxu0 %v1148
      %1317 = vmatpush1.bf16.msra.mxu0 %v1147
      %1318 = vmatprep.subr.bf16.mxu0 %v1150
      %1319 = vmatpush1.bf16.msra.mxu0 %v1149
      %1320 = vmatprep.subr.bf16.mxu0 %v1152
      %1321 = vmatpush1.bf16.msra.mxu0 %v1151
      %1322 = vmatprep.subr.bf16.mxu0 %v1154
      %1323 = vmatpush1.bf16.msra.mxu0 %v1153
      %1324 = vmatprep.subr.bf16.mxu0 %v1156
      %1325 = vmatpush1.bf16.msra.mxu0 %v1155
      %1326 = vmatprep.subr.bf16.mxu0 %v1158
      %1327 = vmatpush1.bf16.msra.mxu0 %v1157
      %1328 = vmatprep.subr.bf16.mxu0 %v1160
      %1329 = vmatpush1.bf16.msra.mxu0 %v1159
      %1330 = vmatprep.subr.bf16.mxu0 %v1162
      %1331 = vmatpush1.bf16.msra.mxu0 %v1161
      %1332 = vmatprep.mubr.bf16.mxu0 %v818
      %1333 = vmatmul.mubr.bf16.gmra.mrb[0].mxu0 %v817
      %v1334 = vpop.f32.mrb[0].mxu0
      %v1335 = vadd.f32 %v1262, %v1334
      %v1336 = vpop.f32.mrb[0].mxu0
      %v1337 = vadd.f32 %v1264, %v1336
      %v1338 = vpop.f32.mrb[0].mxu0
      %v1339 = vadd.f32 %v1266, %v1338
      %v1340 = vpop.f32.mrb[0].mxu0
      %v1341 = vadd.f32 %v1268, %v1340
      %1342 = vmatprep.mubr.bf16.mxu0 %v822
      %1343 = vmatmul.mubr.bf16.gmra.mrb[0].mxu0 %v821
      %v1344 = vpop.f32.mrb[0].mxu0
      %v1345 = vadd.f32 %v1272, %v1344
      %v1346 = vpop.f32.mrb[0].mxu0
      %v1347 = vadd.f32 %v1274, %v1346
      %v1348 = vpop.f32.mrb[0].mxu0
      %v1349 = vadd.f32 %v1276, %v1348
      %v1350 = vpop.f32.mrb[0].mxu0
      %v1351 = vadd.f32 %v1278, %v1350
      %1352 = vmatprep.mubr.bf16.mxu0 %v826
      %1353 = vmatmul.mubr.bf16.gmra.mrb[0].mxu0 %v825
      %v1354 = vpop.f32.mrb[0].mxu0
      %v1355 = vadd.f32 %v1282, %v1354
      %v1356 = vpop.f32.mrb[0].mxu0
      %v1357 = vadd.f32 %v1284, %v1356
      %v1358 = vpop.f32.mrb[0].mxu0
      %v1359 = vadd.f32 %v1286, %v1358
      %v1360 = vpop.f32.mrb[0].mxu0
      %v1361 = vadd.f32 %v1288, %v1360
      %1362 = vmatprep.mubr.bf16.mxu0 %v830
      %1363 = vmatmul.mubr.bf16.gmra.mrb[0].mxu0 %v829
      %v1364 = vpop.f32.mrb[0].mxu0
      %v1365 = vadd.f32 %v1292, %v1364
      %v1366 = vpop.f32.mrb[0].mxu0
      %v1367 = vadd.f32 %v1294, %v1366
      %v1368 = vpop.f32.mrb[0].mxu0
      %v1369 = vadd.f32 %v1296, %v1368
      %v1370 = vpop.f32.mrb[0].mxu0
      %v1371 = vadd.f32 %v1298, %v1370
      %1372 = vdwg.mxu0
      %v1373 = vmax.f32 %v1335, 0.0
      %v1374 = vmax.f32 %v1337, 0.0
      %v1375 = vmax.f32 %v1339, 0.0
      %v1376 = vmax.f32 %v1341, 0.0
      %v1377 = vmax.f32 %v1345, 0.0
      %v1378 = vmax.f32 %v1347, 0.0
      %v1379 = vmax.f32 %v1349, 0.0
      %v1380 = vmax.f32 %v1351, 0.0
      %v1381 = vmax.f32 %v1355, 0.0
      %v1382 = vmax.f32 %v1357, 0.0
      %v1383 = vmax.f32 %v1359, 0.0
      %v1384 = vmax.f32 %v1361, 0.0
      %v1385 = vmax.f32 %v1365, 0.0
      %v1386 = vmax.f32 %v1367, 0.0
      %v1387 = vmax.f32 %v1369, 0.0
      %v1388 = vmax.f32 %v1371, 0.0
      %v1389 = vpack.c.bf16 %v1375, %v1373
      %v1390 = vpack.c.bf16 %v1376, %v1374
      %v1391 = vpack.c.bf16 %v1379, %v1377
      %v1392 = vpack.c.bf16 %v1380, %v1378
      %v1393 = vpack.c.bf16 %v1383, %v1381
      %v1394 = vpack.c.bf16 %v1384, %v1382
      %v1395 = vpack.c.bf16 %v1387, %v1385
      %v1396 = vpack.c.bf16 %v1388, %v1386
      %v1397 = vld [vmem:[%s373] sm:$0xf]
      %v1398 = vld [vmem:[%s373 + $0x4] sm:$0xf]
      %v1399 = vld [vmem:[%s373 + $0x8] sm:$0xf]
      %v1400 = vld [vmem:[%s373 + $0xc] sm:$0xf]
      %v1401 = vld [vmem:[%s373 + $0x10] sm:$0xf]
      %v1402 = vld [vmem:[%s373 + $0x14] sm:$0xf]
      %v1403 = vld [vmem:[%s373 + $0x18] sm:$0xf]
      %v1404 = vld [vmem:[%s373 + $0x1c] sm:$0xf]
      %v1405 = vld [vmem:[%s373 + $0x20] sm:$0xf]
      %v1406 = vld [vmem:[%s373 + $0x24] sm:$0xf]
      %v1407 = vld [vmem:[%s373 + $0x28] sm:$0xf]
      %v1408 = vld [vmem:[%s373 + $0x2c] sm:$0xf]
      %v1409 = vld [vmem:[%s373 + $0x30] sm:$0xf]
      %v1410 = vld [vmem:[%s373 + $0x34] sm:$0xf]
      %v1411 = vld [vmem:[%s373 + $0x38] sm:$0xf]
      %v1412 = vld [vmem:[%s373 + $0x3c] sm:$0xf]
      %v1413 = vld [vmem:[%s373 + $0x40] sm:$0xf]
      %v1414 = vld [vmem:[%s373 + $0x44] sm:$0xf]
      %v1415 = vld [vmem:[%s373 + $0x48] sm:$0xf]
      %v1416 = vld [vmem:[%s373 + $0x4c] sm:$0xf]
      %v1417 = vld [vmem:[%s373 + $0x50] sm:$0xf]
      %v1418 = vld [vmem:[%s373 + $0x54] sm:$0xf]
      %v1419 = vld [vmem:[%s373 + $0x58] sm:$0xf]
      %v1420 = vld [vmem:[%s373 + $0x5c] sm:$0xf]
      %v1421 = vld [vmem:[%s373 + $0x60] sm:$0xf]
      %v1422 = vld [vmem:[%s373 + $0x64] sm:$0xf]
      %v1423 = vld [vmem:[%s373 + $0x68] sm:$0xf]
      %v1424 = vld [vmem:[%s373 + $0x6c] sm:$0xf]
      %v1425 = vld [vmem:[%s373 + $0x70] sm:$0xf]
      %v1426 = vld [vmem:[%s373 + $0x74] sm:$0xf]
      %v1427 = vld [vmem:[%s373 + $0x78] sm:$0xf]
      %v1428 = vld [vmem:[%s373 + $0x7c] sm:$0xf]
      %v1429 = vld [vmem:[%s378] sm:$0x1]
      %v1431 = vlaneseq
      %v1432 = vshrl.u32 %v1431, 7
      %v1433 = vsub.s32 0, %v1432
      %v1434 = vrot.slane %v1429, %v1433
      %v1468 = vunpack.c.l.b16 %v1397
      %v1469 = vunpack.c.l.b16 %v1398
      %v1470 = vunpack.c.l.b16 %v1399
      %v1471 = vunpack.c.l.b16 %v1400
      %v1472 = vunpack.c.l.b16 %v1401
      %v1473 = vunpack.c.l.b16 %v1402
      %v1474 = vunpack.c.l.b16 %v1403
      %v1475 = vunpack.c.l.b16 %v1404
      %v1476 = vunpack.c.l.b16 %v1405
      %v1477 = vunpack.c.l.b16 %v1406
      %v1478 = vunpack.c.l.b16 %v1407
      %v1479 = vunpack.c.l.b16 %v1408
      %v1480 = vunpack.c.l.b16 %v1409
      %v1481 = vunpack.c.l.b16 %v1410
      %v1482 = vunpack.c.l.b16 %v1411
      %v1483 = vunpack.c.l.b16 %v1412
      %v1484 = vunpack.c.l.b16 %v1413
      %v1485 = vunpack.c.l.b16 %v1414
      %v1486 = vunpack.c.l.b16 %v1415
      %v1487 = vunpack.c.l.b16 %v1416
      %v1488 = vunpack.c.l.b16 %v1417
      %v1489 = vunpack.c.l.b16 %v1418
      %v1490 = vunpack.c.l.b16 %v1419
      %v1491 = vunpack.c.l.b16 %v1420
      %v1492 = vunpack.c.l.b16 %v1421
      %v1493 = vunpack.c.l.b16 %v1422
      %v1494 = vunpack.c.l.b16 %v1423
      %v1495 = vunpack.c.l.b16 %v1424
      %v1496 = vunpack.c.l.b16 %v1425
      %v1497 = vunpack.c.l.b16 %v1426
      %v1498 = vunpack.c.l.b16 %v1427
      %v1499 = vunpack.c.l.b16 %v1428
      %v1500 = vpack.c.b16 %v1469, %v1468
      %v1501 = vpack.c.b16 %v1471, %v1470
      %v1502 = vpack.c.b16 %v1473, %v1472
      %v1503 = vpack.c.b16 %v1475, %v1474
      %v1504 = vpack.c.b16 %v1477, %v1476
      %v1505 = vpack.c.b16 %v1479, %v1478
      %v1506 = vpack.c.b16 %v1481, %v1480
      %v1507 = vpack.c.b16 %v1483, %v1482
      %v1508 = vpack.c.b16 %v1485, %v1484
      %v1509 = vpack.c.b16 %v1487, %v1486
      %v1510 = vpack.c.b16 %v1489, %v1488
      %v1511 = vpack.c.b16 %v1491, %v1490
      %v1512 = vpack.c.b16 %v1493, %v1492
      %v1513 = vpack.c.b16 %v1495, %v1494
      %v1514 = vpack.c.b16 %v1497, %v1496
      %v1515 = vpack.c.b16 %v1499, %v1498
      %1532 = vmatprep.subr.bf16.mxu0 0
      %1533 = vmatpush1.bf16.msra.mxu0 %v1500
      %1534 = vmatprep.subr.bf16.mxu0 0
      %1535 = vmatpush1.bf16.msra.mxu0 %v1501
      %1536 = vmatprep.subr.bf16.mxu0 0
      %1537 = vmatpush1.bf16.msra.mxu0 %v1502
      %1538 = vmatprep.subr.bf16.mxu0 0
      %1539 = vmatpush1.bf16.msra.mxu0 %v1503
      %1540 = vmatprep.subr.bf16.mxu0 0
      %1541 = vmatpush1.bf16.msra.mxu0 %v1504
      %1542 = vmatprep.subr.bf16.mxu0 0
      %1543 = vmatpush1.bf16.msra.mxu0 %v1505
      %1544 = vmatprep.subr.bf16.mxu0 0
      %1545 = vmatpush1.bf16.msra.mxu0 %v1506
      %1546 = vmatprep.subr.bf16.mxu0 0
      %1547 = vmatpush1.bf16.msra.mxu0 %v1507
      %1548 = vmatprep.subr.bf16.mxu0 0
      %1549 = vmatpush1.bf16.msra.mxu0 %v1508
      %1550 = vmatprep.subr.bf16.mxu0 0
      %1551 = vmatpush1.bf16.msra.mxu0 %v1509
      %1552 = vmatprep.subr.bf16.mxu0 0
      %1553 = vmatpush1.bf16.msra.mxu0 %v1510
      %1554 = vmatprep.subr.bf16.mxu0 0
      %1555 = vmatpush1.bf16.msra.mxu0 %v1511
      %1556 = vmatprep.subr.bf16.mxu0 0
      %1557 = vmatpush1.bf16.msra.mxu0 %v1512
      %1558 = vmatprep.subr.bf16.mxu0 0
      %1559 = vmatpush1.bf16.msra.mxu0 %v1513
      %1560 = vmatprep.subr.bf16.mxu0 0
      %1561 = vmatpush1.bf16.msra.mxu0 %v1514
      %1562 = vmatprep.subr.bf16.mxu0 0
      %1563 = vmatpush1.bf16.msra.mxu0 %v1515
      %1564 = vmatprep.mubr.bf16.mxu0 %v1390
      %1565 = vmatmul.mubr.bf16.gmra.mrb[0].mxu0 %v1389
      %v1566 = vpop.f32.mrb[0].mxu0
      %v1567 = vadd.f32 %v1434, %v1566
      %v1568 = vpop.f32.mrb[0].mxu0
      %v1569 = vpop.f32.mrb[0].mxu0
      %v1570 = vadd.f32 %v1434, %v1569
      %v1571 = vpop.f32.mrb[0].mxu0
      %1572 = vmatprep.mubr.bf16.mxu0 %v1392
      %1573 = vmatmul.mubr.bf16.gmra.mrb[0].mxu0 %v1391
      %v1574 = vpop.f32.mrb[0].mxu0
      %v1575 = vadd.f32 %v1434, %v1574
      %v1576 = vpop.f32.mrb[0].mxu0
      %v1577 = vpop.f32.mrb[0].mxu0
      %v1578 = vadd.f32 %v1434, %v1577
      %v1579 = vpop.f32.mrb[0].mxu0
      %1580 = vmatprep.mubr.bf16.mxu0 %v1394
      %1581 = vmatmul.mubr.bf16.gmra.mrb[0].mxu0 %v1393
      %v1582 = vpop.f32.mrb[0].mxu0
      %v1583 = vadd.f32 %v1434, %v1582
      %v1584 = vpop.f32.mrb[0].mxu0
      %v1585 = vpop.f32.mrb[0].mxu0
      %v1586 = vadd.f32 %v1434, %v1585
      %v1587 = vpop.f32.mrb[0].mxu0
      %1588 = vmatprep.mubr.bf16.mxu0 %v1396
      %1589 = vmatmul.mubr.bf16.gmra.mrb[0].mxu0 %v1395
      %v1590 = vpop.f32.mrb[0].mxu0
      %v1591 = vadd.f32 %v1434, %v1590
      %v1592 = vpop.f32.mrb[0].mxu0
      %v1593 = vpop.f32.mrb[0].mxu0
      %v1594 = vadd.f32 %v1434, %v1593
      %v1595 = vpop.f32.mrb[0].mxu0
      %1596 = vdwg.mxu0
      %1597 = vst [vmem:[%s388] sm:$0xff] %v1567
      %1598 = vst [vmem:[%s388 + $0x8] sm:$0xff] %v1570
      %1599 = vst [vmem:[%s388 + $0x10] sm:$0xff] %v1575
      %1600 = vst [vmem:[%s388 + $0x18] sm:$0xff] %v1578
      %1601 = vst [vmem:[%s388 + $0x20] sm:$0xff] %v1583
      %1602 = vst [vmem:[%s388 + $0x28] sm:$0xff] %v1586
      %1603 = vst [vmem:[%s388 + $0x30] sm:$0xff] %v1591
      %1604 = vst [vmem:[%s388 + $0x38] sm:$0xff] %v1594
      %s1605 = smul.u32 8, %s30
      %p1606 = scmp.lt.s32.totalorder %s29, 1
      %s1607 = scalar_select %p1606, %s29, 1
      %p1608 = scmp.lt.s32.totalorder %s1605, 7
      %s1609 = scalar_select %p1608, %s1605, 7
      %s1610 = smul.addr %s1607, 8
      %s1611 = sadd.s32 %s1609, %s1610
      %s1612 = smul.addr %s1611, 8
      %s1613 = scalar_lea.vmem %s8, %s1612
      // Predicated region
      $region49: #{deformnet_forward.7} parent=47 // pred_check
        %p1614 = pneg %p230
      $region50: #{deformnet_forward.7} parent=47 // pred_check_branch
        %1616 = sbr.rel (%p1614) target = $region52
      $region51: #{deformnet_forward.7} parent=47 // pred_region
        %s1617 = smul.u32 8, %s30
      $region52: #{deformnet_forward.7} parent=47 // pred_fallthru
        _
    $region48: #{deformnet_forward.7} parent=5 // pred_fallthru
      _
    %p1618 = scmp.le.s32.totalorder 2, %s20
    // Predicated region
    $region53: #{deformnet_forward.7} parent=5 // pred_check
      %p1619 = pneg %p1618
    $region54: #{deformnet_forward.7} parent=5 // pred_check_branch
      %1621 = sbr.rel (%p1619) target = $region56
    $region55: #{deformnet_forward.7} parent=5 // pred_region
      %s1622 = ssub.s32 %s20, 2
      // Predicated region
      $region57: #{deformnet_forward.7} parent=55 // pred_check
        %p1623 = pneg %p236
      $region58: #{deformnet_forward.7} parent=55 // pred_check_branch
        %1625 = sbr.rel (%p1623) target = $region60
      $region59: #{deformnet_forward.7} parent=55 // pred_region
        %s1626 = smul.u32 8, %s32
        %p1627 = scmp.lt.s32.totalorder %s31, 1
        %s1628 = scalar_select %p1627, %s31, 1
        %p1629 = scmp.lt.s32.totalorder %s1626, 7
        %s1630 = scalar_select %p1629, %s1626, 7
        %s1631 = smul.addr %s1628, 8
        %s1632 = sadd.s32 %s1630, %s1631
        %s1633 = smul.addr %s1632, 8
        %s1634 = scalar_lea.vmem %s8, %s1633
      $region60: #{deformnet_forward.7} parent=55 // pred_fallthru
        _
    $region56: #{deformnet_forward.7} parent=5 // pred_fallthru
      _
  $region6: #{deformnet_forward.7} parent=0 // loop_footer
    %s24 = sadd.s32 1, %s20
  $region7: #{deformnet_forward.7} parent=0 // loop_footer_branch
    %19 = sbr.rel target = $region3
  $region8: #{deformnet_forward.7} parent=0 // loop_exit
    _

</llo_original>
